<compile_context>
chip_gen: v5e
topology: v5e:2x2
jax: 0.10.0
libtpu: 0.0.40
codegen_flags: <defaults>
</compile_context>

<pallas_src>
import functools

import jax
import jax.numpy as jnp
from jax.experimental import pallas as pl
from jax.experimental.pallas import tpu as pltpu

F32 = jnp.float32
BF16 = jnp.bfloat16
LN_EPS = 1e-5                      # PyTorch nn.LayerNorm default
_VMEM_LIMIT = 32 * 1024 * 1024     # fits v5e/v6e/v7x scoped VMEM


def _pick_tile(total, pref):
    """Largest tile <= pref that divides `total` with a sublane-friendly (x8) size."""
    if total <= pref:
        return total
    for t in range(pref, 7, -1):
        if total % t == 0 and t % 8 == 0:
            return t
    return total


def _layernorm(x, g, b, eps=LN_EPS):
    mu = jnp.mean(x, axis=-1, keepdims=True)
    var = jnp.mean(jnp.square(x - mu), axis=-1, keepdims=True)
    return (x - mu) * jax.lax.rsqrt(var + eps) * g + b


# --------------------------------------------------------------------------
# K1: attention map  (LN1 + proj_pair + softmax over r), output (B, h, s, r)
# --------------------------------------------------------------------------

def _attn_map_kernel(pair_ref, g1_ref, b1_ref, wp_ref, bp_ref, out_ref, *, n_head):
    x = pair_ref[0].astype(F32)                                   # (L_r, ts, d_in)
    xn = _layernorm(x, g1_ref[...], b1_ref[...])
    l_r, ts, d_in = xn.shape
    logits = jnp.dot(xn.reshape(l_r * ts, d_in).astype(BF16), wp_ref[...],
                     preferred_element_type=F32) + bp_ref[...]    # (L_r*ts, h)
    logits = logits.reshape(l_r, ts, n_head)
    m = jnp.max(logits, axis=0, keepdims=True)                    # softmax over r
    e = jnp.exp(logits - m)
    p = e * pl.reciprocal(jnp.sum(e, axis=0, keepdims=True), approx=True)
    for hd in range(n_head):                                      # static unroll
        out_ref[0, hd] = p[:, :, hd].T.astype(out_ref.dtype)      # (ts, L_r)


def attn_map(pair, lp, n_head):
    B, L, _, d_in = pair.shape
    budget = 8 * 1024 * 1024
    ts = _pick_tile(L, max(8, min(128, budget // max(1, L * d_in * 4))))
    kernel = functools.partial(_attn_map_kernel, n_head=n_head)
    cost = pl.CostEstimate(
        flops=2 * B * L * L * d_in * n_head + 8 * B * L * L * n_head,
        transcendentals=B * L * L * n_head,
        bytes_accessed=4 * B * L * L * d_in + 2 * B * n_head * L * L)
    return pl.pallas_call(
        kernel,
        grid=(B, L // ts),
        in_specs=[
            pl.BlockSpec((1, L, ts, d_in), lambda b, s: (b, 0, s, 0)),
            pl.BlockSpec((1, d_in), lambda b, s: (0, 0)),
            pl.BlockSpec((1, d_in), lambda b, s: (0, 0)),
            pl.BlockSpec((d_in, n_head), lambda b, s: (0, 0)),
            pl.BlockSpec((1, n_head), lambda b, s: (0, 0)),
        ],
        out_specs=pl.BlockSpec((1, n_head, ts, L), lambda b, s: (b, 0, s, 0)),
        out_shape=jax.ShapeDtypeStruct((B, n_head, L, L), BF16),
        compiler_params=pltpu.CompilerParams(
            dimension_semantics=("parallel", "parallel"),
            vmem_limit_bytes=_VMEM_LIMIT),
        cost_estimate=cost,
    )(pair, lp["g1"], lp["b1"], lp["wp"], lp["bp"])


# --------------------------------------------------------------------------
# K2: LN2 + proj_msa + per-head attention apply + proj_out + residual
# --------------------------------------------------------------------------

def _attn_apply_kernel(attn_ref, msa_ref, g2_ref, b2_ref, wm_ref, bm_ref,
                       wo_ref, bo_ref, out_ref, *, n_head, d_k):
    x = msa_ref[0, 0].astype(F32)                                 # (L, d_out)
    xn = _layernorm(x, g2_ref[...], b2_ref[...])
    pv = jnp.dot(xn.astype(BF16), wm_ref[...],
                 preferred_element_type=F32) + bm_ref[...]        # head-major channels
    pv = pv.astype(BF16)
    heads = []
    for hd in range(n_head):                                      # static unroll
        a = attn_ref[0, hd]                                       # (L_s, L_r) bf16
        vh = pv[:, hd * d_k:(hd + 1) * d_k]                       # contiguous lanes
        heads.append(jnp.dot(a, vh, preferred_element_type=F32))  # (L_s, d_k)
    o = jnp.concatenate(heads, axis=-1)                           # (L_s, d_out)
    y = jnp.dot(o.astype(BF16), wo_ref[...],
                preferred_element_type=F32) + bo_ref[...]
    out_ref[0, 0] = (x + y).astype(out_ref.dtype)                 # residual add


def attn_apply(attn_t, msa, lp, n_head):
    B, N, L, d_out = msa.shape
    d_k = d_out // n_head
    kernel = functools.partial(_attn_apply_kernel, n_head=n_head, d_k=d_k)
    cost = pl.CostEstimate(
        flops=4 * B * N * L * d_out * d_out + 2 * B * N * L * L * d_out,
        transcendentals=B * N * L,
        bytes_accessed=8 * B * N * L * d_out + 2 * B * n_head * L * L + 4 * d_out * d_out)
    return pl.pallas_call(
        kernel,
        grid=(B, N),
        in_specs=[
            pl.BlockSpec((1, n_head, L, L), lambda b, n: (b, 0, 0, 0)),
            pl.BlockSpec((1, 1, L, d_out), lambda b, n: (b, n, 0, 0)),
            pl.BlockSpec((1, d_out), lambda b, n: (0, 0)),
            pl.BlockSpec((1, d_out), lambda b, n: (0, 0)),
            pl.BlockSpec((d_out, d_out), lambda b, n: (0, 0)),
            pl.BlockSpec((1, d_out), lambda b, n: (0, 0)),
            pl.BlockSpec((d_out, d_out), lambda b, n: (0, 0)),
            pl.BlockSpec((1, d_out), lambda b, n: (0, 0)),
        ],
        out_specs=pl.BlockSpec((1, 1, L, d_out), lambda b, n: (b, n, 0, 0)),
        out_shape=jax.ShapeDtypeStruct((B, N, L, d_out), F32),
        compiler_params=pltpu.CompilerParams(
            dimension_semantics=("parallel", "parallel"),
            vmem_limit_bytes=_VMEM_LIMIT),
        cost_estimate=cost,
    )(attn_t, msa, lp["g2"], lp["b2"], lp["wm"], lp["bm"], lp["wo"], lp["bo"])


# --------------------------------------------------------------------------
# K3: LN3 + FF1(ReLU) + FF2 + residual (+ fused final encoder LayerNorm)
# --------------------------------------------------------------------------

def _ffn_kernel(x_ref, g3_ref, b3_ref, w1_ref, b1_ref, w2_ref, b2_ref,
                gf_ref, bf_ref, out_ref, *, apply_final_ln):
    x = x_ref[...].astype(F32)                                    # (tm, d_out)
    xn = _layernorm(x, g3_ref[...], b3_ref[...])
    h1 = jnp.dot(xn.astype(BF16), w1_ref[...],
                 preferred_element_type=F32) + b1_ref[...]        # (tm, d_ff)
    h1 = jnp.maximum(h1, 0.0)
    y = jnp.dot(h1.astype(BF16), w2_ref[...],
                preferred_element_type=F32) + b2_ref[...]
    y = x + y
    if apply_final_ln:
        y = _layernorm(y, gf_ref[...], bf_ref[...])
    out_ref[...] = y.astype(out_ref.dtype)


def ffn_block(x, lp, final_ln):
    B, N, L, d_out = x.shape
    d_ff = lp["w1"].shape[1]
    M = B * N * L
    x2 = x.reshape(M, d_out)
    tm = _pick_tile(M, 512)
    apply_final = final_ln is not None
    gf, bf = final_ln if apply_final else (lp["g3"], lp["b3"])    # dummies if unused
    kernel = functools.partial(_ffn_kernel, apply_final_ln=apply_final)
    cost = pl.CostEstimate(
        flops=4 * M * d_out * d_ff,
        transcendentals=2 * M,
        bytes_accessed=8 * M * d_out + 4 * d_out * d_ff)
    out = pl.pallas_call(
        kernel,
        grid=(M // tm,),
        in_specs=[
            pl.BlockSpec((tm, d_out), lambda i: (i, 0)),
            pl.BlockSpec((1, d_out), lambda i: (0, 0)),
            pl.BlockSpec((1, d_out), lambda i: (0, 0)),
            pl.BlockSpec((d_out, d_ff), lambda i: (0, 0)),
            pl.BlockSpec((1, d_ff), lambda i: (0, 0)),
            pl.BlockSpec((d_ff, d_out), lambda i: (0, 0)),
            pl.BlockSpec((1, d_out), lambda i: (0, 0)),
            pl.BlockSpec((1, d_out), lambda i: (0, 0)),
            pl.BlockSpec((1, d_out), lambda i: (0, 0)),
        ],
        out_specs=pl.BlockSpec((tm, d_out), lambda i: (i, 0)),
        out_shape=jax.ShapeDtypeStruct((M, d_out), F32),
        compiler_params=pltpu.CompilerParams(
            dimension_semantics=("parallel",),
            vmem_limit_bytes=_VMEM_LIMIT),
        cost_estimate=cost,
    )(x2, lp["g3"], lp["b3"], lp["w1"], lp["b1f"], lp["w2"], lp["b2f"], gf, bf)
    return out.reshape(B, N, L, d_out)


# --------------------------------------------------------------------------
# Forward pass: Pair2MSA.forward(pair, msa)
# --------------------------------------------------------------------------

def pair2msa_forward(kp, pair, msa, *, n_head):
    out = msa
    n_layers = len(kp["layers"])
    for i, lp in enumerate(kp["layers"]):
        attn_t = attn_map(pair, lp, n_head)
        out = attn_apply(attn_t, out, lp, n_head)
        final = (kp["final_g"], kp["final_b"]) if i == n_layers - 1 else None
        out = ffn_block(out, lp, final)
    return out


# --------------------------------------------------------------------------
# Deterministic parameters + pure-JAX reference (same bf16 MXU operand policy)
# --------------------------------------------------------------------------

class ParamGen:
    def __init__(self, seed=42):
        self._key = jax.random.PRNGKey(seed)

    def take(self):
        self._key, sub = jax.random.split(self._key)
        return sub

    def dense(self, din, dout):
        w = jax.random.normal(self.take(), (din, dout), F32) * (din ** -0.5)
        b = 0.02 * jax.random.normal(self.take(), (dout,), F32)
        return (w, b)

    def ln(self, d):
        g = 1.0 + 0.02 * jax.random.normal(self.take(), (d,), F32)
        b = 0.02 * jax.random.normal(self.take(), (d,), F32)
        return (g, b)


def init_reference_params(pg, n_layer, n_head, d_in, d_out, r_ff):
    d_ff = d_out * r_ff
    layers = []
    for _ in range(n_layer):
        layers.append({
            "ln1": pg.ln(d_in), "ln2": pg.ln(d_out), "ln3": pg.ln(d_out),
            "proj_pair": pg.dense(d_in, n_head),
            "proj_msa": pg.dense(d_out, d_out),
            "proj_out": pg.dense(d_out, d_out),
            "ff1": pg.dense(d_out, d_ff),
            "ff2": pg.dense(d_ff, d_out),
        })
    return {"layers": layers, "final": pg.ln(d_out)}


def pack_kernel_params(ref, n_head):
    layers = []
    for lp in ref["layers"]:
        d_out = lp["proj_msa"][0].shape[0]
        d_k = d_out // n_head
        # DirectMultiheadAttention channel order is c = k*heads + h; permute to
        # head-major so in-kernel per-head slices are contiguous (exact math).
        perm = jnp.array([kd * n_head + hd for hd in range(n_head) for kd in range(d_k)],
                         jnp.int32)
        wp, bp = lp["proj_pair"]
        wm, bm = lp["proj_msa"]
        wo, bo = lp["proj_out"]
        w1, b1 = lp["ff1"]
        w2, b2 = lp["ff2"]
        layers.append({
            "g1": lp["ln1"][0].reshape(1, -1), "b1": lp["ln1"][1].reshape(1, -1),
            "g2": lp["ln2"][0].reshape(1, -1), "b2": lp["ln2"][1].reshape(1, -1),
            "g3": lp["ln3"][0].reshape(1, -1), "b3": lp["ln3"][1].reshape(1, -1),
            "wp": wp.astype(BF16), "bp": bp.reshape(1, -1),
            "wm": wm[:, perm].astype(BF16), "bm": bm[perm].reshape(1, -1),
            "wo": wo[perm, :].astype(BF16), "bo": bo.reshape(1, -1),
            "w1": w1.astype(BF16), "b1f": b1.reshape(1, -1),
            "w2": w2.astype(BF16), "b2f": b2.reshape(1, -1),
        })
    return {"layers": layers,
            "final_g": ref["final"][0].reshape(1, -1),
            "final_b": ref["final"][1].reshape(1, -1)}


def _mm(a, b):
    return jnp.einsum("...k,kn->...n", a.astype(BF16), b.astype(BF16),
                      preferred_element_type=F32)


def reference_forward(ref, pair, msa, n_head):
    def ln(x, p):
        g, b = p
        mu = jnp.mean(x, axis=-1, keepdims=True)
        var = jnp.mean(jnp.square(x - mu), axis=-1, keepdims=True)
        return (x - mu) * jax.lax.rsqrt(var + LN_EPS) * g + b

    out = msa
    for lp in ref["layers"]:
        B, N, L, d_out = out.shape
        d_k = d_out // n_head
        src_n = ln(pair, lp["ln1"])
        tgt_n = ln(out, lp["ln2"])
        logits = _mm(src_n, lp["proj_pair"][0]) + lp["proj_pair"][1]   # (B, r, s, h)
        attn = jax.nn.softmax(logits, axis=1)                          # softmax over r
        pv = _mm(tgt_n, lp["proj_msa"][0]) + lp["proj_msa"][1]         # (B, N, L, d_out)
        v = pv.reshape(B, N, L, d_k, n_head)                           # c = k*heads + h
        o = jnp.einsum("brsh,bnrkh->bnskh", attn.astype(BF16), v.astype(BF16),
                       preferred_element_type=F32).reshape(B, N, L, d_out)
        out = out + _mm(o, lp["proj_out"][0]) + lp["proj_out"][1]
        t3 = ln(out, lp["ln3"])
        hmid = jax.nn.relu(_mm(t3, lp["ff1"][0]) + lp["ff1"][1])
        out = out + _mm(hmid, lp["ff2"][0]) + lp["ff2"][1]
    return ln(out, ref["final"])


# --------------------------------------------------------------------------

if __name__ == "__main__":
    # Pair2MSA defaults: n_layer=1, n_att_head=4, n_feat_in=128, n_feat_out=256, r_ff=4
    B, N, L = 2, 4, 16
    D_IN, D_OUT = 128, 256
    N_HEAD, R_FF, N_LAYER = 4, 4, 1

    key = jax.random.PRNGKey(0)
    k_pair, k_msa = jax.random.split(key)
    pair = jax.random.normal(k_pair, (B, L, L, D_IN), F32)
    msa = jax.random.normal(k_msa, (B, N, L, D_OUT), F32)

    pg = ParamGen(seed=42)
    ref_params = init_reference_params(pg, N_LAYER, N_HEAD, D_IN, D_OUT, R_FF)
    k_params = pack_kernel_params(ref_params, N_HEAD)

    fwd = jax.jit(functools.partial(pair2msa_forward, k_params, n_head=N_HEAD))
    out = fwd(pair, msa)
    jax.block_until_ready(out)

    ref = reference_forward(ref_params, pair, msa, N_HEAD)
    max_err = float(jnp.max(jnp.abs(out - ref)))

    assert out.shape == (B, N, L, D_OUT), out.shape
    assert bool(jnp.all(jnp.isfinite(out)))
    assert max_err < 3e-2, f"max |pallas - reference| = {max_err}"
    print("KERNEL_OK")
</pallas_src>

<mosaic_0001>
module attributes {stable_mosaic.version = 11 : i64} {
  func.func @_attn_map_kernel(%arg0: i32, %arg1: i32, %arg2: memref<1x16x16x128xf32, #tpu.memory_space<vmem>>, %arg3: memref<1x128xf32, #tpu.memory_space<vmem>>, %arg4: memref<1x128xf32, #tpu.memory_space<vmem>>, %arg5: memref<128x4xbf16, #tpu.memory_space<vmem>>, %arg6: memref<1x4xf32, #tpu.memory_space<vmem>>, %arg7: memref<1x4x16x16xbf16, #tpu.memory_space<vmem>>) attributes {dimension_semantics = [#tpu.dimension_semantics<parallel>, #tpu.dimension_semantics<parallel>], iteration_bounds = array<i64: 2, 1>, scalar_prefetch = 0 : i64, scratch_operands = 0 : i64, tpu.core_type = #tpu.core_type<tc>, window_params = [{transform_indices = @transform_0, window_bounds = array<i64: 1, 16, 16, 128>}, {pipeline_mode = #tpu.pipeline_mode<synchronous>, transform_indices = @transform_1, window_bounds = array<i64: 1, 128>}, {pipeline_mode = #tpu.pipeline_mode<synchronous>, transform_indices = @transform_2, window_bounds = array<i64: 1, 128>}, {pipeline_mode = #tpu.pipeline_mode<synchronous>, transform_indices = @transform_3, window_bounds = array<i64: 128, 4>}, {pipeline_mode = #tpu.pipeline_mode<synchronous>, transform_indices = @transform_4, window_bounds = array<i64: 1, 4>}, {transform_indices = @transform_5, window_bounds = array<i64: 1, 4, 16, 16>}]} {
    %c0 = arith.constant 0 : index
    %c0_0 = arith.constant 0 : index
    %c0_1 = arith.constant 0 : index
    %c0_2 = arith.constant 0 : index
    %0 = vector.load %arg2[%c0, %c0_0, %c0_1, %c0_2] : memref<1x16x16x128xf32, #tpu.memory_space<vmem>>, vector<1x16x16x128xf32>
    %1 = vector.shape_cast %0 : vector<1x16x16x128xf32> to vector<16x16x128xf32>
    %c0_3 = arith.constant 0 : index
    %c0_4 = arith.constant 0 : index
    %2 = vector.load %arg3[%c0_3, %c0_4] : memref<1x128xf32, #tpu.memory_space<vmem>>, vector<1x128xf32>
    %c0_5 = arith.constant 0 : index
    %c0_6 = arith.constant 0 : index
    %3 = vector.load %arg4[%c0_5, %c0_6] : memref<1x128xf32, #tpu.memory_space<vmem>>, vector<1x128xf32>
    %cst = arith.constant dense<0.000000e+00> : vector<16x16xf32>
    %4 = vector.multi_reduction <add>, %1, %cst [2] : vector<16x16x128xf32> to vector<16x16xf32>
    %5 = vector.shape_cast %4 : vector<16x16xf32> to vector<16x16x1xf32>
    %cst_7 = arith.constant 1.280000e+02 : f32
    %6 = vector.broadcast %cst_7 : f32 to vector<16x16x1xf32>
    %7 = arith.divf %5, %6 : vector<16x16x1xf32>
    %8 = vector.broadcast %7 : vector<16x16x1xf32> to vector<16x16x128xf32>
    %9 = arith.subf %1, %8 : vector<16x16x128xf32>
    %10 = arith.mulf %9, %9 : vector<16x16x128xf32>
    %cst_8 = arith.constant dense<0.000000e+00> : vector<16x16xf32>
    %11 = vector.multi_reduction <add>, %10, %cst_8 [2] : vector<16x16x128xf32> to vector<16x16xf32>
    %12 = vector.shape_cast %11 : vector<16x16xf32> to vector<16x16x1xf32>
    %cst_9 = arith.constant 1.280000e+02 : f32
    %13 = vector.broadcast %cst_9 : f32 to vector<16x16x1xf32>
    %14 = arith.divf %12, %13 : vector<16x16x1xf32>
    %15 = vector.broadcast %7 : vector<16x16x1xf32> to vector<16x16x128xf32>
    %16 = arith.subf %1, %15 : vector<16x16x128xf32>
    %cst_10 = arith.constant 9.99999974E-6 : f32
    %17 = vector.broadcast %cst_10 : f32 to vector<16x16x1xf32>
    %18 = arith.addf %14, %17 : vector<16x16x1xf32>
    %19 = math.rsqrt %18 : vector<16x16x1xf32>
    %20 = vector.broadcast %19 : vector<16x16x1xf32> to vector<16x16x128xf32>
    %21 = arith.mulf %16, %20 : vector<16x16x128xf32>
    %22 = vector.shape_cast %2 : vector<1x128xf32> to vector<1x1x128xf32>
    %23 = vector.broadcast %22 : vector<1x1x128xf32> to vector<16x16x128xf32>
    %24 = arith.mulf %21, %23 : vector<16x16x128xf32>
    %25 = vector.shape_cast %3 : vector<1x128xf32> to vector<1x1x128xf32>
    %26 = vector.broadcast %25 : vector<1x1x128xf32> to vector<16x16x128xf32>
    %27 = arith.addf %24, %26 : vector<16x16x128xf32>
    %28 = vector.shape_cast %27 : vector<16x16x128xf32> to vector<256x128xf32>
    %29 = arith.truncf %28 : vector<256x128xf32> to vector<256x128xbf16>
    %c0_11 = arith.constant 0 : index
    %c0_12 = arith.constant 0 : index
    %30 = vector.load %arg5[%c0_11, %c0_12] : memref<128x4xbf16, #tpu.memory_space<vmem>>, vector<128x4xbf16>
    %cst_13 = arith.constant dense<0.000000e+00> : vector<256x4xf32>
    %31 = tpu.matmul %29, %30, %cst_13 {dimension_numbers = #tpu.dot_dimension_numbers<[1], [0], [0], [1], [0, 0, 1, 1], [], []>} : vector<256x128xbf16>, vector<128x4xbf16>, vector<256x4xf32> -> vector<256x4xf32>
    %c0_14 = arith.constant 0 : index
    %c0_15 = arith.constant 0 : index
    %32 = vector.load %arg6[%c0_14, %c0_15] : memref<1x4xf32, #tpu.memory_space<vmem>>, vector<1x4xf32>
    %33 = vector.broadcast %32 : vector<1x4xf32> to vector<256x4xf32>
    %34 = arith.addf %31, %33 : vector<256x4xf32>
    %35 = vector.shape_cast %34 : vector<256x4xf32> to vector<16x16x4xf32>
    %cst_16 = arith.constant dense<0xFF800000> : vector<16x4xf32>
    %36 = vector.multi_reduction <maximumf>, %35, %cst_16 [0] : vector<16x16x4xf32> to vector<16x4xf32>
    %37 = vector.shape_cast %36 : vector<16x4xf32> to vector<1x16x4xf32>
    %38 = vector.broadcast %37 : vector<1x16x4xf32> to vector<16x16x4xf32>
    %39 = arith.subf %35, %38 : vector<16x16x4xf32>
    %40 = math.exp %39 : vector<16x16x4xf32>
    %cst_17 = arith.constant dense<0.000000e+00> : vector<16x4xf32>
    %41 = vector.multi_reduction <add>, %40, %cst_17 [0] : vector<16x16x4xf32> to vector<16x4xf32>
    %42 = vector.shape_cast %41 : vector<16x4xf32> to vector<1x16x4xf32>
    %43 = tpu.reciprocal %42 {approx = true} : vector<1x16x4xf32> -> vector<1x16x4xf32>
    %44 = vector.broadcast %43 : vector<1x16x4xf32> to vector<16x16x4xf32>
    %45 = arith.mulf %40, %44 : vector<16x16x4xf32>
    %46 = vector.extract_strided_slice %45 {offsets = [0, 0, 0], sizes = [16, 16, 1], strides = [1, 1, 1]} : vector<16x16x4xf32> to vector<16x16x1xf32>
    %47 = vector.shape_cast %46 : vector<16x16x1xf32> to vector<16x16xf32>
    %48 = tpu.transpose %47, [1, 0] : vector<16x16xf32> -> vector<16x16xf32>
    %49 = arith.truncf %48 : vector<16x16xf32> to vector<16x16xbf16>
    %c0_18 = arith.constant 0 : index
    %c0_19 = arith.constant 0 : index
    %c0_20 = arith.constant 0 : index
    %c0_21 = arith.constant 0 : index
    %50 = vector.load %arg7[%c0_18, %c0_19, %c0_20, %c0_21] : memref<1x4x16x16xbf16, #tpu.memory_space<vmem>>, vector<1x1x16x16xbf16>
    %51 = vector.shape_cast %50 : vector<1x1x16x16xbf16> to vector<16x16xbf16>
    %52 = vector.shape_cast %49 : vector<16x16xbf16> to vector<1x1x16x16xbf16>
    tpu.vector_store %arg7[%c0_18, %c0_19, %c0_20, %c0_21], %52 {strides = array<i32>} : memref<1x4x16x16xbf16, #tpu.memory_space<vmem>>, vector<1x1x16x16xbf16>,
    %53 = vector.extract_strided_slice %45 {offsets = [0, 0, 1], sizes = [16, 16, 1], strides = [1, 1, 1]} : vector<16x16x4xf32> to vector<16x16x1xf32>
    %54 = vector.shape_cast %53 : vector<16x16x1xf32> to vector<16x16xf32>
    %55 = tpu.transpose %54, [1, 0] : vector<16x16xf32> -> vector<16x16xf32>
    %56 = arith.truncf %55 : vector<16x16xf32> to vector<16x16xbf16>
    %c0_22 = arith.constant 0 : index
    %c1 = arith.constant 1 : index
    %c0_23 = arith.constant 0 : index
    %c0_24 = arith.constant 0 : index
    %57 = vector.load %arg7[%c0_22, %c1, %c0_23, %c0_24] : memref<1x4x16x16xbf16, #tpu.memory_space<vmem>>, vector<1x1x16x16xbf16>
    %58 = vector.shape_cast %57 : vector<1x1x16x16xbf16> to vector<16x16xbf16>
    %59 = vector.shape_cast %56 : vector<16x16xbf16> to vector<1x1x16x16xbf16>
    tpu.vector_store %arg7[%c0_22, %c1, %c0_23, %c0_24], %59 {strides = array<i32>} : memref<1x4x16x16xbf16, #tpu.memory_space<vmem>>, vector<1x1x16x16xbf16>,
    %60 = vector.extract_strided_slice %45 {offsets = [0, 0, 2], sizes = [16, 16, 1], strides = [1, 1, 1]} : vector<16x16x4xf32> to vector<16x16x1xf32>
    %61 = vector.shape_cast %60 : vector<16x16x1xf32> to vector<16x16xf32>
    %62 = tpu.transpose %61, [1, 0] : vector<16x16xf32> -> vector<16x16xf32>
    %63 = arith.truncf %62 : vector<16x16xf32> to vector<16x16xbf16>
    %c0_25 = arith.constant 0 : index
    %c2 = arith.constant 2 : index
    %c0_26 = arith.constant 0 : index
    %c0_27 = arith.constant 0 : index
    %64 = vector.load %arg7[%c0_25, %c2, %c0_26, %c0_27] : memref<1x4x16x16xbf16, #tpu.memory_space<vmem>>, vector<1x1x16x16xbf16>
    %65 = vector.shape_cast %64 : vector<1x1x16x16xbf16> to vector<16x16xbf16>
    %66 = vector.shape_cast %63 : vector<16x16xbf16> to vector<1x1x16x16xbf16>
    tpu.vector_store %arg7[%c0_25, %c2, %c0_26, %c0_27], %66 {strides = array<i32>} : memref<1x4x16x16xbf16, #tpu.memory_space<vmem>>, vector<1x1x16x16xbf16>,
    %67 = vector.extract_strided_slice %45 {offsets = [0, 0, 3], sizes = [16, 16, 1], strides = [1, 1, 1]} : vector<16x16x4xf32> to vector<16x16x1xf32>
    %68 = vector.shape_cast %67 : vector<16x16x1xf32> to vector<16x16xf32>
    %69 = tpu.transpose %68, [1, 0] : vector<16x16xf32> -> vector<16x16xf32>
    %70 = arith.truncf %69 : vector<16x16xf32> to vector<16x16xbf16>
    %c0_28 = arith.constant 0 : index
    %c3 = arith.constant 3 : index
    %c0_29 = arith.constant 0 : index
    %c0_30 = arith.constant 0 : index
    %71 = vector.load %arg7[%c0_28, %c3, %c0_29, %c0_30] : memref<1x4x16x16xbf16, #tpu.memory_space<vmem>>, vector<1x1x16x16xbf16>
    %72 = vector.shape_cast %71 : vector<1x1x16x16xbf16> to vector<16x16xbf16>
    %73 = vector.shape_cast %70 : vector<16x16xbf16> to vector<1x1x16x16xbf16>
    tpu.vector_store %arg7[%c0_28, %c3, %c0_29, %c0_30], %73 {strides = array<i32>} : memref<1x4x16x16xbf16, #tpu.memory_space<vmem>>, vector<1x1x16x16xbf16>,
    return
  }
  func.func @transform_0(%arg0: i32, %arg1: i32) -> (i32, i32, i32, i32) {
    %c0_i32 = arith.constant 0 : i32
    %c0_i32_0 = arith.constant 0 : i32
    %c0_i32_1 = arith.constant 0 : i32
    return %arg0, %c0_i32, %arg1, %c0_i32_0 : i32, i32, i32, i32
  }
  func.func @transform_1(%arg0: i32, %arg1: i32) -> (i32, i32) {
    %c0_i32 = arith.constant 0 : i32
    %c0_i32_0 = arith.constant 0 : i32
    %c0_i32_1 = arith.constant 0 : i32
    return %c0_i32, %c0_i32_0 : i32, i32
  }
  func.func @transform_2(%arg0: i32, %arg1: i32) -> (i32, i32) {
    %c0_i32 = arith.constant 0 : i32
    %c0_i32_0 = arith.constant 0 : i32
    %c0_i32_1 = arith.constant 0 : i32
    return %c0_i32, %c0_i32_0 : i32, i32
  }
  func.func @transform_3(%arg0: i32, %arg1: i32) -> (i32, i32) {
    %c0_i32 = arith.constant 0 : i32
    %c0_i32_0 = arith.constant 0 : i32
    %c0_i32_1 = arith.constant 0 : i32
    return %c0_i32, %c0_i32_0 : i32, i32
  }
  func.func @transform_4(%arg0: i32, %arg1: i32) -> (i32, i32) {
    %c0_i32 = arith.constant 0 : i32
    %c0_i32_0 = arith.constant 0 : i32
    %c0_i32_1 = arith.constant 0 : i32
    return %c0_i32, %c0_i32_0 : i32, i32
  }
  func.func @transform_5(%arg0: i32, %arg1: i32) -> (i32, i32, i32, i32) {
    %c0_i32 = arith.constant 0 : i32
    %c0_i32_0 = arith.constant 0 : i32
    %c0_i32_1 = arith.constant 0 : i32
    return %arg0, %c0_i32, %arg1, %c0_i32_0 : i32, i32, i32, i32
  }
}

module attributes {stable_mosaic.version = 11 : i64} {
  func.func @_ffn_kernel(%arg0: i32, %arg1: memref<128x256xf32, #tpu.memory_space<vmem>>, %arg2: memref<1x256xf32, #tpu.memory_space<vmem>>, %arg3: memref<1x256xf32, #tpu.memory_space<vmem>>, %arg4: memref<256x1024xbf16, #tpu.memory_space<vmem>>, %arg5: memref<1x1024xf32, #tpu.memory_space<vmem>>, %arg6: memref<1024x256xbf16, #tpu.memory_space<vmem>>, %arg7: memref<1x256xf32, #tpu.memory_space<vmem>>, %arg8: memref<1x256xf32, #tpu.memory_space<vmem>>, %arg9: memref<1x256xf32, #tpu.memory_space<vmem>>, %arg10: memref<128x256xf32, #tpu.memory_space<vmem>>) attributes {dimension_semantics = [#tpu.dimension_semantics<parallel>], iteration_bounds = array<i64: 1>, scalar_prefetch = 0 : i64, scratch_operands = 0 : i64, tpu.core_type = #tpu.core_type<tc>, window_params = [{transform_indices = @transform_0, window_bounds = array<i64: 128, 256>}, {pipeline_mode = #tpu.pipeline_mode<synchronous>, transform_indices = @transform_1, window_bounds = array<i64: 1, 256>}, {pipeline_mode = #tpu.pipeline_mode<synchronous>, transform_indices = @transform_2, window_bounds = array<i64: 1, 256>}, {pipeline_mode = #tpu.pipeline_mode<synchronous>, transform_indices = @transform_3, window_bounds = array<i64: 256, 1024>}, {pipeline_mode = #tpu.pipeline_mode<synchronous>, transform_indices = @transform_4, window_bounds = array<i64: 1, 1024>}, {pipeline_mode = #tpu.pipeline_mode<synchronous>, transform_indices = @transform_5, window_bounds = array<i64: 1024, 256>}, {pipeline_mode = #tpu.pipeline_mode<synchronous>, transform_indices = @transform_6, window_bounds = array<i64: 1, 256>}, {pipeline_mode = #tpu.pipeline_mode<synchronous>, transform_indices = @transform_7, window_bounds = array<i64: 1, 256>}, {pipeline_mode = #tpu.pipeline_mode<synchronous>, transform_indices = @transform_8, window_bounds = array<i64: 1, 256>}, {transform_indices = @transform_9, window_bounds = array<i64: 128, 256>}]} {
    %c0 = arith.constant 0 : index
    %c0_0 = arith.constant 0 : index
    %0 = vector.load %arg1[%c0, %c0_0] : memref<128x256xf32, #tpu.memory_space<vmem>>, vector<128x256xf32>
    %c0_1 = arith.constant 0 : index
    %c0_2 = arith.constant 0 : index
    %1 = vector.load %arg2[%c0_1, %c0_2] : memref<1x256xf32, #tpu.memory_space<vmem>>, vector<1x256xf32>
    %c0_3 = arith.constant 0 : index
    %c0_4 = arith.constant 0 : index
    %2 = vector.load %arg3[%c0_3, %c0_4] : memref<1x256xf32, #tpu.memory_space<vmem>>, vector<1x256xf32>
    %cst = arith.constant dense<0.000000e+00> : vector<128xf32>
    %3 = vector.multi_reduction <add>, %0, %cst [1] : vector<128x256xf32> to vector<128xf32>
    %4 = vector.shape_cast %3 : vector<128xf32> to vector<128x1xf32>
    %cst_5 = arith.constant 2.560000e+02 : f32
    %5 = vector.broadcast %cst_5 : f32 to vector<128x1xf32>
    %6 = arith.divf %4, %5 : vector<128x1xf32>
    %7 = vector.broadcast %6 : vector<128x1xf32> to vector<128x256xf32>
    %8 = arith.subf %0, %7 : vector<128x256xf32>
    %9 = arith.mulf %8, %8 : vector<128x256xf32>
    %cst_6 = arith.constant dense<0.000000e+00> : vector<128xf32>
    %10 = vector.multi_reduction <add>, %9, %cst_6 [1] : vector<128x256xf32> to vector<128xf32>
    %11 = vector.shape_cast %10 : vector<128xf32> to vector<128x1xf32>
    %cst_7 = arith.constant 2.560000e+02 : f32
    %12 = vector.broadcast %cst_7 : f32 to vector<128x1xf32>
    %13 = arith.divf %11, %12 : vector<128x1xf32>
    %14 = vector.broadcast %6 : vector<128x1xf32> to vector<128x256xf32>
    %15 = arith.subf %0, %14 : vector<128x256xf32>
    %cst_8 = arith.constant 9.99999974E-6 : f32
    %16 = vector.broadcast %cst_8 : f32 to vector<128x1xf32>
    %17 = arith.addf %13, %16 : vector<128x1xf32>
    %18 = math.rsqrt %17 : vector<128x1xf32>
    %19 = vector.broadcast %18 : vector<128x1xf32> to vector<128x256xf32>
    %20 = arith.mulf %15, %19 : vector<128x256xf32>
    %21 = vector.broadcast %1 : vector<1x256xf32> to vector<128x256xf32>
    %22 = arith.mulf %20, %21 : vector<128x256xf32>
    %23 = vector.broadcast %2 : vector<1x256xf32> to vector<128x256xf32>
    %24 = arith.addf %22, %23 : vector<128x256xf32>
    %25 = arith.truncf %24 : vector<128x256xf32> to vector<128x256xbf16>
    %c0_9 = arith.constant 0 : index
    %c0_10 = arith.constant 0 : index
    %26 = vector.load %arg4[%c0_9, %c0_10] : memref<256x1024xbf16, #tpu.memory_space<vmem>>, vector<256x1024xbf16>
    %cst_11 = arith.constant dense<0.000000e+00> : vector<128x1024xf32>
    %27 = tpu.matmul %25, %26, %cst_11 {dimension_numbers = #tpu.dot_dimension_numbers<[1], [0], [0], [1], [0, 0, 1, 1], [], []>} : vector<128x256xbf16>, vector<256x1024xbf16>, vector<128x1024xf32> -> vector<128x1024xf32>
    %c0_12 = arith.constant 0 : index
    %c0_13 = arith.constant 0 : index
    %28 = vector.load %arg5[%c0_12, %c0_13] : memref<1x1024xf32, #tpu.memory_space<vmem>>, vector<1x1024xf32>
    %29 = vector.broadcast %28 : vector<1x1024xf32> to vector<128x1024xf32>
    %30 = arith.addf %27, %29 : vector<128x1024xf32>
    %cst_14 = arith.constant 0.000000e+00 : f32
    %31 = vector.broadcast %cst_14 : f32 to vector<128x1024xf32>
    %32 = arith.maximumf %30, %31 : vector<128x1024xf32>
    %33 = arith.truncf %32 : vector<128x1024xf32> to vector<128x1024xbf16>
    %c0_15 = arith.constant 0 : index
    %c0_16 = arith.constant 0 : index
    %34 = vector.load %arg6[%c0_15, %c0_16] : memref<1024x256xbf16, #tpu.memory_space<vmem>>, vector<1024x256xbf16>
    %cst_17 = arith.constant dense<0.000000e+00> : vector<128x256xf32>
    %35 = tpu.matmul %33, %34, %cst_17 {dimension_numbers = #tpu.dot_dimension_numbers<[1], [0], [0], [1], [0, 0, 1, 1], [], []>} : vector<128x1024xbf16>, vector<1024x256xbf16>, vector<128x256xf32> -> vector<128x256xf32>
    %c0_18 = arith.constant 0 : index
    %c0_19 = arith.constant 0 : index
    %36 = vector.load %arg7[%c0_18, %c0_19] : memref<1x256xf32, #tpu.memory_space<vmem>>, vector<1x256xf32>
    %37 = vector.broadcast %36 : vector<1x256xf32> to vector<128x256xf32>
    %38 = arith.addf %35, %37 : vector<128x256xf32>
    %39 = arith.addf %0, %38 : vector<128x256xf32>
    %c0_20 = arith.constant 0 : index
    %c0_21 = arith.constant 0 : index
    %40 = vector.load %arg8[%c0_20, %c0_21] : memref<1x256xf32, #tpu.memory_space<vmem>>, vector<1x256xf32>
    %c0_22 = arith.constant 0 : index
    %c0_23 = arith.constant 0 : index
    %41 = vector.load %arg9[%c0_22, %c0_23] : memref<1x256xf32, #tpu.memory_space<vmem>>, vector<1x256xf32>
    %cst_24 = arith.constant dense<0.000000e+00> : vector<128xf32>
    %42 = vector.multi_reduction <add>, %39, %cst_24 [1] : vector<128x256xf32> to vector<128xf32>
    %43 = vector.shape_cast %42 : vector<128xf32> to vector<128x1xf32>
    %cst_25 = arith.constant 2.560000e+02 : f32
    %44 = vector.broadcast %cst_25 : f32 to vector<128x1xf32>
    %45 = arith.divf %43, %44 : vector<128x1xf32>
    %46 = vector.broadcast %45 : vector<128x1xf32> to vector<128x256xf32>
    %47 = arith.subf %39, %46 : vector<128x256xf32>
    %48 = arith.mulf %47, %47 : vector<128x256xf32>
    %cst_26 = arith.constant dense<0.000000e+00> : vector<128xf32>
    %49 = vector.multi_reduction <add>, %48, %cst_26 [1] : vector<128x256xf32> to vector<128xf32>
    %50 = vector.shape_cast %49 : vector<128xf32> to vector<128x1xf32>
    %cst_27 = arith.constant 2.560000e+02 : f32
    %51 = vector.broadcast %cst_27 : f32 to vector<128x1xf32>
    %52 = arith.divf %50, %51 : vector<128x1xf32>
    %53 = vector.broadcast %45 : vector<128x1xf32> to vector<128x256xf32>
    %54 = arith.subf %39, %53 : vector<128x256xf32>
    %cst_28 = arith.constant 9.99999974E-6 : f32
    %55 = vector.broadcast %cst_28 : f32 to vector<128x1xf32>
    %56 = arith.addf %52, %55 : vector<128x1xf32>
    %57 = math.rsqrt %56 : vector<128x1xf32>
    %58 = vector.broadcast %57 : vector<128x1xf32> to vector<128x256xf32>
    %59 = arith.mulf %54, %58 : vector<128x256xf32>
    %60 = vector.broadcast %40 : vector<1x256xf32> to vector<128x256xf32>
    %61 = arith.mulf %59, %60 : vector<128x256xf32>
    %62 = vector.broadcast %41 : vector<1x256xf32> to vector<128x256xf32>
    %63 = arith.addf %61, %62 : vector<128x256xf32>
    %c0_29 = arith.constant 0 : index
    %c0_30 = arith.constant 0 : index
    %64 = vector.load %arg10[%c0_29, %c0_30] : memref<128x256xf32, #tpu.memory_space<vmem>>, vector<128x256xf32>
    tpu.vector_store %arg10[%c0_29, %c0_30], %63 {strides = array<i32>} : memref<128x256xf32, #tpu.memory_space<vmem>>, vector<128x256xf32>,
    return
  }
  func.func @transform_0(%arg0: i32) -> (i32, i32) {
    %c0_i32 = arith.constant 0 : i32
    %c0_i32_0 = arith.constant 0 : i32
    return %arg0, %c0_i32 : i32, i32
  }
  func.func @transform_1(%arg0: i32) -> (i32, i32) {
    %c0_i32 = arith.constant 0 : i32
    %c0_i32_0 = arith.constant 0 : i32
    %c0_i32_1 = arith.constant 0 : i32
    return %c0_i32, %c0_i32_0 : i32, i32
  }
  func.func @transform_2(%arg0: i32) -> (i32, i32) {
    %c0_i32 = arith.constant 0 : i32
    %c0_i32_0 = arith.constant 0 : i32
    %c0_i32_1 = arith.constant 0 : i32
    return %c0_i32, %c0_i32_0 : i32, i32
  }
  func.func @transform_3(%arg0: i32) -> (i32, i32) {
    %c0_i32 = arith.constant 0 : i32
    %c0_i32_0 = arith.constant 0 : i32
    %c0_i32_1 = arith.constant 0 : i32
    return %c0_i32, %c0_i32_0 : i32, i32
  }
  func.func @transform_4(%arg0: i32) -> (i32, i32) {
    %c0_i32 = arith.constant 0 : i32
    %c0_i32_0 = arith.constant 0 : i32
    %c0_i32_1 = arith.constant 0 : i32
    return %c0_i32, %c0_i32_0 : i32, i32
  }
  func.func @transform_5(%arg0: i32) -> (i32, i32) {
    %c0_i32 = arith.constant 0 : i32
    %c0_i32_0 = arith.constant 0 : i32
    %c0_i32_1 = arith.constant 0 : i32
    return %c0_i32, %c0_i32_0 : i32, i32
  }
  func.func @transform_6(%arg0: i32) -> (i32, i32) {
    %c0_i32 = arith.constant 0 : i32
    %c0_i32_0 = arith.constant 0 : i32
    %c0_i32_1 = arith.constant 0 : i32
    return %c0_i32, %c0_i32_0 : i32, i32
  }
  func.func @transform_7(%arg0: i32) -> (i32, i32) {
    %c0_i32 = arith.constant 0 : i32
    %c0_i32_0 = arith.constant 0 : i32
    %c0_i32_1 = arith.constant 0 : i32
    return %c0_i32, %c0_i32_0 : i32, i32
  }
  func.func @transform_8(%arg0: i32) -> (i32, i32) {
    %c0_i32 = arith.constant 0 : i32
    %c0_i32_0 = arith.constant 0 : i32
    %c0_i32_1 = arith.constant 0 : i32
    return %c0_i32, %c0_i32_0 : i32, i32
  }
  func.func @transform_9(%arg0: i32) -> (i32, i32) {
    %c0_i32 = arith.constant 0 : i32
    %c0_i32_0 = arith.constant 0 : i32
    return %arg0, %c0_i32 : i32, i32
  }
}

module attributes {stable_mosaic.version = 11 : i64} {
  func.func @_attn_apply_kernel(%arg0: i32, %arg1: i32, %arg2: memref<1x4x16x16xbf16, #tpu.memory_space<vmem>>, %arg3: memref<1x1x16x256xf32, #tpu.memory_space<vmem>>, %arg4: memref<1x256xf32, #tpu.memory_space<vmem>>, %arg5: memref<1x256xf32, #tpu.memory_space<vmem>>, %arg6: memref<256x256xbf16, #tpu.memory_space<vmem>>, %arg7: memref<1x256xf32, #tpu.memory_space<vmem>>, %arg8: memref<256x256xbf16, #tpu.memory_space<vmem>>, %arg9: memref<1x256xf32, #tpu.memory_space<vmem>>, %arg10: memref<1x1x16x256xf32, #tpu.memory_space<vmem>>) attributes {dimension_semantics = [#tpu.dimension_semantics<parallel>, #tpu.dimension_semantics<parallel>], iteration_bounds = array<i64: 2, 4>, scalar_prefetch = 0 : i64, scratch_operands = 0 : i64, tpu.core_type = #tpu.core_type<tc>, window_params = [{transform_indices = @transform_0, window_bounds = array<i64: 1, 4, 16, 16>}, {transform_indices = @transform_1, window_bounds = array<i64: 1, 1, 16, 256>}, {pipeline_mode = #tpu.pipeline_mode<synchronous>, transform_indices = @transform_2, window_bounds = array<i64: 1, 256>}, {pipeline_mode = #tpu.pipeline_mode<synchronous>, transform_indices = @transform_3, window_bounds = array<i64: 1, 256>}, {pipeline_mode = #tpu.pipeline_mode<synchronous>, transform_indices = @transform_4, window_bounds = array<i64: 256, 256>}, {pipeline_mode = #tpu.pipeline_mode<synchronous>, transform_indices = @transform_5, window_bounds = array<i64: 1, 256>}, {pipeline_mode = #tpu.pipeline_mode<synchronous>, transform_indices = @transform_6, window_bounds = array<i64: 256, 256>}, {pipeline_mode = #tpu.pipeline_mode<synchronous>, transform_indices = @transform_7, window_bounds = array<i64: 1, 256>}, {transform_indices = @transform_8, window_bounds = array<i64: 1, 1, 16, 256>}]} {
    %c0 = arith.constant 0 : index
    %c0_0 = arith.constant 0 : index
    %c0_1 = arith.constant 0 : index
    %c0_2 = arith.constant 0 : index
    %0 = vector.load %arg3[%c0, %c0_0, %c0_1, %c0_2] : memref<1x1x16x256xf32, #tpu.memory_space<vmem>>, vector<1x1x16x256xf32>
    %1 = vector.shape_cast %0 : vector<1x1x16x256xf32> to vector<16x256xf32>
    %c0_3 = arith.constant 0 : index
    %c0_4 = arith.constant 0 : index
    %2 = vector.load %arg4[%c0_3, %c0_4] : memref<1x256xf32, #tpu.memory_space<vmem>>, vector<1x256xf32>
    %c0_5 = arith.constant 0 : index
    %c0_6 = arith.constant 0 : index
    %3 = vector.load %arg5[%c0_5, %c0_6] : memref<1x256xf32, #tpu.memory_space<vmem>>, vector<1x256xf32>
    %cst = arith.constant dense<0.000000e+00> : vector<16xf32>
    %4 = vector.multi_reduction <add>, %1, %cst [1] : vector<16x256xf32> to vector<16xf32>
    %5 = vector.shape_cast %4 : vector<16xf32> to vector<16x1xf32>
    %cst_7 = arith.constant 2.560000e+02 : f32
    %6 = vector.broadcast %cst_7 : f32 to vector<16x1xf32>
    %7 = arith.divf %5, %6 : vector<16x1xf32>
    %8 = vector.broadcast %7 : vector<16x1xf32> to vector<16x256xf32>
    %9 = arith.subf %1, %8 : vector<16x256xf32>
    %10 = arith.mulf %9, %9 : vector<16x256xf32>
    %cst_8 = arith.constant dense<0.000000e+00> : vector<16xf32>
    %11 = vector.multi_reduction <add>, %10, %cst_8 [1] : vector<16x256xf32> to vector<16xf32>
    %12 = vector.shape_cast %11 : vector<16xf32> to vector<16x1xf32>
    %cst_9 = arith.constant 2.560000e+02 : f32
    %13 = vector.broadcast %cst_9 : f32 to vector<16x1xf32>
    %14 = arith.divf %12, %13 : vector<16x1xf32>
    %15 = vector.broadcast %7 : vector<16x1xf32> to vector<16x256xf32>
    %16 = arith.subf %1, %15 : vector<16x256xf32>
    %cst_10 = arith.constant 9.99999974E-6 : f32
    %17 = vector.broadcast %cst_10 : f32 to vector<16x1xf32>
    %18 = arith.addf %14, %17 : vector<16x1xf32>
    %19 = math.rsqrt %18 : vector<16x1xf32>
    %20 = vector.broadcast %19 : vector<16x1xf32> to vector<16x256xf32>
    %21 = arith.mulf %16, %20 : vector<16x256xf32>
    %22 = vector.broadcast %2 : vector<1x256xf32> to vector<16x256xf32>
    %23 = arith.mulf %21, %22 : vector<16x256xf32>
    %24 = vector.broadcast %3 : vector<1x256xf32> to vector<16x256xf32>
    %25 = arith.addf %23, %24 : vector<16x256xf32>
    %26 = arith.truncf %25 : vector<16x256xf32> to vector<16x256xbf16>
    %c0_11 = arith.constant 0 : index
    %c0_12 = arith.constant 0 : index
    %27 = vector.load %arg6[%c0_11, %c0_12] : memref<256x256xbf16, #tpu.memory_space<vmem>>, vector<256x256xbf16>
    %cst_13 = arith.constant dense<0.000000e+00> : vector<16x256xf32>
    %28 = tpu.matmul %26, %27, %cst_13 {dimension_numbers = #tpu.dot_dimension_numbers<[1], [0], [0], [1], [0, 0, 1, 1], [], []>} : vector<16x256xbf16>, vector<256x256xbf16>, vector<16x256xf32> -> vector<16x256xf32>
    %c0_14 = arith.constant 0 : index
    %c0_15 = arith.constant 0 : index
    %29 = vector.load %arg7[%c0_14, %c0_15] : memref<1x256xf32, #tpu.memory_space<vmem>>, vector<1x256xf32>
    %30 = vector.broadcast %29 : vector<1x256xf32> to vector<16x256xf32>
    %31 = arith.addf %28, %30 : vector<16x256xf32>
    %32 = arith.truncf %31 : vector<16x256xf32> to vector<16x256xbf16>
    %c0_16 = arith.constant 0 : index
    %c0_17 = arith.constant 0 : index
    %c0_18 = arith.constant 0 : index
    %c0_19 = arith.constant 0 : index
    %33 = vector.load %arg2[%c0_16, %c0_17, %c0_18, %c0_19] : memref<1x4x16x16xbf16, #tpu.memory_space<vmem>>, vector<1x1x16x16xbf16>
    %34 = vector.shape_cast %33 : vector<1x1x16x16xbf16> to vector<16x16xbf16>
    %35 = vector.extract_strided_slice %32 {offsets = [0, 0], sizes = [16, 64], strides = [1, 1]} : vector<16x256xbf16> to vector<16x64xbf16>
    %cst_20 = arith.constant dense<0.000000e+00> : vector<16x64xf32>
    %36 = tpu.matmul %34, %35, %cst_20 {dimension_numbers = #tpu.dot_dimension_numbers<[1], [0], [0], [1], [0, 0, 1, 1], [], []>} : vector<16x16xbf16>, vector<16x64xbf16>, vector<16x64xf32> -> vector<16x64xf32>
    %c0_21 = arith.constant 0 : index
    %c1 = arith.constant 1 : index
    %c0_22 = arith.constant 0 : index
    %c0_23 = arith.constant 0 : index
    %37 = vector.load %arg2[%c0_21, %c1, %c0_22, %c0_23] : memref<1x4x16x16xbf16, #tpu.memory_space<vmem>>, vector<1x1x16x16xbf16>
    %38 = vector.shape_cast %37 : vector<1x1x16x16xbf16> to vector<16x16xbf16>
    %39 = vector.extract_strided_slice %32 {offsets = [0, 64], sizes = [16, 64], strides = [1, 1]} : vector<16x256xbf16> to vector<16x64xbf16>
    %cst_24 = arith.constant dense<0.000000e+00> : vector<16x64xf32>
    %40 = tpu.matmul %38, %39, %cst_24 {dimension_numbers = #tpu.dot_dimension_numbers<[1], [0], [0], [1], [0, 0, 1, 1], [], []>} : vector<16x16xbf16>, vector<16x64xbf16>, vector<16x64xf32> -> vector<16x64xf32>
    %c0_25 = arith.constant 0 : index
    %c2 = arith.constant 2 : index
    %c0_26 = arith.constant 0 : index
    %c0_27 = arith.constant 0 : index
    %41 = vector.load %arg2[%c0_25, %c2, %c0_26, %c0_27] : memref<1x4x16x16xbf16, #tpu.memory_space<vmem>>, vector<1x1x16x16xbf16>
    %42 = vector.shape_cast %41 : vector<1x1x16x16xbf16> to vector<16x16xbf16>
    %43 = vector.extract_strided_slice %32 {offsets = [0, 128], sizes = [16, 64], strides = [1, 1]} : vector<16x256xbf16> to vector<16x64xbf16>
    %cst_28 = arith.constant dense<0.000000e+00> : vector<16x64xf32>
    %44 = tpu.matmul %42, %43, %cst_28 {dimension_numbers = #tpu.dot_dimension_numbers<[1], [0], [0], [1], [0, 0, 1, 1], [], []>} : vector<16x16xbf16>, vector<16x64xbf16>, vector<16x64xf32> -> vector<16x64xf32>
    %c0_29 = arith.constant 0 : index
    %c3 = arith.constant 3 : index
    %c0_30 = arith.constant 0 : index
    %c0_31 = arith.constant 0 : index
    %45 = vector.load %arg2[%c0_29, %c3, %c0_30, %c0_31] : memref<1x4x16x16xbf16, #tpu.memory_space<vmem>>, vector<1x1x16x16xbf16>
    %46 = vector.shape_cast %45 : vector<1x1x16x16xbf16> to vector<16x16xbf16>
    %47 = vector.extract_strided_slice %32 {offsets = [0, 192], sizes = [16, 64], strides = [1, 1]} : vector<16x256xbf16> to vector<16x64xbf16>
    %cst_32 = arith.constant dense<0.000000e+00> : vector<16x64xf32>
    %48 = tpu.matmul %46, %47, %cst_32 {dimension_numbers = #tpu.dot_dimension_numbers<[1], [0], [0], [1], [0, 0, 1, 1], [], []>} : vector<16x16xbf16>, vector<16x64xbf16>, vector<16x64xf32> -> vector<16x64xf32>
    %49 = tpu.concatenate %36, %40, %44, %48 in 1 : vector<16x64xf32>, vector<16x64xf32>, vector<16x64xf32>, vector<16x64xf32> -> vector<16x256xf32>
    %50 = arith.truncf %49 : vector<16x256xf32> to vector<16x256xbf16>
    %c0_33 = arith.constant 0 : index
    %c0_34 = arith.constant 0 : index
    %51 = vector.load %arg8[%c0_33, %c0_34] : memref<256x256xbf16, #tpu.memory_space<vmem>>, vector<256x256xbf16>
    %cst_35 = arith.constant dense<0.000000e+00> : vector<16x256xf32>
    %52 = tpu.matmul %50, %51, %cst_35 {dimension_numbers = #tpu.dot_dimension_numbers<[1], [0], [0], [1], [0, 0, 1, 1], [], []>} : vector<16x256xbf16>, vector<256x256xbf16>, vector<16x256xf32> -> vector<16x256xf32>
    %c0_36 = arith.constant 0 : index
    %c0_37 = arith.constant 0 : index
    %53 = vector.load %arg9[%c0_36, %c0_37] : memref<1x256xf32, #tpu.memory_space<vmem>>, vector<1x256xf32>
    %54 = vector.broadcast %53 : vector<1x256xf32> to vector<16x256xf32>
    %55 = arith.addf %52, %54 : vector<16x256xf32>
    %56 = arith.addf %1, %55 : vector<16x256xf32>
    %c0_38 = arith.constant 0 : index
    %c0_39 = arith.constant 0 : index
    %c0_40 = arith.constant 0 : index
    %c0_41 = arith.constant 0 : index
    %57 = vector.load %arg10[%c0_38, %c0_39, %c0_40, %c0_41] : memref<1x1x16x256xf32, #tpu.memory_space<vmem>>, vector<1x1x16x256xf32>
    %58 = vector.shape_cast %57 : vector<1x1x16x256xf32> to vector<16x256xf32>
    %59 = vector.shape_cast %56 : vector<16x256xf32> to vector<1x1x16x256xf32>
    tpu.vector_store %arg10[%c0_38, %c0_39, %c0_40, %c0_41], %59 {strides = array<i32>} : memref<1x1x16x256xf32, #tpu.memory_space<vmem>>, vector<1x1x16x256xf32>,
    return
  }
  func.func @transform_0(%arg0: i32, %arg1: i32) -> (i32, i32, i32, i32) {
    %c0_i32 = arith.constant 0 : i32
    %c0_i32_0 = arith.constant 0 : i32
    %c0_i32_1 = arith.constant 0 : i32
    %c0_i32_2 = arith.constant 0 : i32
    return %arg0, %c0_i32, %c0_i32_0, %c0_i32_1 : i32, i32, i32, i32
  }
  func.func @transform_1(%arg0: i32, %arg1: i32) -> (i32, i32, i32, i32) {
    %c0_i32 = arith.constant 0 : i32
    %c0_i32_0 = arith.constant 0 : i32
    %c0_i32_1 = arith.constant 0 : i32
    return %arg0, %arg1, %c0_i32, %c0_i32_0 : i32, i32, i32, i32
  }
  func.func @transform_2(%arg0: i32, %arg1: i32) -> (i32, i32) {
    %c0_i32 = arith.constant 0 : i32
    %c0_i32_0 = arith.constant 0 : i32
    %c0_i32_1 = arith.constant 0 : i32
    return %c0_i32, %c0_i32_0 : i32, i32
  }
  func.func @transform_3(%arg0: i32, %arg1: i32) -> (i32, i32) {
    %c0_i32 = arith.constant 0 : i32
    %c0_i32_0 = arith.constant 0 : i32
    %c0_i32_1 = arith.constant 0 : i32
    return %c0_i32, %c0_i32_0 : i32, i32
  }
  func.func @transform_4(%arg0: i32, %arg1: i32) -> (i32, i32) {
    %c0_i32 = arith.constant 0 : i32
    %c0_i32_0 = arith.constant 0 : i32
    %c0_i32_1 = arith.constant 0 : i32
    return %c0_i32, %c0_i32_0 : i32, i32
  }
  func.func @transform_5(%arg0: i32, %arg1: i32) -> (i32, i32) {
    %c0_i32 = arith.constant 0 : i32
    %c0_i32_0 = arith.constant 0 : i32
    %c0_i32_1 = arith.constant 0 : i32
    return %c0_i32, %c0_i32_0 : i32, i32
  }
  func.func @transform_6(%arg0: i32, %arg1: i32) -> (i32, i32) {
    %c0_i32 = arith.constant 0 : i32
    %c0_i32_0 = arith.constant 0 : i32
    %c0_i32_1 = arith.constant 0 : i32
    return %c0_i32, %c0_i32_0 : i32, i32
  }
  func.func @transform_7(%arg0: i32, %arg1: i32) -> (i32, i32) {
    %c0_i32 = arith.constant 0 : i32
    %c0_i32_0 = arith.constant 0 : i32
    %c0_i32_1 = arith.constant 0 : i32
    return %c0_i32, %c0_i32_0 : i32, i32
  }
  func.func @transform_8(%arg0: i32, %arg1: i32) -> (i32, i32, i32, i32) {
    %c0_i32 = arith.constant 0 : i32
    %c0_i32_0 = arith.constant 0 : i32
    %c0_i32_1 = arith.constant 0 : i32
    return %arg0, %arg1, %c0_i32, %c0_i32_0 : i32, i32, i32, i32
  }
}

</mosaic_0001>

<llo_original>
// kernel: pair2msa_forward.4
$region0: #{pair2msa_forward.4}
  #allocation0 [shape = 'u32[]', space=smem, size = 0x4, offset = 0x4, fixed_abs, tag = 'smem constant byte address 0x4 - core index']
  #allocation1 [shape = 'u32[72,128]{1,0:T(1,128)}', space=vmem, size = 0x9000, scoped, tag = 'internal scratch']
  %s0 = inlined_call_operand.vmem [shape: bf16[2,4,16,16], index: 0, kind: input, shape index: {}]
  %s1 = inlined_call_operand.hbm [shape: f32[2,4,16,256], index: 1, kind: input, shape index: {}]
  %s2 = inlined_call_operand.hbm [shape: f32[1,256], index: 2, kind: input, shape index: {}]
  %s3 = inlined_call_operand.hbm [shape: f32[1,256], index: 3, kind: input, shape index: {}]
  %s4 = inlined_call_operand.vmem [shape: bf16[256,256], index: 4, kind: input, shape index: {}]
  %s5 = inlined_call_operand.vmem [shape: f32[1,256], index: 5, kind: input, shape index: {}]
  %s6 = inlined_call_operand.vmem [shape: bf16[256,256], index: 6, kind: input, shape index: {}]
  %s7 = inlined_call_operand.vmem [shape: f32[1,256], index: 7, kind: input, shape index: {}]
  %s8 = inlined_call_operand.vmem [shape: f32[2,4,16,256], index: 8, kind: output, shape index: {}]
  %s9 = sld [smem:[#allocation0]]
  $region77: #{pair2msa_forward.4} parent=0
    _
  %s11 = ssub.s32 1, %s9
  %s12 = scalar_select 0, %s11, %s9
  $region1: #{pair2msa_forward.4} parent=0
    #allocation2 [shape = 'u8[32768]{0}', space=vmem, size = 0x8000, scoped, tag = 'input window, operand 1']
    #allocation3 [shape = 's32[2]{0}', space=sflag, size = 0x8, scoped, tag = 'scoped memory for pair2msa_forward.4']
    #allocation4 [shape = 'u8[1024]{0}', space=vmem, size = 0x400, scoped, tag = 'input window, operand 2, single buffered']
    #allocation5 [shape = 's32[1]{0}', space=sflag, size = 0x4, scoped, tag = 'scoped memory for pair2msa_forward.4']
    #allocation6 [shape = 'u8[1024]{0}', space=vmem, size = 0x400, scoped, tag = 'input window, operand 3, single buffered']
    %13 = vsyncpa [#allocation3], 0
    %s14 = scalar_lea.sflag [#allocation3], 1
    %15 = vsyncpa %s14, 0
    %16 = vsyncpa [#allocation5], 0
    loop: start=0, step=1, limit=10
    $region2: #{pair2msa_forward.4} parent=1 // loop_pre_header
      _
    $region3: #{pair2msa_forward.4} parent=1 // loop_header
      %s18 = sphi 0, %s22
      %p19 = scmp.ge.s32.totalorder %s18, 10
      %s25 = sphi 0, %s37
      %s26 = sphi 0, %s33
      %s27 = sphi 0, %s25
      %s28 = sphi 0, %s26
      %s29 = sphi 0, %s27
      %s30 = sphi 0, %s28
      %s40 = sphi 0, %s42
      %s43 = sphi 0, %s40
      %s44 = sphi 0, %s43
      %s60 = sphi 0, %s44
      %s68 = sphi 0, %s70
      %s71 = sphi 0, %s68
      %s72 = sphi 0, %s71
      %s88 = sphi 0, %s72
      %s92 = sphi 0, %s92
      %s94 = sphi 0, %s92
      %s95 = sphi 0, %s94
      %s109 = sphi 0, %s95
      %s113 = sphi 0, %s113
      %s115 = sphi 0, %s113
      %s116 = sphi 0, %s115
      %s130 = sphi 0, %s116
      %s134 = sphi 0, %s134
      %s136 = sphi 0, %s134
      %s137 = sphi 0, %s136
      %s151 = sphi 0, %s137
      %s155 = sphi 0, %s155
      %s157 = sphi 0, %s155
      %s158 = sphi 0, %s157
      %s172 = sphi 0, %s158
      %s176 = sphi 0, %s176
      %s178 = sphi 0, %s176
      %s179 = sphi 0, %s178
      %s193 = sphi 0, %s179
      %s197 = sphi 0, %s197
      %s199 = sphi 0, %s197
      %s200 = sphi 0, %s199
      %s214 = sphi 0, %s200
      %s222 = sphi 0, %s224
      %s225 = sphi 0, %s222
      %s226 = sphi 0, %s225
      %s242 = sphi 0, %s226
    $region4: #{pair2msa_forward.4} parent=1 // loop_header_branch
      %21 = sbr.rel (%p19) target = $region8
    $region5: #{pair2msa_forward.4} parent=1 // loop_body
      %s23 = ssub.s32 %s18, 1
      %s24 = ssub.s32 %s18, 2
      %s31 = sadd.s32 1, %s26
      %p32 = scmp.ge.s32.totalorder %s31, 4
      %s33 = scalar_select %p32, 0, %s31
      %s34 = sadd.s32 1, %s25
      %s35 = scalar_select %p32, %s34, %s25
      %p36 = scmp.ge.s32.totalorder %s35, 2
      %s37 = scalar_select %p36, 0, %s35
      %s38 = ssub.s32 %s25, %s37
      %p39 = scmp.eq.s32.totalorder %s38, 0
      %s41 = sadd.s32 %s40, 1
      %s42 = scalar_select %p39, %s40, %s41
      %p45 = pneg %p39
      %p46 = scmp.eq.s32.totalorder %s18, 7
      %p47 = por %p45, %p46
      %p48 = scmp.ne.s32.totalorder %s40, %s43
      %p49 = scmp.eq.s32.totalorder %s18, 0
      %p50 = por %p48, %p49
      %p51 = scmp.ne.s32.totalorder %s40, %s43
      %p52 = scmp.eq.s32.totalorder %s23, 7
      %p53 = por %p51, %p52
      %p54 = scmp.ne.s32.totalorder %s43, %s44
      %p55 = scmp.eq.s32.totalorder %s23, 0
      %p56 = por %p54, %p55
      %p57 = scmp.ne.s32.totalorder %s43, %s44
      %p58 = scmp.eq.s32.totalorder %s24, 7
      %p59 = por %p57, %p58
      %p61 = scmp.ne.s32.totalorder %s44, %s60
      %p62 = scmp.eq.s32.totalorder %s24, 0
      %p63 = por %p61, %p62
      %s64 = ssub.s32 %s25, %s37
      %s65 = ssub.s32 %s26, %s33
      %s66 = sor.u32 %s64, %s65
      %p67 = scmp.eq.s32.totalorder %s66, 0
      %s69 = sadd.s32 %s68, 1
      %s70 = scalar_select %p67, %s68, %s69
      %p73 = pneg %p67
      %p74 = scmp.eq.s32.totalorder %s18, 7
      %p75 = por %p73, %p74
      %p76 = scmp.ne.s32.totalorder %s68, %s71
      %p77 = scmp.eq.s32.totalorder %s18, 0
      %p78 = por %p76, %p77
      %p79 = scmp.ne.s32.totalorder %s68, %s71
      %p80 = scmp.eq.s32.totalorder %s23, 7
      %p81 = por %p79, %p80
      %p82 = scmp.ne.s32.totalorder %s71, %s72
      %p83 = scmp.eq.s32.totalorder %s23, 0
      %p84 = por %p82, %p83
      %p85 = scmp.ne.s32.totalorder %s71, %s72
      %p86 = scmp.eq.s32.totalorder %s24, 7
      %p87 = por %p85, %p86
      %p89 = scmp.ne.s32.totalorder %s72, %s88
      %p90 = scmp.eq.s32.totalorder %s24, 0
      %p91 = por %p89, %p90
      %s93 = sadd.s32 %s92, 1
      %p96 = scmp.eq.s32.totalorder %s18, 7
      %p97 = scmp.ne.s32.totalorder %s92, %s94
      %p98 = scmp.eq.s32.totalorder %s18, 0
      %p99 = por %p97, %p98
      %p100 = scmp.ne.s32.totalorder %s92, %s94
      %p101 = scmp.eq.s32.totalorder %s23, 7
      %p102 = por %p100, %p101
      %p103 = scmp.ne.s32.totalorder %s94, %s95
      %p104 = scmp.eq.s32.totalorder %s23, 0
      %p105 = por %p103, %p104
      %p106 = scmp.ne.s32.totalorder %s94, %s95
      %p107 = scmp.eq.s32.totalorder %s24, 7
      %p108 = por %p106, %p107
      %p110 = scmp.ne.s32.totalorder %s95, %s109
      %p111 = scmp.eq.s32.totalorder %s24, 0
      %p112 = por %p110, %p111
      %s114 = sadd.s32 %s113, 1
      %p117 = scmp.eq.s32.totalorder %s18, 7
      %p118 = scmp.ne.s32.totalorder %s113, %s115
      %p119 = scmp.eq.s32.totalorder %s18, 0
      %p120 = por %p118, %p119
      %p121 = scmp.ne.s32.totalorder %s113, %s115
      %p122 = scmp.eq.s32.totalorder %s23, 7
      %p123 = por %p121, %p122
      %p124 = scmp.ne.s32.totalorder %s115, %s116
      %p125 = scmp.eq.s32.totalorder %s23, 0
      %p126 = por %p124, %p125
      %p127 = scmp.ne.s32.totalorder %s115, %s116
      %p128 = scmp.eq.s32.totalorder %s24, 7
      %p129 = por %p127, %p128
      %p131 = scmp.ne.s32.totalorder %s116, %s130
      %p132 = scmp.eq.s32.totalorder %s24, 0
      %p133 = por %p131, %p132
      %s135 = sadd.s32 %s134, 1
      %p138 = scmp.eq.s32.totalorder %s18, 7
      %p139 = scmp.ne.s32.totalorder %s134, %s136
      %p140 = scmp.eq.s32.totalorder %s18, 0
      %p141 = por %p139, %p140
      %p142 = scmp.ne.s32.totalorder %s134, %s136
      %p143 = scmp.eq.s32.totalorder %s23, 7
      %p144 = por %p142, %p143
      %p145 = scmp.ne.s32.totalorder %s136, %s137
      %p146 = scmp.eq.s32.totalorder %s23, 0
      %p147 = por %p145, %p146
      %p148 = scmp.ne.s32.totalorder %s136, %s137
      %p149 = scmp.eq.s32.totalorder %s24, 7
      %p150 = por %p148, %p149
      %p152 = scmp.ne.s32.totalorder %s137, %s151
      %p153 = scmp.eq.s32.totalorder %s24, 0
      %p154 = por %p152, %p153
      %s156 = sadd.s32 %s155, 1
      %p159 = scmp.eq.s32.totalorder %s18, 7
      %p160 = scmp.ne.s32.totalorder %s155, %s157
      %p161 = scmp.eq.s32.totalorder %s18, 0
      %p162 = por %p160, %p161
      %p163 = scmp.ne.s32.totalorder %s155, %s157
      %p164 = scmp.eq.s32.totalorder %s23, 7
      %p165 = por %p163, %p164
      %p166 = scmp.ne.s32.totalorder %s157, %s158
      %p167 = scmp.eq.s32.totalorder %s23, 0
      %p168 = por %p166, %p167
      %p169 = scmp.ne.s32.totalorder %s157, %s158
      %p170 = scmp.eq.s32.totalorder %s24, 7
      %p171 = por %p169, %p170
      %p173 = scmp.ne.s32.totalorder %s158, %s172
      %p174 = scmp.eq.s32.totalorder %s24, 0
      %p175 = por %p173, %p174
      %s177 = sadd.s32 %s176, 1
      %p180 = scmp.eq.s32.totalorder %s18, 7
      %p181 = scmp.ne.s32.totalorder %s176, %s178
      %p182 = scmp.eq.s32.totalorder %s18, 0
      %p183 = por %p181, %p182
      %p184 = scmp.ne.s32.totalorder %s176, %s178
      %p185 = scmp.eq.s32.totalorder %s23, 7
      %p186 = por %p184, %p185
      %p187 = scmp.ne.s32.totalorder %s178, %s179
      %p188 = scmp.eq.s32.totalorder %s23, 0
      %p189 = por %p187, %p188
      %p190 = scmp.ne.s32.totalorder %s178, %s179
      %p191 = scmp.eq.s32.totalorder %s24, 7
      %p192 = por %p190, %p191
      %p194 = scmp.ne.s32.totalorder %s179, %s193
      %p195 = scmp.eq.s32.totalorder %s24, 0
      %p196 = por %p194, %p195
      %s198 = sadd.s32 %s197, 1
      %p201 = scmp.eq.s32.totalorder %s18, 7
      %p202 = scmp.ne.s32.totalorder %s197, %s199
      %p203 = scmp.eq.s32.totalorder %s18, 0
      %p204 = por %p202, %p203
      %p205 = scmp.ne.s32.totalorder %s197, %s199
      %p206 = scmp.eq.s32.totalorder %s23, 7
      %p207 = por %p205, %p206
      %p208 = scmp.ne.s32.totalorder %s199, %s200
      %p209 = scmp.eq.s32.totalorder %s23, 0
      %p210 = por %p208, %p209
      %p211 = scmp.ne.s32.totalorder %s199, %s200
      %p212 = scmp.eq.s32.totalorder %s24, 7
      %p213 = por %p211, %p212
      %p215 = scmp.ne.s32.totalorder %s200, %s214
      %p216 = scmp.eq.s32.totalorder %s24, 0
      %p217 = por %p215, %p216
      %s218 = ssub.s32 %s25, %s37
      %s219 = ssub.s32 %s26, %s33
      %s220 = sor.u32 %s218, %s219
      %p221 = scmp.eq.s32.totalorder %s220, 0
      %s223 = sadd.s32 %s222, 1
      %s224 = scalar_select %p221, %s222, %s223
      %p227 = pneg %p221
      %p228 = scmp.eq.s32.totalorder %s18, 7
      %p229 = por %p227, %p228
      %p230 = scmp.ne.s32.totalorder %s222, %s225
      %p231 = scmp.eq.s32.totalorder %s18, 0
      %p232 = por %p230, %p231
      %p233 = scmp.ne.s32.totalorder %s222, %s225
      %p234 = scmp.eq.s32.totalorder %s23, 7
      %p235 = por %p233, %p234
      %p236 = scmp.ne.s32.totalorder %s225, %s226
      %p237 = scmp.eq.s32.totalorder %s23, 0
      %p238 = por %p236, %p237
      %p239 = scmp.ne.s32.totalorder %s225, %s226
      %p240 = scmp.eq.s32.totalorder %s24, 7
      %p241 = por %p239, %p240
      %p243 = scmp.ne.s32.totalorder %s226, %s242
      %p244 = scmp.eq.s32.totalorder %s24, 0
      %p245 = por %p243, %p244
      %p246 = scmp.le.s32.totalorder 1, %s18
      %p247 = scmp.lt.s32.totalorder %s18, 9
      %p248 = pnand %p246, %p247
      %p249 = pneg %p248
      // Predicated region
      $region9: #{pair2msa_forward.4} parent=5 // pred_check
        _
      $region10: #{pair2msa_forward.4} parent=5 // pred_check_branch
        %251 = sbr.rel (%p248) target = $region12
      $region11: #{pair2msa_forward.4} parent=5 // pred_region
        %s252 = ssub.s32 %s18, 1
        // Predicated region
        $region13: #{pair2msa_forward.4} parent=11 // pred_check
          %p253 = pneg %p105
        $region14: #{pair2msa_forward.4} parent=11 // pred_check_branch
          %255 = sbr.rel (%p253) target = $region16
        $region15: #{pair2msa_forward.4} parent=11 // pred_region
          %257 = vsyncadd [#allocation5], 0
          %s259 = sshll.u32 %s2, 4
          %s260 = int_to_ptr.hbm [resolvable:$true] %s259
          %s261 = sshll.u32 [#allocation4], 4
          %s262 = int_to_ptr.vmem [resolvable:$true] %s261
          %264 = dma.hbm_to_vmem [thread:$0]  %s260, 32, %s262, [#allocation5]
        $region16: #{pair2msa_forward.4} parent=11 // pred_fallthru
          _
        // Predicated region
        $region17: #{pair2msa_forward.4} parent=11 // pred_check
          %p265 = pneg %p126
        $region18: #{pair2msa_forward.4} parent=11 // pred_check_branch
          %267 = sbr.rel (%p265) target = $region20
        $region19: #{pair2msa_forward.4} parent=11 // pred_region
          %269 = vsyncadd [#allocation5], 0
          %s271 = sshll.u32 %s3, 4
          %s272 = int_to_ptr.hbm [resolvable:$true] %s271
          %s273 = sshll.u32 [#allocation6], 4
          %s274 = int_to_ptr.vmem [resolvable:$true] %s273
          %276 = dma.hbm_to_vmem [thread:$0]  %s272, 32, %s274, [#allocation5]
        $region20: #{pair2msa_forward.4} parent=11 // pred_fallthru
          _
        // Predicated region
        $region21: #{pair2msa_forward.4} parent=11 // pred_check
          %p277 = pneg %p147
        $region22: #{pair2msa_forward.4} parent=11 // pred_check_branch
          %279 = sbr.rel (%p277) target = $region24
        $region23: #{pair2msa_forward.4} parent=11 // pred_region
          _
        $region24: #{pair2msa_forward.4} parent=11 // pred_fallthru
          _
        // Predicated region
        $region25: #{pair2msa_forward.4} parent=11 // pred_check
          %p280 = pneg %p168
        $region26: #{pair2msa_forward.4} parent=11 // pred_check_branch
          %282 = sbr.rel (%p280) target = $region28
        $region27: #{pair2msa_forward.4} parent=11 // pred_region
          _
        $region28: #{pair2msa_forward.4} parent=11 // pred_fallthru
          _
        // Predicated region
        $region29: #{pair2msa_forward.4} parent=11 // pred_check
          %p283 = pneg %p189
        $region30: #{pair2msa_forward.4} parent=11 // pred_check_branch
          %285 = sbr.rel (%p283) target = $region32
        $region31: #{pair2msa_forward.4} parent=11 // pred_region
          _
        $region32: #{pair2msa_forward.4} parent=11 // pred_fallthru
          _
        // Predicated region
        $region33: #{pair2msa_forward.4} parent=11 // pred_check
          %p286 = pneg %p210
        $region34: #{pair2msa_forward.4} parent=11 // pred_check_branch
          %288 = sbr.rel (%p286) target = $region36
        $region35: #{pair2msa_forward.4} parent=11 // pred_region
          _
        $region36: #{pair2msa_forward.4} parent=11 // pred_fallthru
          _
      $region12: #{pair2msa_forward.4} parent=5 // pred_fallthru
        _
      %p289 = scmp.lt.s32.totalorder %s18, 8
      // Predicated region
      $region37: #{pair2msa_forward.4} parent=5 // pred_check
        %p290 = pneg %p289
      $region38: #{pair2msa_forward.4} parent=5 // pred_check_branch
        %292 = sbr.rel (%p290) target = $region40
      $region39: #{pair2msa_forward.4} parent=5 // pred_region
        // Predicated region
        $region41: #{pair2msa_forward.4} parent=39 // pred_check
          %p293 = pneg %p50
        $region42: #{pair2msa_forward.4} parent=39 // pred_check_branch
          %295 = sbr.rel (%p293) target = $region44
        $region43: #{pair2msa_forward.4} parent=39 // pred_region
          %p296 = scmp.lt.s32.totalorder %s25, 1
          %s297 = scalar_select %p296, %s25, 1
          %s298 = smul.addr %s297, 8
          %s299 = smul.addr %s298, 4
          %s300 = scalar_lea.vmem %s0, %s299
        $region44: #{pair2msa_forward.4} parent=39 // pred_fallthru
          _
        // Predicated region
        $region45: #{pair2msa_forward.4} parent=39 // pred_check
          %p301 = pneg %p78
        $region46: #{pair2msa_forward.4} parent=39 // pred_check_branch
          %303 = sbr.rel (%p301) target = $region48
        $region47: #{pair2msa_forward.4} parent=39 // pred_region
          %s304 = sand.u32 %s68, 1
          %s305 = scalar_lea.sflag [#allocation3], %s304
          %s306 = sand.u32 %s68, 1
          %s307 = smul.addr %s306, 32
          %s308 = scalar_lea.vmem [#allocation2], %s307
          %310 = vsyncadd %s305, 0
          %s311 = smul.addr %s26, 4
          %s312 = smul.addr %s25, 16
          %s313 = sadd.s32 %s311, %s312
          %s314 = smul.addr %s313, 8
          %s315 = scalar_lea.hbm %s1, %s314
          %s316 = sshll.u32 %s315, 4
          %s317 = int_to_ptr.hbm [resolvable:$true] %s316
          %s318 = sshll.u32 %s308, 4
          %s319 = int_to_ptr.vmem [resolvable:$true] %s318
          %324 = dma.hbm_to_vmem [thread:$0]  %s317, 512, %s319, %s305, 256, 256, 16
        $region48: #{pair2msa_forward.4} parent=39 // pred_fallthru
          _
      $region40: #{pair2msa_forward.4} parent=5 // pred_fallthru
        _
      %p325 = scmp.le.s32.totalorder 1, %s18
      %p326 = scmp.lt.s32.totalorder %s18, 9
      %p327 = pnand %p325, %p326
      %p328 = pneg %p327
      // Predicated region
      $region49: #{pair2msa_forward.4} parent=5 // pred_check
        _
      $region50: #{pair2msa_forward.4} parent=5 // pred_check_branch
        %330 = sbr.rel (%p327) target = $region52
      $region51: #{pair2msa_forward.4} parent=5 // pred_region
        %s331 = ssub.s32 %s18, 1
        %s332 = sand.u32 %s71, 1
        %s333 = scalar_lea.sflag [#allocation3], %s332
        %s334 = sand.u32 %s71, 1
        %s335 = smul.addr %s334, 32
        %s336 = scalar_lea.vmem [#allocation2], %s335
        // Predicated region
        $region53: #{pair2msa_forward.4} parent=51 // pred_check
          %p337 = pneg %p84
        $region54: #{pair2msa_forward.4} parent=51 // pred_check_branch
          %339 = sbr.rel (%p337) target = $region56
        $region55: #{pair2msa_forward.4} parent=51 // pred_region
          %341 = dma.done %s333, 512
        $region56: #{pair2msa_forward.4} parent=51 // pred_fallthru
          _
        // Predicated region
        $region57: #{pair2msa_forward.4} parent=51 // pred_check
          %p342 = pneg %p105
        $region58: #{pair2msa_forward.4} parent=51 // pred_check_branch
          %344 = sbr.rel (%p342) target = $region60
        $region59: #{pair2msa_forward.4} parent=51 // pred_region
          %346 = dma.done [#allocation5], 32
        $region60: #{pair2msa_forward.4} parent=51 // pred_fallthru
          _
        // Predicated region
        $region61: #{pair2msa_forward.4} parent=51 // pred_check
          %p347 = pneg %p126
        $region62: #{pair2msa_forward.4} parent=51 // pred_check_branch
          %349 = sbr.rel (%p347) target = $region64
        $region63: #{pair2msa_forward.4} parent=51 // pred_region
          %351 = dma.done [#allocation5], 32
        $region64: #{pair2msa_forward.4} parent=51 // pred_fallthru
          _
        %p352 = scmp.lt.s32.totalorder %s27, 1
        %s353 = scalar_select %p352, %s27, 1
        %s354 = smul.addr %s353, 8
        %s355 = smul.addr %s354, 4
        %s356 = scalar_lea.vmem %s0, %s355
        %p357 = pneg %p56
        %p358 = pneg %p53
        %s359 = sand.u32 %s71, 1
        %s360 = scalar_lea.sflag [#allocation3], %s359
        %s361 = sand.u32 %s71, 1
        %s362 = smul.addr %s361, 32
        %s363 = scalar_lea.vmem [#allocation2], %s362
        %p364 = pneg %p84
        %p365 = pneg %p81
        %p366 = pneg %p105
        %p367 = pneg %p102
        %p368 = pneg %p126
        %p369 = pneg %p123
        %p370 = pneg %p147
        %p371 = pneg %p144
        %p372 = pneg %p168
        %p373 = pneg %p165
        %p374 = pneg %p189
        %p375 = pneg %p186
        %p376 = pneg %p210
        %p377 = pneg %p207
        %p378 = pneg %p238
        %p379 = pneg %p235
        %p380 = scmp.lt.s32.totalorder %s27, 1
        %s381 = scalar_select %p380, %s27, 1
        %p382 = scmp.lt.s32.totalorder %s28, 3
        %s383 = scalar_select %p382, %s28, 3
        %s384 = smul.addr %s383, 4
        %s385 = smul.addr %s381, 16
        %s386 = sadd.s32 %s384, %s385
        %s387 = smul.addr %s386, 8
        %s388 = scalar_lea.vmem %s8, %s387
        %p389 = scmp.lt.s32.totalorder %s27, 1
        %s390 = scalar_select %p389, %s27, 1
        %s391 = smul.addr %s390, 8
        %s392 = smul.addr %s391, 4
        %s393 = scalar_lea.vmem %s0, %s392
        %p394 = scmp.lt.s32.totalorder %s27, 1
        %s395 = scalar_select %p394, %s27, 1
        %p396 = scmp.lt.s32.totalorder %s28, 3
        %s397 = scalar_select %p396, %s28, 3
        %s398 = smul.addr %s397, 4
        %s399 = smul.addr %s395, 16
        %s400 = sadd.s32 %s398, %s399
        %s401 = smul.addr %s400, 8
        %s402 = scalar_lea.vmem %s8, %s401
        %v404 = vld [vmem:[%s336] sm:$0xff]
        %v405 = vld [vmem:[%s336 + $0x8] sm:$0xff]
        %v406 = vld [vmem:[%s336 + $0x10] sm:$0xff]
        %v407 = vld [vmem:[%s336 + $0x18] sm:$0xff]
        %v408 = vld [vmem:[#allocation4] sm:$0x3]
        %v409 = vld [vmem:[#allocation6] sm:$0x3]
        %v410 = vadd.f32 %v404, %v405
        %411 = vadd.xlane.f32.xlu0 %v410
        %v412 = vpop.xlane.xlu0 %411
        %v413 = vadd.f32 %v406, %v407
        %414 = vadd.xlane.f32.xlu0 %v413
        %v415 = vpop.xlane.xlu0 %414
        %v416 = vrcp.pop 256.0
        %v417 = vmul.f32 256.0, %v416
        %v418 = vsub.f32 1.0, %v417
        %v419 = vmul.f32 %v416, %v418
        %v420 = vadd.f32 %v416, %v419
        %vm421 = vweird.f32 %v416
        %v422 = vsel %vm421, %v416, %v420
        %v423 = vmul.f32 %v412, %v422
        %v424 = vmul.f32 %v415, %v422
        %v425 = vsub.f32 %v404, %v423
        %v426 = vsub.f32 %v405, %v423
        %v427 = vsub.f32 %v406, %v424
        %v428 = vsub.f32 %v407, %v424
        %v429 = vmul.f32 %v425, %v425
        %v430 = vmul.f32 %v426, %v426
        %v431 = vmul.f32 %v427, %v427
        %v432 = vmul.f32 %v428, %v428
        %v433 = vadd.f32 %v429, %v430
        %434 = vadd.xlane.f32.xlu0 %v433
        %v435 = vpop.xlane.xlu0 %434
        %v436 = vadd.f32 %v431, %v432
        %437 = vadd.xlane.f32.xlu0 %v436
        %v438 = vpop.xlane.xlu0 %437
        %v439 = vmul.f32 %v435, %v422
        %v440 = vmul.f32 %v438, %v422
        %v441 = vadd.f32 %v439, 1e-05
        %v442 = vadd.f32 %v440, 1e-05
        %v443 = vrsqrt.pop %v441
        %v444 = vmul.f32 %v443, %v441
        %v445 = vmul.f32 %v444, %v443
        %v446 = vmul.f32 0.5, %v445
        %v447 = vsub.f32 1.5, %v446
        %v448 = vmul.f32 %v443, %v447
        %vm449 = vweird.f32 %v441
        %vm450 = vweird.f32 %v443
        %vm451 = vmor %vm449, %vm450
        %v452 = vsel %vm451, %v443, %v448
        %v453 = vrsqrt.pop %v442
        %v454 = vmul.f32 %v453, %v442
        %v455 = vmul.f32 %v454, %v453
        %v456 = vmul.f32 0.5, %v455
        %v457 = vsub.f32 1.5, %v456
        %v458 = vmul.f32 %v453, %v457
        %vm459 = vweird.f32 %v442
        %vm460 = vweird.f32 %v453
        %vm461 = vmor %vm459, %vm460
        %v462 = vsel %vm461, %v453, %v458
        %v463 = vmul.f32 %v425, %v452
        %v464 = vmul.f32 %v426, %v452
        %v465 = vmul.f32 %v427, %v462
        %v466 = vmul.f32 %v428, %v462
        %v468 = vperm.slane %v408, 0
        %v469 = vperm.slane %v408, 1
        %v472 = vmul.f32 %v463, %v468
        %v473 = vmul.f32 %v464, %v469
        %v474 = vmul.f32 %v465, %v468
        %v475 = vmul.f32 %v466, %v469
        %v477 = vperm.slane %v409, 0
        %v478 = vperm.slane %v409, 1
        %v481 = vadd.f32 %v472, %v477
        %v482 = vadd.f32 %v473, %v478
        %v483 = vadd.f32 %v474, %v477
        %v484 = vadd.f32 %v475, %v478
        %v485 = vpack.c.bf16 %v483, %v481
        %v486 = vpack.c.bf16 %v484, %v482
        %v487 = vld [vmem:[%s4] sm:$0xff]
        %v488 = vld [vmem:[%s4 + $0x8] sm:$0xff]
        %v489 = vld [vmem:[%s4 + $0x10] sm:$0xff]
        %v490 = vld [vmem:[%s4 + $0x18] sm:$0xff]
        %v491 = vld [vmem:[%s4 + $0x20] sm:$0xff]
        %v492 = vld [vmem:[%s4 + $0x28] sm:$0xff]
        %v493 = vld [vmem:[%s4 + $0x30] sm:$0xff]
        %v494 = vld [vmem:[%s4 + $0x38] sm:$0xff]
        %v495 = vld [vmem:[%s4 + $0x40] sm:$0xff]
        %v496 = vld [vmem:[%s4 + $0x48] sm:$0xff]
        %v497 = vld [vmem:[%s4 + $0x50] sm:$0xff]
        %v498 = vld [vmem:[%s4 + $0x58] sm:$0xff]
        %v499 = vld [vmem:[%s4 + $0x60] sm:$0xff]
        %v500 = vld [vmem:[%s4 + $0x68] sm:$0xff]
        %v501 = vld [vmem:[%s4 + $0x70] sm:$0xff]
        %v502 = vld [vmem:[%s4 + $0x78] sm:$0xff]
        %v503 = vld [vmem:[%s4 + $0x80] sm:$0xff]
        %v504 = vld [vmem:[%s4 + $0x88] sm:$0xff]
        %v505 = vld [vmem:[%s4 + $0x90] sm:$0xff]
        %v506 = vld [vmem:[%s4 + $0x98] sm:$0xff]
        %v507 = vld [vmem:[%s4 + $0xa0] sm:$0xff]
        %v508 = vld [vmem:[%s4 + $0xa8] sm:$0xff]
        %v509 = vld [vmem:[%s4 + $0xb0] sm:$0xff]
        %v510 = vld [vmem:[%s4 + $0xb8] sm:$0xff]
        %v511 = vld [vmem:[%s4 + $0xc0] sm:$0xff]
        %v512 = vld [vmem:[%s4 + $0xc8] sm:$0xff]
        %v513 = vld [vmem:[%s4 + $0xd0] sm:$0xff]
        %v514 = vld [vmem:[%s4 + $0xd8] sm:$0xff]
        %v515 = vld [vmem:[%s4 + $0xe0] sm:$0xff]
        %v516 = vld [vmem:[%s4 + $0xe8] sm:$0xff]
        %v517 = vld [vmem:[%s4 + $0xf0] sm:$0xff]
        %v518 = vld [vmem:[%s4 + $0xf8] sm:$0xff]
        %v519 = vld [vmem:[%s5] sm:$0x3]
        %v521 = vperm.slane %v519, 0
        %v522 = vperm.slane %v519, 1
        %v557 = vunpack.c.l.b16 %v487
        %v558 = vunpack.c.h.b16 %v487
        %v559 = vunpack.c.l.b16 %v488
        %v560 = vunpack.c.h.b16 %v488
        %v561 = vunpack.c.l.b16 %v489
        %v562 = vunpack.c.h.b16 %v489
        %v563 = vunpack.c.l.b16 %v490
        %v564 = vunpack.c.h.b16 %v490
        %v565 = vunpack.c.l.b16 %v491
        %v566 = vunpack.c.h.b16 %v491
        %v567 = vunpack.c.l.b16 %v492
        %v568 = vunpack.c.h.b16 %v492
        %v569 = vunpack.c.l.b16 %v493
        %v570 = vunpack.c.h.b16 %v493
        %v571 = vunpack.c.l.b16 %v494
        %v572 = vunpack.c.h.b16 %v494
        %v573 = vunpack.c.l.b16 %v495
        %v574 = vunpack.c.h.b16 %v495
        %v575 = vunpack.c.l.b16 %v496
        %v576 = vunpack.c.h.b16 %v496
        %v577 = vunpack.c.l.b16 %v497
        %v578 = vunpack.c.h.b16 %v497
        %v579 = vunpack.c.l.b16 %v498
        %v580 = vunpack.c.h.b16 %v498
        %v581 = vunpack.c.l.b16 %v499
        %v582 = vunpack.c.h.b16 %v499
        %v583 = vunpack.c.l.b16 %v500
        %v584 = vunpack.c.h.b16 %v500
        %v585 = vunpack.c.l.b16 %v501
        %v586 = vunpack.c.h.b16 %v501
        %v587 = vunpack.c.l.b16 %v502
        %v588 = vunpack.c.h.b16 %v502
        %v589 = vunpack.c.l.b16 %v503
        %v590 = vunpack.c.h.b16 %v503
        %v591 = vunpack.c.l.b16 %v504
        %v592 = vunpack.c.h.b16 %v504
        %v593 = vunpack.c.l.b16 %v505
        %v594 = vunpack.c.h.b16 %v505
        %v595 = vunpack.c.l.b16 %v506
        %v596 = vunpack.c.h.b16 %v506
        %v597 = vunpack.c.l.b16 %v507
        %v598 = vunpack.c.h.b16 %v507
        %v599 = vunpack.c.l.b16 %v508
        %v600 = vunpack.c.h.b16 %v508
        %v601 = vunpack.c.l.b16 %v509
        %v602 = vunpack.c.h.b16 %v509
        %v603 = vunpack.c.l.b16 %v510
        %v604 = vunpack.c.h.b16 %v510
        %v605 = vunpack.c.l.b16 %v511
        %v606 = vunpack.c.h.b16 %v511
        %v607 = vunpack.c.l.b16 %v512
        %v608 = vunpack.c.h.b16 %v512
        %v609 = vunpack.c.l.b16 %v513
        %v610 = vunpack.c.h.b16 %v513
        %v611 = vunpack.c.l.b16 %v514
        %v612 = vunpack.c.h.b16 %v514
        %v613 = vunpack.c.l.b16 %v515
        %v614 = vunpack.c.h.b16 %v515
        %v615 = vunpack.c.l.b16 %v516
        %v616 = vunpack.c.h.b16 %v516
        %v617 = vunpack.c.l.b16 %v517
        %v618 = vunpack.c.h.b16 %v517
        %v619 = vunpack.c.l.b16 %v518
        %v620 = vunpack.c.h.b16 %v518
        %v621 = vpack.c.b16 %v559, %v557
        %v622 = vpack.c.b16 %v560, %v558
        %v623 = vpack.c.b16 %v563, %v561
        %v624 = vpack.c.b16 %v564, %v562
        %v625 = vpack.c.b16 %v567, %v565
        %v626 = vpack.c.b16 %v568, %v566
        %v627 = vpack.c.b16 %v571, %v569
        %v628 = vpack.c.b16 %v572, %v570
        %v629 = vpack.c.b16 %v575, %v573
        %v630 = vpack.c.b16 %v576, %v574
        %v631 = vpack.c.b16 %v579, %v577
        %v632 = vpack.c.b16 %v580, %v578
        %v633 = vpack.c.b16 %v583, %v581
        %v634 = vpack.c.b16 %v584, %v582
        %v635 = vpack.c.b16 %v587, %v585
        %v636 = vpack.c.b16 %v588, %v586
        %v637 = vpack.c.b16 %v591, %v589
        %v638 = vpack.c.b16 %v592, %v590
        %v639 = vpack.c.b16 %v595, %v593
        %v640 = vpack.c.b16 %v596, %v594
        %v641 = vpack.c.b16 %v599, %v597
        %v642 = vpack.c.b16 %v600, %v598
        %v643 = vpack.c.b16 %v603, %v601
        %v644 = vpack.c.b16 %v604, %v602
        %v645 = vpack.c.b16 %v607, %v605
        %v646 = vpack.c.b16 %v608, %v606
        %v647 = vpack.c.b16 %v611, %v609
        %v648 = vpack.c.b16 %v612, %v610
        %v649 = vpack.c.b16 %v615, %v613
        %v650 = vpack.c.b16 %v616, %v614
        %v651 = vpack.c.b16 %v619, %v617
        %v652 = vpack.c.b16 %v620, %v618
        %685 = vmatpush.bf16.msra.mxu0 %v635
        %686 = vmatpush.bf16.msra.mxu0 %v633
        %687 = vmatpush.bf16.msra.mxu0 %v631
        %688 = vmatpush.bf16.msra.mxu0 %v629
        %689 = vmatpush.bf16.msra.mxu0 %v627
        %690 = vmatpush.bf16.msra.mxu0 %v625
        %691 = vmatpush.bf16.msra.mxu0 %v623
        %692 = vmatpush.bf16.msra.mxu0 %v621
        %693 = vmatmul.bf16.gmra.mxu0 %v485
        %v694 = vpop.f32.mrf.mxu0
        %v695 = vadd.f32 %v521, %v694
        %v696 = vpop.f32.mrf.mxu0
        %v697 = vadd.f32 %v521, %v696
        %698 = vdwg.mxu0
        %699 = vmatpush.bf16.msra.mxu0 %v651
        %700 = vmatpush.bf16.msra.mxu0 %v649
        %701 = vmatpush.bf16.msra.mxu0 %v647
        %702 = vmatpush.bf16.msra.mxu0 %v645
        %703 = vmatpush.bf16.msra.mxu0 %v643
        %704 = vmatpush.bf16.msra.mxu0 %v641
        %705 = vmatpush.bf16.msra.mxu0 %v639
        %706 = vmatpush.bf16.msra.mxu0 %v637
        %707 = vmatmul.bf16.gmra.mxu0 %v486
        %v708 = vpop.f32.mrf.mxu0
        %v709 = vadd.f32 %v695, %v708
        %v710 = vpop.f32.mrf.mxu0
        %v711 = vadd.f32 %v697, %v710
        %712 = vdwg.mxu0
        %713 = vmatpush.bf16.msra.mxu0 %v636
        %714 = vmatpush.bf16.msra.mxu0 %v634
        %715 = vmatpush.bf16.msra.mxu0 %v632
        %716 = vmatpush.bf16.msra.mxu0 %v630
        %717 = vmatpush.bf16.msra.mxu0 %v628
        %718 = vmatpush.bf16.msra.mxu0 %v626
        %719 = vmatpush.bf16.msra.mxu0 %v624
        %720 = vmatpush.bf16.msra.mxu0 %v622
        %721 = vmatmul.bf16.gmra.mxu0 %v485
        %v722 = vpop.f32.mrf.mxu0
        %v723 = vadd.f32 %v522, %v722
        %v724 = vpop.f32.mrf.mxu0
        %v725 = vadd.f32 %v522, %v724
        %726 = vdwg.mxu0
        %727 = vmatpush.bf16.msra.mxu0 %v652
        %728 = vmatpush.bf16.msra.mxu0 %v650
        %729 = vmatpush.bf16.msra.mxu0 %v648
        %730 = vmatpush.bf16.msra.mxu0 %v646
        %731 = vmatpush.bf16.msra.mxu0 %v644
        %732 = vmatpush.bf16.msra.mxu0 %v642
        %733 = vmatpush.bf16.msra.mxu0 %v640
        %734 = vmatpush.bf16.msra.mxu0 %v638
        %735 = vmatmul.bf16.gmra.mxu0 %v486
        %v736 = vpop.f32.mrf.mxu0
        %v737 = vadd.f32 %v723, %v736
        %v738 = vpop.f32.mrf.mxu0
        %v739 = vadd.f32 %v725, %v738
        %740 = vdwg.mxu0
        %v741 = vpack.c.bf16 %v737, %v709
        %v742 = vpack.c.bf16 %v739, %v711
        %v743 = vld [vmem:[%s393] sm:$0xf]
        %v744 = vld [vmem:[%s393 + $0x4] sm:$0xf]
        %v747 = vunpack.c.l.b16 %v743
        %v748 = vunpack.c.l.b16 %v744
        %v749 = vpack.c.b16 %v748, %v747
        %v752 = vunpack.c.l.b16 %v741
        %v753 = vunpack.c.l.b16 %v742
        %v754 = vpack.c.b16 %v753, %v752
        %vm756 = vcmask 130048
        %v758 = vsel %vm756, %v749, 0
        %760 = vmatpush.bf16.msra.mxu0 0
        %761 = vmatpush.bf16.msra.mxu0 0
        %762 = vmatpush.bf16.msra.mxu0 0
        %763 = vmatpush.bf16.msra.mxu0 0
        %764 = vmatpush.bf16.msra.mxu0 0
        %765 = vmatpush.bf16.msra.mxu0 0
        %766 = vmatpush.bf16.msra.mxu0 0
        %767 = vmatpush.bf16.msra.mxu0 %v754
        %768 = vmatmul.bf16.gmra.mxu0 %v758
        %v769 = vpop.f32.mrf.mxu0
        %v770 = vadd.f32 0.0, %v769
        %v771 = vpop.f32.mrf.mxu0
        %v772 = vadd.f32 0.0, %v771
        %773 = vdwg.mxu0
        %s774 = scalar_lea.vmem %s393, 8
        %v775 = vld [vmem:[%s774] sm:$0xf]
        %v776 = vld [vmem:[%s774 + $0x4] sm:$0xf]
        %v779 = vunpack.c.l.b16 %v775
        %v780 = vunpack.c.l.b16 %v776
        %v781 = vpack.c.b16 %v780, %v779
        %782 = vrot.lane.b32.xlu0 %v754, 64
        %v783 = vpop.permute.xlu0 %782
        %v786 = vsel %vm756, %v781, 0
        %788 = vmatpush.bf16.msra.mxu0 0
        %789 = vmatpush.bf16.msra.mxu0 0
        %790 = vmatpush.bf16.msra.mxu0 0
        %791 = vmatpush.bf16.msra.mxu0 0
        %792 = vmatpush.bf16.msra.mxu0 0
        %793 = vmatpush.bf16.msra.mxu0 0
        %794 = vmatpush.bf16.msra.mxu0 0
        %795 = vmatpush.bf16.msra.mxu0 %v783
        %796 = vmatmul.bf16.gmra.mxu0 %v786
        %v797 = vpop.f32.mrf.mxu0
        %v798 = vadd.f32 0.0, %v797
        %v799 = vpop.f32.mrf.mxu0
        %v800 = vadd.f32 0.0, %v799
        %801 = vdwg.mxu0
        %s802 = scalar_lea.vmem %s393, 16
        %v803 = vld [vmem:[%s802] sm:$0xf]
        %v804 = vld [vmem:[%s802 + $0x4] sm:$0xf]
        %v807 = vunpack.c.l.b16 %v803
        %v808 = vunpack.c.l.b16 %v804
        %v809 = vpack.c.b16 %v808, %v807
        %v810 = vunpack.c.h.b16 %v741
        %v811 = vunpack.c.h.b16 %v742
        %v812 = vpack.c.b16 %v811, %v810
        %v815 = vsel %vm756, %v809, 0
        %817 = vmatpush.bf16.msra.mxu0 0
        %818 = vmatpush.bf16.msra.mxu0 0
        %819 = vmatpush.bf16.msra.mxu0 0
        %820 = vmatpush.bf16.msra.mxu0 0
        %821 = vmatpush.bf16.msra.mxu0 0
        %822 = vmatpush.bf16.msra.mxu0 0
        %823 = vmatpush.bf16.msra.mxu0 0
        %824 = vmatpush.bf16.msra.mxu0 %v812
        %825 = vmatmul.bf16.gmra.mxu0 %v815
        %v826 = vpop.f32.mrf.mxu0
        %v827 = vadd.f32 0.0, %v826
        %v828 = vpop.f32.mrf.mxu0
        %v829 = vadd.f32 0.0, %v828
        %830 = vdwg.mxu0
        %s831 = scalar_lea.vmem %s393, 24
        %v832 = vld [vmem:[%s831] sm:$0xf]
        %v833 = vld [vmem:[%s831 + $0x4] sm:$0xf]
        %v836 = vunpack.c.l.b16 %v832
        %v837 = vunpack.c.l.b16 %v833
        %v838 = vpack.c.b16 %v837, %v836
        %839 = vrot.lane.b32.xlu0 %v812, 64
        %v840 = vpop.permute.xlu0 %839
        %v843 = vsel %vm756, %v838, 0
        %845 = vmatpush.bf16.msra.mxu0 0
        %846 = vmatpush.bf16.msra.mxu0 0
        %847 = vmatpush.bf16.msra.mxu0 0
        %848 = vmatpush.bf16.msra.mxu0 0
        %849 = vmatpush.bf16.msra.mxu0 0
        %850 = vmatpush.bf16.msra.mxu0 0
        %851 = vmatpush.bf16.msra.mxu0 0
        %852 = vmatpush.bf16.msra.mxu0 %v840
        %853 = vmatmul.bf16.gmra.mxu0 %v843
        %v854 = vpop.f32.mrf.mxu0
        %v855 = vadd.f32 0.0, %v854
        %v856 = vpop.f32.mrf.mxu0
        %v857 = vadd.f32 0.0, %v856
        %858 = vdwg.mxu0
        %861 = vrot.lane.b32.xlu0 %v798, 64
        %v862 = vpop.permute.xlu0 %861
        %863 = vrot.lane.b32.xlu0 %v800, 64
        %v864 = vpop.permute.xlu0 %863
        %869 = vrot.lane.b32.xlu0 %v855, 64
        %v870 = vpop.permute.xlu0 %869
        %871 = vrot.lane.b32.xlu0 %v857, 64
        %v872 = vpop.permute.xlu0 %871
        %vm875 = vcmask 523264
        %v876 = vsel %vm875, %v770, %v862
        %v877 = vsel %vm875, %v772, %v864
        %v878 = vsel %vm875, %v827, %v870
        %v879 = vsel %vm875, %v829, %v872
        %v880 = vpack.c.bf16 %v877, %v876
        %v881 = vpack.c.bf16 %v879, %v878
        %v882 = vld [vmem:[%s6] sm:$0xff]
        %v883 = vld [vmem:[%s6 + $0x8] sm:$0xff]
        %v884 = vld [vmem:[%s6 + $0x10] sm:$0xff]
        %v885 = vld [vmem:[%s6 + $0x18] sm:$0xff]
        %v886 = vld [vmem:[%s6 + $0x20] sm:$0xff]
        %v887 = vld [vmem:[%s6 + $0x28] sm:$0xff]
        %v888 = vld [vmem:[%s6 + $0x30] sm:$0xff]
        %v889 = vld [vmem:[%s6 + $0x38] sm:$0xff]
        %v890 = vld [vmem:[%s6 + $0x40] sm:$0xff]
        %v891 = vld [vmem:[%s6 + $0x48] sm:$0xff]
        %v892 = vld [vmem:[%s6 + $0x50] sm:$0xff]
        %v893 = vld [vmem:[%s6 + $0x58] sm:$0xff]
        %v894 = vld [vmem:[%s6 + $0x60] sm:$0xff]
        %v895 = vld [vmem:[%s6 + $0x68] sm:$0xff]
        %v896 = vld [vmem:[%s6 + $0x70] sm:$0xff]
        %v897 = vld [vmem:[%s6 + $0x78] sm:$0xff]
        %v898 = vld [vmem:[%s6 + $0x80] sm:$0xff]
        %v899 = vld [vmem:[%s6 + $0x88] sm:$0xff]
        %v900 = vld [vmem:[%s6 + $0x90] sm:$0xff]
        %v901 = vld [vmem:[%s6 + $0x98] sm:$0xff]
        %v902 = vld [vmem:[%s6 + $0xa0] sm:$0xff]
        %v903 = vld [vmem:[%s6 + $0xa8] sm:$0xff]
        %v904 = vld [vmem:[%s6 + $0xb0] sm:$0xff]
        %v905 = vld [vmem:[%s6 + $0xb8] sm:$0xff]
        %v906 = vld [vmem:[%s6 + $0xc0] sm:$0xff]
        %v907 = vld [vmem:[%s6 + $0xc8] sm:$0xff]
        %v908 = vld [vmem:[%s6 + $0xd0] sm:$0xff]
        %v909 = vld [vmem:[%s6 + $0xd8] sm:$0xff]
        %v910 = vld [vmem:[%s6 + $0xe0] sm:$0xff]
        %v911 = vld [vmem:[%s6 + $0xe8] sm:$0xff]
        %v912 = vld [vmem:[%s6 + $0xf0] sm:$0xff]
        %v913 = vld [vmem:[%s6 + $0xf8] sm:$0xff]
        %v914 = vld [vmem:[%s7] sm:$0x3]
        %v916 = vperm.slane %v914, 0
        %v917 = vperm.slane %v914, 1
        %v952 = vunpack.c.l.b16 %v882
        %v953 = vunpack.c.h.b16 %v882
        %v954 = vunpack.c.l.b16 %v883
        %v955 = vunpack.c.h.b16 %v883
        %v956 = vunpack.c.l.b16 %v884
        %v957 = vunpack.c.h.b16 %v884
        %v958 = vunpack.c.l.b16 %v885
        %v959 = vunpack.c.h.b16 %v885
        %v960 = vunpack.c.l.b16 %v886
        %v961 = vunpack.c.h.b16 %v886
        %v962 = vunpack.c.l.b16 %v887
        %v963 = vunpack.c.h.b16 %v887
        %v964 = vunpack.c.l.b16 %v888
        %v965 = vunpack.c.h.b16 %v888
        %v966 = vunpack.c.l.b16 %v889
        %v967 = vunpack.c.h.b16 %v889
        %v968 = vunpack.c.l.b16 %v890
        %v969 = vunpack.c.h.b16 %v890
        %v970 = vunpack.c.l.b16 %v891
        %v971 = vunpack.c.h.b16 %v891
        %v972 = vunpack.c.l.b16 %v892
        %v973 = vunpack.c.h.b16 %v892
        %v974 = vunpack.c.l.b16 %v893
        %v975 = vunpack.c.h.b16 %v893
        %v976 = vunpack.c.l.b16 %v894
        %v977 = vunpack.c.h.b16 %v894
        %v978 = vunpack.c.l.b16 %v895
        %v979 = vunpack.c.h.b16 %v895
        %v980 = vunpack.c.l.b16 %v896
        %v981 = vunpack.c.h.b16 %v896
        %v982 = vunpack.c.l.b16 %v897
        %v983 = vunpack.c.h.b16 %v897
        %v984 = vunpack.c.l.b16 %v898
        %v985 = vunpack.c.h.b16 %v898
        %v986 = vunpack.c.l.b16 %v899
        %v987 = vunpack.c.h.b16 %v899
        %v988 = vunpack.c.l.b16 %v900
        %v989 = vunpack.c.h.b16 %v900
        %v990 = vunpack.c.l.b16 %v901
        %v991 = vunpack.c.h.b16 %v901
        %v992 = vunpack.c.l.b16 %v902
        %v993 = vunpack.c.h.b16 %v902
        %v994 = vunpack.c.l.b16 %v903
        %v995 = vunpack.c.h.b16 %v903
        %v996 = vunpack.c.l.b16 %v904
        %v997 = vunpack.c.h.b16 %v904
        %v998 = vunpack.c.l.b16 %v905
        %v999 = vunpack.c.h.b16 %v905
        %v1000 = vunpack.c.l.b16 %v906
        %v1001 = vunpack.c.h.b16 %v906
        %v1002 = vunpack.c.l.b16 %v907
        %v1003 = vunpack.c.h.b16 %v907
        %v1004 = vunpack.c.l.b16 %v908
        %v1005 = vunpack.c.h.b16 %v908
        %v1006 = vunpack.c.l.b16 %v909
        %v1007 = vunpack.c.h.b16 %v909
        %v1008 = vunpack.c.l.b16 %v910
        %v1009 = vunpack.c.h.b16 %v910
        %v1010 = vunpack.c.l.b16 %v911
        %v1011 = vunpack.c.h.b16 %v911
        %v1012 = vunpack.c.l.b16 %v912
        %v1013 = vunpack.c.h.b16 %v912
        %v1014 = vunpack.c.l.b16 %v913
        %v1015 = vunpack.c.h.b16 %v913
        %v1016 = vpack.c.b16 %v954, %v952
        %v1017 = vpack.c.b16 %v955, %v953
        %v1018 = vpack.c.b16 %v958, %v956
        %v1019 = vpack.c.b16 %v959, %v957
        %v1020 = vpack.c.b16 %v962, %v960
        %v1021 = vpack.c.b16 %v963, %v961
        %v1022 = vpack.c.b16 %v966, %v964
        %v1023 = vpack.c.b16 %v967, %v965
        %v1024 = vpack.c.b16 %v970, %v968
        %v1025 = vpack.c.b16 %v971, %v969
        %v1026 = vpack.c.b16 %v974, %v972
        %v1027 = vpack.c.b16 %v975, %v973
        %v1028 = vpack.c.b16 %v978, %v976
        %v1029 = vpack.c.b16 %v979, %v977
        %v1030 = vpack.c.b16 %v982, %v980
        %v1031 = vpack.c.b16 %v983, %v981
        %v1032 = vpack.c.b16 %v986, %v984
        %v1033 = vpack.c.b16 %v987, %v985
        %v1034 = vpack.c.b16 %v990, %v988
        %v1035 = vpack.c.b16 %v991, %v989
        %v1036 = vpack.c.b16 %v994, %v992
        %v1037 = vpack.c.b16 %v995, %v993
        %v1038 = vpack.c.b16 %v998, %v996
        %v1039 = vpack.c.b16 %v999, %v997
        %v1040 = vpack.c.b16 %v1002, %v1000
        %v1041 = vpack.c.b16 %v1003, %v1001
        %v1042 = vpack.c.b16 %v1006, %v1004
        %v1043 = vpack.c.b16 %v1007, %v1005
        %v1044 = vpack.c.b16 %v1010, %v1008
        %v1045 = vpack.c.b16 %v1011, %v1009
        %v1046 = vpack.c.b16 %v1014, %v1012
        %v1047 = vpack.c.b16 %v1015, %v1013
        %1080 = vmatpush.bf16.msra.mxu0 %v1030
        %1081 = vmatpush.bf16.msra.mxu0 %v1028
        %1082 = vmatpush.bf16.msra.mxu0 %v1026
        %1083 = vmatpush.bf16.msra.mxu0 %v1024
        %1084 = vmatpush.bf16.msra.mxu0 %v1022
        %1085 = vmatpush.bf16.msra.mxu0 %v1020
        %1086 = vmatpush.bf16.msra.mxu0 %v1018
        %1087 = vmatpush.bf16.msra.mxu0 %v1016
        %1088 = vmatmul.bf16.gmra.mxu0 %v880
        %v1089 = vpop.f32.mrf.mxu0
        %v1090 = vadd.f32 %v916, %v1089
        %v1091 = vpop.f32.mrf.mxu0
        %v1092 = vadd.f32 %v916, %v1091
        %1093 = vdwg.mxu0
        %1094 = vmatpush.bf16.msra.mxu0 %v1046
        %1095 = vmatpush.bf16.msra.mxu0 %v1044
        %1096 = vmatpush.bf16.msra.mxu0 %v1042
        %1097 = vmatpush.bf16.msra.mxu0 %v1040
        %1098 = vmatpush.bf16.msra.mxu0 %v1038
        %1099 = vmatpush.bf16.msra.mxu0 %v1036
        %1100 = vmatpush.bf16.msra.mxu0 %v1034
        %1101 = vmatpush.bf16.msra.mxu0 %v1032
        %1102 = vmatmul.bf16.gmra.mxu0 %v881
        %v1103 = vpop.f32.mrf.mxu0
        %v1104 = vadd.f32 %v1090, %v1103
        %v1105 = vpop.f32.mrf.mxu0
        %v1106 = vadd.f32 %v1092, %v1105
        %1107 = vdwg.mxu0
        %1108 = vmatpush.bf16.msra.mxu0 %v1031
        %1109 = vmatpush.bf16.msra.mxu0 %v1029
        %1110 = vmatpush.bf16.msra.mxu0 %v1027
        %1111 = vmatpush.bf16.msra.mxu0 %v1025
        %1112 = vmatpush.bf16.msra.mxu0 %v1023
        %1113 = vmatpush.bf16.msra.mxu0 %v1021
        %1114 = vmatpush.bf16.msra.mxu0 %v1019
        %1115 = vmatpush.bf16.msra.mxu0 %v1017
        %1116 = vmatmul.bf16.gmra.mxu0 %v880
        %v1117 = vpop.f32.mrf.mxu0
        %v1118 = vadd.f32 %v917, %v1117
        %v1119 = vpop.f32.mrf.mxu0
        %v1120 = vadd.f32 %v917, %v1119
        %1121 = vdwg.mxu0
        %1122 = vmatpush.bf16.msra.mxu0 %v1047
        %1123 = vmatpush.bf16.msra.mxu0 %v1045
        %1124 = vmatpush.bf16.msra.mxu0 %v1043
        %1125 = vmatpush.bf16.msra.mxu0 %v1041
        %1126 = vmatpush.bf16.msra.mxu0 %v1039
        %1127 = vmatpush.bf16.msra.mxu0 %v1037
        %1128 = vmatpush.bf16.msra.mxu0 %v1035
        %1129 = vmatpush.bf16.msra.mxu0 %v1033
        %1130 = vmatmul.bf16.gmra.mxu0 %v881
        %v1131 = vpop.f32.mrf.mxu0
        %v1132 = vadd.f32 %v1118, %v1131
        %v1133 = vpop.f32.mrf.mxu0
        %v1134 = vadd.f32 %v1120, %v1133
        %1135 = vdwg.mxu0
        %v1136 = vadd.f32 %v404, %v1104
        %v1137 = vadd.f32 %v405, %v1132
        %v1138 = vadd.f32 %v406, %v1106
        %v1139 = vadd.f32 %v407, %v1134
        %1140 = vst [vmem:[%s402] sm:$0xff] %v1136
        %1141 = vst [vmem:[%s402 + $0x8] sm:$0xff] %v1137
        %1142 = vst [vmem:[%s402 + $0x10] sm:$0xff] %v1138
        %1143 = vst [vmem:[%s402 + $0x18] sm:$0xff] %v1139
        %p1144 = scmp.lt.s32.totalorder %s27, 1
        %s1145 = scalar_select %p1144, %s27, 1
        %p1146 = scmp.lt.s32.totalorder %s28, 3
        %s1147 = scalar_select %p1146, %s28, 3
        %s1148 = smul.addr %s1147, 4
        %s1149 = smul.addr %s1145, 16
        %s1150 = sadd.s32 %s1148, %s1149
        %s1151 = smul.addr %s1150, 8
        %s1152 = scalar_lea.vmem %s8, %s1151
        // Predicated region
        $region65: #{pair2msa_forward.4} parent=51 // pred_check
          %p1153 = pneg %p235
        $region66: #{pair2msa_forward.4} parent=51 // pred_check_branch
          %1155 = sbr.rel (%p1153) target = $region68
        $region67: #{pair2msa_forward.4} parent=51 // pred_region
          _
        $region68: #{pair2msa_forward.4} parent=51 // pred_fallthru
          _
      $region52: #{pair2msa_forward.4} parent=5 // pred_fallthru
        _
      %p1156 = scmp.le.s32.totalorder 2, %s18
      // Predicated region
      $region69: #{pair2msa_forward.4} parent=5 // pred_check
        %p1157 = pneg %p1156
      $region70: #{pair2msa_forward.4} parent=5 // pred_check_branch
        %1159 = sbr.rel (%p1157) target = $region72
      $region71: #{pair2msa_forward.4} parent=5 // pred_region
        %s1160 = ssub.s32 %s18, 2
        // Predicated region
        $region73: #{pair2msa_forward.4} parent=71 // pred_check
          %p1161 = pneg %p241
        $region74: #{pair2msa_forward.4} parent=71 // pred_check_branch
          %1163 = sbr.rel (%p1161) target = $region76
        $region75: #{pair2msa_forward.4} parent=71 // pred_region
          %p1164 = scmp.lt.s32.totalorder %s29, 1
          %s1165 = scalar_select %p1164, %s29, 1
          %p1166 = scmp.lt.s32.totalorder %s30, 3
          %s1167 = scalar_select %p1166, %s30, 3
          %s1168 = smul.addr %s1167, 4
          %s1169 = smul.addr %s1165, 16
          %s1170 = sadd.s32 %s1168, %s1169
          %s1171 = smul.addr %s1170, 8
          %s1172 = scalar_lea.vmem %s8, %s1171
        $region76: #{pair2msa_forward.4} parent=71 // pred_fallthru
          _
      $region72: #{pair2msa_forward.4} parent=5 // pred_fallthru
        _
    $region6: #{pair2msa_forward.4} parent=1 // loop_footer
      %s22 = sadd.s32 1, %s18
    $region7: #{pair2msa_forward.4} parent=1 // loop_footer_branch
      %17 = sbr.rel target = $region3
    $region8: #{pair2msa_forward.4} parent=1 // loop_exit
      _
    %1173 = vsyncpa [#allocation3], 1
    %s1174 = scalar_lea.sflag [#allocation3], 1
    %1175 = vsyncpa %s1174, 1
    %1176 = vsyncpa [#allocation5], 1

// kernel: pair2msa_forward.3
$region0: #{pair2msa_forward.3}
  #allocation0 [shape = 'u32[]', space=smem, size = 0x4, offset = 0x4, fixed_abs, tag = 'smem constant byte address 0x4 - core index']
  #allocation1 [shape = 'u32[72,128]{1,0:T(1,128)}', space=vmem, size = 0x9000, scoped, tag = 'internal scratch']
  %s0 = inlined_call_operand.hbm [shape: f32[2,16,16,128], index: 0, kind: input, shape index: {}]
  %s1 = inlined_call_operand.vmem [shape: f32[1,128], index: 1, kind: input, shape index: {}]
  %s2 = inlined_call_operand.vmem [shape: f32[1,128], index: 2, kind: input, shape index: {}]
  %s3 = inlined_call_operand.hbm [shape: bf16[128,4], index: 3, kind: input, shape index: {}]
  %s4 = inlined_call_operand.vmem [shape: f32[1,4], index: 4, kind: input, shape index: {}]
  %s5 = inlined_call_operand.vmem [shape: bf16[2,4,16,16], index: 5, kind: output, shape index: {}]
  %s6 = sld [smem:[#allocation0]]
  $region61: #{pair2msa_forward.3} parent=0
    _
  %s8 = ssub.s32 1, %s6
  %s9 = scalar_select 0, %s8, %s6
  $region1: #{pair2msa_forward.3} parent=0
    #allocation2 [shape = 'u8[262144]{0}', space=vmem, size = 0x40000, scoped, tag = 'input window, operand 0']
    #allocation3 [shape = 's32[2]{0}', space=sflag, size = 0x8, scoped, tag = 'scoped memory for pair2msa_forward.3']
    #allocation4 [shape = 'u8[32768]{0}', space=vmem, size = 0x8000, scoped, tag = 'input window, operand 3, single buffered']
    #allocation5 [shape = 's32[1]{0}', space=sflag, size = 0x4, scoped, tag = 'scoped memory for pair2msa_forward.3']
    %10 = vsyncpa [#allocation3], 0
    %s11 = scalar_lea.sflag [#allocation3], 1
    %12 = vsyncpa %s11, 0
    %13 = vsyncpa [#allocation5], 0
    loop: start=0, step=1, limit=4
    $region2: #{pair2msa_forward.3} parent=1 // loop_pre_header
      _
    $region3: #{pair2msa_forward.3} parent=1 // loop_header
      %s15 = sphi 0, %s19
      %p16 = scmp.ge.s32.totalorder %s15, 4
      %s22 = sphi 0, %s34
      %s23 = sphi 0, %s30
      %s24 = sphi 0, %s22
      %s25 = sphi 0, %s23
      %s26 = sphi 0, %s24
      %s27 = sphi 0, %s25
      %s39 = sphi 0, %s41
      %s42 = sphi 0, %s39
      %s43 = sphi 0, %s42
      %s59 = sphi 0, %s43
      %s63 = sphi 0, %s63
      %s65 = sphi 0, %s63
      %s66 = sphi 0, %s65
      %s80 = sphi 0, %s66
      %s84 = sphi 0, %s84
      %s86 = sphi 0, %s84
      %s87 = sphi 0, %s86
      %s101 = sphi 0, %s87
      %s105 = sphi 0, %s105
      %s107 = sphi 0, %s105
      %s108 = sphi 0, %s107
      %s122 = sphi 0, %s108
      %s126 = sphi 0, %s126
      %s128 = sphi 0, %s126
      %s129 = sphi 0, %s128
      %s143 = sphi 0, %s129
      %s151 = sphi 0, %s153
      %s154 = sphi 0, %s151
      %s155 = sphi 0, %s154
      %s171 = sphi 0, %s155
    $region4: #{pair2msa_forward.3} parent=1 // loop_header_branch
      %18 = sbr.rel (%p16) target = $region8
    $region5: #{pair2msa_forward.3} parent=1 // loop_body
      %s20 = ssub.s32 %s15, 1
      %s21 = ssub.s32 %s15, 2
      %s28 = sadd.s32 1, %s23
      %p29 = scmp.ge.s32.totalorder %s28, 1
      %s30 = scalar_select %p29, 0, %s28
      %s31 = sadd.s32 1, %s22
      %s32 = scalar_select %p29, %s31, %s22
      %p33 = scmp.ge.s32.totalorder %s32, 2
      %s34 = scalar_select %p33, 0, %s32
      %s35 = ssub.s32 %s22, %s34
      %s36 = ssub.s32 %s23, %s30
      %s37 = sor.u32 %s35, %s36
      %p38 = scmp.eq.s32.totalorder %s37, 0
      %s40 = sadd.s32 %s39, 1
      %s41 = scalar_select %p38, %s39, %s40
      %p44 = pneg %p38
      %p45 = scmp.eq.s32.totalorder %s15, 1
      %p46 = por %p44, %p45
      %p47 = scmp.ne.s32.totalorder %s39, %s42
      %p48 = scmp.eq.s32.totalorder %s15, 0
      %p49 = por %p47, %p48
      %p50 = scmp.ne.s32.totalorder %s39, %s42
      %p51 = scmp.eq.s32.totalorder %s20, 1
      %p52 = por %p50, %p51
      %p53 = scmp.ne.s32.totalorder %s42, %s43
      %p54 = scmp.eq.s32.totalorder %s20, 0
      %p55 = por %p53, %p54
      %p56 = scmp.ne.s32.totalorder %s42, %s43
      %p57 = scmp.eq.s32.totalorder %s21, 1
      %p58 = por %p56, %p57
      %p60 = scmp.ne.s32.totalorder %s43, %s59
      %p61 = scmp.eq.s32.totalorder %s21, 0
      %p62 = por %p60, %p61
      %s64 = sadd.s32 %s63, 1
      %p67 = scmp.eq.s32.totalorder %s15, 1
      %p68 = scmp.ne.s32.totalorder %s63, %s65
      %p69 = scmp.eq.s32.totalorder %s15, 0
      %p70 = por %p68, %p69
      %p71 = scmp.ne.s32.totalorder %s63, %s65
      %p72 = scmp.eq.s32.totalorder %s20, 1
      %p73 = por %p71, %p72
      %p74 = scmp.ne.s32.totalorder %s65, %s66
      %p75 = scmp.eq.s32.totalorder %s20, 0
      %p76 = por %p74, %p75
      %p77 = scmp.ne.s32.totalorder %s65, %s66
      %p78 = scmp.eq.s32.totalorder %s21, 1
      %p79 = por %p77, %p78
      %p81 = scmp.ne.s32.totalorder %s66, %s80
      %p82 = scmp.eq.s32.totalorder %s21, 0
      %p83 = por %p81, %p82
      %s85 = sadd.s32 %s84, 1
      %p88 = scmp.eq.s32.totalorder %s15, 1
      %p89 = scmp.ne.s32.totalorder %s84, %s86
      %p90 = scmp.eq.s32.totalorder %s15, 0
      %p91 = por %p89, %p90
      %p92 = scmp.ne.s32.totalorder %s84, %s86
      %p93 = scmp.eq.s32.totalorder %s20, 1
      %p94 = por %p92, %p93
      %p95 = scmp.ne.s32.totalorder %s86, %s87
      %p96 = scmp.eq.s32.totalorder %s20, 0
      %p97 = por %p95, %p96
      %p98 = scmp.ne.s32.totalorder %s86, %s87
      %p99 = scmp.eq.s32.totalorder %s21, 1
      %p100 = por %p98, %p99
      %p102 = scmp.ne.s32.totalorder %s87, %s101
      %p103 = scmp.eq.s32.totalorder %s21, 0
      %p104 = por %p102, %p103
      %s106 = sadd.s32 %s105, 1
      %p109 = scmp.eq.s32.totalorder %s15, 1
      %p110 = scmp.ne.s32.totalorder %s105, %s107
      %p111 = scmp.eq.s32.totalorder %s15, 0
      %p112 = por %p110, %p111
      %p113 = scmp.ne.s32.totalorder %s105, %s107
      %p114 = scmp.eq.s32.totalorder %s20, 1
      %p115 = por %p113, %p114
      %p116 = scmp.ne.s32.totalorder %s107, %s108
      %p117 = scmp.eq.s32.totalorder %s20, 0
      %p118 = por %p116, %p117
      %p119 = scmp.ne.s32.totalorder %s107, %s108
      %p120 = scmp.eq.s32.totalorder %s21, 1
      %p121 = por %p119, %p120
      %p123 = scmp.ne.s32.totalorder %s108, %s122
      %p124 = scmp.eq.s32.totalorder %s21, 0
      %p125 = por %p123, %p124
      %s127 = sadd.s32 %s126, 1
      %p130 = scmp.eq.s32.totalorder %s15, 1
      %p131 = scmp.ne.s32.totalorder %s126, %s128
      %p132 = scmp.eq.s32.totalorder %s15, 0
      %p133 = por %p131, %p132
      %p134 = scmp.ne.s32.totalorder %s126, %s128
      %p135 = scmp.eq.s32.totalorder %s20, 1
      %p136 = por %p134, %p135
      %p137 = scmp.ne.s32.totalorder %s128, %s129
      %p138 = scmp.eq.s32.totalorder %s20, 0
      %p139 = por %p137, %p138
      %p140 = scmp.ne.s32.totalorder %s128, %s129
      %p141 = scmp.eq.s32.totalorder %s21, 1
      %p142 = por %p140, %p141
      %p144 = scmp.ne.s32.totalorder %s129, %s143
      %p145 = scmp.eq.s32.totalorder %s21, 0
      %p146 = por %p144, %p145
      %s147 = ssub.s32 %s22, %s34
      %s148 = ssub.s32 %s23, %s30
      %s149 = sor.u32 %s147, %s148
      %p150 = scmp.eq.s32.totalorder %s149, 0
      %s152 = sadd.s32 %s151, 1
      %s153 = scalar_select %p150, %s151, %s152
      %p156 = pneg %p150
      %p157 = scmp.eq.s32.totalorder %s15, 1
      %p158 = por %p156, %p157
      %p159 = scmp.ne.s32.totalorder %s151, %s154
      %p160 = scmp.eq.s32.totalorder %s15, 0
      %p161 = por %p159, %p160
      %p162 = scmp.ne.s32.totalorder %s151, %s154
      %p163 = scmp.eq.s32.totalorder %s20, 1
      %p164 = por %p162, %p163
      %p165 = scmp.ne.s32.totalorder %s154, %s155
      %p166 = scmp.eq.s32.totalorder %s20, 0
      %p167 = por %p165, %p166
      %p168 = scmp.ne.s32.totalorder %s154, %s155
      %p169 = scmp.eq.s32.totalorder %s21, 1
      %p170 = por %p168, %p169
      %p172 = scmp.ne.s32.totalorder %s155, %s171
      %p173 = scmp.eq.s32.totalorder %s21, 0
      %p174 = por %p172, %p173
      %p175 = scmp.le.s32.totalorder 1, %s15
      %p176 = scmp.lt.s32.totalorder %s15, 3
      %p177 = pnand %p175, %p176
      %p178 = pneg %p177
      // Predicated region
      $region9: #{pair2msa_forward.3} parent=5 // pred_check
        _
      $region10: #{pair2msa_forward.3} parent=5 // pred_check_branch
        %180 = sbr.rel (%p177) target = $region12
      $region11: #{pair2msa_forward.3} parent=5 // pred_region
        %s181 = ssub.s32 %s15, 1
        // Predicated region
        $region13: #{pair2msa_forward.3} parent=11 // pred_check
          %p182 = pneg %p76
        $region14: #{pair2msa_forward.3} parent=11 // pred_check_branch
          %184 = sbr.rel (%p182) target = $region16
        $region15: #{pair2msa_forward.3} parent=11 // pred_region
          _
        $region16: #{pair2msa_forward.3} parent=11 // pred_fallthru
          _
        // Predicated region
        $region17: #{pair2msa_forward.3} parent=11 // pred_check
          %p185 = pneg %p97
        $region18: #{pair2msa_forward.3} parent=11 // pred_check_branch
          %187 = sbr.rel (%p185) target = $region20
        $region19: #{pair2msa_forward.3} parent=11 // pred_region
          _
        $region20: #{pair2msa_forward.3} parent=11 // pred_fallthru
          _
        // Predicated region
        $region21: #{pair2msa_forward.3} parent=11 // pred_check
          %p188 = pneg %p118
        $region22: #{pair2msa_forward.3} parent=11 // pred_check_branch
          %190 = sbr.rel (%p188) target = $region24
        $region23: #{pair2msa_forward.3} parent=11 // pred_region
          %192 = vsyncadd [#allocation5], 0
          %s193 = sshll.u32 %s3, 4
          %s194 = int_to_ptr.hbm [resolvable:$true] %s193
          %s195 = sshll.u32 [#allocation4], 4
          %s196 = int_to_ptr.vmem [resolvable:$true] %s195
          %201 = dma.hbm_to_vmem [thread:$0]  %s194, 1024, %s196, [#allocation5], 64, 64, 4
        $region24: #{pair2msa_forward.3} parent=11 // pred_fallthru
          _
        // Predicated region
        $region25: #{pair2msa_forward.3} parent=11 // pred_check
          %p202 = pneg %p139
        $region26: #{pair2msa_forward.3} parent=11 // pred_check_branch
          %204 = sbr.rel (%p202) target = $region28
        $region27: #{pair2msa_forward.3} parent=11 // pred_region
          _
        $region28: #{pair2msa_forward.3} parent=11 // pred_fallthru
          _
      $region12: #{pair2msa_forward.3} parent=5 // pred_fallthru
        _
      %p205 = scmp.lt.s32.totalorder %s15, 2
      // Predicated region
      $region29: #{pair2msa_forward.3} parent=5 // pred_check
        %p206 = pneg %p205
      $region30: #{pair2msa_forward.3} parent=5 // pred_check_branch
        %208 = sbr.rel (%p206) target = $region32
      $region31: #{pair2msa_forward.3} parent=5 // pred_region
        // Predicated region
        $region33: #{pair2msa_forward.3} parent=31 // pred_check
          %p209 = pneg %p49
        $region34: #{pair2msa_forward.3} parent=31 // pred_check_branch
          %211 = sbr.rel (%p209) target = $region36
        $region35: #{pair2msa_forward.3} parent=31 // pred_region
          %s212 = sand.u32 %s39, 1
          %s213 = scalar_lea.sflag [#allocation3], %s212
          %s214 = sand.u32 %s39, 1
          %s215 = smul.addr %s214, 256
          %s216 = scalar_lea.vmem [#allocation2], %s215
          %s217 = smul.u32 2, %s23
          %219 = vsyncadd %s213, 0
          %s220 = smul.addr %s22, 32
          %s221 = sadd.s32 %s217, %s220
          %s222 = smul.addr %s221, 8
          %s223 = scalar_lea.hbm %s0, %s222
          %s224 = sshll.u32 %s223, 4
          %s225 = int_to_ptr.hbm [resolvable:$true] %s224
          %s226 = sshll.u32 %s216, 4
          %s227 = int_to_ptr.vmem [resolvable:$true] %s226
          %232 = dma.hbm_to_vmem [thread:$0]  %s225, 4096, %s227, %s213, 128, 128, 8
        $region36: #{pair2msa_forward.3} parent=31 // pred_fallthru
          _
      $region32: #{pair2msa_forward.3} parent=5 // pred_fallthru
        _
      %p233 = scmp.le.s32.totalorder 1, %s15
      %p234 = scmp.lt.s32.totalorder %s15, 3
      %p235 = pnand %p233, %p234
      %p236 = pneg %p235
      // Predicated region
      $region37: #{pair2msa_forward.3} parent=5 // pred_check
        _
      $region38: #{pair2msa_forward.3} parent=5 // pred_check_branch
        %238 = sbr.rel (%p235) target = $region40
      $region39: #{pair2msa_forward.3} parent=5 // pred_region
        %s239 = ssub.s32 %s15, 1
        %s240 = sand.u32 %s42, 1
        %s241 = scalar_lea.sflag [#allocation3], %s240
        %s242 = sand.u32 %s42, 1
        %s243 = smul.addr %s242, 256
        %s244 = scalar_lea.vmem [#allocation2], %s243
        // Predicated region
        $region41: #{pair2msa_forward.3} parent=39 // pred_check
          %p245 = pneg %p55
        $region42: #{pair2msa_forward.3} parent=39 // pred_check_branch
          %247 = sbr.rel (%p245) target = $region44
        $region43: #{pair2msa_forward.3} parent=39 // pred_region
          %249 = dma.done %s241, 4096
        $region44: #{pair2msa_forward.3} parent=39 // pred_fallthru
          _
        // Predicated region
        $region45: #{pair2msa_forward.3} parent=39 // pred_check
          %p250 = pneg %p118
        $region46: #{pair2msa_forward.3} parent=39 // pred_check_branch
          %252 = sbr.rel (%p250) target = $region48
        $region47: #{pair2msa_forward.3} parent=39 // pred_region
          %254 = dma.done [#allocation5], 1024
        $region48: #{pair2msa_forward.3} parent=39 // pred_fallthru
          _
        %s255 = sand.u32 %s42, 1
        %s256 = scalar_lea.sflag [#allocation3], %s255
        %s257 = sand.u32 %s42, 1
        %s258 = smul.addr %s257, 256
        %s259 = scalar_lea.vmem [#allocation2], %s258
        %p260 = pneg %p55
        %p261 = pneg %p52
        %p262 = pneg %p76
        %p263 = pneg %p73
        %p264 = pneg %p97
        %p265 = pneg %p94
        %p266 = pneg %p118
        %p267 = pneg %p115
        %p268 = pneg %p139
        %p269 = pneg %p136
        %p270 = pneg %p167
        %p271 = pneg %p164
        %s272 = smul.u32 2, %s25
        %p273 = scmp.lt.s32.totalorder %s24, 1
        %s274 = scalar_select %p273, %s24, 1
        %p275 = scmp.lt.s32.totalorder %s272, 1
        %s276 = scalar_select %p275, %s272, 1
        %s277 = smul.addr %s274, 8
        %s278 = sadd.s32 %s276, %s277
        %s279 = smul.addr %s278, 4
        %s280 = scalar_lea.vmem %s5, %s279
        %s281 = smul.u32 2, %s25
        %s282 = smul.u32 2, %s25
        %p283 = scmp.lt.s32.totalorder %s24, 1
        %s284 = scalar_select %p283, %s24, 1
        %p285 = scmp.lt.s32.totalorder %s282, 1
        %s286 = scalar_select %p285, %s282, 1
        %s287 = smul.addr %s284, 8
        %s288 = sadd.s32 %s286, %s287
        %s289 = smul.addr %s288, 4
        %s290 = scalar_lea.vmem %s5, %s289
        %s291 = smul.u32 2, %s25
        %v292 = vld [vmem:[%s244] sm:$0xff]
        %v293 = vld [vmem:[%s244 + $0x8] sm:$0xff]
        %v294 = vld [vmem:[%s244 + $0x10] sm:$0xff]
        %v295 = vld [vmem:[%s244 + $0x18] sm:$0xff]
        %v296 = vld [vmem:[%s244 + $0x20] sm:$0xff]
        %v297 = vld [vmem:[%s244 + $0x28] sm:$0xff]
        %v298 = vld [vmem:[%s244 + $0x30] sm:$0xff]
        %v299 = vld [vmem:[%s244 + $0x38] sm:$0xff]
        %v300 = vld [vmem:[%s244 + $0x40] sm:$0xff]
        %v301 = vld [vmem:[%s244 + $0x48] sm:$0xff]
        %v302 = vld [vmem:[%s244 + $0x50] sm:$0xff]
        %v303 = vld [vmem:[%s244 + $0x58] sm:$0xff]
        %v304 = vld [vmem:[%s244 + $0x60] sm:$0xff]
        %v305 = vld [vmem:[%s244 + $0x68] sm:$0xff]
        %v306 = vld [vmem:[%s244 + $0x70] sm:$0xff]
        %v307 = vld [vmem:[%s244 + $0x78] sm:$0xff]
        %v308 = vld [vmem:[%s244 + $0x80] sm:$0xff]
        %v309 = vld [vmem:[%s244 + $0x88] sm:$0xff]
        %v310 = vld [vmem:[%s244 + $0x90] sm:$0xff]
        %v311 = vld [vmem:[%s244 + $0x98] sm:$0xff]
        %v312 = vld [vmem:[%s244 + $0xa0] sm:$0xff]
        %v313 = vld [vmem:[%s244 + $0xa8] sm:$0xff]
        %v314 = vld [vmem:[%s244 + $0xb0] sm:$0xff]
        %v315 = vld [vmem:[%s244 + $0xb8] sm:$0xff]
        %v316 = vld [vmem:[%s244 + $0xc0] sm:$0xff]
        %v317 = vld [vmem:[%s244 + $0xc8] sm:$0xff]
        %v318 = vld [vmem:[%s244 + $0xd0] sm:$0xff]
        %v319 = vld [vmem:[%s244 + $0xd8] sm:$0xff]
        %v320 = vld [vmem:[%s244 + $0xe0] sm:$0xff]
        %v321 = vld [vmem:[%s244 + $0xe8] sm:$0xff]
        %v322 = vld [vmem:[%s244 + $0xf0] sm:$0xff]
        %v323 = vld [vmem:[%s244 + $0xf8] sm:$0xff]
        %v324 = vld [vmem:[%s1] sm:$0x1]
        %v325 = vld [vmem:[%s2] sm:$0x1]
        %326 = vadd.xlane.f32.xlu0 %v292
        %v327 = vpop.xlane.xlu0 %326
        %328 = vadd.xlane.f32.xlu0 %v293
        %v329 = vpop.xlane.xlu0 %328
        %330 = vadd.xlane.f32.xlu0 %v294
        %v331 = vpop.xlane.xlu0 %330
        %332 = vadd.xlane.f32.xlu0 %v295
        %v333 = vpop.xlane.xlu0 %332
        %334 = vadd.xlane.f32.xlu0 %v296
        %v335 = vpop.xlane.xlu0 %334
        %336 = vadd.xlane.f32.xlu0 %v297
        %v337 = vpop.xlane.xlu0 %336
        %338 = vadd.xlane.f32.xlu0 %v298
        %v339 = vpop.xlane.xlu0 %338
        %340 = vadd.xlane.f32.xlu0 %v299
        %v341 = vpop.xlane.xlu0 %340
        %342 = vadd.xlane.f32.xlu0 %v300
        %v343 = vpop.xlane.xlu0 %342
        %344 = vadd.xlane.f32.xlu0 %v301
        %v345 = vpop.xlane.xlu0 %344
        %346 = vadd.xlane.f32.xlu0 %v302
        %v347 = vpop.xlane.xlu0 %346
        %348 = vadd.xlane.f32.xlu0 %v303
        %v349 = vpop.xlane.xlu0 %348
        %350 = vadd.xlane.f32.xlu0 %v304
        %v351 = vpop.xlane.xlu0 %350
        %352 = vadd.xlane.f32.xlu0 %v305
        %v353 = vpop.xlane.xlu0 %352
        %354 = vadd.xlane.f32.xlu0 %v306
        %v355 = vpop.xlane.xlu0 %354
        %356 = vadd.xlane.f32.xlu0 %v307
        %v357 = vpop.xlane.xlu0 %356
        %358 = vadd.xlane.f32.xlu0 %v308
        %v359 = vpop.xlane.xlu0 %358
        %360 = vadd.xlane.f32.xlu0 %v309
        %v361 = vpop.xlane.xlu0 %360
        %362 = vadd.xlane.f32.xlu0 %v310
        %v363 = vpop.xlane.xlu0 %362
        %364 = vadd.xlane.f32.xlu0 %v311
        %v365 = vpop.xlane.xlu0 %364
        %366 = vadd.xlane.f32.xlu0 %v312
        %v367 = vpop.xlane.xlu0 %366
        %368 = vadd.xlane.f32.xlu0 %v313
        %v369 = vpop.xlane.xlu0 %368
        %370 = vadd.xlane.f32.xlu0 %v314
        %v371 = vpop.xlane.xlu0 %370
        %372 = vadd.xlane.f32.xlu0 %v315
        %v373 = vpop.xlane.xlu0 %372
        %374 = vadd.xlane.f32.xlu0 %v316
        %v375 = vpop.xlane.xlu0 %374
        %376 = vadd.xlane.f32.xlu0 %v317
        %v377 = vpop.xlane.xlu0 %376
        %378 = vadd.xlane.f32.xlu0 %v318
        %v379 = vpop.xlane.xlu0 %378
        %380 = vadd.xlane.f32.xlu0 %v319
        %v381 = vpop.xlane.xlu0 %380
        %382 = vadd.xlane.f32.xlu0 %v320
        %v383 = vpop.xlane.xlu0 %382
        %384 = vadd.xlane.f32.xlu0 %v321
        %v385 = vpop.xlane.xlu0 %384
        %386 = vadd.xlane.f32.xlu0 %v322
        %v387 = vpop.xlane.xlu0 %386
        %388 = vadd.xlane.f32.xlu0 %v323
        %v389 = vpop.xlane.xlu0 %388
        %v390 = vrcp.pop 128.0
        %v391 = vmul.f32 128.0, %v390
        %v392 = vsub.f32 1.0, %v391
        %v393 = vmul.f32 %v390, %v392
        %v394 = vadd.f32 %v390, %v393
        %vm395 = vweird.f32 %v390
        %v396 = vsel %vm395, %v390, %v394
        %v397 = vmul.f32 %v327, %v396
        %v398 = vmul.f32 %v329, %v396
        %v399 = vmul.f32 %v331, %v396
        %v400 = vmul.f32 %v333, %v396
        %v401 = vmul.f32 %v335, %v396
        %v402 = vmul.f32 %v337, %v396
        %v403 = vmul.f32 %v339, %v396
        %v404 = vmul.f32 %v341, %v396
        %v405 = vmul.f32 %v343, %v396
        %v406 = vmul.f32 %v345, %v396
        %v407 = vmul.f32 %v347, %v396
        %v408 = vmul.f32 %v349, %v396
        %v409 = vmul.f32 %v351, %v396
        %v410 = vmul.f32 %v353, %v396
        %v411 = vmul.f32 %v355, %v396
        %v412 = vmul.f32 %v357, %v396
        %v413 = vmul.f32 %v359, %v396
        %v414 = vmul.f32 %v361, %v396
        %v415 = vmul.f32 %v363, %v396
        %v416 = vmul.f32 %v365, %v396
        %v417 = vmul.f32 %v367, %v396
        %v418 = vmul.f32 %v369, %v396
        %v419 = vmul.f32 %v371, %v396
        %v420 = vmul.f32 %v373, %v396
        %v421 = vmul.f32 %v375, %v396
        %v422 = vmul.f32 %v377, %v396
        %v423 = vmul.f32 %v379, %v396
        %v424 = vmul.f32 %v381, %v396
        %v425 = vmul.f32 %v383, %v396
        %v426 = vmul.f32 %v385, %v396
        %v427 = vmul.f32 %v387, %v396
        %v428 = vmul.f32 %v389, %v396
        %v429 = vsub.f32 %v292, %v397
        %v430 = vsub.f32 %v293, %v398
        %v431 = vsub.f32 %v294, %v399
        %v432 = vsub.f32 %v295, %v400
        %v433 = vsub.f32 %v296, %v401
        %v434 = vsub.f32 %v297, %v402
        %v435 = vsub.f32 %v298, %v403
        %v436 = vsub.f32 %v299, %v404
        %v437 = vsub.f32 %v300, %v405
        %v438 = vsub.f32 %v301, %v406
        %v439 = vsub.f32 %v302, %v407
        %v440 = vsub.f32 %v303, %v408
        %v441 = vsub.f32 %v304, %v409
        %v442 = vsub.f32 %v305, %v410
        %v443 = vsub.f32 %v306, %v411
        %v444 = vsub.f32 %v307, %v412
        %v445 = vsub.f32 %v308, %v413
        %v446 = vsub.f32 %v309, %v414
        %v447 = vsub.f32 %v310, %v415
        %v448 = vsub.f32 %v311, %v416
        %v449 = vsub.f32 %v312, %v417
        %v450 = vsub.f32 %v313, %v418
        %v451 = vsub.f32 %v314, %v419
        %v452 = vsub.f32 %v315, %v420
        %v453 = vsub.f32 %v316, %v421
        %v454 = vsub.f32 %v317, %v422
        %v455 = vsub.f32 %v318, %v423
        %v456 = vsub.f32 %v319, %v424
        %v457 = vsub.f32 %v320, %v425
        %v458 = vsub.f32 %v321, %v426
        %v459 = vsub.f32 %v322, %v427
        %v460 = vsub.f32 %v323, %v428
        %v461 = vmul.f32 %v429, %v429
        %v462 = vmul.f32 %v430, %v430
        %v463 = vmul.f32 %v431, %v431
        %v464 = vmul.f32 %v432, %v432
        %v465 = vmul.f32 %v433, %v433
        %v466 = vmul.f32 %v434, %v434
        %v467 = vmul.f32 %v435, %v435
        %v468 = vmul.f32 %v436, %v436
        %v469 = vmul.f32 %v437, %v437
        %v470 = vmul.f32 %v438, %v438
        %v471 = vmul.f32 %v439, %v439
        %v472 = vmul.f32 %v440, %v440
        %v473 = vmul.f32 %v441, %v441
        %v474 = vmul.f32 %v442, %v442
        %v475 = vmul.f32 %v443, %v443
        %v476 = vmul.f32 %v444, %v444
        %v477 = vmul.f32 %v445, %v445
        %v478 = vmul.f32 %v446, %v446
        %v479 = vmul.f32 %v447, %v447
        %v480 = vmul.f32 %v448, %v448
        %v481 = vmul.f32 %v449, %v449
        %v482 = vmul.f32 %v450, %v450
        %v483 = vmul.f32 %v451, %v451
        %v484 = vmul.f32 %v452, %v452
        %v485 = vmul.f32 %v453, %v453
        %v486 = vmul.f32 %v454, %v454
        %v487 = vmul.f32 %v455, %v455
        %v488 = vmul.f32 %v456, %v456
        %v489 = vmul.f32 %v457, %v457
        %v490 = vmul.f32 %v458, %v458
        %v491 = vmul.f32 %v459, %v459
        %v492 = vmul.f32 %v460, %v460
        %493 = vadd.xlane.f32.xlu0 %v461
        %v494 = vpop.xlane.xlu0 %493
        %495 = vadd.xlane.f32.xlu0 %v462
        %v496 = vpop.xlane.xlu0 %495
        %497 = vadd.xlane.f32.xlu0 %v463
        %v498 = vpop.xlane.xlu0 %497
        %499 = vadd.xlane.f32.xlu0 %v464
        %v500 = vpop.xlane.xlu0 %499
        %501 = vadd.xlane.f32.xlu0 %v465
        %v502 = vpop.xlane.xlu0 %501
        %503 = vadd.xlane.f32.xlu0 %v466
        %v504 = vpop.xlane.xlu0 %503
        %505 = vadd.xlane.f32.xlu0 %v467
        %v506 = vpop.xlane.xlu0 %505
        %507 = vadd.xlane.f32.xlu0 %v468
        %v508 = vpop.xlane.xlu0 %507
        %509 = vadd.xlane.f32.xlu0 %v469
        %v510 = vpop.xlane.xlu0 %509
        %511 = vadd.xlane.f32.xlu0 %v470
        %v512 = vpop.xlane.xlu0 %511
        %513 = vadd.xlane.f32.xlu0 %v471
        %v514 = vpop.xlane.xlu0 %513
        %515 = vadd.xlane.f32.xlu0 %v472
        %v516 = vpop.xlane.xlu0 %515
        %517 = vadd.xlane.f32.xlu0 %v473
        %v518 = vpop.xlane.xlu0 %517
        %519 = vadd.xlane.f32.xlu0 %v474
        %v520 = vpop.xlane.xlu0 %519
        %521 = vadd.xlane.f32.xlu0 %v475
        %v522 = vpop.xlane.xlu0 %521
        %523 = vadd.xlane.f32.xlu0 %v476
        %v524 = vpop.xlane.xlu0 %523
        %525 = vadd.xlane.f32.xlu0 %v477
        %v526 = vpop.xlane.xlu0 %525
        %527 = vadd.xlane.f32.xlu0 %v478
        %v528 = vpop.xlane.xlu0 %527
        %529 = vadd.xlane.f32.xlu0 %v479
        %v530 = vpop.xlane.xlu0 %529
        %531 = vadd.xlane.f32.xlu0 %v480
        %v532 = vpop.xlane.xlu0 %531
        %533 = vadd.xlane.f32.xlu0 %v481
        %v534 = vpop.xlane.xlu0 %533
        %535 = vadd.xlane.f32.xlu0 %v482
        %v536 = vpop.xlane.xlu0 %535
        %537 = vadd.xlane.f32.xlu0 %v483
        %v538 = vpop.xlane.xlu0 %537
        %539 = vadd.xlane.f32.xlu0 %v484
        %v540 = vpop.xlane.xlu0 %539
        %541 = vadd.xlane.f32.xlu0 %v485
        %v542 = vpop.xlane.xlu0 %541
        %543 = vadd.xlane.f32.xlu0 %v486
        %v544 = vpop.xlane.xlu0 %543
        %545 = vadd.xlane.f32.xlu0 %v487
        %v546 = vpop.xlane.xlu0 %545
        %547 = vadd.xlane.f32.xlu0 %v488
        %v548 = vpop.xlane.xlu0 %547
        %549 = vadd.xlane.f32.xlu0 %v489
        %v550 = vpop.xlane.xlu0 %549
        %551 = vadd.xlane.f32.xlu0 %v490
        %v552 = vpop.xlane.xlu0 %551
        %553 = vadd.xlane.f32.xlu0 %v491
        %v554 = vpop.xlane.xlu0 %553
        %555 = vadd.xlane.f32.xlu0 %v492
        %v556 = vpop.xlane.xlu0 %555
        %v557 = vmul.f32 %v494, %v396
        %v558 = vmul.f32 %v496, %v396
        %v559 = vmul.f32 %v498, %v396
        %v560 = vmul.f32 %v500, %v396
        %v561 = vmul.f32 %v502, %v396
        %v562 = vmul.f32 %v504, %v396
        %v563 = vmul.f32 %v506, %v396
        %v564 = vmul.f32 %v508, %v396
        %v565 = vmul.f32 %v510, %v396
        %v566 = vmul.f32 %v512, %v396
        %v567 = vmul.f32 %v514, %v396
        %v568 = vmul.f32 %v516, %v396
        %v569 = vmul.f32 %v518, %v396
        %v570 = vmul.f32 %v520, %v396
        %v571 = vmul.f32 %v522, %v396
        %v572 = vmul.f32 %v524, %v396
        %v573 = vmul.f32 %v526, %v396
        %v574 = vmul.f32 %v528, %v396
        %v575 = vmul.f32 %v530, %v396
        %v576 = vmul.f32 %v532, %v396
        %v577 = vmul.f32 %v534, %v396
        %v578 = vmul.f32 %v536, %v396
        %v579 = vmul.f32 %v538, %v396
        %v580 = vmul.f32 %v540, %v396
        %v581 = vmul.f32 %v542, %v396
        %v582 = vmul.f32 %v544, %v396
        %v583 = vmul.f32 %v546, %v396
        %v584 = vmul.f32 %v548, %v396
        %v585 = vmul.f32 %v550, %v396
        %v586 = vmul.f32 %v552, %v396
        %v587 = vmul.f32 %v554, %v396
        %v588 = vmul.f32 %v556, %v396
        %v589 = vadd.f32 %v557, 1e-05
        %v590 = vadd.f32 %v558, 1e-05
        %v591 = vadd.f32 %v559, 1e-05
        %v592 = vadd.f32 %v560, 1e-05
        %v593 = vadd.f32 %v561, 1e-05
        %v594 = vadd.f32 %v562, 1e-05
        %v595 = vadd.f32 %v563, 1e-05
        %v596 = vadd.f32 %v564, 1e-05
        %v597 = vadd.f32 %v565, 1e-05
        %v598 = vadd.f32 %v566, 1e-05
        %v599 = vadd.f32 %v567, 1e-05
        %v600 = vadd.f32 %v568, 1e-05
        %v601 = vadd.f32 %v569, 1e-05
        %v602 = vadd.f32 %v570, 1e-05
        %v603 = vadd.f32 %v571, 1e-05
        %v604 = vadd.f32 %v572, 1e-05
        %v605 = vadd.f32 %v573, 1e-05
        %v606 = vadd.f32 %v574, 1e-05
        %v607 = vadd.f32 %v575, 1e-05
        %v608 = vadd.f32 %v576, 1e-05
        %v609 = vadd.f32 %v577, 1e-05
        %v610 = vadd.f32 %v578, 1e-05
        %v611 = vadd.f32 %v579, 1e-05
        %v612 = vadd.f32 %v580, 1e-05
        %v613 = vadd.f32 %v581, 1e-05
        %v614 = vadd.f32 %v582, 1e-05
        %v615 = vadd.f32 %v583, 1e-05
        %v616 = vadd.f32 %v584, 1e-05
        %v617 = vadd.f32 %v585, 1e-05
        %v618 = vadd.f32 %v586, 1e-05
        %v619 = vadd.f32 %v587, 1e-05
        %v620 = vadd.f32 %v588, 1e-05
        %v621 = vrsqrt.pop %v589
        %v622 = vmul.f32 %v621, %v589
        %v623 = vmul.f32 %v622, %v621
        %v624 = vmul.f32 0.5, %v623
        %v625 = vsub.f32 1.5, %v624
        %v626 = vmul.f32 %v621, %v625
        %vm627 = vweird.f32 %v589
        %vm628 = vweird.f32 %v621
        %vm629 = vmor %vm627, %vm628
        %v630 = vsel %vm629, %v621, %v626
        %v631 = vrsqrt.pop %v590
        %v632 = vmul.f32 %v631, %v590
        %v633 = vmul.f32 %v632, %v631
        %v634 = vmul.f32 0.5, %v633
        %v635 = vsub.f32 1.5, %v634
        %v636 = vmul.f32 %v631, %v635
        %vm637 = vweird.f32 %v590
        %vm638 = vweird.f32 %v631
        %vm639 = vmor %vm637, %vm638
        %v640 = vsel %vm639, %v631, %v636
        %v641 = vrsqrt.pop %v591
        %v642 = vmul.f32 %v641, %v591
        %v643 = vmul.f32 %v642, %v641
        %v644 = vmul.f32 0.5, %v643
        %v645 = vsub.f32 1.5, %v644
        %v646 = vmul.f32 %v641, %v645
        %vm647 = vweird.f32 %v591
        %vm648 = vweird.f32 %v641
        %vm649 = vmor %vm647, %vm648
        %v650 = vsel %vm649, %v641, %v646
        %v651 = vrsqrt.pop %v592
        %v652 = vmul.f32 %v651, %v592
        %v653 = vmul.f32 %v652, %v651
        %v654 = vmul.f32 0.5, %v653
        %v655 = vsub.f32 1.5, %v654
        %v656 = vmul.f32 %v651, %v655
        %vm657 = vweird.f32 %v592
        %vm658 = vweird.f32 %v651
        %vm659 = vmor %vm657, %vm658
        %v660 = vsel %vm659, %v651, %v656
        %v661 = vrsqrt.pop %v593
        %v662 = vmul.f32 %v661, %v593
        %v663 = vmul.f32 %v662, %v661
        %v664 = vmul.f32 0.5, %v663
        %v665 = vsub.f32 1.5, %v664
        %v666 = vmul.f32 %v661, %v665
        %vm667 = vweird.f32 %v593
        %vm668 = vweird.f32 %v661
        %vm669 = vmor %vm667, %vm668
        %v670 = vsel %vm669, %v661, %v666
        %v671 = vrsqrt.pop %v594
        %v672 = vmul.f32 %v671, %v594
        %v673 = vmul.f32 %v672, %v671
        %v674 = vmul.f32 0.5, %v673
        %v675 = vsub.f32 1.5, %v674
        %v676 = vmul.f32 %v671, %v675
        %vm677 = vweird.f32 %v594
        %vm678 = vweird.f32 %v671
        %vm679 = vmor %vm677, %vm678
        %v680 = vsel %vm679, %v671, %v676
        %v681 = vrsqrt.pop %v595
        %v682 = vmul.f32 %v681, %v595
        %v683 = vmul.f32 %v682, %v681
        %v684 = vmul.f32 0.5, %v683
        %v685 = vsub.f32 1.5, %v684
        %v686 = vmul.f32 %v681, %v685
        %vm687 = vweird.f32 %v595
        %vm688 = vweird.f32 %v681
        %vm689 = vmor %vm687, %vm688
        %v690 = vsel %vm689, %v681, %v686
        %v691 = vrsqrt.pop %v596
        %v692 = vmul.f32 %v691, %v596
        %v693 = vmul.f32 %v692, %v691
        %v694 = vmul.f32 0.5, %v693
        %v695 = vsub.f32 1.5, %v694
        %v696 = vmul.f32 %v691, %v695
        %vm697 = vweird.f32 %v596
        %vm698 = vweird.f32 %v691
        %vm699 = vmor %vm697, %vm698
        %v700 = vsel %vm699, %v691, %v696
        %v701 = vrsqrt.pop %v597
        %v702 = vmul.f32 %v701, %v597
        %v703 = vmul.f32 %v702, %v701
        %v704 = vmul.f32 0.5, %v703
        %v705 = vsub.f32 1.5, %v704
        %v706 = vmul.f32 %v701, %v705
        %vm707 = vweird.f32 %v597
        %vm708 = vweird.f32 %v701
        %vm709 = vmor %vm707, %vm708
        %v710 = vsel %vm709, %v701, %v706
        %v711 = vrsqrt.pop %v598
        %v712 = vmul.f32 %v711, %v598
        %v713 = vmul.f32 %v712, %v711
        %v714 = vmul.f32 0.5, %v713
        %v715 = vsub.f32 1.5, %v714
        %v716 = vmul.f32 %v711, %v715
        %vm717 = vweird.f32 %v598
        %vm718 = vweird.f32 %v711
        %vm719 = vmor %vm717, %vm718
        %v720 = vsel %vm719, %v711, %v716
        %v721 = vrsqrt.pop %v599
        %v722 = vmul.f32 %v721, %v599
        %v723 = vmul.f32 %v722, %v721
        %v724 = vmul.f32 0.5, %v723
        %v725 = vsub.f32 1.5, %v724
        %v726 = vmul.f32 %v721, %v725
        %vm727 = vweird.f32 %v599
        %vm728 = vweird.f32 %v721
        %vm729 = vmor %vm727, %vm728
        %v730 = vsel %vm729, %v721, %v726
        %v731 = vrsqrt.pop %v600
        %v732 = vmul.f32 %v731, %v600
        %v733 = vmul.f32 %v732, %v731
        %v734 = vmul.f32 0.5, %v733
        %v735 = vsub.f32 1.5, %v734
        %v736 = vmul.f32 %v731, %v735
        %vm737 = vweird.f32 %v600
        %vm738 = vweird.f32 %v731
        %vm739 = vmor %vm737, %vm738
        %v740 = vsel %vm739, %v731, %v736
        %v741 = vrsqrt.pop %v601
        %v742 = vmul.f32 %v741, %v601
        %v743 = vmul.f32 %v742, %v741
        %v744 = vmul.f32 0.5, %v743
        %v745 = vsub.f32 1.5, %v744
        %v746 = vmul.f32 %v741, %v745
        %vm747 = vweird.f32 %v601
        %vm748 = vweird.f32 %v741
        %vm749 = vmor %vm747, %vm748
        %v750 = vsel %vm749, %v741, %v746
        %v751 = vrsqrt.pop %v602
        %v752 = vmul.f32 %v751, %v602
        %v753 = vmul.f32 %v752, %v751
        %v754 = vmul.f32 0.5, %v753
        %v755 = vsub.f32 1.5, %v754
        %v756 = vmul.f32 %v751, %v755
        %vm757 = vweird.f32 %v602
        %vm758 = vweird.f32 %v751
        %vm759 = vmor %vm757, %vm758
        %v760 = vsel %vm759, %v751, %v756
        %v761 = vrsqrt.pop %v603
        %v762 = vmul.f32 %v761, %v603
        %v763 = vmul.f32 %v762, %v761
        %v764 = vmul.f32 0.5, %v763
        %v765 = vsub.f32 1.5, %v764
        %v766 = vmul.f32 %v761, %v765
        %vm767 = vweird.f32 %v603
        %vm768 = vweird.f32 %v761
        %vm769 = vmor %vm767, %vm768
        %v770 = vsel %vm769, %v761, %v766
        %v771 = vrsqrt.pop %v604
        %v772 = vmul.f32 %v771, %v604
        %v773 = vmul.f32 %v772, %v771
        %v774 = vmul.f32 0.5, %v773
        %v775 = vsub.f32 1.5, %v774
        %v776 = vmul.f32 %v771, %v775
        %vm777 = vweird.f32 %v604
        %vm778 = vweird.f32 %v771
        %vm779 = vmor %vm777, %vm778
        %v780 = vsel %vm779, %v771, %v776
        %v781 = vrsqrt.pop %v605
        %v782 = vmul.f32 %v781, %v605
        %v783 = vmul.f32 %v782, %v781
        %v784 = vmul.f32 0.5, %v783
        %v785 = vsub.f32 1.5, %v784
        %v786 = vmul.f32 %v781, %v785
        %vm787 = vweird.f32 %v605
        %vm788 = vweird.f32 %v781
        %vm789 = vmor %vm787, %vm788
        %v790 = vsel %vm789, %v781, %v786
        %v791 = vrsqrt.pop %v606
        %v792 = vmul.f32 %v791, %v606
        %v793 = vmul.f32 %v792, %v791
        %v794 = vmul.f32 0.5, %v793
        %v795 = vsub.f32 1.5, %v794
        %v796 = vmul.f32 %v791, %v795
        %vm797 = vweird.f32 %v606
        %vm798 = vweird.f32 %v791
        %vm799 = vmor %vm797, %vm798
        %v800 = vsel %vm799, %v791, %v796
        %v801 = vrsqrt.pop %v607
        %v802 = vmul.f32 %v801, %v607
        %v803 = vmul.f32 %v802, %v801
        %v804 = vmul.f32 0.5, %v803
        %v805 = vsub.f32 1.5, %v804
        %v806 = vmul.f32 %v801, %v805
        %vm807 = vweird.f32 %v607
        %vm808 = vweird.f32 %v801
        %vm809 = vmor %vm807, %vm808
        %v810 = vsel %vm809, %v801, %v806
        %v811 = vrsqrt.pop %v608
        %v812 = vmul.f32 %v811, %v608
        %v813 = vmul.f32 %v812, %v811
        %v814 = vmul.f32 0.5, %v813
        %v815 = vsub.f32 1.5, %v814
        %v816 = vmul.f32 %v811, %v815
        %vm817 = vweird.f32 %v608
        %vm818 = vweird.f32 %v811
        %vm819 = vmor %vm817, %vm818
        %v820 = vsel %vm819, %v811, %v816
        %v821 = vrsqrt.pop %v609
        %v822 = vmul.f32 %v821, %v609
        %v823 = vmul.f32 %v822, %v821
        %v824 = vmul.f32 0.5, %v823
        %v825 = vsub.f32 1.5, %v824
        %v826 = vmul.f32 %v821, %v825
        %vm827 = vweird.f32 %v609
        %vm828 = vweird.f32 %v821
        %vm829 = vmor %vm827, %vm828
        %v830 = vsel %vm829, %v821, %v826
        %v831 = vrsqrt.pop %v610
        %v832 = vmul.f32 %v831, %v610
        %v833 = vmul.f32 %v832, %v831
        %v834 = vmul.f32 0.5, %v833
        %v835 = vsub.f32 1.5, %v834
        %v836 = vmul.f32 %v831, %v835
        %vm837 = vweird.f32 %v610
        %vm838 = vweird.f32 %v831
        %vm839 = vmor %vm837, %vm838
        %v840 = vsel %vm839, %v831, %v836
        %v841 = vrsqrt.pop %v611
        %v842 = vmul.f32 %v841, %v611
        %v843 = vmul.f32 %v842, %v841
        %v844 = vmul.f32 0.5, %v843
        %v845 = vsub.f32 1.5, %v844
        %v846 = vmul.f32 %v841, %v845
        %vm847 = vweird.f32 %v611
        %vm848 = vweird.f32 %v841
        %vm849 = vmor %vm847, %vm848
        %v850 = vsel %vm849, %v841, %v846
        %v851 = vrsqrt.pop %v612
        %v852 = vmul.f32 %v851, %v612
        %v853 = vmul.f32 %v852, %v851
        %v854 = vmul.f32 0.5, %v853
        %v855 = vsub.f32 1.5, %v854
        %v856 = vmul.f32 %v851, %v855
        %vm857 = vweird.f32 %v612
        %vm858 = vweird.f32 %v851
        %vm859 = vmor %vm857, %vm858
        %v860 = vsel %vm859, %v851, %v856
        %v861 = vrsqrt.pop %v613
        %v862 = vmul.f32 %v861, %v613
        %v863 = vmul.f32 %v862, %v861
        %v864 = vmul.f32 0.5, %v863
        %v865 = vsub.f32 1.5, %v864
        %v866 = vmul.f32 %v861, %v865
        %vm867 = vweird.f32 %v613
        %vm868 = vweird.f32 %v861
        %vm869 = vmor %vm867, %vm868
        %v870 = vsel %vm869, %v861, %v866
        %v871 = vrsqrt.pop %v614
        %v872 = vmul.f32 %v871, %v614
        %v873 = vmul.f32 %v872, %v871
        %v874 = vmul.f32 0.5, %v873
        %v875 = vsub.f32 1.5, %v874
        %v876 = vmul.f32 %v871, %v875
        %vm877 = vweird.f32 %v614
        %vm878 = vweird.f32 %v871
        %vm879 = vmor %vm877, %vm878
        %v880 = vsel %vm879, %v871, %v876
        %v881 = vrsqrt.pop %v615
        %v882 = vmul.f32 %v881, %v615
        %v883 = vmul.f32 %v882, %v881
        %v884 = vmul.f32 0.5, %v883
        %v885 = vsub.f32 1.5, %v884
        %v886 = vmul.f32 %v881, %v885
        %vm887 = vweird.f32 %v615
        %vm888 = vweird.f32 %v881
        %vm889 = vmor %vm887, %vm888
        %v890 = vsel %vm889, %v881, %v886
        %v891 = vrsqrt.pop %v616
        %v892 = vmul.f32 %v891, %v616
        %v893 = vmul.f32 %v892, %v891
        %v894 = vmul.f32 0.5, %v893
        %v895 = vsub.f32 1.5, %v894
        %v896 = vmul.f32 %v891, %v895
        %vm897 = vweird.f32 %v616
        %vm898 = vweird.f32 %v891
        %vm899 = vmor %vm897, %vm898
        %v900 = vsel %vm899, %v891, %v896
        %v901 = vrsqrt.pop %v617
        %v902 = vmul.f32 %v901, %v617
        %v903 = vmul.f32 %v902, %v901
        %v904 = vmul.f32 0.5, %v903
        %v905 = vsub.f32 1.5, %v904
        %v906 = vmul.f32 %v901, %v905
        %vm907 = vweird.f32 %v617
        %vm908 = vweird.f32 %v901
        %vm909 = vmor %vm907, %vm908
        %v910 = vsel %vm909, %v901, %v906
        %v911 = vrsqrt.pop %v618
        %v912 = vmul.f32 %v911, %v618
        %v913 = vmul.f32 %v912, %v911
        %v914 = vmul.f32 0.5, %v913
        %v915 = vsub.f32 1.5, %v914
        %v916 = vmul.f32 %v911, %v915
        %vm917 = vweird.f32 %v618
        %vm918 = vweird.f32 %v911
        %vm919 = vmor %vm917, %vm918
        %v920 = vsel %vm919, %v911, %v916
        %v921 = vrsqrt.pop %v619
        %v922 = vmul.f32 %v921, %v619
        %v923 = vmul.f32 %v922, %v921
        %v924 = vmul.f32 0.5, %v923
        %v925 = vsub.f32 1.5, %v924
        %v926 = vmul.f32 %v921, %v925
        %vm927 = vweird.f32 %v619
        %vm928 = vweird.f32 %v921
        %vm929 = vmor %vm927, %vm928
        %v930 = vsel %vm929, %v921, %v926
        %v931 = vrsqrt.pop %v620
        %v932 = vmul.f32 %v931, %v620
        %v933 = vmul.f32 %v932, %v931
        %v934 = vmul.f32 0.5, %v933
        %v935 = vsub.f32 1.5, %v934
        %v936 = vmul.f32 %v931, %v935
        %vm937 = vweird.f32 %v620
        %vm938 = vweird.f32 %v931
        %vm939 = vmor %vm937, %vm938
        %v940 = vsel %vm939, %v931, %v936
        %v941 = vmul.f32 %v429, %v630
        %v942 = vmul.f32 %v430, %v640
        %v943 = vmul.f32 %v431, %v650
        %v944 = vmul.f32 %v432, %v660
        %v945 = vmul.f32 %v433, %v670
        %v946 = vmul.f32 %v434, %v680
        %v947 = vmul.f32 %v435, %v690
        %v948 = vmul.f32 %v436, %v700
        %v949 = vmul.f32 %v437, %v710
        %v950 = vmul.f32 %v438, %v720
        %v951 = vmul.f32 %v439, %v730
        %v952 = vmul.f32 %v440, %v740
        %v953 = vmul.f32 %v441, %v750
        %v954 = vmul.f32 %v442, %v760
        %v955 = vmul.f32 %v443, %v770
        %v956 = vmul.f32 %v444, %v780
        %v957 = vmul.f32 %v445, %v790
        %v958 = vmul.f32 %v446, %v800
        %v959 = vmul.f32 %v447, %v810
        %v960 = vmul.f32 %v448, %v820
        %v961 = vmul.f32 %v449, %v830
        %v962 = vmul.f32 %v450, %v840
        %v963 = vmul.f32 %v451, %v850
        %v964 = vmul.f32 %v452, %v860
        %v965 = vmul.f32 %v453, %v870
        %v966 = vmul.f32 %v454, %v880
        %v967 = vmul.f32 %v455, %v890
        %v968 = vmul.f32 %v456, %v900
        %v969 = vmul.f32 %v457, %v910
        %v970 = vmul.f32 %v458, %v920
        %v971 = vmul.f32 %v459, %v930
        %v972 = vmul.f32 %v460, %v940
        %v974 = vperm.slane %v324, 0
        %v976 = vmul.f32 %v941, %v974
        %v977 = vmul.f32 %v942, %v974
        %v978 = vmul.f32 %v943, %v974
        %v979 = vmul.f32 %v944, %v974
        %v980 = vmul.f32 %v945, %v974
        %v981 = vmul.f32 %v946, %v974
        %v982 = vmul.f32 %v947, %v974
        %v983 = vmul.f32 %v948, %v974
        %v984 = vmul.f32 %v949, %v974
        %v985 = vmul.f32 %v950, %v974
        %v986 = vmul.f32 %v951, %v974
        %v987 = vmul.f32 %v952, %v974
        %v988 = vmul.f32 %v953, %v974
        %v989 = vmul.f32 %v954, %v974
        %v990 = vmul.f32 %v955, %v974
        %v991 = vmul.f32 %v956, %v974
        %v992 = vmul.f32 %v957, %v974
        %v993 = vmul.f32 %v958, %v974
        %v994 = vmul.f32 %v959, %v974
        %v995 = vmul.f32 %v960, %v974
        %v996 = vmul.f32 %v961, %v974
        %v997 = vmul.f32 %v962, %v974
        %v998 = vmul.f32 %v963, %v974
        %v999 = vmul.f32 %v964, %v974
        %v1000 = vmul.f32 %v965, %v974
        %v1001 = vmul.f32 %v966, %v974
        %v1002 = vmul.f32 %v967, %v974
        %v1003 = vmul.f32 %v968, %v974
        %v1004 = vmul.f32 %v969, %v974
        %v1005 = vmul.f32 %v970, %v974
        %v1006 = vmul.f32 %v971, %v974
        %v1007 = vmul.f32 %v972, %v974
        %v1009 = vperm.slane %v325, 0
        %v1011 = vadd.f32 %v976, %v1009
        %v1012 = vadd.f32 %v977, %v1009
        %v1013 = vadd.f32 %v978, %v1009
        %v1014 = vadd.f32 %v979, %v1009
        %v1015 = vadd.f32 %v980, %v1009
        %v1016 = vadd.f32 %v981, %v1009
        %v1017 = vadd.f32 %v982, %v1009
        %v1018 = vadd.f32 %v983, %v1009
        %v1019 = vadd.f32 %v984, %v1009
        %v1020 = vadd.f32 %v985, %v1009
        %v1021 = vadd.f32 %v986, %v1009
        %v1022 = vadd.f32 %v987, %v1009
        %v1023 = vadd.f32 %v988, %v1009
        %v1024 = vadd.f32 %v989, %v1009
        %v1025 = vadd.f32 %v990, %v1009
        %v1026 = vadd.f32 %v991, %v1009
        %v1027 = vadd.f32 %v992, %v1009
        %v1028 = vadd.f32 %v993, %v1009
        %v1029 = vadd.f32 %v994, %v1009
        %v1030 = vadd.f32 %v995, %v1009
        %v1031 = vadd.f32 %v996, %v1009
        %v1032 = vadd.f32 %v997, %v1009
        %v1033 = vadd.f32 %v998, %v1009
        %v1034 = vadd.f32 %v999, %v1009
        %v1035 = vadd.f32 %v1000, %v1009
        %v1036 = vadd.f32 %v1001, %v1009
        %v1037 = vadd.f32 %v1002, %v1009
        %v1038 = vadd.f32 %v1003, %v1009
        %v1039 = vadd.f32 %v1004, %v1009
        %v1040 = vadd.f32 %v1005, %v1009
        %v1041 = vadd.f32 %v1006, %v1009
        %v1042 = vadd.f32 %v1007, %v1009
        %v1043 = vpack.c.bf16 %v1012, %v1011
        %v1044 = vpack.c.bf16 %v1014, %v1013
        %v1045 = vpack.c.bf16 %v1016, %v1015
        %v1046 = vpack.c.bf16 %v1018, %v1017
        %v1047 = vpack.c.bf16 %v1020, %v1019
        %v1048 = vpack.c.bf16 %v1022, %v1021
        %v1049 = vpack.c.bf16 %v1024, %v1023
        %v1050 = vpack.c.bf16 %v1026, %v1025
        %v1051 = vpack.c.bf16 %v1028, %v1027
        %v1052 = vpack.c.bf16 %v1030, %v1029
        %v1053 = vpack.c.bf16 %v1032, %v1031
        %v1054 = vpack.c.bf16 %v1034, %v1033
        %v1055 = vpack.c.bf16 %v1036, %v1035
        %v1056 = vpack.c.bf16 %v1038, %v1037
        %v1057 = vpack.c.bf16 %v1040, %v1039
        %v1058 = vpack.c.bf16 %v1042, %v1041
        %v1059 = vld [vmem:[#allocation4] sm:$0xf]
        %v1060 = vld [vmem:[#allocation4 + $0x4] sm:$0xf]
        %v1061 = vld [vmem:[#allocation4 + $0x8] sm:$0xf]
        %v1062 = vld [vmem:[#allocation4 + $0xc] sm:$0xf]
        %v1063 = vld [vmem:[#allocation4 + $0x10] sm:$0xf]
        %v1064 = vld [vmem:[#allocation4 + $0x14] sm:$0xf]
        %v1065 = vld [vmem:[#allocation4 + $0x18] sm:$0xf]
        %v1066 = vld [vmem:[#allocation4 + $0x1c] sm:$0xf]
        %v1067 = vld [vmem:[#allocation4 + $0x20] sm:$0xf]
        %v1068 = vld [vmem:[#allocation4 + $0x24] sm:$0xf]
        %v1069 = vld [vmem:[#allocation4 + $0x28] sm:$0xf]
        %v1070 = vld [vmem:[#allocation4 + $0x2c] sm:$0xf]
        %v1071 = vld [vmem:[#allocation4 + $0x30] sm:$0xf]
        %v1072 = vld [vmem:[#allocation4 + $0x34] sm:$0xf]
        %v1073 = vld [vmem:[#allocation4 + $0x38] sm:$0xf]
        %v1074 = vld [vmem:[#allocation4 + $0x3c] sm:$0xf]
        %v1075 = vld [vmem:[%s4] sm:$0x1]
        %v1077 = vperm.slane %v1075, 0
        %v1095 = vunpack.c.l.b16 %v1059
        %v1096 = vunpack.c.l.b16 %v1060
        %v1097 = vunpack.c.l.b16 %v1061
        %v1098 = vunpack.c.l.b16 %v1062
        %v1099 = vunpack.c.l.b16 %v1063
        %v1100 = vunpack.c.l.b16 %v1064
        %v1101 = vunpack.c.l.b16 %v1065
        %v1102 = vunpack.c.l.b16 %v1066
        %v1103 = vunpack.c.l.b16 %v1067
        %v1104 = vunpack.c.l.b16 %v1068
        %v1105 = vunpack.c.l.b16 %v1069
        %v1106 = vunpack.c.l.b16 %v1070
        %v1107 = vunpack.c.l.b16 %v1071
        %v1108 = vunpack.c.l.b16 %v1072
        %v1109 = vunpack.c.l.b16 %v1073
        %v1110 = vunpack.c.l.b16 %v1074
        %v1111 = vpack.c.b16 %v1096, %v1095
        %v1112 = vpack.c.b16 %v1098, %v1097
        %v1113 = vpack.c.b16 %v1100, %v1099
        %v1114 = vpack.c.b16 %v1102, %v1101
        %v1115 = vpack.c.b16 %v1104, %v1103
        %v1116 = vpack.c.b16 %v1106, %v1105
        %v1117 = vpack.c.b16 %v1108, %v1107
        %v1118 = vpack.c.b16 %v1110, %v1109
        %1127 = vmatpush.bf16.msra.mxu0 %v1118
        %1128 = vmatpush.bf16.msra.mxu0 %v1117
        %1129 = vmatpush.bf16.msra.mxu0 %v1116
        %1130 = vmatpush.bf16.msra.mxu0 %v1115
        %1131 = vmatpush.bf16.msra.mxu0 %v1114
        %1132 = vmatpush.bf16.msra.mxu0 %v1113
        %1133 = vmatpush.bf16.msra.mxu0 %v1112
        %1134 = vmatpush.bf16.msra.mxu0 %v1111
        %1135 = vmatmul.bf16.gmra.mxu0 %v1043
        %v1136 = vpop.f32.mrf.mxu0
        %v1137 = vadd.f32 %v1077, %v1136
        %v1138 = vpop.f32.mrf.mxu0
        %v1139 = vadd.f32 %v1077, %v1138
        %1140 = vmatmul.bf16.gmra.mxu0 %v1044
        %v1141 = vpop.f32.mrf.mxu0
        %v1142 = vadd.f32 %v1077, %v1141
        %v1143 = vpop.f32.mrf.mxu0
        %v1144 = vadd.f32 %v1077, %v1143
        %1145 = vmatmul.bf16.gmra.mxu0 %v1045
        %v1146 = vpop.f32.mrf.mxu0
        %v1147 = vadd.f32 %v1077, %v1146
        %v1148 = vpop.f32.mrf.mxu0
        %v1149 = vadd.f32 %v1077, %v1148
        %1150 = vmatmul.bf16.gmra.mxu0 %v1046
        %v1151 = vpop.f32.mrf.mxu0
        %v1152 = vadd.f32 %v1077, %v1151
        %v1153 = vpop.f32.mrf.mxu0
        %v1154 = vadd.f32 %v1077, %v1153
        %1155 = vmatmul.bf16.gmra.mxu0 %v1047
        %v1156 = vpop.f32.mrf.mxu0
        %v1157 = vadd.f32 %v1077, %v1156
        %v1158 = vpop.f32.mrf.mxu0
        %v1159 = vadd.f32 %v1077, %v1158
        %1160 = vmatmul.bf16.gmra.mxu0 %v1048
        %v1161 = vpop.f32.mrf.mxu0
        %v1162 = vadd.f32 %v1077, %v1161
        %v1163 = vpop.f32.mrf.mxu0
        %v1164 = vadd.f32 %v1077, %v1163
        %1165 = vmatmul.bf16.gmra.mxu0 %v1049
        %v1166 = vpop.f32.mrf.mxu0
        %v1167 = vadd.f32 %v1077, %v1166
        %v1168 = vpop.f32.mrf.mxu0
        %v1169 = vadd.f32 %v1077, %v1168
        %1170 = vmatmul.bf16.gmra.mxu0 %v1050
        %v1171 = vpop.f32.mrf.mxu0
        %v1172 = vadd.f32 %v1077, %v1171
        %v1173 = vpop.f32.mrf.mxu0
        %v1174 = vadd.f32 %v1077, %v1173
        %1175 = vmatmul.bf16.gmra.mxu0 %v1051
        %v1176 = vpop.f32.mrf.mxu0
        %v1177 = vadd.f32 %v1077, %v1176
        %v1178 = vpop.f32.mrf.mxu0
        %v1179 = vadd.f32 %v1077, %v1178
        %1180 = vmatmul.bf16.gmra.mxu0 %v1052
        %v1181 = vpop.f32.mrf.mxu0
        %v1182 = vadd.f32 %v1077, %v1181
        %v1183 = vpop.f32.mrf.mxu0
        %v1184 = vadd.f32 %v1077, %v1183
        %1185 = vmatmul.bf16.gmra.mxu0 %v1053
        %v1186 = vpop.f32.mrf.mxu0
        %v1187 = vadd.f32 %v1077, %v1186
        %v1188 = vpop.f32.mrf.mxu0
        %v1189 = vadd.f32 %v1077, %v1188
        %1190 = vmatmul.bf16.gmra.mxu0 %v1054
        %v1191 = vpop.f32.mrf.mxu0
        %v1192 = vadd.f32 %v1077, %v1191
        %v1193 = vpop.f32.mrf.mxu0
        %v1194 = vadd.f32 %v1077, %v1193
        %1195 = vmatmul.bf16.gmra.mxu0 %v1055
        %v1196 = vpop.f32.mrf.mxu0
        %v1197 = vadd.f32 %v1077, %v1196
        %v1198 = vpop.f32.mrf.mxu0
        %v1199 = vadd.f32 %v1077, %v1198
        %1200 = vmatmul.bf16.gmra.mxu0 %v1056
        %v1201 = vpop.f32.mrf.mxu0
        %v1202 = vadd.f32 %v1077, %v1201
        %v1203 = vpop.f32.mrf.mxu0
        %v1204 = vadd.f32 %v1077, %v1203
        %1205 = vmatmul.bf16.gmra.mxu0 %v1057
        %v1206 = vpop.f32.mrf.mxu0
        %v1207 = vadd.f32 %v1077, %v1206
        %v1208 = vpop.f32.mrf.mxu0
        %v1209 = vadd.f32 %v1077, %v1208
        %1210 = vmatmul.bf16.gmra.mxu0 %v1058
        %v1211 = vpop.f32.mrf.mxu0
        %v1212 = vadd.f32 %v1077, %v1211
        %v1213 = vpop.f32.mrf.mxu0
        %v1214 = vadd.f32 %v1077, %v1213
        %1215 = vdwg.mxu0
        %vm1216 = vcmask 31744
        %v1217 = vsel %vm1216, %v1137, -inf
        %v1218 = vsel %vm1216, %v1142, -inf
        %v1219 = vsel %vm1216, %v1147, -inf
        %v1220 = vmax.f32 %v1217, %v1219
        %v1221 = vsel %vm1216, %v1152, -inf
        %v1222 = vmax.f32 %v1218, %v1221
        %v1223 = vsel %vm1216, %v1157, -inf
        %v1224 = vmax.f32 %v1220, %v1223
        %v1225 = vsel %vm1216, %v1162, -inf
        %v1226 = vmax.f32 %v1222, %v1225
        %v1227 = vsel %vm1216, %v1167, -inf
        %v1228 = vmax.f32 %v1224, %v1227
        %v1229 = vsel %vm1216, %v1172, -inf
        %v1230 = vmax.f32 %v1226, %v1229
        %v1231 = vsel %vm1216, %v1177, -inf
        %v1232 = vmax.f32 %v1228, %v1231
        %v1233 = vsel %vm1216, %v1182, -inf
        %v1234 = vmax.f32 %v1230, %v1233
        %v1235 = vsel %vm1216, %v1187, -inf
        %v1236 = vmax.f32 %v1232, %v1235
        %v1237 = vsel %vm1216, %v1192, -inf
        %v1238 = vmax.f32 %v1234, %v1237
        %v1239 = vsel %vm1216, %v1197, -inf
        %v1240 = vmax.f32 %v1236, %v1239
        %v1241 = vsel %vm1216, %v1202, -inf
        %v1242 = vmax.f32 %v1238, %v1241
        %v1243 = vsel %vm1216, %v1207, -inf
        %v1244 = vmax.f32 %v1240, %v1243
        %v1245 = vsel %vm1216, %v1212, -inf
        %v1246 = vmax.f32 %v1242, %v1245
        %v1247 = vmax.f32 %v1244, %v1246
        %v1248 = vsel %vm1216, %v1139, -inf
        %v1249 = vsel %vm1216, %v1144, -inf
        %v1250 = vsel %vm1216, %v1149, -inf
        %v1251 = vmax.f32 %v1248, %v1250
        %v1252 = vsel %vm1216, %v1154, -inf
        %v1253 = vmax.f32 %v1249, %v1252
        %v1254 = vsel %vm1216, %v1159, -inf
        %v1255 = vmax.f32 %v1251, %v1254
        %v1256 = vsel %vm1216, %v1164, -inf
        %v1257 = vmax.f32 %v1253, %v1256
        %v1258 = vsel %vm1216, %v1169, -inf
        %v1259 = vmax.f32 %v1255, %v1258
        %v1260 = vsel %vm1216, %v1174, -inf
        %v1261 = vmax.f32 %v1257, %v1260
        %v1262 = vsel %vm1216, %v1179, -inf
        %v1263 = vmax.f32 %v1259, %v1262
        %v1264 = vsel %vm1216, %v1184, -inf
        %v1265 = vmax.f32 %v1261, %v1264
        %v1266 = vsel %vm1216, %v1189, -inf
        %v1267 = vmax.f32 %v1263, %v1266
        %v1268 = vsel %vm1216, %v1194, -inf
        %v1269 = vmax.f32 %v1265, %v1268
        %v1270 = vsel %vm1216, %v1199, -inf
        %v1271 = vmax.f32 %v1267, %v1270
        %v1272 = vsel %vm1216, %v1204, -inf
        %v1273 = vmax.f32 %v1269, %v1272
        %v1274 = vsel %vm1216, %v1209, -inf
        %v1275 = vmax.f32 %v1271, %v1274
        %v1276 = vsel %vm1216, %v1214, -inf
        %v1277 = vmax.f32 %v1273, %v1276
        %v1278 = vmax.f32 %v1275, %v1277
        %v1279 = vsub.f32 %v1137, %v1247
        %v1280 = vsub.f32 %v1139, %v1278
        %v1281 = vsub.f32 %v1142, %v1247
        %v1282 = vsub.f32 %v1144, %v1278
        %v1283 = vsub.f32 %v1147, %v1247
        %v1284 = vsub.f32 %v1149, %v1278
        %v1285 = vsub.f32 %v1152, %v1247
        %v1286 = vsub.f32 %v1154, %v1278
        %v1287 = vsub.f32 %v1157, %v1247
        %v1288 = vsub.f32 %v1159, %v1278
        %v1289 = vsub.f32 %v1162, %v1247
        %v1290 = vsub.f32 %v1164, %v1278
        %v1291 = vsub.f32 %v1167, %v1247
        %v1292 = vsub.f32 %v1169, %v1278
        %v1293 = vsub.f32 %v1172, %v1247
        %v1294 = vsub.f32 %v1174, %v1278
        %v1295 = vsub.f32 %v1177, %v1247
        %v1296 = vsub.f32 %v1179, %v1278
        %v1297 = vsub.f32 %v1182, %v1247
        %v1298 = vsub.f32 %v1184, %v1278
        %v1299 = vsub.f32 %v1187, %v1247
        %v1300 = vsub.f32 %v1189, %v1278
        %v1301 = vsub.f32 %v1192, %v1247
        %v1302 = vsub.f32 %v1194, %v1278
        %v1303 = vsub.f32 %v1197, %v1247
        %v1304 = vsub.f32 %v1199, %v1278
        %v1305 = vsub.f32 %v1202, %v1247
        %v1306 = vsub.f32 %v1204, %v1278
        %v1307 = vsub.f32 %v1207, %v1247
        %v1308 = vsub.f32 %v1209, %v1278
        %v1309 = vsub.f32 %v1212, %v1247
        %v1310 = vsub.f32 %v1214, %v1278
        %v1311 = vmul.f32 %v1279, 1.442695
        %v1312 = vpow.pop %v1311
        %v1313 = vmul.f32 %v1280, 1.442695
        %v1314 = vpow.pop %v1313
        %v1315 = vmul.f32 %v1281, 1.442695
        %v1316 = vpow.pop %v1315
        %v1317 = vmul.f32 %v1282, 1.442695
        %v1318 = vpow.pop %v1317
        %v1319 = vmul.f32 %v1283, 1.442695
        %v1320 = vpow.pop %v1319
        %v1321 = vmul.f32 %v1284, 1.442695
        %v1322 = vpow.pop %v1321
        %v1323 = vmul.f32 %v1285, 1.442695
        %v1324 = vpow.pop %v1323
        %v1325 = vmul.f32 %v1286, 1.442695
        %v1326 = vpow.pop %v1325
        %v1327 = vmul.f32 %v1287, 1.442695
        %v1328 = vpow.pop %v1327
        %v1329 = vmul.f32 %v1288, 1.442695
        %v1330 = vpow.pop %v1329
        %v1331 = vmul.f32 %v1289, 1.442695
        %v1332 = vpow.pop %v1331
        %v1333 = vmul.f32 %v1290, 1.442695
        %v1334 = vpow.pop %v1333
        %v1335 = vmul.f32 %v1291, 1.442695
        %v1336 = vpow.pop %v1335
        %v1337 = vmul.f32 %v1292, 1.442695
        %v1338 = vpow.pop %v1337
        %v1339 = vmul.f32 %v1293, 1.442695
        %v1340 = vpow.pop %v1339
        %v1341 = vmul.f32 %v1294, 1.442695
        %v1342 = vpow.pop %v1341
        %v1343 = vmul.f32 %v1295, 1.442695
        %v1344 = vpow.pop %v1343
        %v1345 = vmul.f32 %v1296, 1.442695
        %v1346 = vpow.pop %v1345
        %v1347 = vmul.f32 %v1297, 1.442695
        %v1348 = vpow.pop %v1347
        %v1349 = vmul.f32 %v1298, 1.442695
        %v1350 = vpow.pop %v1349
        %v1351 = vmul.f32 %v1299, 1.442695
        %v1352 = vpow.pop %v1351
        %v1353 = vmul.f32 %v1300, 1.442695
        %v1354 = vpow.pop %v1353
        %v1355 = vmul.f32 %v1301, 1.442695
        %v1356 = vpow.pop %v1355
        %v1357 = vmul.f32 %v1302, 1.442695
        %v1358 = vpow.pop %v1357
        %v1359 = vmul.f32 %v1303, 1.442695
        %v1360 = vpow.pop %v1359
        %v1361 = vmul.f32 %v1304, 1.442695
        %v1362 = vpow.pop %v1361
        %v1363 = vmul.f32 %v1305, 1.442695
        %v1364 = vpow.pop %v1363
        %v1365 = vmul.f32 %v1306, 1.442695
        %v1366 = vpow.pop %v1365
        %v1367 = vmul.f32 %v1307, 1.442695
        %v1368 = vpow.pop %v1367
        %v1369 = vmul.f32 %v1308, 1.442695
        %v1370 = vpow.pop %v1369
        %v1371 = vmul.f32 %v1309, 1.442695
        %v1372 = vpow.pop %v1371
        %v1373 = vmul.f32 %v1310, 1.442695
        %v1374 = vpow.pop %v1373
        %v1375 = vsel %vm1216, %v1312, 0.0
        %v1376 = vsel %vm1216, %v1316, 0.0
        %v1377 = vadd.f32 %v1375, %v1376
        %v1378 = vsel %vm1216, %v1320, 0.0
        %v1379 = vadd.f32 %v1377, %v1378
        %v1380 = vsel %vm1216, %v1324, 0.0
        %v1381 = vadd.f32 %v1379, %v1380
        %v1382 = vsel %vm1216, %v1328, 0.0
        %v1383 = vadd.f32 %v1381, %v1382
        %v1384 = vsel %vm1216, %v1332, 0.0
        %v1385 = vadd.f32 %v1383, %v1384
        %v1386 = vsel %vm1216, %v1336, 0.0
        %v1387 = vadd.f32 %v1385, %v1386
        %v1388 = vsel %vm1216, %v1340, 0.0
        %v1389 = vadd.f32 %v1387, %v1388
        %v1390 = vsel %vm1216, %v1344, 0.0
        %v1391 = vadd.f32 %v1389, %v1390
        %v1392 = vsel %vm1216, %v1348, 0.0
        %v1393 = vadd.f32 %v1391, %v1392
        %v1394 = vsel %vm1216, %v1352, 0.0
        %v1395 = vadd.f32 %v1393, %v1394
        %v1396 = vsel %vm1216, %v1356, 0.0
        %v1397 = vadd.f32 %v1395, %v1396
        %v1398 = vsel %vm1216, %v1360, 0.0
        %v1399 = vadd.f32 %v1397, %v1398
        %v1400 = vsel %vm1216, %v1364, 0.0
        %v1401 = vadd.f32 %v1399, %v1400
        %v1402 = vsel %vm1216, %v1368, 0.0
        %v1403 = vadd.f32 %v1401, %v1402
        %v1404 = vsel %vm1216, %v1372, 0.0
        %v1405 = vadd.f32 %v1403, %v1404
        %v1406 = vsel %vm1216, %v1314, 0.0
        %v1407 = vsel %vm1216, %v1318, 0.0
        %v1408 = vadd.f32 %v1406, %v1407
        %v1409 = vsel %vm1216, %v1322, 0.0
        %v1410 = vadd.f32 %v1408, %v1409
        %v1411 = vsel %vm1216, %v1326, 0.0
        %v1412 = vadd.f32 %v1410, %v1411
        %v1413 = vsel %vm1216, %v1330, 0.0
        %v1414 = vadd.f32 %v1412, %v1413
        %v1415 = vsel %vm1216, %v1334, 0.0
        %v1416 = vadd.f32 %v1414, %v1415
        %v1417 = vsel %vm1216, %v1338, 0.0
        %v1418 = vadd.f32 %v1416, %v1417
        %v1419 = vsel %vm1216, %v1342, 0.0
        %v1420 = vadd.f32 %v1418, %v1419
        %v1421 = vsel %vm1216, %v1346, 0.0
        %v1422 = vadd.f32 %v1420, %v1421
        %v1423 = vsel %vm1216, %v1350, 0.0
        %v1424 = vadd.f32 %v1422, %v1423
        %v1425 = vsel %vm1216, %v1354, 0.0
        %v1426 = vadd.f32 %v1424, %v1425
        %v1427 = vsel %vm1216, %v1358, 0.0
        %v1428 = vadd.f32 %v1426, %v1427
        %v1429 = vsel %vm1216, %v1362, 0.0
        %v1430 = vadd.f32 %v1428, %v1429
        %v1431 = vsel %vm1216, %v1366, 0.0
        %v1432 = vadd.f32 %v1430, %v1431
        %v1433 = vsel %vm1216, %v1370, 0.0
        %v1434 = vadd.f32 %v1432, %v1433
        %v1435 = vsel %vm1216, %v1374, 0.0
        %v1436 = vadd.f32 %v1434, %v1435
        %v1437 = vrcp.pop %v1405
        %v1438 = vrcp.pop %v1436
        %v1439 = vmul.f32 %v1312, %v1437
        %v1440 = vmul.f32 %v1314, %v1438
        %v1441 = vmul.f32 %v1316, %v1437
        %v1442 = vmul.f32 %v1318, %v1438
        %v1443 = vmul.f32 %v1320, %v1437
        %v1444 = vmul.f32 %v1322, %v1438
        %v1445 = vmul.f32 %v1324, %v1437
        %v1446 = vmul.f32 %v1326, %v1438
        %v1447 = vmul.f32 %v1328, %v1437
        %v1448 = vmul.f32 %v1330, %v1438
        %v1449 = vmul.f32 %v1332, %v1437
        %v1450 = vmul.f32 %v1334, %v1438
        %v1451 = vmul.f32 %v1336, %v1437
        %v1452 = vmul.f32 %v1338, %v1438
        %v1453 = vmul.f32 %v1340, %v1437
        %v1454 = vmul.f32 %v1342, %v1438
        %v1455 = vmul.f32 %v1344, %v1437
        %v1456 = vmul.f32 %v1346, %v1438
        %v1457 = vmul.f32 %v1348, %v1437
        %v1458 = vmul.f32 %v1350, %v1438
        %v1459 = vmul.f32 %v1352, %v1437
        %v1460 = vmul.f32 %v1354, %v1438
        %v1461 = vmul.f32 %v1356, %v1437
        %v1462 = vmul.f32 %v1358, %v1438
        %v1463 = vmul.f32 %v1360, %v1437
        %v1464 = vmul.f32 %v1362, %v1438
        %v1465 = vmul.f32 %v1364, %v1437
        %v1466 = vmul.f32 %v1366, %v1438
        %v1467 = vmul.f32 %v1368, %v1437
        %v1468 = vmul.f32 %v1370, %v1438
        %v1469 = vmul.f32 %v1372, %v1437
        %v1470 = vmul.f32 %v1374, %v1438
        %1503 = vset.pattern.permute.xlu0 0
        %1504 = vperm.xlu0 %1503, %v1439
        %v1505 = vpop.permute.xlu0 %1504
        %1506 = vset.pattern.permute.xlu0 0
        %1507 = vperm.xlu0 %1506, %v1440
        %v1508 = vpop.permute.xlu0 %1507
        %1509 = vset.pattern.permute.xlu0 0
        %1510 = vperm.xlu0 %1509, %v1441
        %v1511 = vpop.permute.xlu0 %1510
        %1512 = vset.pattern.permute.xlu0 0
        %1513 = vperm.xlu0 %1512, %v1442
        %v1514 = vpop.permute.xlu0 %1513
        %1515 = vset.pattern.permute.xlu0 0
        %1516 = vperm.xlu0 %1515, %v1443
        %v1517 = vpop.permute.xlu0 %1516
        %1518 = vset.pattern.permute.xlu0 0
        %1519 = vperm.xlu0 %1518, %v1444
        %v1520 = vpop.permute.xlu0 %1519
        %1521 = vset.pattern.permute.xlu0 0
        %1522 = vperm.xlu0 %1521, %v1445
        %v1523 = vpop.permute.xlu0 %1522
        %1524 = vset.pattern.permute.xlu0 0
        %1525 = vperm.xlu0 %1524, %v1446
        %v1526 = vpop.permute.xlu0 %1525
        %1527 = vset.pattern.permute.xlu0 0
        %1528 = vperm.xlu0 %1527, %v1447
        %v1529 = vpop.permute.xlu0 %1528
        %1530 = vset.pattern.permute.xlu0 0
        %1531 = vperm.xlu0 %1530, %v1448
        %v1532 = vpop.permute.xlu0 %1531
        %1533 = vset.pattern.permute.xlu0 0
        %1534 = vperm.xlu0 %1533, %v1449
        %v1535 = vpop.permute.xlu0 %1534
        %1536 = vset.pattern.permute.xlu0 0
        %1537 = vperm.xlu0 %1536, %v1450
        %v1538 = vpop.permute.xlu0 %1537
        %1539 = vset.pattern.permute.xlu0 0
        %1540 = vperm.xlu0 %1539, %v1451
        %v1541 = vpop.permute.xlu0 %1540
        %1542 = vset.pattern.permute.xlu0 0
        %1543 = vperm.xlu0 %1542, %v1452
        %v1544 = vpop.permute.xlu0 %1543
        %1545 = vset.pattern.permute.xlu0 0
        %1546 = vperm.xlu0 %1545, %v1453
        %v1547 = vpop.permute.xlu0 %1546
        %1548 = vset.pattern.permute.xlu0 0
        %1549 = vperm.xlu0 %1548, %v1454
        %v1550 = vpop.permute.xlu0 %1549
        %1551 = vset.pattern.permute.xlu0 0
        %1552 = vperm.xlu0 %1551, %v1455
        %v1553 = vpop.permute.xlu0 %1552
        %1554 = vset.pattern.permute.xlu0 0
        %1555 = vperm.xlu0 %1554, %v1456
        %v1556 = vpop.permute.xlu0 %1555
        %1557 = vset.pattern.permute.xlu0 0
        %1558 = vperm.xlu0 %1557, %v1457
        %v1559 = vpop.permute.xlu0 %1558
        %1560 = vset.pattern.permute.xlu0 0
        %1561 = vperm.xlu0 %1560, %v1458
        %v1562 = vpop.permute.xlu0 %1561
        %1563 = vset.pattern.permute.xlu0 0
        %1564 = vperm.xlu0 %1563, %v1459
        %v1565 = vpop.permute.xlu0 %1564
        %1566 = vset.pattern.permute.xlu0 0
        %1567 = vperm.xlu0 %1566, %v1460
        %v1568 = vpop.permute.xlu0 %1567
        %1569 = vset.pattern.permute.xlu0 0
        %1570 = vperm.xlu0 %1569, %v1461
        %v1571 = vpop.permute.xlu0 %1570
        %1572 = vset.pattern.permute.xlu0 0
        %1573 = vperm.xlu0 %1572, %v1462
        %v1574 = vpop.permute.xlu0 %1573
        %1575 = vset.pattern.permute.xlu0 0
        %1576 = vperm.xlu0 %1575, %v1463
        %v1577 = vpop.permute.xlu0 %1576
        %1578 = vset.pattern.permute.xlu0 0
        %1579 = vperm.xlu0 %1578, %v1464
        %v1580 = vpop.permute.xlu0 %1579
        %1581 = vset.pattern.permute.xlu0 0
        %1582 = vperm.xlu0 %1581, %v1465
        %v1583 = vpop.permute.xlu0 %1582
        %1584 = vset.pattern.permute.xlu0 0
        %1585 = vperm.xlu0 %1584, %v1466
        %v1586 = vpop.permute.xlu0 %1585
        %1587 = vset.pattern.permute.xlu0 0
        %1588 = vperm.xlu0 %1587, %v1467
        %v1589 = vpop.permute.xlu0 %1588
        %1590 = vset.pattern.permute.xlu0 0
        %1591 = vperm.xlu0 %1590, %v1468
        %v1592 = vpop.permute.xlu0 %1591
        %1593 = vset.pattern.permute.xlu0 0
        %1594 = vperm.xlu0 %1593, %v1469
        %v1595 = vpop.permute.xlu0 %1594
        %1596 = vset.pattern.permute.xlu0 0
        %1597 = vperm.xlu0 %1596, %v1470
        %v1598 = vpop.permute.xlu0 %1597
        %v1599 = vlaneseq
        %v1600 = vand.u32 %v1599, 127
        %v1601 = vperm.slane %v1505, %v1600
        %v1602 = vadd.s32 %v1600, 4294967288
        %v1603 = vperm.slane %v1508, %v1602
        %vm1604 = vcmask 130112
        %v1605 = vsel %vm1604, %v1603, %v1601
        %v1606 = vperm.slane %v1511, %v1600
        %v1607 = vperm.slane %v1514, %v1602
        %v1608 = vsel %vm1604, %v1607, %v1606
        %v1609 = vperm.slane %v1517, %v1600
        %v1610 = vperm.slane %v1520, %v1602
        %v1611 = vsel %vm1604, %v1610, %v1609
        %v1612 = vperm.slane %v1523, %v1600
        %v1613 = vperm.slane %v1526, %v1602
        %v1614 = vsel %vm1604, %v1613, %v1612
        %v1615 = vperm.slane %v1529, %v1600
        %v1616 = vperm.slane %v1532, %v1602
        %v1617 = vsel %vm1604, %v1616, %v1615
        %v1618 = vperm.slane %v1535, %v1600
        %v1619 = vperm.slane %v1538, %v1602
        %v1620 = vsel %vm1604, %v1619, %v1618
        %v1621 = vperm.slane %v1541, %v1600
        %v1622 = vperm.slane %v1544, %v1602
        %v1623 = vsel %vm1604, %v1622, %v1621
        %v1624 = vperm.slane %v1547, %v1600
        %v1625 = vperm.slane %v1550, %v1602
        %v1626 = vsel %vm1604, %v1625, %v1624
        %v1627 = vperm.slane %v1553, %v1600
        %v1628 = vperm.slane %v1556, %v1602
        %v1629 = vsel %vm1604, %v1628, %v1627
        %v1630 = vperm.slane %v1559, %v1600
        %v1631 = vperm.slane %v1562, %v1602
        %v1632 = vsel %vm1604, %v1631, %v1630
        %v1633 = vperm.slane %v1565, %v1600
        %v1634 = vperm.slane %v1568, %v1602
        %v1635 = vsel %vm1604, %v1634, %v1633
        %v1636 = vperm.slane %v1571, %v1600
        %v1637 = vperm.slane %v1574, %v1602
        %v1638 = vsel %vm1604, %v1637, %v1636
        %v1639 = vperm.slane %v1577, %v1600
        %v1640 = vperm.slane %v1580, %v1602
        %v1641 = vsel %vm1604, %v1640, %v1639
        %v1642 = vperm.slane %v1583, %v1600
        %v1643 = vperm.slane %v1586, %v1602
        %v1644 = vsel %vm1604, %v1643, %v1642
        %v1645 = vperm.slane %v1589, %v1600
        %v1646 = vperm.slane %v1592, %v1602
        %v1647 = vsel %vm1604, %v1646, %v1645
        %v1648 = vperm.slane %v1595, %v1600
        %v1649 = vperm.slane %v1598, %v1602
        %v1650 = vsel %vm1604, %v1649, %v1648
        %vm1651 = vcmask 1041409
        %v1652 = vsel %vm1651, %v1608, %v1605
        %vm1653 = vcmask 1042434
        %v1654 = vsel %vm1653, %v1611, %v1652
        %vm1655 = vcmask 1043459
        %v1656 = vsel %vm1655, %v1614, %v1654
        %vm1657 = vcmask 1044484
        %v1658 = vsel %vm1657, %v1617, %v1656
        %vm1659 = vcmask 1045509
        %v1660 = vsel %vm1659, %v1620, %v1658
        %vm1661 = vcmask 1046534
        %v1662 = vsel %vm1661, %v1623, %v1660
        %vm1663 = vcmask 1047559
        %v1664 = vsel %vm1663, %v1626, %v1662
        %v1665 = vsel %vm1651, %v1632, %v1629
        %v1666 = vsel %vm1653, %v1635, %v1665
        %v1667 = vsel %vm1655, %v1638, %v1666
        %v1668 = vsel %vm1657, %v1641, %v1667
        %v1669 = vsel %vm1659, %v1644, %v1668
        %v1670 = vsel %vm1661, %v1647, %v1669
        %v1671 = vsel %vm1663, %v1650, %v1670
        %1674 = vxpose.xlu0.b32.start [1/16] %v1664, 128
        %1675 = vxpose.xlu0.b32.cont [2/16] %v1671, 128
        %1676 = vxpose.xlu0.b32.cont [3/16] 0.0, 128
        %1677 = vxpose.xlu0.b32.cont [4/16] 0.0, 128
        %1678 = vxpose.xlu0.b32.cont [5/16] 0.0, 128
        %1679 = vxpose.xlu0.b32.cont [6/16] 0.0, 128
        %1680 = vxpose.xlu0.b32.cont [7/16] 0.0, 128
        %1681 = vxpose.xlu0.b32.cont [8/16] 0.0, 128
        %1682 = vxpose.xlu0.b32.cont [9/16] 0.0, 128
        %1683 = vxpose.xlu0.b32.cont [10/16] 0.0, 128
        %1684 = vxpose.xlu0.b32.cont [11/16] 0.0, 128
        %1685 = vxpose.xlu0.b32.cont [12/16] 0.0, 128
        %1686 = vxpose.xlu0.b32.cont [13/16] 0.0, 128
        %1687 = vxpose.xlu0.b32.cont [14/16] 0.0, 128
        %1688 = vxpose.xlu0.b32.cont [15/16] 0.0, 128
        %1689 = vxpose.xlu0.b32.end [16/16] 0.0, 128
        %v1690 = vpop.trf.xlu0
        %v1691 = vpop.trf.xlu0
        %v1692 = vpop.trf.xlu0
        %v1693 = vpop.trf.xlu0
        %v1694 = vpop.trf.xlu0
        %v1695 = vpop.trf.xlu0
        %v1696 = vpop.trf.xlu0
        %v1697 = vpop.trf.xlu0
        %v1698 = vpop.trf.xlu0
        %v1699 = vpop.trf.xlu0
        %v1700 = vpop.trf.xlu0
        %v1701 = vpop.trf.xlu0
        %v1702 = vpop.trf.xlu0
        %v1703 = vpop.trf.xlu0
        %v1704 = vpop.trf.xlu0
        %v1705 = vpop.trf.xlu0
        %v1706 = vpack.c.bf16 %v1690, %v1690
        %v1707 = vpack.c.bf16 %v1691, %v1691
        %vm1708 = vcmask 125952
        %1709 = vst.msk [vmem:[%s290] sm:$0xf] %vm1708, %v1706
        %1710 = vst.msk [vmem:[%s290 + $0x4] sm:$0xf] %vm1708, %v1707
        %1711 = vset.pattern.permute.xlu0 1
        %1712 = vperm.xlu0 %1711, %v1439
        %v1713 = vpop.permute.xlu0 %1712
        %1714 = vset.pattern.permute.xlu0 1
        %1715 = vperm.xlu0 %1714, %v1440
        %v1716 = vpop.permute.xlu0 %1715
        %1717 = vset.pattern.permute.xlu0 1
        %1718 = vperm.xlu0 %1717, %v1441
        %v1719 = vpop.permute.xlu0 %1718
        %1720 = vset.pattern.permute.xlu0 1
        %1721 = vperm.xlu0 %1720, %v1442
        %v1722 = vpop.permute.xlu0 %1721
        %1723 = vset.pattern.permute.xlu0 1
        %1724 = vperm.xlu0 %1723, %v1443
        %v1725 = vpop.permute.xlu0 %1724
        %1726 = vset.pattern.permute.xlu0 1
        %1727 = vperm.xlu0 %1726, %v1444
        %v1728 = vpop.permute.xlu0 %1727
        %1729 = vset.pattern.permute.xlu0 1
        %1730 = vperm.xlu0 %1729, %v1445
        %v1731 = vpop.permute.xlu0 %1730
        %1732 = vset.pattern.permute.xlu0 1
        %1733 = vperm.xlu0 %1732, %v1446
        %v1734 = vpop.permute.xlu0 %1733
        %1735 = vset.pattern.permute.xlu0 1
        %1736 = vperm.xlu0 %1735, %v1447
        %v1737 = vpop.permute.xlu0 %1736
        %1738 = vset.pattern.permute.xlu0 1
        %1739 = vperm.xlu0 %1738, %v1448
        %v1740 = vpop.permute.xlu0 %1739
        %1741 = vset.pattern.permute.xlu0 1
        %1742 = vperm.xlu0 %1741, %v1449
        %v1743 = vpop.permute.xlu0 %1742
        %1744 = vset.pattern.permute.xlu0 1
        %1745 = vperm.xlu0 %1744, %v1450
        %v1746 = vpop.permute.xlu0 %1745
        %1747 = vset.pattern.permute.xlu0 1
        %1748 = vperm.xlu0 %1747, %v1451
        %v1749 = vpop.permute.xlu0 %1748
        %1750 = vset.pattern.permute.xlu0 1
        %1751 = vperm.xlu0 %1750, %v1452
        %v1752 = vpop.permute.xlu0 %1751
        %1753 = vset.pattern.permute.xlu0 1
        %1754 = vperm.xlu0 %1753, %v1453
        %v1755 = vpop.permute.xlu0 %1754
        %1756 = vset.pattern.permute.xlu0 1
        %1757 = vperm.xlu0 %1756, %v1454
        %v1758 = vpop.permute.xlu0 %1757
        %1759 = vset.pattern.permute.xlu0 1
        %1760 = vperm.xlu0 %1759, %v1455
        %v1761 = vpop.permute.xlu0 %1760
        %1762 = vset.pattern.permute.xlu0 1
        %1763 = vperm.xlu0 %1762, %v1456
        %v1764 = vpop.permute.xlu0 %1763
        %1765 = vset.pattern.permute.xlu0 1
        %1766 = vperm.xlu0 %1765, %v1457
        %v1767 = vpop.permute.xlu0 %1766
        %1768 = vset.pattern.permute.xlu0 1
        %1769 = vperm.xlu0 %1768, %v1458
        %v1770 = vpop.permute.xlu0 %1769
        %1771 = vset.pattern.permute.xlu0 1
        %1772 = vperm.xlu0 %1771, %v1459
        %v1773 = vpop.permute.xlu0 %1772
        %1774 = vset.pattern.permute.xlu0 1
        %1775 = vperm.xlu0 %1774, %v1460
        %v1776 = vpop.permute.xlu0 %1775
        %1777 = vset.pattern.permute.xlu0 1
        %1778 = vperm.xlu0 %1777, %v1461
        %v1779 = vpop.permute.xlu0 %1778
        %1780 = vset.pattern.permute.xlu0 1
        %1781 = vperm.xlu0 %1780, %v1462
        %v1782 = vpop.permute.xlu0 %1781
        %1783 = vset.pattern.permute.xlu0 1
        %1784 = vperm.xlu0 %1783, %v1463
        %v1785 = vpop.permute.xlu0 %1784
        %1786 = vset.pattern.permute.xlu0 1
        %1787 = vperm.xlu0 %1786, %v1464
        %v1788 = vpop.permute.xlu0 %1787
        %1789 = vset.pattern.permute.xlu0 1
        %1790 = vperm.xlu0 %1789, %v1465
        %v1791 = vpop.permute.xlu0 %1790
        %1792 = vset.pattern.permute.xlu0 1
        %1793 = vperm.xlu0 %1792, %v1466
        %v1794 = vpop.permute.xlu0 %1793
        %1795 = vset.pattern.permute.xlu0 1
        %1796 = vperm.xlu0 %1795, %v1467
        %v1797 = vpop.permute.xlu0 %1796
        %1798 = vset.pattern.permute.xlu0 1
        %1799 = vperm.xlu0 %1798, %v1468
        %v1800 = vpop.permute.xlu0 %1799
        %1801 = vset.pattern.permute.xlu0 1
        %1802 = vperm.xlu0 %1801, %v1469
        %v1803 = vpop.permute.xlu0 %1802
        %1804 = vset.pattern.permute.xlu0 1
        %1805 = vperm.xlu0 %1804, %v1470
        %v1806 = vpop.permute.xlu0 %1805
        %v1807 = vperm.slane %v1713, %v1600
        %v1808 = vperm.slane %v1716, %v1602
        %v1809 = vsel %vm1604, %v1808, %v1807
        %v1810 = vperm.slane %v1719, %v1600
        %v1811 = vperm.slane %v1722, %v1602
        %v1812 = vsel %vm1604, %v1811, %v1810
        %v1813 = vperm.slane %v1725, %v1600
        %v1814 = vperm.slane %v1728, %v1602
        %v1815 = vsel %vm1604, %v1814, %v1813
        %v1816 = vperm.slane %v1731, %v1600
        %v1817 = vperm.slane %v1734, %v1602
        %v1818 = vsel %vm1604, %v1817, %v1816
        %v1819 = vperm.slane %v1737, %v1600
        %v1820 = vperm.slane %v1740, %v1602
        %v1821 = vsel %vm1604, %v1820, %v1819
        %v1822 = vperm.slane %v1743, %v1600
        %v1823 = vperm.slane %v1746, %v1602
        %v1824 = vsel %vm1604, %v1823, %v1822
        %v1825 = vperm.slane %v1749, %v1600
        %v1826 = vperm.slane %v1752, %v1602
        %v1827 = vsel %vm1604, %v1826, %v1825
        %v1828 = vperm.slane %v1755, %v1600
        %v1829 = vperm.slane %v1758, %v1602
        %v1830 = vsel %vm1604, %v1829, %v1828
        %v1831 = vperm.slane %v1761, %v1600
        %v1832 = vperm.slane %v1764, %v1602
        %v1833 = vsel %vm1604, %v1832, %v1831
        %v1834 = vperm.slane %v1767, %v1600
        %v1835 = vperm.slane %v1770, %v1602
        %v1836 = vsel %vm1604, %v1835, %v1834
        %v1837 = vperm.slane %v1773, %v1600
        %v1838 = vperm.slane %v1776, %v1602
        %v1839 = vsel %vm1604, %v1838, %v1837
        %v1840 = vperm.slane %v1779, %v1600
        %v1841 = vperm.slane %v1782, %v1602
        %v1842 = vsel %vm1604, %v1841, %v1840
        %v1843 = vperm.slane %v1785, %v1600
        %v1844 = vperm.slane %v1788, %v1602
        %v1845 = vsel %vm1604, %v1844, %v1843
        %v1846 = vperm.slane %v1791, %v1600
        %v1847 = vperm.slane %v1794, %v1602
        %v1848 = vsel %vm1604, %v1847, %v1846
        %v1849 = vperm.slane %v1797, %v1600
        %v1850 = vperm.slane %v1800, %v1602
        %v1851 = vsel %vm1604, %v1850, %v1849
        %v1852 = vperm.slane %v1803, %v1600
        %v1853 = vperm.slane %v1806, %v1602
        %v1854 = vsel %vm1604, %v1853, %v1852
        %v1855 = vsel %vm1651, %v1812, %v1809
        %v1856 = vsel %vm1653, %v1815, %v1855
        %v1857 = vsel %vm1655, %v1818, %v1856
        %v1858 = vsel %vm1657, %v1821, %v1857
        %v1859 = vsel %vm1659, %v1824, %v1858
        %v1860 = vsel %vm1661, %v1827, %v1859
        %v1861 = vsel %vm1663, %v1830, %v1860
        %v1862 = vsel %vm1651, %v1836, %v1833
        %v1863 = vsel %vm1653, %v1839, %v1862
        %v1864 = vsel %vm1655, %v1842, %v1863
        %v1865 = vsel %vm1657, %v1845, %v1864
        %v1866 = vsel %vm1659, %v1848, %v1865
        %v1867 = vsel %vm1661, %v1851, %v1866
        %v1868 = vsel %vm1663, %v1854, %v1867
        %1871 = vxpose.xlu0.b32.start [1/16] %v1861, 128
        %1872 = vxpose.xlu0.b32.cont [2/16] %v1868, 128
        %1873 = vxpose.xlu0.b32.cont [3/16] 0.0, 128
        %1874 = vxpose.xlu0.b32.cont [4/16] 0.0, 128
        %1875 = vxpose.xlu0.b32.cont [5/16] 0.0, 128
        %1876 = vxpose.xlu0.b32.cont [6/16] 0.0, 128
        %1877 = vxpose.xlu0.b32.cont [7/16] 0.0, 128
        %1878 = vxpose.xlu0.b32.cont [8/16] 0.0, 128
        %1879 = vxpose.xlu0.b32.cont [9/16] 0.0, 128
        %1880 = vxpose.xlu0.b32.cont [10/16] 0.0, 128
        %1881 = vxpose.xlu0.b32.cont [11/16] 0.0, 128
        %1882 = vxpose.xlu0.b32.cont [12/16] 0.0, 128
        %1883 = vxpose.xlu0.b32.cont [13/16] 0.0, 128
        %1884 = vxpose.xlu0.b32.cont [14/16] 0.0, 128
        %1885 = vxpose.xlu0.b32.cont [15/16] 0.0, 128
        %1886 = vxpose.xlu0.b32.end [16/16] 0.0, 128
        %v1887 = vpop.trf.xlu0
        %v1888 = vpop.trf.xlu0
        %v1889 = vpop.trf.xlu0
        %v1890 = vpop.trf.xlu0
        %v1891 = vpop.trf.xlu0
        %v1892 = vpop.trf.xlu0
        %v1893 = vpop.trf.xlu0
        %v1894 = vpop.trf.xlu0
        %v1895 = vpop.trf.xlu0
        %v1896 = vpop.trf.xlu0
        %v1897 = vpop.trf.xlu0
        %v1898 = vpop.trf.xlu0
        %v1899 = vpop.trf.xlu0
        %v1900 = vpop.trf.xlu0
        %v1901 = vpop.trf.xlu0
        %v1902 = vpop.trf.xlu0
        %v1903 = vpack.c.bf16 %v1887, %v1887
        %v1904 = vpack.c.bf16 %v1888, %v1888
        %s1905 = scalar_lea.vmem %s290, 8
        %1906 = vst.msk [vmem:[%s1905] sm:$0xf] %vm1708, %v1903
        %1907 = vst.msk [vmem:[%s1905 + $0x4] sm:$0xf] %vm1708, %v1904
        %1908 = vset.pattern.permute.xlu0 2
        %1909 = vperm.xlu0 %1908, %v1439
        %v1910 = vpop.permute.xlu0 %1909
        %1911 = vset.pattern.permute.xlu0 2
        %1912 = vperm.xlu0 %1911, %v1440
        %v1913 = vpop.permute.xlu0 %1912
        %1914 = vset.pattern.permute.xlu0 2
        %1915 = vperm.xlu0 %1914, %v1441
        %v1916 = vpop.permute.xlu0 %1915
        %1917 = vset.pattern.permute.xlu0 2
        %1918 = vperm.xlu0 %1917, %v1442
        %v1919 = vpop.permute.xlu0 %1918
        %1920 = vset.pattern.permute.xlu0 2
        %1921 = vperm.xlu0 %1920, %v1443
        %v1922 = vpop.permute.xlu0 %1921
        %1923 = vset.pattern.permute.xlu0 2
        %1924 = vperm.xlu0 %1923, %v1444
        %v1925 = vpop.permute.xlu0 %1924
        %1926 = vset.pattern.permute.xlu0 2
        %1927 = vperm.xlu0 %1926, %v1445
        %v1928 = vpop.permute.xlu0 %1927
        %1929 = vset.pattern.permute.xlu0 2
        %1930 = vperm.xlu0 %1929, %v1446
        %v1931 = vpop.permute.xlu0 %1930
        %1932 = vset.pattern.permute.xlu0 2
        %1933 = vperm.xlu0 %1932, %v1447
        %v1934 = vpop.permute.xlu0 %1933
        %1935 = vset.pattern.permute.xlu0 2
        %1936 = vperm.xlu0 %1935, %v1448
        %v1937 = vpop.permute.xlu0 %1936
        %1938 = vset.pattern.permute.xlu0 2
        %1939 = vperm.xlu0 %1938, %v1449
        %v1940 = vpop.permute.xlu0 %1939
        %1941 = vset.pattern.permute.xlu0 2
        %1942 = vperm.xlu0 %1941, %v1450
        %v1943 = vpop.permute.xlu0 %1942
        %1944 = vset.pattern.permute.xlu0 2
        %1945 = vperm.xlu0 %1944, %v1451
        %v1946 = vpop.permute.xlu0 %1945
        %1947 = vset.pattern.permute.xlu0 2
        %1948 = vperm.xlu0 %1947, %v1452
        %v1949 = vpop.permute.xlu0 %1948
        %1950 = vset.pattern.permute.xlu0 2
        %1951 = vperm.xlu0 %1950, %v1453
        %v1952 = vpop.permute.xlu0 %1951
        %1953 = vset.pattern.permute.xlu0 2
        %1954 = vperm.xlu0 %1953, %v1454
        %v1955 = vpop.permute.xlu0 %1954
        %1956 = vset.pattern.permute.xlu0 2
        %1957 = vperm.xlu0 %1956, %v1455
        %v1958 = vpop.permute.xlu0 %1957
        %1959 = vset.pattern.permute.xlu0 2
        %1960 = vperm.xlu0 %1959, %v1456
        %v1961 = vpop.permute.xlu0 %1960
        %1962 = vset.pattern.permute.xlu0 2
        %1963 = vperm.xlu0 %1962, %v1457
        %v1964 = vpop.permute.xlu0 %1963
        %1965 = vset.pattern.permute.xlu0 2
        %1966 = vperm.xlu0 %1965, %v1458
        %v1967 = vpop.permute.xlu0 %1966
        %1968 = vset.pattern.permute.xlu0 2
        %1969 = vperm.xlu0 %1968, %v1459
        %v1970 = vpop.permute.xlu0 %1969
        %1971 = vset.pattern.permute.xlu0 2
        %1972 = vperm.xlu0 %1971, %v1460
        %v1973 = vpop.permute.xlu0 %1972
        %1974 = vset.pattern.permute.xlu0 2
        %1975 = vperm.xlu0 %1974, %v1461
        %v1976 = vpop.permute.xlu0 %1975
        %1977 = vset.pattern.permute.xlu0 2
        %1978 = vperm.xlu0 %1977, %v1462
        %v1979 = vpop.permute.xlu0 %1978
        %1980 = vset.pattern.permute.xlu0 2
        %1981 = vperm.xlu0 %1980, %v1463
        %v1982 = vpop.permute.xlu0 %1981
        %1983 = vset.pattern.permute.xlu0 2
        %1984 = vperm.xlu0 %1983, %v1464
        %v1985 = vpop.permute.xlu0 %1984
        %1986 = vset.pattern.permute.xlu0 2
        %1987 = vperm.xlu0 %1986, %v1465
        %v1988 = vpop.permute.xlu0 %1987
        %1989 = vset.pattern.permute.xlu0 2
        %1990 = vperm.xlu0 %1989, %v1466
        %v1991 = vpop.permute.xlu0 %1990
        %1992 = vset.pattern.permute.xlu0 2
        %1993 = vperm.xlu0 %1992, %v1467
        %v1994 = vpop.permute.xlu0 %1993
        %1995 = vset.pattern.permute.xlu0 2
        %1996 = vperm.xlu0 %1995, %v1468
        %v1997 = vpop.permute.xlu0 %1996
        %1998 = vset.pattern.permute.xlu0 2
        %1999 = vperm.xlu0 %1998, %v1469
        %v2000 = vpop.permute.xlu0 %1999
        %2001 = vset.pattern.permute.xlu0 2
        %2002 = vperm.xlu0 %2001, %v1470
        %v2003 = vpop.permute.xlu0 %2002
        %v2004 = vperm.slane %v1910, %v1600
        %v2005 = vperm.slane %v1913, %v1602
        %v2006 = vsel %vm1604, %v2005, %v2004
        %v2007 = vperm.slane %v1916, %v1600
        %v2008 = vperm.slane %v1919, %v1602
        %v2009 = vsel %vm1604, %v2008, %v2007
        %v2010 = vperm.slane %v1922, %v1600
        %v2011 = vperm.slane %v1925, %v1602
        %v2012 = vsel %vm1604, %v2011, %v2010
        %v2013 = vperm.slane %v1928, %v1600
        %v2014 = vperm.slane %v1931, %v1602
        %v2015 = vsel %vm1604, %v2014, %v2013
        %v2016 = vperm.slane %v1934, %v1600
        %v2017 = vperm.slane %v1937, %v1602
        %v2018 = vsel %vm1604, %v2017, %v2016
        %v2019 = vperm.slane %v1940, %v1600
        %v2020 = vperm.slane %v1943, %v1602
        %v2021 = vsel %vm1604, %v2020, %v2019
        %v2022 = vperm.slane %v1946, %v1600
        %v2023 = vperm.slane %v1949, %v1602
        %v2024 = vsel %vm1604, %v2023, %v2022
        %v2025 = vperm.slane %v1952, %v1600
        %v2026 = vperm.slane %v1955, %v1602
        %v2027 = vsel %vm1604, %v2026, %v2025
        %v2028 = vperm.slane %v1958, %v1600
        %v2029 = vperm.slane %v1961, %v1602
        %v2030 = vsel %vm1604, %v2029, %v2028
        %v2031 = vperm.slane %v1964, %v1600
        %v2032 = vperm.slane %v1967, %v1602
        %v2033 = vsel %vm1604, %v2032, %v2031
        %v2034 = vperm.slane %v1970, %v1600
        %v2035 = vperm.slane %v1973, %v1602
        %v2036 = vsel %vm1604, %v2035, %v2034
        %v2037 = vperm.slane %v1976, %v1600
        %v2038 = vperm.slane %v1979, %v1602
        %v2039 = vsel %vm1604, %v2038, %v2037
        %v2040 = vperm.slane %v1982, %v1600
        %v2041 = vperm.slane %v1985, %v1602
        %v2042 = vsel %vm1604, %v2041, %v2040
        %v2043 = vperm.slane %v1988, %v1600
        %v2044 = vperm.slane %v1991, %v1602
        %v2045 = vsel %vm1604, %v2044, %v2043
        %v2046 = vperm.slane %v1994, %v1600
        %v2047 = vperm.slane %v1997, %v1602
        %v2048 = vsel %vm1604, %v2047, %v2046
        %v2049 = vperm.slane %v2000, %v1600
        %v2050 = vperm.slane %v2003, %v1602
        %v2051 = vsel %vm1604, %v2050, %v2049
        %v2052 = vsel %vm1651, %v2009, %v2006
        %v2053 = vsel %vm1653, %v2012, %v2052
        %v2054 = vsel %vm1655, %v2015, %v2053
        %v2055 = vsel %vm1657, %v2018, %v2054
        %v2056 = vsel %vm1659, %v2021, %v2055
        %v2057 = vsel %vm1661, %v2024, %v2056
        %v2058 = vsel %vm1663, %v2027, %v2057
        %v2059 = vsel %vm1651, %v2033, %v2030
        %v2060 = vsel %vm1653, %v2036, %v2059
        %v2061 = vsel %vm1655, %v2039, %v2060
        %v2062 = vsel %vm1657, %v2042, %v2061
        %v2063 = vsel %vm1659, %v2045, %v2062
        %v2064 = vsel %vm1661, %v2048, %v2063
        %v2065 = vsel %vm1663, %v2051, %v2064
        %2068 = vxpose.xlu0.b32.start [1/16] %v2058, 128
        %2069 = vxpose.xlu0.b32.cont [2/16] %v2065, 128
        %2070 = vxpose.xlu0.b32.cont [3/16] 0.0, 128
        %2071 = vxpose.xlu0.b32.cont [4/16] 0.0, 128
        %2072 = vxpose.xlu0.b32.cont [5/16] 0.0, 128
        %2073 = vxpose.xlu0.b32.cont [6/16] 0.0, 128
        %2074 = vxpose.xlu0.b32.cont [7/16] 0.0, 128
        %2075 = vxpose.xlu0.b32.cont [8/16] 0.0, 128
        %2076 = vxpose.xlu0.b32.cont [9/16] 0.0, 128
        %2077 = vxpose.xlu0.b32.cont [10/16] 0.0, 128
        %2078 = vxpose.xlu0.b32.cont [11/16] 0.0, 128
        %2079 = vxpose.xlu0.b32.cont [12/16] 0.0, 128
        %2080 = vxpose.xlu0.b32.cont [13/16] 0.0, 128
        %2081 = vxpose.xlu0.b32.cont [14/16] 0.0, 128
        %2082 = vxpose.xlu0.b32.cont [15/16] 0.0, 128
        %2083 = vxpose.xlu0.b32.end [16/16] 0.0, 128
        %v2084 = vpop.trf.xlu0
        %v2085 = vpop.trf.xlu0
        %v2086 = vpop.trf.xlu0
        %v2087 = vpop.trf.xlu0
        %v2088 = vpop.trf.xlu0
        %v2089 = vpop.trf.xlu0
        %v2090 = vpop.trf.xlu0
        %v2091 = vpop.trf.xlu0
        %v2092 = vpop.trf.xlu0
        %v2093 = vpop.trf.xlu0
        %v2094 = vpop.trf.xlu0
        %v2095 = vpop.trf.xlu0
        %v2096 = vpop.trf.xlu0
        %v2097 = vpop.trf.xlu0
        %v2098 = vpop.trf.xlu0
        %v2099 = vpop.trf.xlu0
        %v2100 = vpack.c.bf16 %v2084, %v2084
        %v2101 = vpack.c.bf16 %v2085, %v2085
        %s2102 = scalar_lea.vmem %s290, 16
        %2103 = vst.msk [vmem:[%s2102] sm:$0xf] %vm1708, %v2100
        %2104 = vst.msk [vmem:[%s2102 + $0x4] sm:$0xf] %vm1708, %v2101
        %2105 = vset.pattern.permute.xlu0 3
        %2106 = vperm.xlu0 %2105, %v1439
        %v2107 = vpop.permute.xlu0 %2106
        %2108 = vset.pattern.permute.xlu0 3
        %2109 = vperm.xlu0 %2108, %v1440
        %v2110 = vpop.permute.xlu0 %2109
        %2111 = vset.pattern.permute.xlu0 3
        %2112 = vperm.xlu0 %2111, %v1441
        %v2113 = vpop.permute.xlu0 %2112
        %2114 = vset.pattern.permute.xlu0 3
        %2115 = vperm.xlu0 %2114, %v1442
        %v2116 = vpop.permute.xlu0 %2115
        %2117 = vset.pattern.permute.xlu0 3
        %2118 = vperm.xlu0 %2117, %v1443
        %v2119 = vpop.permute.xlu0 %2118
        %2120 = vset.pattern.permute.xlu0 3
        %2121 = vperm.xlu0 %2120, %v1444
        %v2122 = vpop.permute.xlu0 %2121
        %2123 = vset.pattern.permute.xlu0 3
        %2124 = vperm.xlu0 %2123, %v1445
        %v2125 = vpop.permute.xlu0 %2124
        %2126 = vset.pattern.permute.xlu0 3
        %2127 = vperm.xlu0 %2126, %v1446
        %v2128 = vpop.permute.xlu0 %2127
        %2129 = vset.pattern.permute.xlu0 3
        %2130 = vperm.xlu0 %2129, %v1447
        %v2131 = vpop.permute.xlu0 %2130
        %2132 = vset.pattern.permute.xlu0 3
        %2133 = vperm.xlu0 %2132, %v1448
        %v2134 = vpop.permute.xlu0 %2133
        %2135 = vset.pattern.permute.xlu0 3
        %2136 = vperm.xlu0 %2135, %v1449
        %v2137 = vpop.permute.xlu0 %2136
        %2138 = vset.pattern.permute.xlu0 3
        %2139 = vperm.xlu0 %2138, %v1450
        %v2140 = vpop.permute.xlu0 %2139
        %2141 = vset.pattern.permute.xlu0 3
        %2142 = vperm.xlu0 %2141, %v1451
        %v2143 = vpop.permute.xlu0 %2142
        %2144 = vset.pattern.permute.xlu0 3
        %2145 = vperm.xlu0 %2144, %v1452
        %v2146 = vpop.permute.xlu0 %2145
        %2147 = vset.pattern.permute.xlu0 3
        %2148 = vperm.xlu0 %2147, %v1453
        %v2149 = vpop.permute.xlu0 %2148
        %2150 = vset.pattern.permute.xlu0 3
        %2151 = vperm.xlu0 %2150, %v1454
        %v2152 = vpop.permute.xlu0 %2151
        %2153 = vset.pattern.permute.xlu0 3
        %2154 = vperm.xlu0 %2153, %v1455
        %v2155 = vpop.permute.xlu0 %2154
        %2156 = vset.pattern.permute.xlu0 3
        %2157 = vperm.xlu0 %2156, %v1456
        %v2158 = vpop.permute.xlu0 %2157
        %2159 = vset.pattern.permute.xlu0 3
        %2160 = vperm.xlu0 %2159, %v1457
        %v2161 = vpop.permute.xlu0 %2160
        %2162 = vset.pattern.permute.xlu0 3
        %2163 = vperm.xlu0 %2162, %v1458
        %v2164 = vpop.permute.xlu0 %2163
        %2165 = vset.pattern.permute.xlu0 3
        %2166 = vperm.xlu0 %2165, %v1459
        %v2167 = vpop.permute.xlu0 %2166
        %2168 = vset.pattern.permute.xlu0 3
        %2169 = vperm.xlu0 %2168, %v1460
        %v2170 = vpop.permute.xlu0 %2169
        %2171 = vset.pattern.permute.xlu0 3
        %2172 = vperm.xlu0 %2171, %v1461
        %v2173 = vpop.permute.xlu0 %2172
        %2174 = vset.pattern.permute.xlu0 3
        %2175 = vperm.xlu0 %2174, %v1462
        %v2176 = vpop.permute.xlu0 %2175
        %2177 = vset.pattern.permute.xlu0 3
        %2178 = vperm.xlu0 %2177, %v1463
        %v2179 = vpop.permute.xlu0 %2178
        %2180 = vset.pattern.permute.xlu0 3
        %2181 = vperm.xlu0 %2180, %v1464
        %v2182 = vpop.permute.xlu0 %2181
        %2183 = vset.pattern.permute.xlu0 3
        %2184 = vperm.xlu0 %2183, %v1465
        %v2185 = vpop.permute.xlu0 %2184
        %2186 = vset.pattern.permute.xlu0 3
        %2187 = vperm.xlu0 %2186, %v1466
        %v2188 = vpop.permute.xlu0 %2187
        %2189 = vset.pattern.permute.xlu0 3
        %2190 = vperm.xlu0 %2189, %v1467
        %v2191 = vpop.permute.xlu0 %2190
        %2192 = vset.pattern.permute.xlu0 3
        %2193 = vperm.xlu0 %2192, %v1468
        %v2194 = vpop.permute.xlu0 %2193
        %2195 = vset.pattern.permute.xlu0 3
        %2196 = vperm.xlu0 %2195, %v1469
        %v2197 = vpop.permute.xlu0 %2196
        %2198 = vset.pattern.permute.xlu0 3
        %2199 = vperm.xlu0 %2198, %v1470
        %v2200 = vpop.permute.xlu0 %2199
        %v2201 = vperm.slane %v2107, %v1600
        %v2202 = vperm.slane %v2110, %v1602
        %v2203 = vsel %vm1604, %v2202, %v2201
        %v2204 = vperm.slane %v2113, %v1600
        %v2205 = vperm.slane %v2116, %v1602
        %v2206 = vsel %vm1604, %v2205, %v2204
        %v2207 = vperm.slane %v2119, %v1600
        %v2208 = vperm.slane %v2122, %v1602
        %v2209 = vsel %vm1604, %v2208, %v2207
        %v2210 = vperm.slane %v2125, %v1600
        %v2211 = vperm.slane %v2128, %v1602
        %v2212 = vsel %vm1604, %v2211, %v2210
        %v2213 = vperm.slane %v2131, %v1600
        %v2214 = vperm.slane %v2134, %v1602
        %v2215 = vsel %vm1604, %v2214, %v2213
        %v2216 = vperm.slane %v2137, %v1600
        %v2217 = vperm.slane %v2140, %v1602
        %v2218 = vsel %vm1604, %v2217, %v2216
        %v2219 = vperm.slane %v2143, %v1600
        %v2220 = vperm.slane %v2146, %v1602
        %v2221 = vsel %vm1604, %v2220, %v2219
        %v2222 = vperm.slane %v2149, %v1600
        %v2223 = vperm.slane %v2152, %v1602
        %v2224 = vsel %vm1604, %v2223, %v2222
        %v2225 = vperm.slane %v2155, %v1600
        %v2226 = vperm.slane %v2158, %v1602
        %v2227 = vsel %vm1604, %v2226, %v2225
        %v2228 = vperm.slane %v2161, %v1600
        %v2229 = vperm.slane %v2164, %v1602
        %v2230 = vsel %vm1604, %v2229, %v2228
        %v2231 = vperm.slane %v2167, %v1600
        %v2232 = vperm.slane %v2170, %v1602
        %v2233 = vsel %vm1604, %v2232, %v2231
        %v2234 = vperm.slane %v2173, %v1600
        %v2235 = vperm.slane %v2176, %v1602
        %v2236 = vsel %vm1604, %v2235, %v2234
        %v2237 = vperm.slane %v2179, %v1600
        %v2238 = vperm.slane %v2182, %v1602
        %v2239 = vsel %vm1604, %v2238, %v2237
        %v2240 = vperm.slane %v2185, %v1600
        %v2241 = vperm.slane %v2188, %v1602
        %v2242 = vsel %vm1604, %v2241, %v2240
        %v2243 = vperm.slane %v2191, %v1600
        %v2244 = vperm.slane %v2194, %v1602
        %v2245 = vsel %vm1604, %v2244, %v2243
        %v2246 = vperm.slane %v2197, %v1600
        %v2247 = vperm.slane %v2200, %v1602
        %v2248 = vsel %vm1604, %v2247, %v2246
        %v2249 = vsel %vm1651, %v2206, %v2203
        %v2250 = vsel %vm1653, %v2209, %v2249
        %v2251 = vsel %vm1655, %v2212, %v2250
        %v2252 = vsel %vm1657, %v2215, %v2251
        %v2253 = vsel %vm1659, %v2218, %v2252
        %v2254 = vsel %vm1661, %v2221, %v2253
        %v2255 = vsel %vm1663, %v2224, %v2254
        %v2256 = vsel %vm1651, %v2230, %v2227
        %v2257 = vsel %vm1653, %v2233, %v2256
        %v2258 = vsel %vm1655, %v2236, %v2257
        %v2259 = vsel %vm1657, %v2239, %v2258
        %v2260 = vsel %vm1659, %v2242, %v2259
        %v2261 = vsel %vm1661, %v2245, %v2260
        %v2262 = vsel %vm1663, %v2248, %v2261
        %2265 = vxpose.xlu0.b32.start [1/16] %v2255, 128
        %2266 = vxpose.xlu0.b32.cont [2/16] %v2262, 128
        %2267 = vxpose.xlu0.b32.cont [3/16] 0.0, 128
        %2268 = vxpose.xlu0.b32.cont [4/16] 0.0, 128
        %2269 = vxpose.xlu0.b32.cont [5/16] 0.0, 128
        %2270 = vxpose.xlu0.b32.cont [6/16] 0.0, 128
        %2271 = vxpose.xlu0.b32.cont [7/16] 0.0, 128
        %2272 = vxpose.xlu0.b32.cont [8/16] 0.0, 128
        %2273 = vxpose.xlu0.b32.cont [9/16] 0.0, 128
        %2274 = vxpose.xlu0.b32.cont [10/16] 0.0, 128
        %2275 = vxpose.xlu0.b32.cont [11/16] 0.0, 128
        %2276 = vxpose.xlu0.b32.cont [12/16] 0.0, 128
        %2277 = vxpose.xlu0.b32.cont [13/16] 0.0, 128
        %2278 = vxpose.xlu0.b32.cont [14/16] 0.0, 128
        %2279 = vxpose.xlu0.b32.cont [15/16] 0.0, 128
        %2280 = vxpose.xlu0.b32.end [16/16] 0.0, 128
        %v2281 = vpop.trf.xlu0
        %v2282 = vpop.trf.xlu0
        %v2283 = vpop.trf.xlu0
        %v2284 = vpop.trf.xlu0
        %v2285 = vpop.trf.xlu0
        %v2286 = vpop.trf.xlu0
        %v2287 = vpop.trf.xlu0
        %v2288 = vpop.trf.xlu0
        %v2289 = vpop.trf.xlu0
        %v2290 = vpop.trf.xlu0
        %v2291 = vpop.trf.xlu0
        %v2292 = vpop.trf.xlu0
        %v2293 = vpop.trf.xlu0
        %v2294 = vpop.trf.xlu0
        %v2295 = vpop.trf.xlu0
        %v2296 = vpop.trf.xlu0
        %v2297 = vpack.c.bf16 %v2281, %v2281
        %v2298 = vpack.c.bf16 %v2282, %v2282
        %s2299 = scalar_lea.vmem %s290, 24
        %2300 = vst.msk [vmem:[%s2299] sm:$0xf] %vm1708, %v2297
        %2301 = vst.msk [vmem:[%s2299 + $0x4] sm:$0xf] %vm1708, %v2298
        %s2302 = smul.u32 2, %s25
        %p2303 = scmp.lt.s32.totalorder %s24, 1
        %s2304 = scalar_select %p2303, %s24, 1
        %p2305 = scmp.lt.s32.totalorder %s2302, 1
        %s2306 = scalar_select %p2305, %s2302, 1
        %s2307 = smul.addr %s2304, 8
        %s2308 = sadd.s32 %s2306, %s2307
        %s2309 = smul.addr %s2308, 4
        %s2310 = scalar_lea.vmem %s5, %s2309
        // Predicated region
        $region49: #{pair2msa_forward.3} parent=39 // pred_check
          %p2311 = pneg %p164
        $region50: #{pair2msa_forward.3} parent=39 // pred_check_branch
          %2313 = sbr.rel (%p2311) target = $region52
        $region51: #{pair2msa_forward.3} parent=39 // pred_region
          %s2314 = smul.u32 2, %s25
        $region52: #{pair2msa_forward.3} parent=39 // pred_fallthru
          _
      $region40: #{pair2msa_forward.3} parent=5 // pred_fallthru
        _
      %p2315 = scmp.le.s32.totalorder 2, %s15
      // Predicated region
      $region53: #{pair2msa_forward.3} parent=5 // pred_check
        %p2316 = pneg %p2315
      $region54: #{pair2msa_forward.3} parent=5 // pred_check_branch
        %2318 = sbr.rel (%p2316) target = $region56
      $region55: #{pair2msa_forward.3} parent=5 // pred_region
        %s2319 = ssub.s32 %s15, 2
        // Predicated region
        $region57: #{pair2msa_forward.3} parent=55 // pred_check
          %p2320 = pneg %p170
        $region58: #{pair2msa_forward.3} parent=55 // pred_check_branch
          %2322 = sbr.rel (%p2320) target = $region60
        $region59: #{pair2msa_forward.3} parent=55 // pred_region
          %s2323 = smul.u32 2, %s27
          %p2324 = scmp.lt.s32.totalorder %s26, 1
          %s2325 = scalar_select %p2324, %s26, 1
          %p2326 = scmp.lt.s32.totalorder %s2323, 1
          %s2327 = scalar_select %p2326, %s2323, 1
          %s2328 = smul.addr %s2325, 8
          %s2329 = sadd.s32 %s2327, %s2328
          %s2330 = smul.addr %s2329, 4
          %s2331 = scalar_lea.vmem %s5, %s2330
        $region60: #{pair2msa_forward.3} parent=55 // pred_fallthru
          _
      $region56: #{pair2msa_forward.3} parent=5 // pred_fallthru
        _
    $region6: #{pair2msa_forward.3} parent=1 // loop_footer
      %s19 = sadd.s32 1, %s15
    $region7: #{pair2msa_forward.3} parent=1 // loop_footer_branch
      %14 = sbr.rel target = $region3
    $region8: #{pair2msa_forward.3} parent=1 // loop_exit
      _
    %2332 = vsyncpa [#allocation3], 1
    %s2333 = scalar_lea.sflag [#allocation3], 1
    %2334 = vsyncpa %s2333, 1
    %2335 = vsyncpa [#allocation5], 1

// kernel: pair2msa_forward.5
$region0: #{pair2msa_forward.5}
  #allocation0 [shape = 'u32[]', space=smem, size = 0x4, offset = 0x4, fixed_abs, tag = 'smem constant byte address 0x4 - core index']
  #allocation1 [shape = 'u32[72,128]{1,0:T(1,128)}', space=vmem, size = 0x9000, scoped, tag = 'internal scratch']
  %s0 = inlined_call_operand.vmem [shape: f32[128,256], index: 0, kind: input, shape index: {}]
  %s1 = inlined_call_operand.vmem [shape: f32[1,256], index: 1, kind: input, shape index: {}]
  %s2 = inlined_call_operand.vmem [shape: f32[1,256], index: 2, kind: input, shape index: {}]
  %s3 = inlined_call_operand.hbm [shape: bf16[256,1024], index: 3, kind: input, shape index: {}]
  %s4 = inlined_call_operand.vmem [shape: f32[1,1024], index: 4, kind: input, shape index: {}]
  %s5 = inlined_call_operand.vmem [shape: bf16[1024,256], index: 5, kind: input, shape index: {}]
  %s6 = inlined_call_operand.vmem [shape: f32[1,256], index: 6, kind: input, shape index: {}]
  %s7 = inlined_call_operand.vmem [shape: f32[1,256], index: 7, kind: input, shape index: {}]
  %s8 = inlined_call_operand.vmem [shape: f32[1,256], index: 8, kind: input, shape index: {}]
  %s9 = inlined_call_operand.hbm [shape: f32[128,256], index: 9, kind: output, shape index: {}]
  %s10 = sld [smem:[#allocation0]]
  $region50: #{pair2msa_forward.5} parent=0
    _
  %s12 = ssub.s32 1, %s10
  %s13 = scalar_select 0, %s12, %s10
  $region1: #{pair2msa_forward.5} parent=0
    #allocation2 [shape = 'u8[524288]{0}', space=vmem, size = 0x80000, scoped, tag = 'input window, operand 3, single buffered']
    #allocation3 [shape = 's32[1]{0}', space=sflag, size = 0x4, scoped, tag = 'scoped memory for pair2msa_forward.5']
    #allocation4 [shape = 's32[1]{0}', space=sflag, size = 0x4, scoped, tag = 'scoped memory for pair2msa_forward.5']
    #allocation5 [shape = 'u8[131072]{0}', space=vmem, size = 0x20000, scoped, tag = 'output window, operand 0, single buffered']
    %14 = vsyncpa [#allocation3], 0
    %15 = vsyncpa [#allocation4], 0
    // Predicated region
    $region2: #{pair2msa_forward.5} parent=1 // pred_check
      _
    $region3: #{pair2msa_forward.5} parent=1 // pred_check_branch
      %17 = sbr.rel (0) target = $region5
    $region4: #{pair2msa_forward.5} parent=1 // pred_region
      _
    $region5: #{pair2msa_forward.5} parent=1 // pred_fallthru
      _
    // Predicated region
    $region6: #{pair2msa_forward.5} parent=1 // pred_check
      _
    $region7: #{pair2msa_forward.5} parent=1 // pred_check_branch
      %19 = sbr.rel (0) target = $region9
    $region8: #{pair2msa_forward.5} parent=1 // pred_region
      _
    $region9: #{pair2msa_forward.5} parent=1 // pred_fallthru
      _
    // Predicated region
    $region10: #{pair2msa_forward.5} parent=1 // pred_check
      _
    $region11: #{pair2msa_forward.5} parent=1 // pred_check_branch
      %21 = sbr.rel (0) target = $region13
    $region12: #{pair2msa_forward.5} parent=1 // pred_region
      _
    $region13: #{pair2msa_forward.5} parent=1 // pred_fallthru
      _
    // Predicated region
    $region14: #{pair2msa_forward.5} parent=1 // pred_check
      _
    $region15: #{pair2msa_forward.5} parent=1 // pred_check_branch
      %23 = sbr.rel (0) target = $region17
    $region16: #{pair2msa_forward.5} parent=1 // pred_region
      %25 = vsyncadd [#allocation3], 0
      %s26 = sshll.u32 %s3, 4
      %s27 = int_to_ptr.hbm [resolvable:$true] %s26
      %s28 = sshll.u32 [#allocation2], 4
      %s29 = int_to_ptr.vmem [resolvable:$true] %s28
      %34 = dma.hbm_to_vmem [thread:$0]  %s27, 16384, %s29, [#allocation3], 512, 512, 32
    $region17: #{pair2msa_forward.5} parent=1 // pred_fallthru
      _
    // Predicated region
    $region18: #{pair2msa_forward.5} parent=1 // pred_check
      _
    $region19: #{pair2msa_forward.5} parent=1 // pred_check_branch
      %36 = sbr.rel (0) target = $region21
    $region20: #{pair2msa_forward.5} parent=1 // pred_region
      _
    $region21: #{pair2msa_forward.5} parent=1 // pred_fallthru
      _
    // Predicated region
    $region22: #{pair2msa_forward.5} parent=1 // pred_check
      _
    $region23: #{pair2msa_forward.5} parent=1 // pred_check_branch
      %38 = sbr.rel (0) target = $region25
    $region24: #{pair2msa_forward.5} parent=1 // pred_region
      _
    $region25: #{pair2msa_forward.5} parent=1 // pred_fallthru
      _
    // Predicated region
    $region26: #{pair2msa_forward.5} parent=1 // pred_check
      _
    $region27: #{pair2msa_forward.5} parent=1 // pred_check_branch
      %40 = sbr.rel (0) target = $region29
    $region28: #{pair2msa_forward.5} parent=1 // pred_region
      _
    $region29: #{pair2msa_forward.5} parent=1 // pred_fallthru
      _
    // Predicated region
    $region30: #{pair2msa_forward.5} parent=1 // pred_check
      _
    $region31: #{pair2msa_forward.5} parent=1 // pred_check_branch
      %42 = sbr.rel (0) target = $region33
    $region32: #{pair2msa_forward.5} parent=1 // pred_region
      _
    $region33: #{pair2msa_forward.5} parent=1 // pred_fallthru
      _
    // Predicated region
    $region34: #{pair2msa_forward.5} parent=1 // pred_check
      _
    $region35: #{pair2msa_forward.5} parent=1 // pred_check_branch
      %44 = sbr.rel (0) target = $region37
    $region36: #{pair2msa_forward.5} parent=1 // pred_region
      _
    $region37: #{pair2msa_forward.5} parent=1 // pred_fallthru
      _
    // Predicated region
    $region38: #{pair2msa_forward.5} parent=1 // pred_check
      _
    $region39: #{pair2msa_forward.5} parent=1 // pred_check_branch
      %46 = sbr.rel (0) target = $region41
    $region40: #{pair2msa_forward.5} parent=1 // pred_region
      %48 = dma.done [#allocation3], 16384
    $region41: #{pair2msa_forward.5} parent=1 // pred_fallthru
      _
    %v49 = vld [vmem:[%s0] sm:$0xff]
    %v50 = vld [vmem:[%s0 + $0x8] sm:$0xff]
    %v51 = vld [vmem:[%s0 + $0x10] sm:$0xff]
    %v52 = vld [vmem:[%s0 + $0x18] sm:$0xff]
    %v53 = vld [vmem:[%s0 + $0x20] sm:$0xff]
    %v54 = vld [vmem:[%s0 + $0x28] sm:$0xff]
    %v55 = vld [vmem:[%s0 + $0x30] sm:$0xff]
    %v56 = vld [vmem:[%s0 + $0x38] sm:$0xff]
    %v57 = vld [vmem:[%s0 + $0x40] sm:$0xff]
    %v58 = vld [vmem:[%s0 + $0x48] sm:$0xff]
    %v59 = vld [vmem:[%s0 + $0x50] sm:$0xff]
    %v60 = vld [vmem:[%s0 + $0x58] sm:$0xff]
    %v61 = vld [vmem:[%s0 + $0x60] sm:$0xff]
    %v62 = vld [vmem:[%s0 + $0x68] sm:$0xff]
    %v63 = vld [vmem:[%s0 + $0x70] sm:$0xff]
    %v64 = vld [vmem:[%s0 + $0x78] sm:$0xff]
    %v65 = vld [vmem:[%s0 + $0x80] sm:$0xff]
    %v66 = vld [vmem:[%s0 + $0x88] sm:$0xff]
    %v67 = vld [vmem:[%s0 + $0x90] sm:$0xff]
    %v68 = vld [vmem:[%s0 + $0x98] sm:$0xff]
    %v69 = vld [vmem:[%s0 + $0xa0] sm:$0xff]
    %v70 = vld [vmem:[%s0 + $0xa8] sm:$0xff]
    %v71 = vld [vmem:[%s0 + $0xb0] sm:$0xff]
    %v72 = vld [vmem:[%s0 + $0xb8] sm:$0xff]
    %v73 = vld [vmem:[%s0 + $0xc0] sm:$0xff]
    %v74 = vld [vmem:[%s0 + $0xc8] sm:$0xff]
    %v75 = vld [vmem:[%s0 + $0xd0] sm:$0xff]
    %v76 = vld [vmem:[%s0 + $0xd8] sm:$0xff]
    %v77 = vld [vmem:[%s0 + $0xe0] sm:$0xff]
    %v78 = vld [vmem:[%s0 + $0xe8] sm:$0xff]
    %v79 = vld [vmem:[%s0 + $0xf0] sm:$0xff]
    %v80 = vld [vmem:[%s0 + $0xf8] sm:$0xff]
    %v81 = vld [vmem:[%s1] sm:$0x3]
    %v82 = vld [vmem:[%s2] sm:$0x3]
    %v83 = vadd.f32 %v49, %v50
    %84 = vadd.xlane.f32.xlu0 %v83
    %v85 = vpop.xlane.xlu0 %84
    %v86 = vadd.f32 %v51, %v52
    %87 = vadd.xlane.f32.xlu0 %v86
    %v88 = vpop.xlane.xlu0 %87
    %v89 = vadd.f32 %v53, %v54
    %90 = vadd.xlane.f32.xlu0 %v89
    %v91 = vpop.xlane.xlu0 %90
    %v92 = vadd.f32 %v55, %v56
    %93 = vadd.xlane.f32.xlu0 %v92
    %v94 = vpop.xlane.xlu0 %93
    %v95 = vadd.f32 %v57, %v58
    %96 = vadd.xlane.f32.xlu0 %v95
    %v97 = vpop.xlane.xlu0 %96
    %v98 = vadd.f32 %v59, %v60
    %99 = vadd.xlane.f32.xlu0 %v98
    %v100 = vpop.xlane.xlu0 %99
    %v101 = vadd.f32 %v61, %v62
    %102 = vadd.xlane.f32.xlu0 %v101
    %v103 = vpop.xlane.xlu0 %102
    %v104 = vadd.f32 %v63, %v64
    %105 = vadd.xlane.f32.xlu0 %v104
    %v106 = vpop.xlane.xlu0 %105
    %v107 = vadd.f32 %v65, %v66
    %108 = vadd.xlane.f32.xlu0 %v107
    %v109 = vpop.xlane.xlu0 %108
    %v110 = vadd.f32 %v67, %v68
    %111 = vadd.xlane.f32.xlu0 %v110
    %v112 = vpop.xlane.xlu0 %111
    %v113 = vadd.f32 %v69, %v70
    %114 = vadd.xlane.f32.xlu0 %v113
    %v115 = vpop.xlane.xlu0 %114
    %v116 = vadd.f32 %v71, %v72
    %117 = vadd.xlane.f32.xlu0 %v116
    %v118 = vpop.xlane.xlu0 %117
    %v119 = vadd.f32 %v73, %v74
    %120 = vadd.xlane.f32.xlu0 %v119
    %v121 = vpop.xlane.xlu0 %120
    %v122 = vadd.f32 %v75, %v76
    %123 = vadd.xlane.f32.xlu0 %v122
    %v124 = vpop.xlane.xlu0 %123
    %v125 = vadd.f32 %v77, %v78
    %126 = vadd.xlane.f32.xlu0 %v125
    %v127 = vpop.xlane.xlu0 %126
    %v128 = vadd.f32 %v79, %v80
    %129 = vadd.xlane.f32.xlu0 %v128
    %v130 = vpop.xlane.xlu0 %129
    %v131 = vrcp.pop 256.0
    %v132 = vmul.f32 256.0, %v131
    %v133 = vsub.f32 1.0, %v132
    %v134 = vmul.f32 %v131, %v133
    %v135 = vadd.f32 %v131, %v134
    %vm136 = vweird.f32 %v131
    %v137 = vsel %vm136, %v131, %v135
    %v138 = vmul.f32 %v85, %v137
    %v139 = vmul.f32 %v88, %v137
    %v140 = vmul.f32 %v91, %v137
    %v141 = vmul.f32 %v94, %v137
    %v142 = vmul.f32 %v97, %v137
    %v143 = vmul.f32 %v100, %v137
    %v144 = vmul.f32 %v103, %v137
    %v145 = vmul.f32 %v106, %v137
    %v146 = vmul.f32 %v109, %v137
    %v147 = vmul.f32 %v112, %v137
    %v148 = vmul.f32 %v115, %v137
    %v149 = vmul.f32 %v118, %v137
    %v150 = vmul.f32 %v121, %v137
    %v151 = vmul.f32 %v124, %v137
    %v152 = vmul.f32 %v127, %v137
    %v153 = vmul.f32 %v130, %v137
    %v154 = vsub.f32 %v49, %v138
    %v155 = vsub.f32 %v50, %v138
    %v156 = vsub.f32 %v51, %v139
    %v157 = vsub.f32 %v52, %v139
    %v158 = vsub.f32 %v53, %v140
    %v159 = vsub.f32 %v54, %v140
    %v160 = vsub.f32 %v55, %v141
    %v161 = vsub.f32 %v56, %v141
    %v162 = vsub.f32 %v57, %v142
    %v163 = vsub.f32 %v58, %v142
    %v164 = vsub.f32 %v59, %v143
    %v165 = vsub.f32 %v60, %v143
    %v166 = vsub.f32 %v61, %v144
    %v167 = vsub.f32 %v62, %v144
    %v168 = vsub.f32 %v63, %v145
    %v169 = vsub.f32 %v64, %v145
    %v170 = vsub.f32 %v65, %v146
    %v171 = vsub.f32 %v66, %v146
    %v172 = vsub.f32 %v67, %v147
    %v173 = vsub.f32 %v68, %v147
    %v174 = vsub.f32 %v69, %v148
    %v175 = vsub.f32 %v70, %v148
    %v176 = vsub.f32 %v71, %v149
    %v177 = vsub.f32 %v72, %v149
    %v178 = vsub.f32 %v73, %v150
    %v179 = vsub.f32 %v74, %v150
    %v180 = vsub.f32 %v75, %v151
    %v181 = vsub.f32 %v76, %v151
    %v182 = vsub.f32 %v77, %v152
    %v183 = vsub.f32 %v78, %v152
    %v184 = vsub.f32 %v79, %v153
    %v185 = vsub.f32 %v80, %v153
    %v186 = vmul.f32 %v154, %v154
    %v187 = vmul.f32 %v155, %v155
    %v188 = vmul.f32 %v156, %v156
    %v189 = vmul.f32 %v157, %v157
    %v190 = vmul.f32 %v158, %v158
    %v191 = vmul.f32 %v159, %v159
    %v192 = vmul.f32 %v160, %v160
    %v193 = vmul.f32 %v161, %v161
    %v194 = vmul.f32 %v162, %v162
    %v195 = vmul.f32 %v163, %v163
    %v196 = vmul.f32 %v164, %v164
    %v197 = vmul.f32 %v165, %v165
    %v198 = vmul.f32 %v166, %v166
    %v199 = vmul.f32 %v167, %v167
    %v200 = vmul.f32 %v168, %v168
    %v201 = vmul.f32 %v169, %v169
    %v202 = vmul.f32 %v170, %v170
    %v203 = vmul.f32 %v171, %v171
    %v204 = vmul.f32 %v172, %v172
    %v205 = vmul.f32 %v173, %v173
    %v206 = vmul.f32 %v174, %v174
    %v207 = vmul.f32 %v175, %v175
    %v208 = vmul.f32 %v176, %v176
    %v209 = vmul.f32 %v177, %v177
    %v210 = vmul.f32 %v178, %v178
    %v211 = vmul.f32 %v179, %v179
    %v212 = vmul.f32 %v180, %v180
    %v213 = vmul.f32 %v181, %v181
    %v214 = vmul.f32 %v182, %v182
    %v215 = vmul.f32 %v183, %v183
    %v216 = vmul.f32 %v184, %v184
    %v217 = vmul.f32 %v185, %v185
    %v218 = vadd.f32 %v186, %v187
    %219 = vadd.xlane.f32.xlu0 %v218
    %v220 = vpop.xlane.xlu0 %219
    %v221 = vadd.f32 %v188, %v189
    %222 = vadd.xlane.f32.xlu0 %v221
    %v223 = vpop.xlane.xlu0 %222
    %v224 = vadd.f32 %v190, %v191
    %225 = vadd.xlane.f32.xlu0 %v224
    %v226 = vpop.xlane.xlu0 %225
    %v227 = vadd.f32 %v192, %v193
    %228 = vadd.xlane.f32.xlu0 %v227
    %v229 = vpop.xlane.xlu0 %228
    %v230 = vadd.f32 %v194, %v195
    %231 = vadd.xlane.f32.xlu0 %v230
    %v232 = vpop.xlane.xlu0 %231
    %v233 = vadd.f32 %v196, %v197
    %234 = vadd.xlane.f32.xlu0 %v233
    %v235 = vpop.xlane.xlu0 %234
    %v236 = vadd.f32 %v198, %v199
    %237 = vadd.xlane.f32.xlu0 %v236
    %v238 = vpop.xlane.xlu0 %237
    %v239 = vadd.f32 %v200, %v201
    %240 = vadd.xlane.f32.xlu0 %v239
    %v241 = vpop.xlane.xlu0 %240
    %v242 = vadd.f32 %v202, %v203
    %243 = vadd.xlane.f32.xlu0 %v242
    %v244 = vpop.xlane.xlu0 %243
    %v245 = vadd.f32 %v204, %v205
    %246 = vadd.xlane.f32.xlu0 %v245
    %v247 = vpop.xlane.xlu0 %246
    %v248 = vadd.f32 %v206, %v207
    %249 = vadd.xlane.f32.xlu0 %v248
    %v250 = vpop.xlane.xlu0 %249
    %v251 = vadd.f32 %v208, %v209
    %252 = vadd.xlane.f32.xlu0 %v251
    %v253 = vpop.xlane.xlu0 %252
    %v254 = vadd.f32 %v210, %v211
    %255 = vadd.xlane.f32.xlu0 %v254
    %v256 = vpop.xlane.xlu0 %255
    %v257 = vadd.f32 %v212, %v213
    %258 = vadd.xlane.f32.xlu0 %v257
    %v259 = vpop.xlane.xlu0 %258
    %v260 = vadd.f32 %v214, %v215
    %261 = vadd.xlane.f32.xlu0 %v260
    %v262 = vpop.xlane.xlu0 %261
    %v263 = vadd.f32 %v216, %v217
    %264 = vadd.xlane.f32.xlu0 %v263
    %v265 = vpop.xlane.xlu0 %264
    %v266 = vmul.f32 %v220, %v137
    %v267 = vmul.f32 %v223, %v137
    %v268 = vmul.f32 %v226, %v137
    %v269 = vmul.f32 %v229, %v137
    %v270 = vmul.f32 %v232, %v137
    %v271 = vmul.f32 %v235, %v137
    %v272 = vmul.f32 %v238, %v137
    %v273 = vmul.f32 %v241, %v137
    %v274 = vmul.f32 %v244, %v137
    %v275 = vmul.f32 %v247, %v137
    %v276 = vmul.f32 %v250, %v137
    %v277 = vmul.f32 %v253, %v137
    %v278 = vmul.f32 %v256, %v137
    %v279 = vmul.f32 %v259, %v137
    %v280 = vmul.f32 %v262, %v137
    %v281 = vmul.f32 %v265, %v137
    %v282 = vadd.f32 %v266, 1e-05
    %v283 = vadd.f32 %v267, 1e-05
    %v284 = vadd.f32 %v268, 1e-05
    %v285 = vadd.f32 %v269, 1e-05
    %v286 = vadd.f32 %v270, 1e-05
    %v287 = vadd.f32 %v271, 1e-05
    %v288 = vadd.f32 %v272, 1e-05
    %v289 = vadd.f32 %v273, 1e-05
    %v290 = vadd.f32 %v274, 1e-05
    %v291 = vadd.f32 %v275, 1e-05
    %v292 = vadd.f32 %v276, 1e-05
    %v293 = vadd.f32 %v277, 1e-05
    %v294 = vadd.f32 %v278, 1e-05
    %v295 = vadd.f32 %v279, 1e-05
    %v296 = vadd.f32 %v280, 1e-05
    %v297 = vadd.f32 %v281, 1e-05
    %v298 = vrsqrt.pop %v282
    %v299 = vmul.f32 %v298, %v282
    %v300 = vmul.f32 %v299, %v298
    %v301 = vmul.f32 0.5, %v300
    %v302 = vsub.f32 1.5, %v301
    %v303 = vmul.f32 %v298, %v302
    %vm304 = vweird.f32 %v282
    %vm305 = vweird.f32 %v298
    %vm306 = vmor %vm304, %vm305
    %v307 = vsel %vm306, %v298, %v303
    %v308 = vrsqrt.pop %v283
    %v309 = vmul.f32 %v308, %v283
    %v310 = vmul.f32 %v309, %v308
    %v311 = vmul.f32 0.5, %v310
    %v312 = vsub.f32 1.5, %v311
    %v313 = vmul.f32 %v308, %v312
    %vm314 = vweird.f32 %v283
    %vm315 = vweird.f32 %v308
    %vm316 = vmor %vm314, %vm315
    %v317 = vsel %vm316, %v308, %v313
    %v318 = vrsqrt.pop %v284
    %v319 = vmul.f32 %v318, %v284
    %v320 = vmul.f32 %v319, %v318
    %v321 = vmul.f32 0.5, %v320
    %v322 = vsub.f32 1.5, %v321
    %v323 = vmul.f32 %v318, %v322
    %vm324 = vweird.f32 %v284
    %vm325 = vweird.f32 %v318
    %vm326 = vmor %vm324, %vm325
    %v327 = vsel %vm326, %v318, %v323
    %v328 = vrsqrt.pop %v285
    %v329 = vmul.f32 %v328, %v285
    %v330 = vmul.f32 %v329, %v328
    %v331 = vmul.f32 0.5, %v330
    %v332 = vsub.f32 1.5, %v331
    %v333 = vmul.f32 %v328, %v332
    %vm334 = vweird.f32 %v285
    %vm335 = vweird.f32 %v328
    %vm336 = vmor %vm334, %vm335
    %v337 = vsel %vm336, %v328, %v333
    %v338 = vrsqrt.pop %v286
    %v339 = vmul.f32 %v338, %v286
    %v340 = vmul.f32 %v339, %v338
    %v341 = vmul.f32 0.5, %v340
    %v342 = vsub.f32 1.5, %v341
    %v343 = vmul.f32 %v338, %v342
    %vm344 = vweird.f32 %v286
    %vm345 = vweird.f32 %v338
    %vm346 = vmor %vm344, %vm345
    %v347 = vsel %vm346, %v338, %v343
    %v348 = vrsqrt.pop %v287
    %v349 = vmul.f32 %v348, %v287
    %v350 = vmul.f32 %v349, %v348
    %v351 = vmul.f32 0.5, %v350
    %v352 = vsub.f32 1.5, %v351
    %v353 = vmul.f32 %v348, %v352
    %vm354 = vweird.f32 %v287
    %vm355 = vweird.f32 %v348
    %vm356 = vmor %vm354, %vm355
    %v357 = vsel %vm356, %v348, %v353
    %v358 = vrsqrt.pop %v288
    %v359 = vmul.f32 %v358, %v288
    %v360 = vmul.f32 %v359, %v358
    %v361 = vmul.f32 0.5, %v360
    %v362 = vsub.f32 1.5, %v361
    %v363 = vmul.f32 %v358, %v362
    %vm364 = vweird.f32 %v288
    %vm365 = vweird.f32 %v358
    %vm366 = vmor %vm364, %vm365
    %v367 = vsel %vm366, %v358, %v363
    %v368 = vrsqrt.pop %v289
    %v369 = vmul.f32 %v368, %v289
    %v370 = vmul.f32 %v369, %v368
    %v371 = vmul.f32 0.5, %v370
    %v372 = vsub.f32 1.5, %v371
    %v373 = vmul.f32 %v368, %v372
    %vm374 = vweird.f32 %v289
    %vm375 = vweird.f32 %v368
    %vm376 = vmor %vm374, %vm375
    %v377 = vsel %vm376, %v368, %v373
    %v378 = vrsqrt.pop %v290
    %v379 = vmul.f32 %v378, %v290
    %v380 = vmul.f32 %v379, %v378
    %v381 = vmul.f32 0.5, %v380
    %v382 = vsub.f32 1.5, %v381
    %v383 = vmul.f32 %v378, %v382
    %vm384 = vweird.f32 %v290
    %vm385 = vweird.f32 %v378
    %vm386 = vmor %vm384, %vm385
    %v387 = vsel %vm386, %v378, %v383
    %v388 = vrsqrt.pop %v291
    %v389 = vmul.f32 %v388, %v291
    %v390 = vmul.f32 %v389, %v388
    %v391 = vmul.f32 0.5, %v390
    %v392 = vsub.f32 1.5, %v391
    %v393 = vmul.f32 %v388, %v392
    %vm394 = vweird.f32 %v291
    %vm395 = vweird.f32 %v388
    %vm396 = vmor %vm394, %vm395
    %v397 = vsel %vm396, %v388, %v393
    %v398 = vrsqrt.pop %v292
    %v399 = vmul.f32 %v398, %v292
    %v400 = vmul.f32 %v399, %v398
    %v401 = vmul.f32 0.5, %v400
    %v402 = vsub.f32 1.5, %v401
    %v403 = vmul.f32 %v398, %v402
    %vm404 = vweird.f32 %v292
    %vm405 = vweird.f32 %v398
    %vm406 = vmor %vm404, %vm405
    %v407 = vsel %vm406, %v398, %v403
    %v408 = vrsqrt.pop %v293
    %v409 = vmul.f32 %v408, %v293
    %v410 = vmul.f32 %v409, %v408
    %v411 = vmul.f32 0.5, %v410
    %v412 = vsub.f32 1.5, %v411
    %v413 = vmul.f32 %v408, %v412
    %vm414 = vweird.f32 %v293
    %vm415 = vweird.f32 %v408
    %vm416 = vmor %vm414, %vm415
    %v417 = vsel %vm416, %v408, %v413
    %v418 = vrsqrt.pop %v294
    %v419 = vmul.f32 %v418, %v294
    %v420 = vmul.f32 %v419, %v418
    %v421 = vmul.f32 0.5, %v420
    %v422 = vsub.f32 1.5, %v421
    %v423 = vmul.f32 %v418, %v422
    %vm424 = vweird.f32 %v294
    %vm425 = vweird.f32 %v418
    %vm426 = vmor %vm424, %vm425
    %v427 = vsel %vm426, %v418, %v423
    %v428 = vrsqrt.pop %v295
    %v429 = vmul.f32 %v428, %v295
    %v430 = vmul.f32 %v429, %v428
    %v431 = vmul.f32 0.5, %v430
    %v432 = vsub.f32 1.5, %v431
    %v433 = vmul.f32 %v428, %v432
    %vm434 = vweird.f32 %v295
    %vm435 = vweird.f32 %v428
    %vm436 = vmor %vm434, %vm435
    %v437 = vsel %vm436, %v428, %v433
    %v438 = vrsqrt.pop %v296
    %v439 = vmul.f32 %v438, %v296
    %v440 = vmul.f32 %v439, %v438
    %v441 = vmul.f32 0.5, %v440
    %v442 = vsub.f32 1.5, %v441
    %v443 = vmul.f32 %v438, %v442
    %vm444 = vweird.f32 %v296
    %vm445 = vweird.f32 %v438
    %vm446 = vmor %vm444, %vm445
    %v447 = vsel %vm446, %v438, %v443
    %v448 = vrsqrt.pop %v297
    %v449 = vmul.f32 %v448, %v297
    %v450 = vmul.f32 %v449, %v448
    %v451 = vmul.f32 0.5, %v450
    %v452 = vsub.f32 1.5, %v451
    %v453 = vmul.f32 %v448, %v452
    %vm454 = vweird.f32 %v297
    %vm455 = vweird.f32 %v448
    %vm456 = vmor %vm454, %vm455
    %v457 = vsel %vm456, %v448, %v453
    %v458 = vmul.f32 %v154, %v307
    %v459 = vmul.f32 %v155, %v307
    %v460 = vmul.f32 %v156, %v317
    %v461 = vmul.f32 %v157, %v317
    %v462 = vmul.f32 %v158, %v327
    %v463 = vmul.f32 %v159, %v327
    %v464 = vmul.f32 %v160, %v337
    %v465 = vmul.f32 %v161, %v337
    %v466 = vmul.f32 %v162, %v347
    %v467 = vmul.f32 %v163, %v347
    %v468 = vmul.f32 %v164, %v357
    %v469 = vmul.f32 %v165, %v357
    %v470 = vmul.f32 %v166, %v367
    %v471 = vmul.f32 %v167, %v367
    %v472 = vmul.f32 %v168, %v377
    %v473 = vmul.f32 %v169, %v377
    %v474 = vmul.f32 %v170, %v387
    %v475 = vmul.f32 %v171, %v387
    %v476 = vmul.f32 %v172, %v397
    %v477 = vmul.f32 %v173, %v397
    %v478 = vmul.f32 %v174, %v407
    %v479 = vmul.f32 %v175, %v407
    %v480 = vmul.f32 %v176, %v417
    %v481 = vmul.f32 %v177, %v417
    %v482 = vmul.f32 %v178, %v427
    %v483 = vmul.f32 %v179, %v427
    %v484 = vmul.f32 %v180, %v437
    %v485 = vmul.f32 %v181, %v437
    %v486 = vmul.f32 %v182, %v447
    %v487 = vmul.f32 %v183, %v447
    %v488 = vmul.f32 %v184, %v457
    %v489 = vmul.f32 %v185, %v457
    %v491 = vperm.slane %v81, 0
    %v492 = vperm.slane %v81, 1
    %v495 = vmul.f32 %v458, %v491
    %v496 = vmul.f32 %v459, %v492
    %v497 = vmul.f32 %v460, %v491
    %v498 = vmul.f32 %v461, %v492
    %v499 = vmul.f32 %v462, %v491
    %v500 = vmul.f32 %v463, %v492
    %v501 = vmul.f32 %v464, %v491
    %v502 = vmul.f32 %v465, %v492
    %v503 = vmul.f32 %v466, %v491
    %v504 = vmul.f32 %v467, %v492
    %v505 = vmul.f32 %v468, %v491
    %v506 = vmul.f32 %v469, %v492
    %v507 = vmul.f32 %v470, %v491
    %v508 = vmul.f32 %v471, %v492
    %v509 = vmul.f32 %v472, %v491
    %v510 = vmul.f32 %v473, %v492
    %v511 = vmul.f32 %v474, %v491
    %v512 = vmul.f32 %v475, %v492
    %v513 = vmul.f32 %v476, %v491
    %v514 = vmul.f32 %v477, %v492
    %v515 = vmul.f32 %v478, %v491
    %v516 = vmul.f32 %v479, %v492
    %v517 = vmul.f32 %v480, %v491
    %v518 = vmul.f32 %v481, %v492
    %v519 = vmul.f32 %v482, %v491
    %v520 = vmul.f32 %v483, %v492
    %v521 = vmul.f32 %v484, %v491
    %v522 = vmul.f32 %v485, %v492
    %v523 = vmul.f32 %v486, %v491
    %v524 = vmul.f32 %v487, %v492
    %v525 = vmul.f32 %v488, %v491
    %v526 = vmul.f32 %v489, %v492
    %v528 = vperm.slane %v82, 0
    %v529 = vperm.slane %v82, 1
    %v532 = vadd.f32 %v495, %v528
    %v533 = vadd.f32 %v496, %v529
    %v534 = vadd.f32 %v497, %v528
    %v535 = vadd.f32 %v498, %v529
    %v536 = vadd.f32 %v499, %v528
    %v537 = vadd.f32 %v500, %v529
    %v538 = vadd.f32 %v501, %v528
    %v539 = vadd.f32 %v502, %v529
    %v540 = vadd.f32 %v503, %v528
    %v541 = vadd.f32 %v504, %v529
    %v542 = vadd.f32 %v505, %v528
    %v543 = vadd.f32 %v506, %v529
    %v544 = vadd.f32 %v507, %v528
    %v545 = vadd.f32 %v508, %v529
    %v546 = vadd.f32 %v509, %v528
    %v547 = vadd.f32 %v510, %v529
    %v548 = vadd.f32 %v511, %v528
    %v549 = vadd.f32 %v512, %v529
    %v550 = vadd.f32 %v513, %v528
    %v551 = vadd.f32 %v514, %v529
    %v552 = vadd.f32 %v515, %v528
    %v553 = vadd.f32 %v516, %v529
    %v554 = vadd.f32 %v517, %v528
    %v555 = vadd.f32 %v518, %v529
    %v556 = vadd.f32 %v519, %v528
    %v557 = vadd.f32 %v520, %v529
    %v558 = vadd.f32 %v521, %v528
    %v559 = vadd.f32 %v522, %v529
    %v560 = vadd.f32 %v523, %v528
    %v561 = vadd.f32 %v524, %v529
    %v562 = vadd.f32 %v525, %v528
    %v563 = vadd.f32 %v526, %v529
    %v564 = vpack.c.bf16 %v534, %v532
    %v565 = vpack.c.bf16 %v535, %v533
    %v566 = vpack.c.bf16 %v538, %v536
    %v567 = vpack.c.bf16 %v539, %v537
    %v568 = vpack.c.bf16 %v542, %v540
    %v569 = vpack.c.bf16 %v543, %v541
    %v570 = vpack.c.bf16 %v546, %v544
    %v571 = vpack.c.bf16 %v547, %v545
    %v572 = vpack.c.bf16 %v550, %v548
    %v573 = vpack.c.bf16 %v551, %v549
    %v574 = vpack.c.bf16 %v554, %v552
    %v575 = vpack.c.bf16 %v555, %v553
    %v576 = vpack.c.bf16 %v558, %v556
    %v577 = vpack.c.bf16 %v559, %v557
    %v578 = vpack.c.bf16 %v562, %v560
    %v579 = vpack.c.bf16 %v563, %v561
    %v580 = vld [vmem:[#allocation2] sm:$0xff]
    %v581 = vld [vmem:[#allocation2 + $0x8] sm:$0xff]
    %v582 = vld [vmem:[#allocation2 + $0x10] sm:$0xff]
    %v583 = vld [vmem:[#allocation2 + $0x18] sm:$0xff]
    %v584 = vld [vmem:[#allocation2 + $0x20] sm:$0xff]
    %v585 = vld [vmem:[#allocation2 + $0x28] sm:$0xff]
    %v586 = vld [vmem:[#allocation2 + $0x30] sm:$0xff]
    %v587 = vld [vmem:[#allocation2 + $0x38] sm:$0xff]
    %v588 = vld [vmem:[#allocation2 + $0x40] sm:$0xff]
    %v589 = vld [vmem:[#allocation2 + $0x48] sm:$0xff]
    %v590 = vld [vmem:[#allocation2 + $0x50] sm:$0xff]
    %v591 = vld [vmem:[#allocation2 + $0x58] sm:$0xff]
    %v592 = vld [vmem:[#allocation2 + $0x60] sm:$0xff]
    %v593 = vld [vmem:[#allocation2 + $0x68] sm:$0xff]
    %v594 = vld [vmem:[#allocation2 + $0x70] sm:$0xff]
    %v595 = vld [vmem:[#allocation2 + $0x78] sm:$0xff]
    %v596 = vld [vmem:[#allocation2 + $0x80] sm:$0xff]
    %v597 = vld [vmem:[#allocation2 + $0x88] sm:$0xff]
    %v598 = vld [vmem:[#allocation2 + $0x90] sm:$0xff]
    %v599 = vld [vmem:[#allocation2 + $0x98] sm:$0xff]
    %v600 = vld [vmem:[#allocation2 + $0xa0] sm:$0xff]
    %v601 = vld [vmem:[#allocation2 + $0xa8] sm:$0xff]
    %v602 = vld [vmem:[#allocation2 + $0xb0] sm:$0xff]
    %v603 = vld [vmem:[#allocation2 + $0xb8] sm:$0xff]
    %v604 = vld [vmem:[#allocation2 + $0xc0] sm:$0xff]
    %v605 = vld [vmem:[#allocation2 + $0xc8] sm:$0xff]
    %v606 = vld [vmem:[#allocation2 + $0xd0] sm:$0xff]
    %v607 = vld [vmem:[#allocation2 + $0xd8] sm:$0xff]
    %v608 = vld [vmem:[#allocation2 + $0xe0] sm:$0xff]
    %v609 = vld [vmem:[#allocation2 + $0xe8] sm:$0xff]
    %v610 = vld [vmem:[#allocation2 + $0xf0] sm:$0xff]
    %v611 = vld [vmem:[#allocation2 + $0xf8] sm:$0xff]
    %v612 = vld [vmem:[#allocation2 + $0x100] sm:$0xff]
    %v613 = vld [vmem:[#allocation2 + $0x108] sm:$0xff]
    %v614 = vld [vmem:[#allocation2 + $0x110] sm:$0xff]
    %v615 = vld [vmem:[#allocation2 + $0x118] sm:$0xff]
    %v616 = vld [vmem:[#allocation2 + $0x120] sm:$0xff]
    %v617 = vld [vmem:[#allocation2 + $0x128] sm:$0xff]
    %v618 = vld [vmem:[#allocation2 + $0x130] sm:$0xff]
    %v619 = vld [vmem:[#allocation2 + $0x138] sm:$0xff]
    %v620 = vld [vmem:[#allocation2 + $0x140] sm:$0xff]
    %v621 = vld [vmem:[#allocation2 + $0x148] sm:$0xff]
    %v622 = vld [vmem:[#allocation2 + $0x150] sm:$0xff]
    %v623 = vld [vmem:[#allocation2 + $0x158] sm:$0xff]
    %v624 = vld [vmem:[#allocation2 + $0x160] sm:$0xff]
    %v625 = vld [vmem:[#allocation2 + $0x168] sm:$0xff]
    %v626 = vld [vmem:[#allocation2 + $0x170] sm:$0xff]
    %v627 = vld [vmem:[#allocation2 + $0x178] sm:$0xff]
    %v628 = vld [vmem:[#allocation2 + $0x180] sm:$0xff]
    %v629 = vld [vmem:[#allocation2 + $0x188] sm:$0xff]
    %v630 = vld [vmem:[#allocation2 + $0x190] sm:$0xff]
    %v631 = vld [vmem:[#allocation2 + $0x198] sm:$0xff]
    %v632 = vld [vmem:[#allocation2 + $0x1a0] sm:$0xff]
    %v633 = vld [vmem:[#allocation2 + $0x1a8] sm:$0xff]
    %v634 = vld [vmem:[#allocation2 + $0x1b0] sm:$0xff]
    %v635 = vld [vmem:[#allocation2 + $0x1b8] sm:$0xff]
    %v636 = vld [vmem:[#allocation2 + $0x1c0] sm:$0xff]
    %v637 = vld [vmem:[#allocation2 + $0x1c8] sm:$0xff]
    %v638 = vld [vmem:[#allocation2 + $0x1d0] sm:$0xff]
    %v639 = vld [vmem:[#allocation2 + $0x1d8] sm:$0xff]
    %v640 = vld [vmem:[#allocation2 + $0x1e0] sm:$0xff]
    %v641 = vld [vmem:[#allocation2 + $0x1e8] sm:$0xff]
    %v642 = vld [vmem:[#allocation2 + $0x1f0] sm:$0xff]
    %v643 = vld [vmem:[#allocation2 + $0x1f8] sm:$0xff]
    %v644 = vld [vmem:[#allocation2 + $0x200] sm:$0xff]
    %v645 = vld [vmem:[#allocation2 + $0x208] sm:$0xff]
    %v646 = vld [vmem:[#allocation2 + $0x210] sm:$0xff]
    %v647 = vld [vmem:[#allocation2 + $0x218] sm:$0xff]
    %v648 = vld [vmem:[#allocation2 + $0x220] sm:$0xff]
    %v649 = vld [vmem:[#allocation2 + $0x228] sm:$0xff]
    %v650 = vld [vmem:[#allocation2 + $0x230] sm:$0xff]
    %v651 = vld [vmem:[#allocation2 + $0x238] sm:$0xff]
    %v652 = vld [vmem:[#allocation2 + $0x240] sm:$0xff]
    %v653 = vld [vmem:[#allocation2 + $0x248] sm:$0xff]
    %v654 = vld [vmem:[#allocation2 + $0x250] sm:$0xff]
    %v655 = vld [vmem:[#allocation2 + $0x258] sm:$0xff]
    %v656 = vld [vmem:[#allocation2 + $0x260] sm:$0xff]
    %v657 = vld [vmem:[#allocation2 + $0x268] sm:$0xff]
    %v658 = vld [vmem:[#allocation2 + $0x270] sm:$0xff]
    %v659 = vld [vmem:[#allocation2 + $0x278] sm:$0xff]
    %v660 = vld [vmem:[#allocation2 + $0x280] sm:$0xff]
    %v661 = vld [vmem:[#allocation2 + $0x288] sm:$0xff]
    %v662 = vld [vmem:[#allocation2 + $0x290] sm:$0xff]
    %v663 = vld [vmem:[#allocation2 + $0x298] sm:$0xff]
    %v664 = vld [vmem:[#allocation2 + $0x2a0] sm:$0xff]
    %v665 = vld [vmem:[#allocation2 + $0x2a8] sm:$0xff]
    %v666 = vld [vmem:[#allocation2 + $0x2b0] sm:$0xff]
    %v667 = vld [vmem:[#allocation2 + $0x2b8] sm:$0xff]
    %v668 = vld [vmem:[#allocation2 + $0x2c0] sm:$0xff]
    %v669 = vld [vmem:[#allocation2 + $0x2c8] sm:$0xff]
    %v670 = vld [vmem:[#allocation2 + $0x2d0] sm:$0xff]
    %v671 = vld [vmem:[#allocation2 + $0x2d8] sm:$0xff]
    %v672 = vld [vmem:[#allocation2 + $0x2e0] sm:$0xff]
    %v673 = vld [vmem:[#allocation2 + $0x2e8] sm:$0xff]
    %v674 = vld [vmem:[#allocation2 + $0x2f0] sm:$0xff]
    %v675 = vld [vmem:[#allocation2 + $0x2f8] sm:$0xff]
    %v676 = vld [vmem:[#allocation2 + $0x300] sm:$0xff]
    %v677 = vld [vmem:[#allocation2 + $0x308] sm:$0xff]
    %v678 = vld [vmem:[#allocation2 + $0x310] sm:$0xff]
    %v679 = vld [vmem:[#allocation2 + $0x318] sm:$0xff]
    %v680 = vld [vmem:[#allocation2 + $0x320] sm:$0xff]
    %v681 = vld [vmem:[#allocation2 + $0x328] sm:$0xff]
    %v682 = vld [vmem:[#allocation2 + $0x330] sm:$0xff]
    %v683 = vld [vmem:[#allocation2 + $0x338] sm:$0xff]
    %v684 = vld [vmem:[#allocation2 + $0x340] sm:$0xff]
    %v685 = vld [vmem:[#allocation2 + $0x348] sm:$0xff]
    %v686 = vld [vmem:[#allocation2 + $0x350] sm:$0xff]
    %v687 = vld [vmem:[#allocation2 + $0x358] sm:$0xff]
    %v688 = vld [vmem:[#allocation2 + $0x360] sm:$0xff]
    %v689 = vld [vmem:[#allocation2 + $0x368] sm:$0xff]
    %v690 = vld [vmem:[#allocation2 + $0x370] sm:$0xff]
    %v691 = vld [vmem:[#allocation2 + $0x378] sm:$0xff]
    %v692 = vld [vmem:[#allocation2 + $0x380] sm:$0xff]
    %v693 = vld [vmem:[#allocation2 + $0x388] sm:$0xff]
    %v694 = vld [vmem:[#allocation2 + $0x390] sm:$0xff]
    %v695 = vld [vmem:[#allocation2 + $0x398] sm:$0xff]
    %v696 = vld [vmem:[#allocation2 + $0x3a0] sm:$0xff]
    %v697 = vld [vmem:[#allocation2 + $0x3a8] sm:$0xff]
    %v698 = vld [vmem:[#allocation2 + $0x3b0] sm:$0xff]
    %v699 = vld [vmem:[#allocation2 + $0x3b8] sm:$0xff]
    %v700 = vld [vmem:[#allocation2 + $0x3c0] sm:$0xff]
    %v701 = vld [vmem:[#allocation2 + $0x3c8] sm:$0xff]
    %v702 = vld [vmem:[#allocation2 + $0x3d0] sm:$0xff]
    %v703 = vld [vmem:[#allocation2 + $0x3d8] sm:$0xff]
    %v704 = vld [vmem:[#allocation2 + $0x3e0] sm:$0xff]
    %v705 = vld [vmem:[#allocation2 + $0x3e8] sm:$0xff]
    %v706 = vld [vmem:[#allocation2 + $0x3f0] sm:$0xff]
    %v707 = vld [vmem:[#allocation2 + $0x3f8] sm:$0xff]
    %v708 = vld [vmem:[%s4] sm:$0xff]
    %v710 = vperm.slane %v708, 0
    %v711 = vperm.slane %v708, 1
    %v712 = vperm.slane %v708, 2
    %v713 = vperm.slane %v708, 3
    %v714 = vperm.slane %v708, 4
    %v715 = vperm.slane %v708, 5
    %v716 = vperm.slane %v708, 6
    %v717 = vperm.slane %v708, 7
    %v854 = vunpack.c.l.b16 %v580
    %v855 = vunpack.c.h.b16 %v580
    %v856 = vunpack.c.l.b16 %v581
    %v857 = vunpack.c.h.b16 %v581
    %v858 = vunpack.c.l.b16 %v582
    %v859 = vunpack.c.h.b16 %v582
    %v860 = vunpack.c.l.b16 %v583
    %v861 = vunpack.c.h.b16 %v583
    %v862 = vunpack.c.l.b16 %v584
    %v863 = vunpack.c.h.b16 %v584
    %v864 = vunpack.c.l.b16 %v585
    %v865 = vunpack.c.h.b16 %v585
    %v866 = vunpack.c.l.b16 %v586
    %v867 = vunpack.c.h.b16 %v586
    %v868 = vunpack.c.l.b16 %v587
    %v869 = vunpack.c.h.b16 %v587
    %v870 = vunpack.c.l.b16 %v588
    %v871 = vunpack.c.h.b16 %v588
    %v872 = vunpack.c.l.b16 %v589
    %v873 = vunpack.c.h.b16 %v589
    %v874 = vunpack.c.l.b16 %v590
    %v875 = vunpack.c.h.b16 %v590
    %v876 = vunpack.c.l.b16 %v591
    %v877 = vunpack.c.h.b16 %v591
    %v878 = vunpack.c.l.b16 %v592
    %v879 = vunpack.c.h.b16 %v592
    %v880 = vunpack.c.l.b16 %v593
    %v881 = vunpack.c.h.b16 %v593
    %v882 = vunpack.c.l.b16 %v594
    %v883 = vunpack.c.h.b16 %v594
    %v884 = vunpack.c.l.b16 %v595
    %v885 = vunpack.c.h.b16 %v595
    %v886 = vunpack.c.l.b16 %v596
    %v887 = vunpack.c.h.b16 %v596
    %v888 = vunpack.c.l.b16 %v597
    %v889 = vunpack.c.h.b16 %v597
    %v890 = vunpack.c.l.b16 %v598
    %v891 = vunpack.c.h.b16 %v598
    %v892 = vunpack.c.l.b16 %v599
    %v893 = vunpack.c.h.b16 %v599
    %v894 = vunpack.c.l.b16 %v600
    %v895 = vunpack.c.h.b16 %v600
    %v896 = vunpack.c.l.b16 %v601
    %v897 = vunpack.c.h.b16 %v601
    %v898 = vunpack.c.l.b16 %v602
    %v899 = vunpack.c.h.b16 %v602
    %v900 = vunpack.c.l.b16 %v603
    %v901 = vunpack.c.h.b16 %v603
    %v902 = vunpack.c.l.b16 %v604
    %v903 = vunpack.c.h.b16 %v604
    %v904 = vunpack.c.l.b16 %v605
    %v905 = vunpack.c.h.b16 %v605
    %v906 = vunpack.c.l.b16 %v606
    %v907 = vunpack.c.h.b16 %v606
    %v908 = vunpack.c.l.b16 %v607
    %v909 = vunpack.c.h.b16 %v607
    %v910 = vunpack.c.l.b16 %v608
    %v911 = vunpack.c.h.b16 %v608
    %v912 = vunpack.c.l.b16 %v609
    %v913 = vunpack.c.h.b16 %v609
    %v914 = vunpack.c.l.b16 %v610
    %v915 = vunpack.c.h.b16 %v610
    %v916 = vunpack.c.l.b16 %v611
    %v917 = vunpack.c.h.b16 %v611
    %v918 = vunpack.c.l.b16 %v612
    %v919 = vunpack.c.h.b16 %v612
    %v920 = vunpack.c.l.b16 %v613
    %v921 = vunpack.c.h.b16 %v613
    %v922 = vunpack.c.l.b16 %v614
    %v923 = vunpack.c.h.b16 %v614
    %v924 = vunpack.c.l.b16 %v615
    %v925 = vunpack.c.h.b16 %v615
    %v926 = vunpack.c.l.b16 %v616
    %v927 = vunpack.c.h.b16 %v616
    %v928 = vunpack.c.l.b16 %v617
    %v929 = vunpack.c.h.b16 %v617
    %v930 = vunpack.c.l.b16 %v618
    %v931 = vunpack.c.h.b16 %v618
    %v932 = vunpack.c.l.b16 %v619
    %v933 = vunpack.c.h.b16 %v619
    %v934 = vunpack.c.l.b16 %v620
    %v935 = vunpack.c.h.b16 %v620
    %v936 = vunpack.c.l.b16 %v621
    %v937 = vunpack.c.h.b16 %v621
    %v938 = vunpack.c.l.b16 %v622
    %v939 = vunpack.c.h.b16 %v622
    %v940 = vunpack.c.l.b16 %v623
    %v941 = vunpack.c.h.b16 %v623
    %v942 = vunpack.c.l.b16 %v624
    %v943 = vunpack.c.h.b16 %v624
    %v944 = vunpack.c.l.b16 %v625
    %v945 = vunpack.c.h.b16 %v625
    %v946 = vunpack.c.l.b16 %v626
    %v947 = vunpack.c.h.b16 %v626
    %v948 = vunpack.c.l.b16 %v627
    %v949 = vunpack.c.h.b16 %v627
    %v950 = vunpack.c.l.b16 %v628
    %v951 = vunpack.c.h.b16 %v628
    %v952 = vunpack.c.l.b16 %v629
    %v953 = vunpack.c.h.b16 %v629
    %v954 = vunpack.c.l.b16 %v630
    %v955 = vunpack.c.h.b16 %v630
    %v956 = vunpack.c.l.b16 %v631
    %v957 = vunpack.c.h.b16 %v631
    %v958 = vunpack.c.l.b16 %v632
    %v959 = vunpack.c.h.b16 %v632
    %v960 = vunpack.c.l.b16 %v633
    %v961 = vunpack.c.h.b16 %v633
    %v962 = vunpack.c.l.b16 %v634
    %v963 = vunpack.c.h.b16 %v634
    %v964 = vunpack.c.l.b16 %v635
    %v965 = vunpack.c.h.b16 %v635
    %v966 = vunpack.c.l.b16 %v636
    %v967 = vunpack.c.h.b16 %v636
    %v968 = vunpack.c.l.b16 %v637
    %v969 = vunpack.c.h.b16 %v637
    %v970 = vunpack.c.l.b16 %v638
    %v971 = vunpack.c.h.b16 %v638
    %v972 = vunpack.c.l.b16 %v639
    %v973 = vunpack.c.h.b16 %v639
    %v974 = vunpack.c.l.b16 %v640
    %v975 = vunpack.c.h.b16 %v640
    %v976 = vunpack.c.l.b16 %v641
    %v977 = vunpack.c.h.b16 %v641
    %v978 = vunpack.c.l.b16 %v642
    %v979 = vunpack.c.h.b16 %v642
    %v980 = vunpack.c.l.b16 %v643
    %v981 = vunpack.c.h.b16 %v643
    %v982 = vunpack.c.l.b16 %v644
    %v983 = vunpack.c.h.b16 %v644
    %v984 = vunpack.c.l.b16 %v645
    %v985 = vunpack.c.h.b16 %v645
    %v986 = vunpack.c.l.b16 %v646
    %v987 = vunpack.c.h.b16 %v646
    %v988 = vunpack.c.l.b16 %v647
    %v989 = vunpack.c.h.b16 %v647
    %v990 = vunpack.c.l.b16 %v648
    %v991 = vunpack.c.h.b16 %v648
    %v992 = vunpack.c.l.b16 %v649
    %v993 = vunpack.c.h.b16 %v649
    %v994 = vunpack.c.l.b16 %v650
    %v995 = vunpack.c.h.b16 %v650
    %v996 = vunpack.c.l.b16 %v651
    %v997 = vunpack.c.h.b16 %v651
    %v998 = vunpack.c.l.b16 %v652
    %v999 = vunpack.c.h.b16 %v652
    %v1000 = vunpack.c.l.b16 %v653
    %v1001 = vunpack.c.h.b16 %v653
    %v1002 = vunpack.c.l.b16 %v654
    %v1003 = vunpack.c.h.b16 %v654
    %v1004 = vunpack.c.l.b16 %v655
    %v1005 = vunpack.c.h.b16 %v655
    %v1006 = vunpack.c.l.b16 %v656
    %v1007 = vunpack.c.h.b16 %v656
    %v1008 = vunpack.c.l.b16 %v657
    %v1009 = vunpack.c.h.b16 %v657
    %v1010 = vunpack.c.l.b16 %v658
    %v1011 = vunpack.c.h.b16 %v658
    %v1012 = vunpack.c.l.b16 %v659
    %v1013 = vunpack.c.h.b16 %v659
    %v1014 = vunpack.c.l.b16 %v660
    %v1015 = vunpack.c.h.b16 %v660
    %v1016 = vunpack.c.l.b16 %v661
    %v1017 = vunpack.c.h.b16 %v661
    %v1018 = vunpack.c.l.b16 %v662
    %v1019 = vunpack.c.h.b16 %v662
    %v1020 = vunpack.c.l.b16 %v663
    %v1021 = vunpack.c.h.b16 %v663
    %v1022 = vunpack.c.l.b16 %v664
    %v1023 = vunpack.c.h.b16 %v664
    %v1024 = vunpack.c.l.b16 %v665
    %v1025 = vunpack.c.h.b16 %v665
    %v1026 = vunpack.c.l.b16 %v666
    %v1027 = vunpack.c.h.b16 %v666
    %v1028 = vunpack.c.l.b16 %v667
    %v1029 = vunpack.c.h.b16 %v667
    %v1030 = vunpack.c.l.b16 %v668
    %v1031 = vunpack.c.h.b16 %v668
    %v1032 = vunpack.c.l.b16 %v669
    %v1033 = vunpack.c.h.b16 %v669
    %v1034 = vunpack.c.l.b16 %v670
    %v1035 = vunpack.c.h.b16 %v670
    %v1036 = vunpack.c.l.b16 %v671
    %v1037 = vunpack.c.h.b16 %v671
    %v1038 = vunpack.c.l.b16 %v672
    %v1039 = vunpack.c.h.b16 %v672
    %v1040 = vunpack.c.l.b16 %v673
    %v1041 = vunpack.c.h.b16 %v673
    %v1042 = vunpack.c.l.b16 %v674
    %v1043 = vunpack.c.h.b16 %v674
    %v1044 = vunpack.c.l.b16 %v675
    %v1045 = vunpack.c.h.b16 %v675
    %v1046 = vunpack.c.l.b16 %v676
    %v1047 = vunpack.c.h.b16 %v676
    %v1048 = vunpack.c.l.b16 %v677
    %v1049 = vunpack.c.h.b16 %v677
    %v1050 = vunpack.c.l.b16 %v678
    %v1051 = vunpack.c.h.b16 %v678
    %v1052 = vunpack.c.l.b16 %v679
    %v1053 = vunpack.c.h.b16 %v679
    %v1054 = vunpack.c.l.b16 %v680
    %v1055 = vunpack.c.h.b16 %v680
    %v1056 = vunpack.c.l.b16 %v681
    %v1057 = vunpack.c.h.b16 %v681
    %v1058 = vunpack.c.l.b16 %v682
    %v1059 = vunpack.c.h.b16 %v682
    %v1060 = vunpack.c.l.b16 %v683
    %v1061 = vunpack.c.h.b16 %v683
    %v1062 = vunpack.c.l.b16 %v684
    %v1063 = vunpack.c.h.b16 %v684
    %v1064 = vunpack.c.l.b16 %v685
    %v1065 = vunpack.c.h.b16 %v685
    %v1066 = vunpack.c.l.b16 %v686
    %v1067 = vunpack.c.h.b16 %v686
    %v1068 = vunpack.c.l.b16 %v687
    %v1069 = vunpack.c.h.b16 %v687
    %v1070 = vunpack.c.l.b16 %v688
    %v1071 = vunpack.c.h.b16 %v688
    %v1072 = vunpack.c.l.b16 %v689
    %v1073 = vunpack.c.h.b16 %v689
    %v1074 = vunpack.c.l.b16 %v690
    %v1075 = vunpack.c.h.b16 %v690
    %v1076 = vunpack.c.l.b16 %v691
    %v1077 = vunpack.c.h.b16 %v691
    %v1078 = vunpack.c.l.b16 %v692
    %v1079 = vunpack.c.h.b16 %v692
    %v1080 = vunpack.c.l.b16 %v693
    %v1081 = vunpack.c.h.b16 %v693
    %v1082 = vunpack.c.l.b16 %v694
    %v1083 = vunpack.c.h.b16 %v694
    %v1084 = vunpack.c.l.b16 %v695
    %v1085 = vunpack.c.h.b16 %v695
    %v1086 = vunpack.c.l.b16 %v696
    %v1087 = vunpack.c.h.b16 %v696
    %v1088 = vunpack.c.l.b16 %v697
    %v1089 = vunpack.c.h.b16 %v697
    %v1090 = vunpack.c.l.b16 %v698
    %v1091 = vunpack.c.h.b16 %v698
    %v1092 = vunpack.c.l.b16 %v699
    %v1093 = vunpack.c.h.b16 %v699
    %v1094 = vunpack.c.l.b16 %v700
    %v1095 = vunpack.c.h.b16 %v700
    %v1096 = vunpack.c.l.b16 %v701
    %v1097 = vunpack.c.h.b16 %v701
    %v1098 = vunpack.c.l.b16 %v702
    %v1099 = vunpack.c.h.b16 %v702
    %v1100 = vunpack.c.l.b16 %v703
    %v1101 = vunpack.c.h.b16 %v703
    %v1102 = vunpack.c.l.b16 %v704
    %v1103 = vunpack.c.h.b16 %v704
    %v1104 = vunpack.c.l.b16 %v705
    %v1105 = vunpack.c.h.b16 %v705
    %v1106 = vunpack.c.l.b16 %v706
    %v1107 = vunpack.c.h.b16 %v706
    %v1108 = vunpack.c.l.b16 %v707
    %v1109 = vunpack.c.h.b16 %v707
    %v1110 = vpack.c.b16 %v862, %v854
    %v1111 = vpack.c.b16 %v863, %v855
    %v1112 = vpack.c.b16 %v864, %v856
    %v1113 = vpack.c.b16 %v865, %v857
    %v1114 = vpack.c.b16 %v866, %v858
    %v1115 = vpack.c.b16 %v867, %v859
    %v1116 = vpack.c.b16 %v868, %v860
    %v1117 = vpack.c.b16 %v869, %v861
    %v1118 = vpack.c.b16 %v878, %v870
    %v1119 = vpack.c.b16 %v879, %v871
    %v1120 = vpack.c.b16 %v880, %v872
    %v1121 = vpack.c.b16 %v881, %v873
    %v1122 = vpack.c.b16 %v882, %v874
    %v1123 = vpack.c.b16 %v883, %v875
    %v1124 = vpack.c.b16 %v884, %v876
    %v1125 = vpack.c.b16 %v885, %v877
    %v1126 = vpack.c.b16 %v894, %v886
    %v1127 = vpack.c.b16 %v895, %v887
    %v1128 = vpack.c.b16 %v896, %v888
    %v1129 = vpack.c.b16 %v897, %v889
    %v1130 = vpack.c.b16 %v898, %v890
    %v1131 = vpack.c.b16 %v899, %v891
    %v1132 = vpack.c.b16 %v900, %v892
    %v1133 = vpack.c.b16 %v901, %v893
    %v1134 = vpack.c.b16 %v910, %v902
    %v1135 = vpack.c.b16 %v911, %v903
    %v1136 = vpack.c.b16 %v912, %v904
    %v1137 = vpack.c.b16 %v913, %v905
    %v1138 = vpack.c.b16 %v914, %v906
    %v1139 = vpack.c.b16 %v915, %v907
    %v1140 = vpack.c.b16 %v916, %v908
    %v1141 = vpack.c.b16 %v917, %v909
    %v1142 = vpack.c.b16 %v926, %v918
    %v1143 = vpack.c.b16 %v927, %v919
    %v1144 = vpack.c.b16 %v928, %v920
    %v1145 = vpack.c.b16 %v929, %v921
    %v1146 = vpack.c.b16 %v930, %v922
    %v1147 = vpack.c.b16 %v931, %v923
    %v1148 = vpack.c.b16 %v932, %v924
    %v1149 = vpack.c.b16 %v933, %v925
    %v1150 = vpack.c.b16 %v942, %v934
    %v1151 = vpack.c.b16 %v943, %v935
    %v1152 = vpack.c.b16 %v944, %v936
    %v1153 = vpack.c.b16 %v945, %v937
    %v1154 = vpack.c.b16 %v946, %v938
    %v1155 = vpack.c.b16 %v947, %v939
    %v1156 = vpack.c.b16 %v948, %v940
    %v1157 = vpack.c.b16 %v949, %v941
    %v1158 = vpack.c.b16 %v958, %v950
    %v1159 = vpack.c.b16 %v959, %v951
    %v1160 = vpack.c.b16 %v960, %v952
    %v1161 = vpack.c.b16 %v961, %v953
    %v1162 = vpack.c.b16 %v962, %v954
    %v1163 = vpack.c.b16 %v963, %v955
    %v1164 = vpack.c.b16 %v964, %v956
    %v1165 = vpack.c.b16 %v965, %v957
    %v1166 = vpack.c.b16 %v974, %v966
    %v1167 = vpack.c.b16 %v975, %v967
    %v1168 = vpack.c.b16 %v976, %v968
    %v1169 = vpack.c.b16 %v977, %v969
    %v1170 = vpack.c.b16 %v978, %v970
    %v1171 = vpack.c.b16 %v979, %v971
    %v1172 = vpack.c.b16 %v980, %v972
    %v1173 = vpack.c.b16 %v981, %v973
    %v1174 = vpack.c.b16 %v990, %v982
    %v1175 = vpack.c.b16 %v991, %v983
    %v1176 = vpack.c.b16 %v992, %v984
    %v1177 = vpack.c.b16 %v993, %v985
    %v1178 = vpack.c.b16 %v994, %v986
    %v1179 = vpack.c.b16 %v995, %v987
    %v1180 = vpack.c.b16 %v996, %v988
    %v1181 = vpack.c.b16 %v997, %v989
    %v1182 = vpack.c.b16 %v1006, %v998
    %v1183 = vpack.c.b16 %v1007, %v999
    %v1184 = vpack.c.b16 %v1008, %v1000
    %v1185 = vpack.c.b16 %v1009, %v1001
    %v1186 = vpack.c.b16 %v1010, %v1002
    %v1187 = vpack.c.b16 %v1011, %v1003
    %v1188 = vpack.c.b16 %v1012, %v1004
    %v1189 = vpack.c.b16 %v1013, %v1005
    %v1190 = vpack.c.b16 %v1022, %v1014
    %v1191 = vpack.c.b16 %v1023, %v1015
    %v1192 = vpack.c.b16 %v1024, %v1016
    %v1193 = vpack.c.b16 %v1025, %v1017
    %v1194 = vpack.c.b16 %v1026, %v1018
    %v1195 = vpack.c.b16 %v1027, %v1019
    %v1196 = vpack.c.b16 %v1028, %v1020
    %v1197 = vpack.c.b16 %v1029, %v1021
    %v1198 = vpack.c.b16 %v1038, %v1030
    %v1199 = vpack.c.b16 %v1039, %v1031
    %v1200 = vpack.c.b16 %v1040, %v1032
    %v1201 = vpack.c.b16 %v1041, %v1033
    %v1202 = vpack.c.b16 %v1042, %v1034
    %v1203 = vpack.c.b16 %v1043, %v1035
    %v1204 = vpack.c.b16 %v1044, %v1036
    %v1205 = vpack.c.b16 %v1045, %v1037
    %v1206 = vpack.c.b16 %v1054, %v1046
    %v1207 = vpack.c.b16 %v1055, %v1047
    %v1208 = vpack.c.b16 %v1056, %v1048
    %v1209 = vpack.c.b16 %v1057, %v1049
    %v1210 = vpack.c.b16 %v1058, %v1050
    %v1211 = vpack.c.b16 %v1059, %v1051
    %v1212 = vpack.c.b16 %v1060, %v1052
    %v1213 = vpack.c.b16 %v1061, %v1053
    %v1214 = vpack.c.b16 %v1070, %v1062
    %v1215 = vpack.c.b16 %v1071, %v1063
    %v1216 = vpack.c.b16 %v1072, %v1064
    %v1217 = vpack.c.b16 %v1073, %v1065
    %v1218 = vpack.c.b16 %v1074, %v1066
    %v1219 = vpack.c.b16 %v1075, %v1067
    %v1220 = vpack.c.b16 %v1076, %v1068
    %v1221 = vpack.c.b16 %v1077, %v1069
    %v1222 = vpack.c.b16 %v1086, %v1078
    %v1223 = vpack.c.b16 %v1087, %v1079
    %v1224 = vpack.c.b16 %v1088, %v1080
    %v1225 = vpack.c.b16 %v1089, %v1081
    %v1226 = vpack.c.b16 %v1090, %v1082
    %v1227 = vpack.c.b16 %v1091, %v1083
    %v1228 = vpack.c.b16 %v1092, %v1084
    %v1229 = vpack.c.b16 %v1093, %v1085
    %v1230 = vpack.c.b16 %v1102, %v1094
    %v1231 = vpack.c.b16 %v1103, %v1095
    %v1232 = vpack.c.b16 %v1104, %v1096
    %v1233 = vpack.c.b16 %v1105, %v1097
    %v1234 = vpack.c.b16 %v1106, %v1098
    %v1235 = vpack.c.b16 %v1107, %v1099
    %v1236 = vpack.c.b16 %v1108, %v1100
    %v1237 = vpack.c.b16 %v1109, %v1101
    %1366 = vmatpush.bf16.msra.mxu0 %v1166
    %1367 = vmatpush.bf16.msra.mxu0 %v1158
    %1368 = vmatpush.bf16.msra.mxu0 %v1150
    %1369 = vmatpush.bf16.msra.mxu0 %v1142
    %1370 = vmatpush.bf16.msra.mxu0 %v1134
    %1371 = vmatpush.bf16.msra.mxu0 %v1126
    %1372 = vmatpush.bf16.msra.mxu0 %v1118
    %1373 = vmatpush.bf16.msra.mxu0 %v1110
    %1374 = vmatmul.bf16.gmra.mxu0 %v564
    %v1375 = vpop.f32.mrf.mxu0
    %v1376 = vadd.f32 %v710, %v1375
    %v1377 = vpop.f32.mrf.mxu0
    %v1378 = vadd.f32 %v710, %v1377
    %1379 = vmatmul.bf16.gmra.mxu0 %v566
    %v1380 = vpop.f32.mrf.mxu0
    %v1381 = vadd.f32 %v710, %v1380
    %v1382 = vpop.f32.mrf.mxu0
    %v1383 = vadd.f32 %v710, %v1382
    %1384 = vmatmul.bf16.gmra.mxu0 %v568
    %v1385 = vpop.f32.mrf.mxu0
    %v1386 = vadd.f32 %v710, %v1385
    %v1387 = vpop.f32.mrf.mxu0
    %v1388 = vadd.f32 %v710, %v1387
    %1389 = vmatmul.bf16.gmra.mxu0 %v570
    %v1390 = vpop.f32.mrf.mxu0
    %v1391 = vadd.f32 %v710, %v1390
    %v1392 = vpop.f32.mrf.mxu0
    %v1393 = vadd.f32 %v710, %v1392
    %1394 = vmatmul.bf16.gmra.mxu0 %v572
    %v1395 = vpop.f32.mrf.mxu0
    %v1396 = vadd.f32 %v710, %v1395
    %v1397 = vpop.f32.mrf.mxu0
    %v1398 = vadd.f32 %v710, %v1397
    %1399 = vmatmul.bf16.gmra.mxu0 %v574
    %v1400 = vpop.f32.mrf.mxu0
    %v1401 = vadd.f32 %v710, %v1400
    %v1402 = vpop.f32.mrf.mxu0
    %v1403 = vadd.f32 %v710, %v1402
    %1404 = vmatmul.bf16.gmra.mxu0 %v576
    %v1405 = vpop.f32.mrf.mxu0
    %v1406 = vadd.f32 %v710, %v1405
    %v1407 = vpop.f32.mrf.mxu0
    %v1408 = vadd.f32 %v710, %v1407
    %1409 = vmatmul.bf16.gmra.mxu0 %v578
    %v1410 = vpop.f32.mrf.mxu0
    %v1411 = vadd.f32 %v710, %v1410
    %v1412 = vpop.f32.mrf.mxu0
    %v1413 = vadd.f32 %v710, %v1412
    %1414 = vdwg.mxu0
    %1415 = vmatpush.bf16.msra.mxu0 %v1230
    %1416 = vmatpush.bf16.msra.mxu0 %v1222
    %1417 = vmatpush.bf16.msra.mxu0 %v1214
    %1418 = vmatpush.bf16.msra.mxu0 %v1206
    %1419 = vmatpush.bf16.msra.mxu0 %v1198
    %1420 = vmatpush.bf16.msra.mxu0 %v1190
    %1421 = vmatpush.bf16.msra.mxu0 %v1182
    %1422 = vmatpush.bf16.msra.mxu0 %v1174
    %1423 = vmatmul.bf16.gmra.mxu0 %v565
    %v1424 = vpop.f32.mrf.mxu0
    %v1425 = vadd.f32 %v1376, %v1424
    %v1426 = vpop.f32.mrf.mxu0
    %v1427 = vadd.f32 %v1378, %v1426
    %1428 = vmatmul.bf16.gmra.mxu0 %v567
    %v1429 = vpop.f32.mrf.mxu0
    %v1430 = vadd.f32 %v1381, %v1429
    %v1431 = vpop.f32.mrf.mxu0
    %v1432 = vadd.f32 %v1383, %v1431
    %1433 = vmatmul.bf16.gmra.mxu0 %v569
    %v1434 = vpop.f32.mrf.mxu0
    %v1435 = vadd.f32 %v1386, %v1434
    %v1436 = vpop.f32.mrf.mxu0
    %v1437 = vadd.f32 %v1388, %v1436
    %1438 = vmatmul.bf16.gmra.mxu0 %v571
    %v1439 = vpop.f32.mrf.mxu0
    %v1440 = vadd.f32 %v1391, %v1439
    %v1441 = vpop.f32.mrf.mxu0
    %v1442 = vadd.f32 %v1393, %v1441
    %1443 = vmatmul.bf16.gmra.mxu0 %v573
    %v1444 = vpop.f32.mrf.mxu0
    %v1445 = vadd.f32 %v1396, %v1444
    %v1446 = vpop.f32.mrf.mxu0
    %v1447 = vadd.f32 %v1398, %v1446
    %1448 = vmatmul.bf16.gmra.mxu0 %v575
    %v1449 = vpop.f32.mrf.mxu0
    %v1450 = vadd.f32 %v1401, %v1449
    %v1451 = vpop.f32.mrf.mxu0
    %v1452 = vadd.f32 %v1403, %v1451
    %1453 = vmatmul.bf16.gmra.mxu0 %v577
    %v1454 = vpop.f32.mrf.mxu0
    %v1455 = vadd.f32 %v1406, %v1454
    %v1456 = vpop.f32.mrf.mxu0
    %v1457 = vadd.f32 %v1408, %v1456
    %1458 = vmatmul.bf16.gmra.mxu0 %v579
    %v1459 = vpop.f32.mrf.mxu0
    %v1460 = vadd.f32 %v1411, %v1459
    %v1461 = vpop.f32.mrf.mxu0
    %v1462 = vadd.f32 %v1413, %v1461
    %1463 = vdwg.mxu0
    %1464 = vmatpush.bf16.msra.mxu0 %v1167
    %1465 = vmatpush.bf16.msra.mxu0 %v1159
    %1466 = vmatpush.bf16.msra.mxu0 %v1151
    %1467 = vmatpush.bf16.msra.mxu0 %v1143
    %1468 = vmatpush.bf16.msra.mxu0 %v1135
    %1469 = vmatpush.bf16.msra.mxu0 %v1127
    %1470 = vmatpush.bf16.msra.mxu0 %v1119
    %1471 = vmatpush.bf16.msra.mxu0 %v1111
    %1472 = vmatmul.bf16.gmra.mxu0 %v564
    %v1473 = vpop.f32.mrf.mxu0
    %v1474 = vadd.f32 %v711, %v1473
    %v1475 = vpop.f32.mrf.mxu0
    %v1476 = vadd.f32 %v711, %v1475
    %1477 = vmatmul.bf16.gmra.mxu0 %v566
    %v1478 = vpop.f32.mrf.mxu0
    %v1479 = vadd.f32 %v711, %v1478
    %v1480 = vpop.f32.mrf.mxu0
    %v1481 = vadd.f32 %v711, %v1480
    %1482 = vmatmul.bf16.gmra.mxu0 %v568
    %v1483 = vpop.f32.mrf.mxu0
    %v1484 = vadd.f32 %v711, %v1483
    %v1485 = vpop.f32.mrf.mxu0
    %v1486 = vadd.f32 %v711, %v1485
    %1487 = vmatmul.bf16.gmra.mxu0 %v570
    %v1488 = vpop.f32.mrf.mxu0
    %v1489 = vadd.f32 %v711, %v1488
    %v1490 = vpop.f32.mrf.mxu0
    %v1491 = vadd.f32 %v711, %v1490
    %1492 = vmatmul.bf16.gmra.mxu0 %v572
    %v1493 = vpop.f32.mrf.mxu0
    %v1494 = vadd.f32 %v711, %v1493
    %v1495 = vpop.f32.mrf.mxu0
    %v1496 = vadd.f32 %v711, %v1495
    %1497 = vmatmul.bf16.gmra.mxu0 %v574
    %v1498 = vpop.f32.mrf.mxu0
    %v1499 = vadd.f32 %v711, %v1498
    %v1500 = vpop.f32.mrf.mxu0
    %v1501 = vadd.f32 %v711, %v1500
    %1502 = vmatmul.bf16.gmra.mxu0 %v576
    %v1503 = vpop.f32.mrf.mxu0
    %v1504 = vadd.f32 %v711, %v1503
    %v1505 = vpop.f32.mrf.mxu0
    %v1506 = vadd.f32 %v711, %v1505
    %1507 = vmatmul.bf16.gmra.mxu0 %v578
    %v1508 = vpop.f32.mrf.mxu0
    %v1509 = vadd.f32 %v711, %v1508
    %v1510 = vpop.f32.mrf.mxu0
    %v1511 = vadd.f32 %v711, %v1510
    %1512 = vdwg.mxu0
    %1513 = vmatpush.bf16.msra.mxu0 %v1231
    %1514 = vmatpush.bf16.msra.mxu0 %v1223
    %1515 = vmatpush.bf16.msra.mxu0 %v1215
    %1516 = vmatpush.bf16.msra.mxu0 %v1207
    %1517 = vmatpush.bf16.msra.mxu0 %v1199
    %1518 = vmatpush.bf16.msra.mxu0 %v1191
    %1519 = vmatpush.bf16.msra.mxu0 %v1183
    %1520 = vmatpush.bf16.msra.mxu0 %v1175
    %1521 = vmatmul.bf16.gmra.mxu0 %v565
    %v1522 = vpop.f32.mrf.mxu0
    %v1523 = vadd.f32 %v1474, %v1522
    %v1524 = vpop.f32.mrf.mxu0
    %v1525 = vadd.f32 %v1476, %v1524
    %1526 = vmatmul.bf16.gmra.mxu0 %v567
    %v1527 = vpop.f32.mrf.mxu0
    %v1528 = vadd.f32 %v1479, %v1527
    %v1529 = vpop.f32.mrf.mxu0
    %v1530 = vadd.f32 %v1481, %v1529
    %1531 = vmatmul.bf16.gmra.mxu0 %v569
    %v1532 = vpop.f32.mrf.mxu0
    %v1533 = vadd.f32 %v1484, %v1532
    %v1534 = vpop.f32.mrf.mxu0
    %v1535 = vadd.f32 %v1486, %v1534
    %1536 = vmatmul.bf16.gmra.mxu0 %v571
    %v1537 = vpop.f32.mrf.mxu0
    %v1538 = vadd.f32 %v1489, %v1537
    %v1539 = vpop.f32.mrf.mxu0
    %v1540 = vadd.f32 %v1491, %v1539
    %1541 = vmatmul.bf16.gmra.mxu0 %v573
    %v1542 = vpop.f32.mrf.mxu0
    %v1543 = vadd.f32 %v1494, %v1542
    %v1544 = vpop.f32.mrf.mxu0
    %v1545 = vadd.f32 %v1496, %v1544
    %1546 = vmatmul.bf16.gmra.mxu0 %v575
    %v1547 = vpop.f32.mrf.mxu0
    %v1548 = vadd.f32 %v1499, %v1547
    %v1549 = vpop.f32.mrf.mxu0
    %v1550 = vadd.f32 %v1501, %v1549
    %1551 = vmatmul.bf16.gmra.mxu0 %v577
    %v1552 = vpop.f32.mrf.mxu0
    %v1553 = vadd.f32 %v1504, %v1552
    %v1554 = vpop.f32.mrf.mxu0
    %v1555 = vadd.f32 %v1506, %v1554
    %1556 = vmatmul.bf16.gmra.mxu0 %v579
    %v1557 = vpop.f32.mrf.mxu0
    %v1558 = vadd.f32 %v1509, %v1557
    %v1559 = vpop.f32.mrf.mxu0
    %v1560 = vadd.f32 %v1511, %v1559
    %1561 = vdwg.mxu0
    %1562 = vmatpush.bf16.msra.mxu0 %v1168
    %1563 = vmatpush.bf16.msra.mxu0 %v1160
    %1564 = vmatpush.bf16.msra.mxu0 %v1152
    %1565 = vmatpush.bf16.msra.mxu0 %v1144
    %1566 = vmatpush.bf16.msra.mxu0 %v1136
    %1567 = vmatpush.bf16.msra.mxu0 %v1128
    %1568 = vmatpush.bf16.msra.mxu0 %v1120
    %1569 = vmatpush.bf16.msra.mxu0 %v1112
    %1570 = vmatmul.bf16.gmra.mxu0 %v564
    %v1571 = vpop.f32.mrf.mxu0
    %v1572 = vadd.f32 %v712, %v1571
    %v1573 = vpop.f32.mrf.mxu0
    %v1574 = vadd.f32 %v712, %v1573
    %1575 = vmatmul.bf16.gmra.mxu0 %v566
    %v1576 = vpop.f32.mrf.mxu0
    %v1577 = vadd.f32 %v712, %v1576
    %v1578 = vpop.f32.mrf.mxu0
    %v1579 = vadd.f32 %v712, %v1578
    %1580 = vmatmul.bf16.gmra.mxu0 %v568
    %v1581 = vpop.f32.mrf.mxu0
    %v1582 = vadd.f32 %v712, %v1581
    %v1583 = vpop.f32.mrf.mxu0
    %v1584 = vadd.f32 %v712, %v1583
    %1585 = vmatmul.bf16.gmra.mxu0 %v570
    %v1586 = vpop.f32.mrf.mxu0
    %v1587 = vadd.f32 %v712, %v1586
    %v1588 = vpop.f32.mrf.mxu0
    %v1589 = vadd.f32 %v712, %v1588
    %1590 = vmatmul.bf16.gmra.mxu0 %v572
    %v1591 = vpop.f32.mrf.mxu0
    %v1592 = vadd.f32 %v712, %v1591
    %v1593 = vpop.f32.mrf.mxu0
    %v1594 = vadd.f32 %v712, %v1593
    %1595 = vmatmul.bf16.gmra.mxu0 %v574
    %v1596 = vpop.f32.mrf.mxu0
    %v1597 = vadd.f32 %v712, %v1596
    %v1598 = vpop.f32.mrf.mxu0
    %v1599 = vadd.f32 %v712, %v1598
    %1600 = vmatmul.bf16.gmra.mxu0 %v576
    %v1601 = vpop.f32.mrf.mxu0
    %v1602 = vadd.f32 %v712, %v1601
    %v1603 = vpop.f32.mrf.mxu0
    %v1604 = vadd.f32 %v712, %v1603
    %1605 = vmatmul.bf16.gmra.mxu0 %v578
    %v1606 = vpop.f32.mrf.mxu0
    %v1607 = vadd.f32 %v712, %v1606
    %v1608 = vpop.f32.mrf.mxu0
    %v1609 = vadd.f32 %v712, %v1608
    %1610 = vdwg.mxu0
    %1611 = vmatpush.bf16.msra.mxu0 %v1232
    %1612 = vmatpush.bf16.msra.mxu0 %v1224
    %1613 = vmatpush.bf16.msra.mxu0 %v1216
    %1614 = vmatpush.bf16.msra.mxu0 %v1208
    %1615 = vmatpush.bf16.msra.mxu0 %v1200
    %1616 = vmatpush.bf16.msra.mxu0 %v1192
    %1617 = vmatpush.bf16.msra.mxu0 %v1184
    %1618 = vmatpush.bf16.msra.mxu0 %v1176
    %1619 = vmatmul.bf16.gmra.mxu0 %v565
    %v1620 = vpop.f32.mrf.mxu0
    %v1621 = vadd.f32 %v1572, %v1620
    %v1622 = vpop.f32.mrf.mxu0
    %v1623 = vadd.f32 %v1574, %v1622
    %1624 = vmatmul.bf16.gmra.mxu0 %v567
    %v1625 = vpop.f32.mrf.mxu0
    %v1626 = vadd.f32 %v1577, %v1625
    %v1627 = vpop.f32.mrf.mxu0
    %v1628 = vadd.f32 %v1579, %v1627
    %1629 = vmatmul.bf16.gmra.mxu0 %v569
    %v1630 = vpop.f32.mrf.mxu0
    %v1631 = vadd.f32 %v1582, %v1630
    %v1632 = vpop.f32.mrf.mxu0
    %v1633 = vadd.f32 %v1584, %v1632
    %1634 = vmatmul.bf16.gmra.mxu0 %v571
    %v1635 = vpop.f32.mrf.mxu0
    %v1636 = vadd.f32 %v1587, %v1635
    %v1637 = vpop.f32.mrf.mxu0
    %v1638 = vadd.f32 %v1589, %v1637
    %1639 = vmatmul.bf16.gmra.mxu0 %v573
    %v1640 = vpop.f32.mrf.mxu0
    %v1641 = vadd.f32 %v1592, %v1640
    %v1642 = vpop.f32.mrf.mxu0
    %v1643 = vadd.f32 %v1594, %v1642
    %1644 = vmatmul.bf16.gmra.mxu0 %v575
    %v1645 = vpop.f32.mrf.mxu0
    %v1646 = vadd.f32 %v1597, %v1645
    %v1647 = vpop.f32.mrf.mxu0
    %v1648 = vadd.f32 %v1599, %v1647
    %1649 = vmatmul.bf16.gmra.mxu0 %v577
    %v1650 = vpop.f32.mrf.mxu0
    %v1651 = vadd.f32 %v1602, %v1650
    %v1652 = vpop.f32.mrf.mxu0
    %v1653 = vadd.f32 %v1604, %v1652
    %1654 = vmatmul.bf16.gmra.mxu0 %v579
    %v1655 = vpop.f32.mrf.mxu0
    %v1656 = vadd.f32 %v1607, %v1655
    %v1657 = vpop.f32.mrf.mxu0
    %v1658 = vadd.f32 %v1609, %v1657
    %1659 = vdwg.mxu0
    %1660 = vmatpush.bf16.msra.mxu0 %v1169
    %1661 = vmatpush.bf16.msra.mxu0 %v1161
    %1662 = vmatpush.bf16.msra.mxu0 %v1153
    %1663 = vmatpush.bf16.msra.mxu0 %v1145
    %1664 = vmatpush.bf16.msra.mxu0 %v1137
    %1665 = vmatpush.bf16.msra.mxu0 %v1129
    %1666 = vmatpush.bf16.msra.mxu0 %v1121
    %1667 = vmatpush.bf16.msra.mxu0 %v1113
    %1668 = vmatmul.bf16.gmra.mxu0 %v564
    %v1669 = vpop.f32.mrf.mxu0
    %v1670 = vadd.f32 %v713, %v1669
    %v1671 = vpop.f32.mrf.mxu0
    %v1672 = vadd.f32 %v713, %v1671
    %1673 = vmatmul.bf16.gmra.mxu0 %v566
    %v1674 = vpop.f32.mrf.mxu0
    %v1675 = vadd.f32 %v713, %v1674
    %v1676 = vpop.f32.mrf.mxu0
    %v1677 = vadd.f32 %v713, %v1676
    %1678 = vmatmul.bf16.gmra.mxu0 %v568
    %v1679 = vpop.f32.mrf.mxu0
    %v1680 = vadd.f32 %v713, %v1679
    %v1681 = vpop.f32.mrf.mxu0
    %v1682 = vadd.f32 %v713, %v1681
    %1683 = vmatmul.bf16.gmra.mxu0 %v570
    %v1684 = vpop.f32.mrf.mxu0
    %v1685 = vadd.f32 %v713, %v1684
    %v1686 = vpop.f32.mrf.mxu0
    %v1687 = vadd.f32 %v713, %v1686
    %1688 = vmatmul.bf16.gmra.mxu0 %v572
    %v1689 = vpop.f32.mrf.mxu0
    %v1690 = vadd.f32 %v713, %v1689
    %v1691 = vpop.f32.mrf.mxu0
    %v1692 = vadd.f32 %v713, %v1691
    %1693 = vmatmul.bf16.gmra.mxu0 %v574
    %v1694 = vpop.f32.mrf.mxu0
    %v1695 = vadd.f32 %v713, %v1694
    %v1696 = vpop.f32.mrf.mxu0
    %v1697 = vadd.f32 %v713, %v1696
    %1698 = vmatmul.bf16.gmra.mxu0 %v576
    %v1699 = vpop.f32.mrf.mxu0
    %v1700 = vadd.f32 %v713, %v1699
    %v1701 = vpop.f32.mrf.mxu0
    %v1702 = vadd.f32 %v713, %v1701
    %1703 = vmatmul.bf16.gmra.mxu0 %v578
    %v1704 = vpop.f32.mrf.mxu0
    %v1705 = vadd.f32 %v713, %v1704
    %v1706 = vpop.f32.mrf.mxu0
    %v1707 = vadd.f32 %v713, %v1706
    %1708 = vdwg.mxu0
    %1709 = vmatpush.bf16.msra.mxu0 %v1233
    %1710 = vmatpush.bf16.msra.mxu0 %v1225
    %1711 = vmatpush.bf16.msra.mxu0 %v1217
    %1712 = vmatpush.bf16.msra.mxu0 %v1209
    %1713 = vmatpush.bf16.msra.mxu0 %v1201
    %1714 = vmatpush.bf16.msra.mxu0 %v1193
    %1715 = vmatpush.bf16.msra.mxu0 %v1185
    %1716 = vmatpush.bf16.msra.mxu0 %v1177
    %1717 = vmatmul.bf16.gmra.mxu0 %v565
    %v1718 = vpop.f32.mrf.mxu0
    %v1719 = vadd.f32 %v1670, %v1718
    %v1720 = vpop.f32.mrf.mxu0
    %v1721 = vadd.f32 %v1672, %v1720
    %1722 = vmatmul.bf16.gmra.mxu0 %v567
    %v1723 = vpop.f32.mrf.mxu0
    %v1724 = vadd.f32 %v1675, %v1723
    %v1725 = vpop.f32.mrf.mxu0
    %v1726 = vadd.f32 %v1677, %v1725
    %1727 = vmatmul.bf16.gmra.mxu0 %v569
    %v1728 = vpop.f32.mrf.mxu0
    %v1729 = vadd.f32 %v1680, %v1728
    %v1730 = vpop.f32.mrf.mxu0
    %v1731 = vadd.f32 %v1682, %v1730
    %1732 = vmatmul.bf16.gmra.mxu0 %v571
    %v1733 = vpop.f32.mrf.mxu0
    %v1734 = vadd.f32 %v1685, %v1733
    %v1735 = vpop.f32.mrf.mxu0
    %v1736 = vadd.f32 %v1687, %v1735
    %1737 = vmatmul.bf16.gmra.mxu0 %v573
    %v1738 = vpop.f32.mrf.mxu0
    %v1739 = vadd.f32 %v1690, %v1738
    %v1740 = vpop.f32.mrf.mxu0
    %v1741 = vadd.f32 %v1692, %v1740
    %1742 = vmatmul.bf16.gmra.mxu0 %v575
    %v1743 = vpop.f32.mrf.mxu0
    %v1744 = vadd.f32 %v1695, %v1743
    %v1745 = vpop.f32.mrf.mxu0
    %v1746 = vadd.f32 %v1697, %v1745
    %1747 = vmatmul.bf16.gmra.mxu0 %v577
    %v1748 = vpop.f32.mrf.mxu0
    %v1749 = vadd.f32 %v1700, %v1748
    %v1750 = vpop.f32.mrf.mxu0
    %v1751 = vadd.f32 %v1702, %v1750
    %1752 = vmatmul.bf16.gmra.mxu0 %v579
    %v1753 = vpop.f32.mrf.mxu0
    %v1754 = vadd.f32 %v1705, %v1753
    %v1755 = vpop.f32.mrf.mxu0
    %v1756 = vadd.f32 %v1707, %v1755
    %1757 = vdwg.mxu0
    %1758 = vmatpush.bf16.msra.mxu0 %v1170
    %1759 = vmatpush.bf16.msra.mxu0 %v1162
    %1760 = vmatpush.bf16.msra.mxu0 %v1154
    %1761 = vmatpush.bf16.msra.mxu0 %v1146
    %1762 = vmatpush.bf16.msra.mxu0 %v1138
    %1763 = vmatpush.bf16.msra.mxu0 %v1130
    %1764 = vmatpush.bf16.msra.mxu0 %v1122
    %1765 = vmatpush.bf16.msra.mxu0 %v1114
    %1766 = vmatmul.bf16.gmra.mxu0 %v564
    %v1767 = vpop.f32.mrf.mxu0
    %v1768 = vadd.f32 %v714, %v1767
    %v1769 = vpop.f32.mrf.mxu0
    %v1770 = vadd.f32 %v714, %v1769
    %1771 = vmatmul.bf16.gmra.mxu0 %v566
    %v1772 = vpop.f32.mrf.mxu0
    %v1773 = vadd.f32 %v714, %v1772
    %v1774 = vpop.f32.mrf.mxu0
    %v1775 = vadd.f32 %v714, %v1774
    %1776 = vmatmul.bf16.gmra.mxu0 %v568
    %v1777 = vpop.f32.mrf.mxu0
    %v1778 = vadd.f32 %v714, %v1777
    %v1779 = vpop.f32.mrf.mxu0
    %v1780 = vadd.f32 %v714, %v1779
    %1781 = vmatmul.bf16.gmra.mxu0 %v570
    %v1782 = vpop.f32.mrf.mxu0
    %v1783 = vadd.f32 %v714, %v1782
    %v1784 = vpop.f32.mrf.mxu0
    %v1785 = vadd.f32 %v714, %v1784
    %1786 = vmatmul.bf16.gmra.mxu0 %v572
    %v1787 = vpop.f32.mrf.mxu0
    %v1788 = vadd.f32 %v714, %v1787
    %v1789 = vpop.f32.mrf.mxu0
    %v1790 = vadd.f32 %v714, %v1789
    %1791 = vmatmul.bf16.gmra.mxu0 %v574
    %v1792 = vpop.f32.mrf.mxu0
    %v1793 = vadd.f32 %v714, %v1792
    %v1794 = vpop.f32.mrf.mxu0
    %v1795 = vadd.f32 %v714, %v1794
    %1796 = vmatmul.bf16.gmra.mxu0 %v576
    %v1797 = vpop.f32.mrf.mxu0
    %v1798 = vadd.f32 %v714, %v1797
    %v1799 = vpop.f32.mrf.mxu0
    %v1800 = vadd.f32 %v714, %v1799
    %1801 = vmatmul.bf16.gmra.mxu0 %v578
    %v1802 = vpop.f32.mrf.mxu0
    %v1803 = vadd.f32 %v714, %v1802
    %v1804 = vpop.f32.mrf.mxu0
    %v1805 = vadd.f32 %v714, %v1804
    %1806 = vdwg.mxu0
    %1807 = vmatpush.bf16.msra.mxu0 %v1234
    %1808 = vmatpush.bf16.msra.mxu0 %v1226
    %1809 = vmatpush.bf16.msra.mxu0 %v1218
    %1810 = vmatpush.bf16.msra.mxu0 %v1210
    %1811 = vmatpush.bf16.msra.mxu0 %v1202
    %1812 = vmatpush.bf16.msra.mxu0 %v1194
    %1813 = vmatpush.bf16.msra.mxu0 %v1186
    %1814 = vmatpush.bf16.msra.mxu0 %v1178
    %1815 = vmatmul.bf16.gmra.mxu0 %v565
    %v1816 = vpop.f32.mrf.mxu0
    %v1817 = vadd.f32 %v1768, %v1816
    %v1818 = vpop.f32.mrf.mxu0
    %v1819 = vadd.f32 %v1770, %v1818
    %1820 = vmatmul.bf16.gmra.mxu0 %v567
    %v1821 = vpop.f32.mrf.mxu0
    %v1822 = vadd.f32 %v1773, %v1821
    %v1823 = vpop.f32.mrf.mxu0
    %v1824 = vadd.f32 %v1775, %v1823
    %1825 = vmatmul.bf16.gmra.mxu0 %v569
    %v1826 = vpop.f32.mrf.mxu0
    %v1827 = vadd.f32 %v1778, %v1826
    %v1828 = vpop.f32.mrf.mxu0
    %v1829 = vadd.f32 %v1780, %v1828
    %1830 = vmatmul.bf16.gmra.mxu0 %v571
    %v1831 = vpop.f32.mrf.mxu0
    %v1832 = vadd.f32 %v1783, %v1831
    %v1833 = vpop.f32.mrf.mxu0
    %v1834 = vadd.f32 %v1785, %v1833
    %1835 = vmatmul.bf16.gmra.mxu0 %v573
    %v1836 = vpop.f32.mrf.mxu0
    %v1837 = vadd.f32 %v1788, %v1836
    %v1838 = vpop.f32.mrf.mxu0
    %v1839 = vadd.f32 %v1790, %v1838
    %1840 = vmatmul.bf16.gmra.mxu0 %v575
    %v1841 = vpop.f32.mrf.mxu0
    %v1842 = vadd.f32 %v1793, %v1841
    %v1843 = vpop.f32.mrf.mxu0
    %v1844 = vadd.f32 %v1795, %v1843
    %1845 = vmatmul.bf16.gmra.mxu0 %v577
    %v1846 = vpop.f32.mrf.mxu0
    %v1847 = vadd.f32 %v1798, %v1846
    %v1848 = vpop.f32.mrf.mxu0
    %v1849 = vadd.f32 %v1800, %v1848
    %1850 = vmatmul.bf16.gmra.mxu0 %v579
    %v1851 = vpop.f32.mrf.mxu0
    %v1852 = vadd.f32 %v1803, %v1851
    %v1853 = vpop.f32.mrf.mxu0
    %v1854 = vadd.f32 %v1805, %v1853
    %1855 = vdwg.mxu0
    %1856 = vmatpush.bf16.msra.mxu0 %v1171
    %1857 = vmatpush.bf16.msra.mxu0 %v1163
    %1858 = vmatpush.bf16.msra.mxu0 %v1155
    %1859 = vmatpush.bf16.msra.mxu0 %v1147
    %1860 = vmatpush.bf16.msra.mxu0 %v1139
    %1861 = vmatpush.bf16.msra.mxu0 %v1131
    %1862 = vmatpush.bf16.msra.mxu0 %v1123
    %1863 = vmatpush.bf16.msra.mxu0 %v1115
    %1864 = vmatmul.bf16.gmra.mxu0 %v564
    %v1865 = vpop.f32.mrf.mxu0
    %v1866 = vadd.f32 %v715, %v1865
    %v1867 = vpop.f32.mrf.mxu0
    %v1868 = vadd.f32 %v715, %v1867
    %1869 = vmatmul.bf16.gmra.mxu0 %v566
    %v1870 = vpop.f32.mrf.mxu0
    %v1871 = vadd.f32 %v715, %v1870
    %v1872 = vpop.f32.mrf.mxu0
    %v1873 = vadd.f32 %v715, %v1872
    %1874 = vmatmul.bf16.gmra.mxu0 %v568
    %v1875 = vpop.f32.mrf.mxu0
    %v1876 = vadd.f32 %v715, %v1875
    %v1877 = vpop.f32.mrf.mxu0
    %v1878 = vadd.f32 %v715, %v1877
    %1879 = vmatmul.bf16.gmra.mxu0 %v570
    %v1880 = vpop.f32.mrf.mxu0
    %v1881 = vadd.f32 %v715, %v1880
    %v1882 = vpop.f32.mrf.mxu0
    %v1883 = vadd.f32 %v715, %v1882
    %1884 = vmatmul.bf16.gmra.mxu0 %v572
    %v1885 = vpop.f32.mrf.mxu0
    %v1886 = vadd.f32 %v715, %v1885
    %v1887 = vpop.f32.mrf.mxu0
    %v1888 = vadd.f32 %v715, %v1887
    %1889 = vmatmul.bf16.gmra.mxu0 %v574
    %v1890 = vpop.f32.mrf.mxu0
    %v1891 = vadd.f32 %v715, %v1890
    %v1892 = vpop.f32.mrf.mxu0
    %v1893 = vadd.f32 %v715, %v1892
    %1894 = vmatmul.bf16.gmra.mxu0 %v576
    %v1895 = vpop.f32.mrf.mxu0
    %v1896 = vadd.f32 %v715, %v1895
    %v1897 = vpop.f32.mrf.mxu0
    %v1898 = vadd.f32 %v715, %v1897
    %1899 = vmatmul.bf16.gmra.mxu0 %v578
    %v1900 = vpop.f32.mrf.mxu0
    %v1901 = vadd.f32 %v715, %v1900
    %v1902 = vpop.f32.mrf.mxu0
    %v1903 = vadd.f32 %v715, %v1902
    %1904 = vdwg.mxu0
    %1905 = vmatpush.bf16.msra.mxu0 %v1235
    %1906 = vmatpush.bf16.msra.mxu0 %v1227
    %1907 = vmatpush.bf16.msra.mxu0 %v1219
    %1908 = vmatpush.bf16.msra.mxu0 %v1211
    %1909 = vmatpush.bf16.msra.mxu0 %v1203
    %1910 = vmatpush.bf16.msra.mxu0 %v1195
    %1911 = vmatpush.bf16.msra.mxu0 %v1187
    %1912 = vmatpush.bf16.msra.mxu0 %v1179
    %1913 = vmatmul.bf16.gmra.mxu0 %v565
    %v1914 = vpop.f32.mrf.mxu0
    %v1915 = vadd.f32 %v1866, %v1914
    %v1916 = vpop.f32.mrf.mxu0
    %v1917 = vadd.f32 %v1868, %v1916
    %1918 = vmatmul.bf16.gmra.mxu0 %v567
    %v1919 = vpop.f32.mrf.mxu0
    %v1920 = vadd.f32 %v1871, %v1919
    %v1921 = vpop.f32.mrf.mxu0
    %v1922 = vadd.f32 %v1873, %v1921
    %1923 = vmatmul.bf16.gmra.mxu0 %v569
    %v1924 = vpop.f32.mrf.mxu0
    %v1925 = vadd.f32 %v1876, %v1924
    %v1926 = vpop.f32.mrf.mxu0
    %v1927 = vadd.f32 %v1878, %v1926
    %1928 = vmatmul.bf16.gmra.mxu0 %v571
    %v1929 = vpop.f32.mrf.mxu0
    %v1930 = vadd.f32 %v1881, %v1929
    %v1931 = vpop.f32.mrf.mxu0
    %v1932 = vadd.f32 %v1883, %v1931
    %1933 = vmatmul.bf16.gmra.mxu0 %v573
    %v1934 = vpop.f32.mrf.mxu0
    %v1935 = vadd.f32 %v1886, %v1934
    %v1936 = vpop.f32.mrf.mxu0
    %v1937 = vadd.f32 %v1888, %v1936
    %1938 = vmatmul.bf16.gmra.mxu0 %v575
    %v1939 = vpop.f32.mrf.mxu0
    %v1940 = vadd.f32 %v1891, %v1939
    %v1941 = vpop.f32.mrf.mxu0
    %v1942 = vadd.f32 %v1893, %v1941
    %1943 = vmatmul.bf16.gmra.mxu0 %v577
    %v1944 = vpop.f32.mrf.mxu0
    %v1945 = vadd.f32 %v1896, %v1944
    %v1946 = vpop.f32.mrf.mxu0
    %v1947 = vadd.f32 %v1898, %v1946
    %1948 = vmatmul.bf16.gmra.mxu0 %v579
    %v1949 = vpop.f32.mrf.mxu0
    %v1950 = vadd.f32 %v1901, %v1949
    %v1951 = vpop.f32.mrf.mxu0
    %v1952 = vadd.f32 %v1903, %v1951
    %1953 = vdwg.mxu0
    %1954 = vmatpush.bf16.msra.mxu0 %v1172
    %1955 = vmatpush.bf16.msra.mxu0 %v1164
    %1956 = vmatpush.bf16.msra.mxu0 %v1156
    %1957 = vmatpush.bf16.msra.mxu0 %v1148
    %1958 = vmatpush.bf16.msra.mxu0 %v1140
    %1959 = vmatpush.bf16.msra.mxu0 %v1132
    %1960 = vmatpush.bf16.msra.mxu0 %v1124
    %1961 = vmatpush.bf16.msra.mxu0 %v1116
    %1962 = vmatmul.bf16.gmra.mxu0 %v564
    %v1963 = vpop.f32.mrf.mxu0
    %v1964 = vadd.f32 %v716, %v1963
    %v1965 = vpop.f32.mrf.mxu0
    %v1966 = vadd.f32 %v716, %v1965
    %1967 = vmatmul.bf16.gmra.mxu0 %v566
    %v1968 = vpop.f32.mrf.mxu0
    %v1969 = vadd.f32 %v716, %v1968
    %v1970 = vpop.f32.mrf.mxu0
    %v1971 = vadd.f32 %v716, %v1970
    %1972 = vmatmul.bf16.gmra.mxu0 %v568
    %v1973 = vpop.f32.mrf.mxu0
    %v1974 = vadd.f32 %v716, %v1973
    %v1975 = vpop.f32.mrf.mxu0
    %v1976 = vadd.f32 %v716, %v1975
    %1977 = vmatmul.bf16.gmra.mxu0 %v570
    %v1978 = vpop.f32.mrf.mxu0
    %v1979 = vadd.f32 %v716, %v1978
    %v1980 = vpop.f32.mrf.mxu0
    %v1981 = vadd.f32 %v716, %v1980
    %1982 = vmatmul.bf16.gmra.mxu0 %v572
    %v1983 = vpop.f32.mrf.mxu0
    %v1984 = vadd.f32 %v716, %v1983
    %v1985 = vpop.f32.mrf.mxu0
    %v1986 = vadd.f32 %v716, %v1985
    %1987 = vmatmul.bf16.gmra.mxu0 %v574
    %v1988 = vpop.f32.mrf.mxu0
    %v1989 = vadd.f32 %v716, %v1988
    %v1990 = vpop.f32.mrf.mxu0
    %v1991 = vadd.f32 %v716, %v1990
    %1992 = vmatmul.bf16.gmra.mxu0 %v576
    %v1993 = vpop.f32.mrf.mxu0
    %v1994 = vadd.f32 %v716, %v1993
    %v1995 = vpop.f32.mrf.mxu0
    %v1996 = vadd.f32 %v716, %v1995
    %1997 = vmatmul.bf16.gmra.mxu0 %v578
    %v1998 = vpop.f32.mrf.mxu0
    %v1999 = vadd.f32 %v716, %v1998
    %v2000 = vpop.f32.mrf.mxu0
    %v2001 = vadd.f32 %v716, %v2000
    %2002 = vdwg.mxu0
    %2003 = vmatpush.bf16.msra.mxu0 %v1236
    %2004 = vmatpush.bf16.msra.mxu0 %v1228
    %2005 = vmatpush.bf16.msra.mxu0 %v1220
    %2006 = vmatpush.bf16.msra.mxu0 %v1212
    %2007 = vmatpush.bf16.msra.mxu0 %v1204
    %2008 = vmatpush.bf16.msra.mxu0 %v1196
    %2009 = vmatpush.bf16.msra.mxu0 %v1188
    %2010 = vmatpush.bf16.msra.mxu0 %v1180
    %2011 = vmatmul.bf16.gmra.mxu0 %v565
    %v2012 = vpop.f32.mrf.mxu0
    %v2013 = vadd.f32 %v1964, %v2012
    %v2014 = vpop.f32.mrf.mxu0
    %v2015 = vadd.f32 %v1966, %v2014
    %2016 = vmatmul.bf16.gmra.mxu0 %v567
    %v2017 = vpop.f32.mrf.mxu0
    %v2018 = vadd.f32 %v1969, %v2017
    %v2019 = vpop.f32.mrf.mxu0
    %v2020 = vadd.f32 %v1971, %v2019
    %2021 = vmatmul.bf16.gmra.mxu0 %v569
    %v2022 = vpop.f32.mrf.mxu0
    %v2023 = vadd.f32 %v1974, %v2022
    %v2024 = vpop.f32.mrf.mxu0
    %v2025 = vadd.f32 %v1976, %v2024
    %2026 = vmatmul.bf16.gmra.mxu0 %v571
    %v2027 = vpop.f32.mrf.mxu0
    %v2028 = vadd.f32 %v1979, %v2027
    %v2029 = vpop.f32.mrf.mxu0
    %v2030 = vadd.f32 %v1981, %v2029
    %2031 = vmatmul.bf16.gmra.mxu0 %v573
    %v2032 = vpop.f32.mrf.mxu0
    %v2033 = vadd.f32 %v1984, %v2032
    %v2034 = vpop.f32.mrf.mxu0
    %v2035 = vadd.f32 %v1986, %v2034
    %2036 = vmatmul.bf16.gmra.mxu0 %v575
    %v2037 = vpop.f32.mrf.mxu0
    %v2038 = vadd.f32 %v1989, %v2037
    %v2039 = vpop.f32.mrf.mxu0
    %v2040 = vadd.f32 %v1991, %v2039
    %2041 = vmatmul.bf16.gmra.mxu0 %v577
    %v2042 = vpop.f32.mrf.mxu0
    %v2043 = vadd.f32 %v1994, %v2042
    %v2044 = vpop.f32.mrf.mxu0
    %v2045 = vadd.f32 %v1996, %v2044
    %2046 = vmatmul.bf16.gmra.mxu0 %v579
    %v2047 = vpop.f32.mrf.mxu0
    %v2048 = vadd.f32 %v1999, %v2047
    %v2049 = vpop.f32.mrf.mxu0
    %v2050 = vadd.f32 %v2001, %v2049
    %2051 = vdwg.mxu0
    %2052 = vmatpush.bf16.msra.mxu0 %v1173
    %2053 = vmatpush.bf16.msra.mxu0 %v1165
    %2054 = vmatpush.bf16.msra.mxu0 %v1157
    %2055 = vmatpush.bf16.msra.mxu0 %v1149
    %2056 = vmatpush.bf16.msra.mxu0 %v1141
    %2057 = vmatpush.bf16.msra.mxu0 %v1133
    %2058 = vmatpush.bf16.msra.mxu0 %v1125
    %2059 = vmatpush.bf16.msra.mxu0 %v1117
    %2060 = vmatmul.bf16.gmra.mxu0 %v564
    %v2061 = vpop.f32.mrf.mxu0
    %v2062 = vadd.f32 %v717, %v2061
    %v2063 = vpop.f32.mrf.mxu0
    %v2064 = vadd.f32 %v717, %v2063
    %2065 = vmatmul.bf16.gmra.mxu0 %v566
    %v2066 = vpop.f32.mrf.mxu0
    %v2067 = vadd.f32 %v717, %v2066
    %v2068 = vpop.f32.mrf.mxu0
    %v2069 = vadd.f32 %v717, %v2068
    %2070 = vmatmul.bf16.gmra.mxu0 %v568
    %v2071 = vpop.f32.mrf.mxu0
    %v2072 = vadd.f32 %v717, %v2071
    %v2073 = vpop.f32.mrf.mxu0
    %v2074 = vadd.f32 %v717, %v2073
    %2075 = vmatmul.bf16.gmra.mxu0 %v570
    %v2076 = vpop.f32.mrf.mxu0
    %v2077 = vadd.f32 %v717, %v2076
    %v2078 = vpop.f32.mrf.mxu0
    %v2079 = vadd.f32 %v717, %v2078
    %2080 = vmatmul.bf16.gmra.mxu0 %v572
    %v2081 = vpop.f32.mrf.mxu0
    %v2082 = vadd.f32 %v717, %v2081
    %v2083 = vpop.f32.mrf.mxu0
    %v2084 = vadd.f32 %v717, %v2083
    %2085 = vmatmul.bf16.gmra.mxu0 %v574
    %v2086 = vpop.f32.mrf.mxu0
    %v2087 = vadd.f32 %v717, %v2086
    %v2088 = vpop.f32.mrf.mxu0
    %v2089 = vadd.f32 %v717, %v2088
    %2090 = vmatmul.bf16.gmra.mxu0 %v576
    %v2091 = vpop.f32.mrf.mxu0
    %v2092 = vadd.f32 %v717, %v2091
    %v2093 = vpop.f32.mrf.mxu0
    %v2094 = vadd.f32 %v717, %v2093
    %2095 = vmatmul.bf16.gmra.mxu0 %v578
    %v2096 = vpop.f32.mrf.mxu0
    %v2097 = vadd.f32 %v717, %v2096
    %v2098 = vpop.f32.mrf.mxu0
    %v2099 = vadd.f32 %v717, %v2098
    %2100 = vdwg.mxu0
    %2101 = vmatpush.bf16.msra.mxu0 %v1237
    %2102 = vmatpush.bf16.msra.mxu0 %v1229
    %2103 = vmatpush.bf16.msra.mxu0 %v1221
    %2104 = vmatpush.bf16.msra.mxu0 %v1213
    %2105 = vmatpush.bf16.msra.mxu0 %v1205
    %2106 = vmatpush.bf16.msra.mxu0 %v1197
    %2107 = vmatpush.bf16.msra.mxu0 %v1189
    %2108 = vmatpush.bf16.msra.mxu0 %v1181
    %2109 = vmatmul.bf16.gmra.mxu0 %v565
    %v2110 = vpop.f32.mrf.mxu0
    %v2111 = vadd.f32 %v2062, %v2110
    %v2112 = vpop.f32.mrf.mxu0
    %v2113 = vadd.f32 %v2064, %v2112
    %2114 = vmatmul.bf16.gmra.mxu0 %v567
    %v2115 = vpop.f32.mrf.mxu0
    %v2116 = vadd.f32 %v2067, %v2115
    %v2117 = vpop.f32.mrf.mxu0
    %v2118 = vadd.f32 %v2069, %v2117
    %2119 = vmatmul.bf16.gmra.mxu0 %v569
    %v2120 = vpop.f32.mrf.mxu0
    %v2121 = vadd.f32 %v2072, %v2120
    %v2122 = vpop.f32.mrf.mxu0
    %v2123 = vadd.f32 %v2074, %v2122
    %2124 = vmatmul.bf16.gmra.mxu0 %v571
    %v2125 = vpop.f32.mrf.mxu0
    %v2126 = vadd.f32 %v2077, %v2125
    %v2127 = vpop.f32.mrf.mxu0
    %v2128 = vadd.f32 %v2079, %v2127
    %2129 = vmatmul.bf16.gmra.mxu0 %v573
    %v2130 = vpop.f32.mrf.mxu0
    %v2131 = vadd.f32 %v2082, %v2130
    %v2132 = vpop.f32.mrf.mxu0
    %v2133 = vadd.f32 %v2084, %v2132
    %2134 = vmatmul.bf16.gmra.mxu0 %v575
    %v2135 = vpop.f32.mrf.mxu0
    %v2136 = vadd.f32 %v2087, %v2135
    %v2137 = vpop.f32.mrf.mxu0
    %v2138 = vadd.f32 %v2089, %v2137
    %2139 = vmatmul.bf16.gmra.mxu0 %v577
    %v2140 = vpop.f32.mrf.mxu0
    %v2141 = vadd.f32 %v2092, %v2140
    %v2142 = vpop.f32.mrf.mxu0
    %v2143 = vadd.f32 %v2094, %v2142
    %2144 = vmatmul.bf16.gmra.mxu0 %v579
    %v2145 = vpop.f32.mrf.mxu0
    %v2146 = vadd.f32 %v2097, %v2145
    %v2147 = vpop.f32.mrf.mxu0
    %v2148 = vadd.f32 %v2099, %v2147
    %2149 = vdwg.mxu0
    %v2150 = vmax.f32 %v1425, 0.0
    %v2151 = vmax.f32 %v1523, 0.0
    %v2152 = vmax.f32 %v1621, 0.0
    %v2153 = vmax.f32 %v1719, 0.0
    %v2154 = vmax.f32 %v1817, 0.0
    %v2155 = vmax.f32 %v1915, 0.0
    %v2156 = vmax.f32 %v2013, 0.0
    %v2157 = vmax.f32 %v2111, 0.0
    %v2158 = vmax.f32 %v1427, 0.0
    %v2159 = vmax.f32 %v1525, 0.0
    %v2160 = vmax.f32 %v1623, 0.0
    %v2161 = vmax.f32 %v1721, 0.0
    %v2162 = vmax.f32 %v1819, 0.0
    %v2163 = vmax.f32 %v1917, 0.0
    %v2164 = vmax.f32 %v2015, 0.0
    %v2165 = vmax.f32 %v2113, 0.0
    %v2166 = vmax.f32 %v1430, 0.0
    %v2167 = vmax.f32 %v1528, 0.0
    %v2168 = vmax.f32 %v1626, 0.0
    %v2169 = vmax.f32 %v1724, 0.0
    %v2170 = vmax.f32 %v1822, 0.0
    %v2171 = vmax.f32 %v1920, 0.0
    %v2172 = vmax.f32 %v2018, 0.0
    %v2173 = vmax.f32 %v2116, 0.0
    %v2174 = vmax.f32 %v1432, 0.0
    %v2175 = vmax.f32 %v1530, 0.0
    %v2176 = vmax.f32 %v1628, 0.0
    %v2177 = vmax.f32 %v1726, 0.0
    %v2178 = vmax.f32 %v1824, 0.0
    %v2179 = vmax.f32 %v1922, 0.0
    %v2180 = vmax.f32 %v2020, 0.0
    %v2181 = vmax.f32 %v2118, 0.0
    %v2182 = vmax.f32 %v1435, 0.0
    %v2183 = vmax.f32 %v1533, 0.0
    %v2184 = vmax.f32 %v1631, 0.0
    %v2185 = vmax.f32 %v1729, 0.0
    %v2186 = vmax.f32 %v1827, 0.0
    %v2187 = vmax.f32 %v1925, 0.0
    %v2188 = vmax.f32 %v2023, 0.0
    %v2189 = vmax.f32 %v2121, 0.0
    %v2190 = vmax.f32 %v1437, 0.0
    %v2191 = vmax.f32 %v1535, 0.0
    %v2192 = vmax.f32 %v1633, 0.0
    %v2193 = vmax.f32 %v1731, 0.0
    %v2194 = vmax.f32 %v1829, 0.0
    %v2195 = vmax.f32 %v1927, 0.0
    %v2196 = vmax.f32 %v2025, 0.0
    %v2197 = vmax.f32 %v2123, 0.0
    %v2198 = vmax.f32 %v1440, 0.0
    %v2199 = vmax.f32 %v1538, 0.0
    %v2200 = vmax.f32 %v1636, 0.0
    %v2201 = vmax.f32 %v1734, 0.0
    %v2202 = vmax.f32 %v1832, 0.0
    %v2203 = vmax.f32 %v1930, 0.0
    %v2204 = vmax.f32 %v2028, 0.0
    %v2205 = vmax.f32 %v2126, 0.0
    %v2206 = vmax.f32 %v1442, 0.0
    %v2207 = vmax.f32 %v1540, 0.0
    %v2208 = vmax.f32 %v1638, 0.0
    %v2209 = vmax.f32 %v1736, 0.0
    %v2210 = vmax.f32 %v1834, 0.0
    %v2211 = vmax.f32 %v1932, 0.0
    %v2212 = vmax.f32 %v2030, 0.0
    %v2213 = vmax.f32 %v2128, 0.0
    %v2214 = vmax.f32 %v1445, 0.0
    %v2215 = vmax.f32 %v1543, 0.0
    %v2216 = vmax.f32 %v1641, 0.0
    %v2217 = vmax.f32 %v1739, 0.0
    %v2218 = vmax.f32 %v1837, 0.0
    %v2219 = vmax.f32 %v1935, 0.0
    %v2220 = vmax.f32 %v2033, 0.0
    %v2221 = vmax.f32 %v2131, 0.0
    %v2222 = vmax.f32 %v1447, 0.0
    %v2223 = vmax.f32 %v1545, 0.0
    %v2224 = vmax.f32 %v1643, 0.0
    %v2225 = vmax.f32 %v1741, 0.0
    %v2226 = vmax.f32 %v1839, 0.0
    %v2227 = vmax.f32 %v1937, 0.0
    %v2228 = vmax.f32 %v2035, 0.0
    %v2229 = vmax.f32 %v2133, 0.0
    %v2230 = vmax.f32 %v1450, 0.0
    %v2231 = vmax.f32 %v1548, 0.0
    %v2232 = vmax.f32 %v1646, 0.0
    %v2233 = vmax.f32 %v1744, 0.0
    %v2234 = vmax.f32 %v1842, 0.0
    %v2235 = vmax.f32 %v1940, 0.0
    %v2236 = vmax.f32 %v2038, 0.0
    %v2237 = vmax.f32 %v2136, 0.0
    %v2238 = vmax.f32 %v1452, 0.0
    %v2239 = vmax.f32 %v1550, 0.0
    %v2240 = vmax.f32 %v1648, 0.0
    %v2241 = vmax.f32 %v1746, 0.0
    %v2242 = vmax.f32 %v1844, 0.0
    %v2243 = vmax.f32 %v1942, 0.0
    %v2244 = vmax.f32 %v2040, 0.0
    %v2245 = vmax.f32 %v2138, 0.0
    %v2246 = vmax.f32 %v1455, 0.0
    %v2247 = vmax.f32 %v1553, 0.0
    %v2248 = vmax.f32 %v1651, 0.0
    %v2249 = vmax.f32 %v1749, 0.0
    %v2250 = vmax.f32 %v1847, 0.0
    %v2251 = vmax.f32 %v1945, 0.0
    %v2252 = vmax.f32 %v2043, 0.0
    %v2253 = vmax.f32 %v2141, 0.0
    %v2254 = vmax.f32 %v1457, 0.0
    %v2255 = vmax.f32 %v1555, 0.0
    %v2256 = vmax.f32 %v1653, 0.0
    %v2257 = vmax.f32 %v1751, 0.0
    %v2258 = vmax.f32 %v1849, 0.0
    %v2259 = vmax.f32 %v1947, 0.0
    %v2260 = vmax.f32 %v2045, 0.0
    %v2261 = vmax.f32 %v2143, 0.0
    %v2262 = vmax.f32 %v1460, 0.0
    %v2263 = vmax.f32 %v1558, 0.0
    %v2264 = vmax.f32 %v1656, 0.0
    %v2265 = vmax.f32 %v1754, 0.0
    %v2266 = vmax.f32 %v1852, 0.0
    %v2267 = vmax.f32 %v1950, 0.0
    %v2268 = vmax.f32 %v2048, 0.0
    %v2269 = vmax.f32 %v2146, 0.0
    %v2270 = vmax.f32 %v1462, 0.0
    %v2271 = vmax.f32 %v1560, 0.0
    %v2272 = vmax.f32 %v1658, 0.0
    %v2273 = vmax.f32 %v1756, 0.0
    %v2274 = vmax.f32 %v1854, 0.0
    %v2275 = vmax.f32 %v1952, 0.0
    %v2276 = vmax.f32 %v2050, 0.0
    %v2277 = vmax.f32 %v2148, 0.0
    %v2278 = vpack.c.bf16 %v2158, %v2150
    %v2279 = vpack.c.bf16 %v2159, %v2151
    %v2280 = vpack.c.bf16 %v2160, %v2152
    %v2281 = vpack.c.bf16 %v2161, %v2153
    %v2282 = vpack.c.bf16 %v2162, %v2154
    %v2283 = vpack.c.bf16 %v2163, %v2155
    %v2284 = vpack.c.bf16 %v2164, %v2156
    %v2285 = vpack.c.bf16 %v2165, %v2157
    %v2286 = vpack.c.bf16 %v2174, %v2166
    %v2287 = vpack.c.bf16 %v2175, %v2167
    %v2288 = vpack.c.bf16 %v2176, %v2168
    %v2289 = vpack.c.bf16 %v2177, %v2169
    %v2290 = vpack.c.bf16 %v2178, %v2170
    %v2291 = vpack.c.bf16 %v2179, %v2171
    %v2292 = vpack.c.bf16 %v2180, %v2172
    %v2293 = vpack.c.bf16 %v2181, %v2173
    %v2294 = vpack.c.bf16 %v2190, %v2182
    %v2295 = vpack.c.bf16 %v2191, %v2183
    %v2296 = vpack.c.bf16 %v2192, %v2184
    %v2297 = vpack.c.bf16 %v2193, %v2185
    %v2298 = vpack.c.bf16 %v2194, %v2186
    %v2299 = vpack.c.bf16 %v2195, %v2187
    %v2300 = vpack.c.bf16 %v2196, %v2188
    %v2301 = vpack.c.bf16 %v2197, %v2189
    %v2302 = vpack.c.bf16 %v2206, %v2198
    %v2303 = vpack.c.bf16 %v2207, %v2199
    %v2304 = vpack.c.bf16 %v2208, %v2200
    %v2305 = vpack.c.bf16 %v2209, %v2201
    %v2306 = vpack.c.bf16 %v2210, %v2202
    %v2307 = vpack.c.bf16 %v2211, %v2203
    %v2308 = vpack.c.bf16 %v2212, %v2204
    %v2309 = vpack.c.bf16 %v2213, %v2205
    %v2310 = vpack.c.bf16 %v2222, %v2214
    %v2311 = vpack.c.bf16 %v2223, %v2215
    %v2312 = vpack.c.bf16 %v2224, %v2216
    %v2313 = vpack.c.bf16 %v2225, %v2217
    %v2314 = vpack.c.bf16 %v2226, %v2218
    %v2315 = vpack.c.bf16 %v2227, %v2219
    %v2316 = vpack.c.bf16 %v2228, %v2220
    %v2317 = vpack.c.bf16 %v2229, %v2221
    %v2318 = vpack.c.bf16 %v2238, %v2230
    %v2319 = vpack.c.bf16 %v2239, %v2231
    %v2320 = vpack.c.bf16 %v2240, %v2232
    %v2321 = vpack.c.bf16 %v2241, %v2233
    %v2322 = vpack.c.bf16 %v2242, %v2234
    %v2323 = vpack.c.bf16 %v2243, %v2235
    %v2324 = vpack.c.bf16 %v2244, %v2236
    %v2325 = vpack.c.bf16 %v2245, %v2237
    %v2326 = vpack.c.bf16 %v2254, %v2246
    %v2327 = vpack.c.bf16 %v2255, %v2247
    %v2328 = vpack.c.bf16 %v2256, %v2248
    %v2329 = vpack.c.bf16 %v2257, %v2249
    %v2330 = vpack.c.bf16 %v2258, %v2250
    %v2331 = vpack.c.bf16 %v2259, %v2251
    %v2332 = vpack.c.bf16 %v2260, %v2252
    %v2333 = vpack.c.bf16 %v2261, %v2253
    %v2334 = vpack.c.bf16 %v2270, %v2262
    %v2335 = vpack.c.bf16 %v2271, %v2263
    %v2336 = vpack.c.bf16 %v2272, %v2264
    %v2337 = vpack.c.bf16 %v2273, %v2265
    %v2338 = vpack.c.bf16 %v2274, %v2266
    %v2339 = vpack.c.bf16 %v2275, %v2267
    %v2340 = vpack.c.bf16 %v2276, %v2268
    %v2341 = vpack.c.bf16 %v2277, %v2269
    %v2342 = vld [vmem:[%s5] sm:$0xff]
    %v2343 = vld [vmem:[%s5 + $0x8] sm:$0xff]
    %v2344 = vld [vmem:[%s5 + $0x10] sm:$0xff]
    %v2345 = vld [vmem:[%s5 + $0x18] sm:$0xff]
    %v2346 = vld [vmem:[%s5 + $0x20] sm:$0xff]
    %v2347 = vld [vmem:[%s5 + $0x28] sm:$0xff]
    %v2348 = vld [vmem:[%s5 + $0x30] sm:$0xff]
    %v2349 = vld [vmem:[%s5 + $0x38] sm:$0xff]
    %v2350 = vld [vmem:[%s5 + $0x40] sm:$0xff]
    %v2351 = vld [vmem:[%s5 + $0x48] sm:$0xff]
    %v2352 = vld [vmem:[%s5 + $0x50] sm:$0xff]
    %v2353 = vld [vmem:[%s5 + $0x58] sm:$0xff]
    %v2354 = vld [vmem:[%s5 + $0x60] sm:$0xff]
    %v2355 = vld [vmem:[%s5 + $0x68] sm:$0xff]
    %v2356 = vld [vmem:[%s5 + $0x70] sm:$0xff]
    %v2357 = vld [vmem:[%s5 + $0x78] sm:$0xff]
    %v2358 = vld [vmem:[%s5 + $0x80] sm:$0xff]
    %v2359 = vld [vmem:[%s5 + $0x88] sm:$0xff]
    %v2360 = vld [vmem:[%s5 + $0x90] sm:$0xff]
    %v2361 = vld [vmem:[%s5 + $0x98] sm:$0xff]
    %v2362 = vld [vmem:[%s5 + $0xa0] sm:$0xff]
    %v2363 = vld [vmem:[%s5 + $0xa8] sm:$0xff]
    %v2364 = vld [vmem:[%s5 + $0xb0] sm:$0xff]
    %v2365 = vld [vmem:[%s5 + $0xb8] sm:$0xff]
    %v2366 = vld [vmem:[%s5 + $0xc0] sm:$0xff]
    %v2367 = vld [vmem:[%s5 + $0xc8] sm:$0xff]
    %v2368 = vld [vmem:[%s5 + $0xd0] sm:$0xff]
    %v2369 = vld [vmem:[%s5 + $0xd8] sm:$0xff]
    %v2370 = vld [vmem:[%s5 + $0xe0] sm:$0xff]
    %v2371 = vld [vmem:[%s5 + $0xe8] sm:$0xff]
    %v2372 = vld [vmem:[%s5 + $0xf0] sm:$0xff]
    %v2373 = vld [vmem:[%s5 + $0xf8] sm:$0xff]
    %v2374 = vld [vmem:[%s5 + $0x100] sm:$0xff]
    %v2375 = vld [vmem:[%s5 + $0x108] sm:$0xff]
    %v2376 = vld [vmem:[%s5 + $0x110] sm:$0xff]
    %v2377 = vld [vmem:[%s5 + $0x118] sm:$0xff]
    %v2378 = vld [vmem:[%s5 + $0x120] sm:$0xff]
    %v2379 = vld [vmem:[%s5 + $0x128] sm:$0xff]
    %v2380 = vld [vmem:[%s5 + $0x130] sm:$0xff]
    %v2381 = vld [vmem:[%s5 + $0x138] sm:$0xff]
    %v2382 = vld [vmem:[%s5 + $0x140] sm:$0xff]
    %v2383 = vld [vmem:[%s5 + $0x148] sm:$0xff]
    %v2384 = vld [vmem:[%s5 + $0x150] sm:$0xff]
    %v2385 = vld [vmem:[%s5 + $0x158] sm:$0xff]
    %v2386 = vld [vmem:[%s5 + $0x160] sm:$0xff]
    %v2387 = vld [vmem:[%s5 + $0x168] sm:$0xff]
    %v2388 = vld [vmem:[%s5 + $0x170] sm:$0xff]
    %v2389 = vld [vmem:[%s5 + $0x178] sm:$0xff]
    %v2390 = vld [vmem:[%s5 + $0x180] sm:$0xff]
    %v2391 = vld [vmem:[%s5 + $0x188] sm:$0xff]
    %v2392 = vld [vmem:[%s5 + $0x190] sm:$0xff]
    %v2393 = vld [vmem:[%s5 + $0x198] sm:$0xff]
    %v2394 = vld [vmem:[%s5 + $0x1a0] sm:$0xff]
    %v2395 = vld [vmem:[%s5 + $0x1a8] sm:$0xff]
    %v2396 = vld [vmem:[%s5 + $0x1b0] sm:$0xff]
    %v2397 = vld [vmem:[%s5 + $0x1b8] sm:$0xff]
    %v2398 = vld [vmem:[%s5 + $0x1c0] sm:$0xff]
    %v2399 = vld [vmem:[%s5 + $0x1c8] sm:$0xff]
    %v2400 = vld [vmem:[%s5 + $0x1d0] sm:$0xff]
    %v2401 = vld [vmem:[%s5 + $0x1d8] sm:$0xff]
    %v2402 = vld [vmem:[%s5 + $0x1e0] sm:$0xff]
    %v2403 = vld [vmem:[%s5 + $0x1e8] sm:$0xff]
    %v2404 = vld [vmem:[%s5 + $0x1f0] sm:$0xff]
    %v2405 = vld [vmem:[%s5 + $0x1f8] sm:$0xff]
    %v2406 = vld [vmem:[%s5 + $0x200] sm:$0xff]
    %v2407 = vld [vmem:[%s5 + $0x208] sm:$0xff]
    %v2408 = vld [vmem:[%s5 + $0x210] sm:$0xff]
    %v2409 = vld [vmem:[%s5 + $0x218] sm:$0xff]
    %v2410 = vld [vmem:[%s5 + $0x220] sm:$0xff]
    %v2411 = vld [vmem:[%s5 + $0x228] sm:$0xff]
    %v2412 = vld [vmem:[%s5 + $0x230] sm:$0xff]
    %v2413 = vld [vmem:[%s5 + $0x238] sm:$0xff]
    %v2414 = vld [vmem:[%s5 + $0x240] sm:$0xff]
    %v2415 = vld [vmem:[%s5 + $0x248] sm:$0xff]
    %v2416 = vld [vmem:[%s5 + $0x250] sm:$0xff]
    %v2417 = vld [vmem:[%s5 + $0x258] sm:$0xff]
    %v2418 = vld [vmem:[%s5 + $0x260] sm:$0xff]
    %v2419 = vld [vmem:[%s5 + $0x268] sm:$0xff]
    %v2420 = vld [vmem:[%s5 + $0x270] sm:$0xff]
    %v2421 = vld [vmem:[%s5 + $0x278] sm:$0xff]
    %v2422 = vld [vmem:[%s5 + $0x280] sm:$0xff]
    %v2423 = vld [vmem:[%s5 + $0x288] sm:$0xff]
    %v2424 = vld [vmem:[%s5 + $0x290] sm:$0xff]
    %v2425 = vld [vmem:[%s5 + $0x298] sm:$0xff]
    %v2426 = vld [vmem:[%s5 + $0x2a0] sm:$0xff]
    %v2427 = vld [vmem:[%s5 + $0x2a8] sm:$0xff]
    %v2428 = vld [vmem:[%s5 + $0x2b0] sm:$0xff]
    %v2429 = vld [vmem:[%s5 + $0x2b8] sm:$0xff]
    %v2430 = vld [vmem:[%s5 + $0x2c0] sm:$0xff]
    %v2431 = vld [vmem:[%s5 + $0x2c8] sm:$0xff]
    %v2432 = vld [vmem:[%s5 + $0x2d0] sm:$0xff]
    %v2433 = vld [vmem:[%s5 + $0x2d8] sm:$0xff]
    %v2434 = vld [vmem:[%s5 + $0x2e0] sm:$0xff]
    %v2435 = vld [vmem:[%s5 + $0x2e8] sm:$0xff]
    %v2436 = vld [vmem:[%s5 + $0x2f0] sm:$0xff]
    %v2437 = vld [vmem:[%s5 + $0x2f8] sm:$0xff]
    %v2438 = vld [vmem:[%s5 + $0x300] sm:$0xff]
    %v2439 = vld [vmem:[%s5 + $0x308] sm:$0xff]
    %v2440 = vld [vmem:[%s5 + $0x310] sm:$0xff]
    %v2441 = vld [vmem:[%s5 + $0x318] sm:$0xff]
    %v2442 = vld [vmem:[%s5 + $0x320] sm:$0xff]
    %v2443 = vld [vmem:[%s5 + $0x328] sm:$0xff]
    %v2444 = vld [vmem:[%s5 + $0x330] sm:$0xff]
    %v2445 = vld [vmem:[%s5 + $0x338] sm:$0xff]
    %v2446 = vld [vmem:[%s5 + $0x340] sm:$0xff]
    %v2447 = vld [vmem:[%s5 + $0x348] sm:$0xff]
    %v2448 = vld [vmem:[%s5 + $0x350] sm:$0xff]
    %v2449 = vld [vmem:[%s5 + $0x358] sm:$0xff]
    %v2450 = vld [vmem:[%s5 + $0x360] sm:$0xff]
    %v2451 = vld [vmem:[%s5 + $0x368] sm:$0xff]
    %v2452 = vld [vmem:[%s5 + $0x370] sm:$0xff]
    %v2453 = vld [vmem:[%s5 + $0x378] sm:$0xff]
    %v2454 = vld [vmem:[%s5 + $0x380] sm:$0xff]
    %v2455 = vld [vmem:[%s5 + $0x388] sm:$0xff]
    %v2456 = vld [vmem:[%s5 + $0x390] sm:$0xff]
    %v2457 = vld [vmem:[%s5 + $0x398] sm:$0xff]
    %v2458 = vld [vmem:[%s5 + $0x3a0] sm:$0xff]
    %v2459 = vld [vmem:[%s5 + $0x3a8] sm:$0xff]
    %v2460 = vld [vmem:[%s5 + $0x3b0] sm:$0xff]
    %v2461 = vld [vmem:[%s5 + $0x3b8] sm:$0xff]
    %v2462 = vld [vmem:[%s5 + $0x3c0] sm:$0xff]
    %v2463 = vld [vmem:[%s5 + $0x3c8] sm:$0xff]
    %v2464 = vld [vmem:[%s5 + $0x3d0] sm:$0xff]
    %v2465 = vld [vmem:[%s5 + $0x3d8] sm:$0xff]
    %v2466 = vld [vmem:[%s5 + $0x3e0] sm:$0xff]
    %v2467 = vld [vmem:[%s5 + $0x3e8] sm:$0xff]
    %v2468 = vld [vmem:[%s5 + $0x3f0] sm:$0xff]
    %v2469 = vld [vmem:[%s5 + $0x3f8] sm:$0xff]
    %v2470 = vld [vmem:[%s6] sm:$0x3]
    %v2472 = vperm.slane %v2470, 0
    %v2473 = vperm.slane %v2470, 1
    %v2604 = vunpack.c.l.b16 %v2342
    %v2605 = vunpack.c.h.b16 %v2342
    %v2606 = vunpack.c.l.b16 %v2343
    %v2607 = vunpack.c.h.b16 %v2343
    %v2608 = vunpack.c.l.b16 %v2344
    %v2609 = vunpack.c.h.b16 %v2344
    %v2610 = vunpack.c.l.b16 %v2345
    %v2611 = vunpack.c.h.b16 %v2345
    %v2612 = vunpack.c.l.b16 %v2346
    %v2613 = vunpack.c.h.b16 %v2346
    %v2614 = vunpack.c.l.b16 %v2347
    %v2615 = vunpack.c.h.b16 %v2347
    %v2616 = vunpack.c.l.b16 %v2348
    %v2617 = vunpack.c.h.b16 %v2348
    %v2618 = vunpack.c.l.b16 %v2349
    %v2619 = vunpack.c.h.b16 %v2349
    %v2620 = vunpack.c.l.b16 %v2350
    %v2621 = vunpack.c.h.b16 %v2350
    %v2622 = vunpack.c.l.b16 %v2351
    %v2623 = vunpack.c.h.b16 %v2351
    %v2624 = vunpack.c.l.b16 %v2352
    %v2625 = vunpack.c.h.b16 %v2352
    %v2626 = vunpack.c.l.b16 %v2353
    %v2627 = vunpack.c.h.b16 %v2353
    %v2628 = vunpack.c.l.b16 %v2354
    %v2629 = vunpack.c.h.b16 %v2354
    %v2630 = vunpack.c.l.b16 %v2355
    %v2631 = vunpack.c.h.b16 %v2355
    %v2632 = vunpack.c.l.b16 %v2356
    %v2633 = vunpack.c.h.b16 %v2356
    %v2634 = vunpack.c.l.b16 %v2357
    %v2635 = vunpack.c.h.b16 %v2357
    %v2636 = vunpack.c.l.b16 %v2358
    %v2637 = vunpack.c.h.b16 %v2358
    %v2638 = vunpack.c.l.b16 %v2359
    %v2639 = vunpack.c.h.b16 %v2359
    %v2640 = vunpack.c.l.b16 %v2360
    %v2641 = vunpack.c.h.b16 %v2360
    %v2642 = vunpack.c.l.b16 %v2361
    %v2643 = vunpack.c.h.b16 %v2361
    %v2644 = vunpack.c.l.b16 %v2362
    %v2645 = vunpack.c.h.b16 %v2362
    %v2646 = vunpack.c.l.b16 %v2363
    %v2647 = vunpack.c.h.b16 %v2363
    %v2648 = vunpack.c.l.b16 %v2364
    %v2649 = vunpack.c.h.b16 %v2364
    %v2650 = vunpack.c.l.b16 %v2365
    %v2651 = vunpack.c.h.b16 %v2365
    %v2652 = vunpack.c.l.b16 %v2366
    %v2653 = vunpack.c.h.b16 %v2366
    %v2654 = vunpack.c.l.b16 %v2367
    %v2655 = vunpack.c.h.b16 %v2367
    %v2656 = vunpack.c.l.b16 %v2368
    %v2657 = vunpack.c.h.b16 %v2368
    %v2658 = vunpack.c.l.b16 %v2369
    %v2659 = vunpack.c.h.b16 %v2369
    %v2660 = vunpack.c.l.b16 %v2370
    %v2661 = vunpack.c.h.b16 %v2370
    %v2662 = vunpack.c.l.b16 %v2371
    %v2663 = vunpack.c.h.b16 %v2371
    %v2664 = vunpack.c.l.b16 %v2372
    %v2665 = vunpack.c.h.b16 %v2372
    %v2666 = vunpack.c.l.b16 %v2373
    %v2667 = vunpack.c.h.b16 %v2373
    %v2668 = vunpack.c.l.b16 %v2374
    %v2669 = vunpack.c.h.b16 %v2374
    %v2670 = vunpack.c.l.b16 %v2375
    %v2671 = vunpack.c.h.b16 %v2375
    %v2672 = vunpack.c.l.b16 %v2376
    %v2673 = vunpack.c.h.b16 %v2376
    %v2674 = vunpack.c.l.b16 %v2377
    %v2675 = vunpack.c.h.b16 %v2377
    %v2676 = vunpack.c.l.b16 %v2378
    %v2677 = vunpack.c.h.b16 %v2378
    %v2678 = vunpack.c.l.b16 %v2379
    %v2679 = vunpack.c.h.b16 %v2379
    %v2680 = vunpack.c.l.b16 %v2380
    %v2681 = vunpack.c.h.b16 %v2380
    %v2682 = vunpack.c.l.b16 %v2381
    %v2683 = vunpack.c.h.b16 %v2381
    %v2684 = vunpack.c.l.b16 %v2382
    %v2685 = vunpack.c.h.b16 %v2382
    %v2686 = vunpack.c.l.b16 %v2383
    %v2687 = vunpack.c.h.b16 %v2383
    %v2688 = vunpack.c.l.b16 %v2384
    %v2689 = vunpack.c.h.b16 %v2384
    %v2690 = vunpack.c.l.b16 %v2385
    %v2691 = vunpack.c.h.b16 %v2385
    %v2692 = vunpack.c.l.b16 %v2386
    %v2693 = vunpack.c.h.b16 %v2386
    %v2694 = vunpack.c.l.b16 %v2387
    %v2695 = vunpack.c.h.b16 %v2387
    %v2696 = vunpack.c.l.b16 %v2388
    %v2697 = vunpack.c.h.b16 %v2388
    %v2698 = vunpack.c.l.b16 %v2389
    %v2699 = vunpack.c.h.b16 %v2389
    %v2700 = vunpack.c.l.b16 %v2390
    %v2701 = vunpack.c.h.b16 %v2390
    %v2702 = vunpack.c.l.b16 %v2391
    %v2703 = vunpack.c.h.b16 %v2391
    %v2704 = vunpack.c.l.b16 %v2392
    %v2705 = vunpack.c.h.b16 %v2392
    %v2706 = vunpack.c.l.b16 %v2393
    %v2707 = vunpack.c.h.b16 %v2393
    %v2708 = vunpack.c.l.b16 %v2394
    %v2709 = vunpack.c.h.b16 %v2394
    %v2710 = vunpack.c.l.b16 %v2395
    %v2711 = vunpack.c.h.b16 %v2395
    %v2712 = vunpack.c.l.b16 %v2396
    %v2713 = vunpack.c.h.b16 %v2396
    %v2714 = vunpack.c.l.b16 %v2397
    %v2715 = vunpack.c.h.b16 %v2397
    %v2716 = vunpack.c.l.b16 %v2398
    %v2717 = vunpack.c.h.b16 %v2398
    %v2718 = vunpack.c.l.b16 %v2399
    %v2719 = vunpack.c.h.b16 %v2399
    %v2720 = vunpack.c.l.b16 %v2400
    %v2721 = vunpack.c.h.b16 %v2400
    %v2722 = vunpack.c.l.b16 %v2401
    %v2723 = vunpack.c.h.b16 %v2401
    %v2724 = vunpack.c.l.b16 %v2402
    %v2725 = vunpack.c.h.b16 %v2402
    %v2726 = vunpack.c.l.b16 %v2403
    %v2727 = vunpack.c.h.b16 %v2403
    %v2728 = vunpack.c.l.b16 %v2404
    %v2729 = vunpack.c.h.b16 %v2404
    %v2730 = vunpack.c.l.b16 %v2405
    %v2731 = vunpack.c.h.b16 %v2405
    %v2732 = vunpack.c.l.b16 %v2406
    %v2733 = vunpack.c.h.b16 %v2406
    %v2734 = vunpack.c.l.b16 %v2407
    %v2735 = vunpack.c.h.b16 %v2407
    %v2736 = vunpack.c.l.b16 %v2408
    %v2737 = vunpack.c.h.b16 %v2408
    %v2738 = vunpack.c.l.b16 %v2409
    %v2739 = vunpack.c.h.b16 %v2409
    %v2740 = vunpack.c.l.b16 %v2410
    %v2741 = vunpack.c.h.b16 %v2410
    %v2742 = vunpack.c.l.b16 %v2411
    %v2743 = vunpack.c.h.b16 %v2411
    %v2744 = vunpack.c.l.b16 %v2412
    %v2745 = vunpack.c.h.b16 %v2412
    %v2746 = vunpack.c.l.b16 %v2413
    %v2747 = vunpack.c.h.b16 %v2413
    %v2748 = vunpack.c.l.b16 %v2414
    %v2749 = vunpack.c.h.b16 %v2414
    %v2750 = vunpack.c.l.b16 %v2415
    %v2751 = vunpack.c.h.b16 %v2415
    %v2752 = vunpack.c.l.b16 %v2416
    %v2753 = vunpack.c.h.b16 %v2416
    %v2754 = vunpack.c.l.b16 %v2417
    %v2755 = vunpack.c.h.b16 %v2417
    %v2756 = vunpack.c.l.b16 %v2418
    %v2757 = vunpack.c.h.b16 %v2418
    %v2758 = vunpack.c.l.b16 %v2419
    %v2759 = vunpack.c.h.b16 %v2419
    %v2760 = vunpack.c.l.b16 %v2420
    %v2761 = vunpack.c.h.b16 %v2420
    %v2762 = vunpack.c.l.b16 %v2421
    %v2763 = vunpack.c.h.b16 %v2421
    %v2764 = vunpack.c.l.b16 %v2422
    %v2765 = vunpack.c.h.b16 %v2422
    %v2766 = vunpack.c.l.b16 %v2423
    %v2767 = vunpack.c.h.b16 %v2423
    %v2768 = vunpack.c.l.b16 %v2424
    %v2769 = vunpack.c.h.b16 %v2424
    %v2770 = vunpack.c.l.b16 %v2425
    %v2771 = vunpack.c.h.b16 %v2425
    %v2772 = vunpack.c.l.b16 %v2426
    %v2773 = vunpack.c.h.b16 %v2426
    %v2774 = vunpack.c.l.b16 %v2427
    %v2775 = vunpack.c.h.b16 %v2427
    %v2776 = vunpack.c.l.b16 %v2428
    %v2777 = vunpack.c.h.b16 %v2428
    %v2778 = vunpack.c.l.b16 %v2429
    %v2779 = vunpack.c.h.b16 %v2429
    %v2780 = vunpack.c.l.b16 %v2430
    %v2781 = vunpack.c.h.b16 %v2430
    %v2782 = vunpack.c.l.b16 %v2431
    %v2783 = vunpack.c.h.b16 %v2431
    %v2784 = vunpack.c.l.b16 %v2432
    %v2785 = vunpack.c.h.b16 %v2432
    %v2786 = vunpack.c.l.b16 %v2433
    %v2787 = vunpack.c.h.b16 %v2433
    %v2788 = vunpack.c.l.b16 %v2434
    %v2789 = vunpack.c.h.b16 %v2434
    %v2790 = vunpack.c.l.b16 %v2435
    %v2791 = vunpack.c.h.b16 %v2435
    %v2792 = vunpack.c.l.b16 %v2436
    %v2793 = vunpack.c.h.b16 %v2436
    %v2794 = vunpack.c.l.b16 %v2437
    %v2795 = vunpack.c.h.b16 %v2437
    %v2796 = vunpack.c.l.b16 %v2438
    %v2797 = vunpack.c.h.b16 %v2438
    %v2798 = vunpack.c.l.b16 %v2439
    %v2799 = vunpack.c.h.b16 %v2439
    %v2800 = vunpack.c.l.b16 %v2440
    %v2801 = vunpack.c.h.b16 %v2440
    %v2802 = vunpack.c.l.b16 %v2441
    %v2803 = vunpack.c.h.b16 %v2441
    %v2804 = vunpack.c.l.b16 %v2442
    %v2805 = vunpack.c.h.b16 %v2442
    %v2806 = vunpack.c.l.b16 %v2443
    %v2807 = vunpack.c.h.b16 %v2443
    %v2808 = vunpack.c.l.b16 %v2444
    %v2809 = vunpack.c.h.b16 %v2444
    %v2810 = vunpack.c.l.b16 %v2445
    %v2811 = vunpack.c.h.b16 %v2445
    %v2812 = vunpack.c.l.b16 %v2446
    %v2813 = vunpack.c.h.b16 %v2446
    %v2814 = vunpack.c.l.b16 %v2447
    %v2815 = vunpack.c.h.b16 %v2447
    %v2816 = vunpack.c.l.b16 %v2448
    %v2817 = vunpack.c.h.b16 %v2448
    %v2818 = vunpack.c.l.b16 %v2449
    %v2819 = vunpack.c.h.b16 %v2449
    %v2820 = vunpack.c.l.b16 %v2450
    %v2821 = vunpack.c.h.b16 %v2450
    %v2822 = vunpack.c.l.b16 %v2451
    %v2823 = vunpack.c.h.b16 %v2451
    %v2824 = vunpack.c.l.b16 %v2452
    %v2825 = vunpack.c.h.b16 %v2452
    %v2826 = vunpack.c.l.b16 %v2453
    %v2827 = vunpack.c.h.b16 %v2453
    %v2828 = vunpack.c.l.b16 %v2454
    %v2829 = vunpack.c.h.b16 %v2454
    %v2830 = vunpack.c.l.b16 %v2455
    %v2831 = vunpack.c.h.b16 %v2455
    %v2832 = vunpack.c.l.b16 %v2456
    %v2833 = vunpack.c.h.b16 %v2456
    %v2834 = vunpack.c.l.b16 %v2457
    %v2835 = vunpack.c.h.b16 %v2457
    %v2836 = vunpack.c.l.b16 %v2458
    %v2837 = vunpack.c.h.b16 %v2458
    %v2838 = vunpack.c.l.b16 %v2459
    %v2839 = vunpack.c.h.b16 %v2459
    %v2840 = vunpack.c.l.b16 %v2460
    %v2841 = vunpack.c.h.b16 %v2460
    %v2842 = vunpack.c.l.b16 %v2461
    %v2843 = vunpack.c.h.b16 %v2461
    %v2844 = vunpack.c.l.b16 %v2462
    %v2845 = vunpack.c.h.b16 %v2462
    %v2846 = vunpack.c.l.b16 %v2463
    %v2847 = vunpack.c.h.b16 %v2463
    %v2848 = vunpack.c.l.b16 %v2464
    %v2849 = vunpack.c.h.b16 %v2464
    %v2850 = vunpack.c.l.b16 %v2465
    %v2851 = vunpack.c.h.b16 %v2465
    %v2852 = vunpack.c.l.b16 %v2466
    %v2853 = vunpack.c.h.b16 %v2466
    %v2854 = vunpack.c.l.b16 %v2467
    %v2855 = vunpack.c.h.b16 %v2467
    %v2856 = vunpack.c.l.b16 %v2468
    %v2857 = vunpack.c.h.b16 %v2468
    %v2858 = vunpack.c.l.b16 %v2469
    %v2859 = vunpack.c.h.b16 %v2469
    %v2860 = vpack.c.b16 %v2606, %v2604
    %v2861 = vpack.c.b16 %v2607, %v2605
    %v2862 = vpack.c.b16 %v2610, %v2608
    %v2863 = vpack.c.b16 %v2611, %v2609
    %v2864 = vpack.c.b16 %v2614, %v2612
    %v2865 = vpack.c.b16 %v2615, %v2613
    %v2866 = vpack.c.b16 %v2618, %v2616
    %v2867 = vpack.c.b16 %v2619, %v2617
    %v2868 = vpack.c.b16 %v2622, %v2620
    %v2869 = vpack.c.b16 %v2623, %v2621
    %v2870 = vpack.c.b16 %v2626, %v2624
    %v2871 = vpack.c.b16 %v2627, %v2625
    %v2872 = vpack.c.b16 %v2630, %v2628
    %v2873 = vpack.c.b16 %v2631, %v2629
    %v2874 = vpack.c.b16 %v2634, %v2632
    %v2875 = vpack.c.b16 %v2635, %v2633
    %v2876 = vpack.c.b16 %v2638, %v2636
    %v2877 = vpack.c.b16 %v2639, %v2637
    %v2878 = vpack.c.b16 %v2642, %v2640
    %v2879 = vpack.c.b16 %v2643, %v2641
    %v2880 = vpack.c.b16 %v2646, %v2644
    %v2881 = vpack.c.b16 %v2647, %v2645
    %v2882 = vpack.c.b16 %v2650, %v2648
    %v2883 = vpack.c.b16 %v2651, %v2649
    %v2884 = vpack.c.b16 %v2654, %v2652
    %v2885 = vpack.c.b16 %v2655, %v2653
    %v2886 = vpack.c.b16 %v2658, %v2656
    %v2887 = vpack.c.b16 %v2659, %v2657
    %v2888 = vpack.c.b16 %v2662, %v2660
    %v2889 = vpack.c.b16 %v2663, %v2661
    %v2890 = vpack.c.b16 %v2666, %v2664
    %v2891 = vpack.c.b16 %v2667, %v2665
    %v2892 = vpack.c.b16 %v2670, %v2668
    %v2893 = vpack.c.b16 %v2671, %v2669
    %v2894 = vpack.c.b16 %v2674, %v2672
    %v2895 = vpack.c.b16 %v2675, %v2673
    %v2896 = vpack.c.b16 %v2678, %v2676
    %v2897 = vpack.c.b16 %v2679, %v2677
    %v2898 = vpack.c.b16 %v2682, %v2680
    %v2899 = vpack.c.b16 %v2683, %v2681
    %v2900 = vpack.c.b16 %v2686, %v2684
    %v2901 = vpack.c.b16 %v2687, %v2685
    %v2902 = vpack.c.b16 %v2690, %v2688
    %v2903 = vpack.c.b16 %v2691, %v2689
    %v2904 = vpack.c.b16 %v2694, %v2692
    %v2905 = vpack.c.b16 %v2695, %v2693
    %v2906 = vpack.c.b16 %v2698, %v2696
    %v2907 = vpack.c.b16 %v2699, %v2697
    %v2908 = vpack.c.b16 %v2702, %v2700
    %v2909 = vpack.c.b16 %v2703, %v2701
    %v2910 = vpack.c.b16 %v2706, %v2704
    %v2911 = vpack.c.b16 %v2707, %v2705
    %v2912 = vpack.c.b16 %v2710, %v2708
    %v2913 = vpack.c.b16 %v2711, %v2709
    %v2914 = vpack.c.b16 %v2714, %v2712
    %v2915 = vpack.c.b16 %v2715, %v2713
    %v2916 = vpack.c.b16 %v2718, %v2716
    %v2917 = vpack.c.b16 %v2719, %v2717
    %v2918 = vpack.c.b16 %v2722, %v2720
    %v2919 = vpack.c.b16 %v2723, %v2721
    %v2920 = vpack.c.b16 %v2726, %v2724
    %v2921 = vpack.c.b16 %v2727, %v2725
    %v2922 = vpack.c.b16 %v2730, %v2728
    %v2923 = vpack.c.b16 %v2731, %v2729
    %v2924 = vpack.c.b16 %v2734, %v2732
    %v2925 = vpack.c.b16 %v2735, %v2733
    %v2926 = vpack.c.b16 %v2738, %v2736
    %v2927 = vpack.c.b16 %v2739, %v2737
    %v2928 = vpack.c.b16 %v2742, %v2740
    %v2929 = vpack.c.b16 %v2743, %v2741
    %v2930 = vpack.c.b16 %v2746, %v2744
    %v2931 = vpack.c.b16 %v2747, %v2745
    %v2932 = vpack.c.b16 %v2750, %v2748
    %v2933 = vpack.c.b16 %v2751, %v2749
    %v2934 = vpack.c.b16 %v2754, %v2752
    %v2935 = vpack.c.b16 %v2755, %v2753
    %v2936 = vpack.c.b16 %v2758, %v2756
    %v2937 = vpack.c.b16 %v2759, %v2757
    %v2938 = vpack.c.b16 %v2762, %v2760
    %v2939 = vpack.c.b16 %v2763, %v2761
    %v2940 = vpack.c.b16 %v2766, %v2764
    %v2941 = vpack.c.b16 %v2767, %v2765
    %v2942 = vpack.c.b16 %v2770, %v2768
    %v2943 = vpack.c.b16 %v2771, %v2769
    %v2944 = vpack.c.b16 %v2774, %v2772
    %v2945 = vpack.c.b16 %v2775, %v2773
    %v2946 = vpack.c.b16 %v2778, %v2776
    %v2947 = vpack.c.b16 %v2779, %v2777
    %v2948 = vpack.c.b16 %v2782, %v2780
    %v2949 = vpack.c.b16 %v2783, %v2781
    %v2950 = vpack.c.b16 %v2786, %v2784
    %v2951 = vpack.c.b16 %v2787, %v2785
    %v2952 = vpack.c.b16 %v2790, %v2788
    %v2953 = vpack.c.b16 %v2791, %v2789
    %v2954 = vpack.c.b16 %v2794, %v2792
    %v2955 = vpack.c.b16 %v2795, %v2793
    %v2956 = vpack.c.b16 %v2798, %v2796
    %v2957 = vpack.c.b16 %v2799, %v2797
    %v2958 = vpack.c.b16 %v2802, %v2800
    %v2959 = vpack.c.b16 %v2803, %v2801
    %v2960 = vpack.c.b16 %v2806, %v2804
    %v2961 = vpack.c.b16 %v2807, %v2805
    %v2962 = vpack.c.b16 %v2810, %v2808
    %v2963 = vpack.c.b16 %v2811, %v2809
    %v2964 = vpack.c.b16 %v2814, %v2812
    %v2965 = vpack.c.b16 %v2815, %v2813
    %v2966 = vpack.c.b16 %v2818, %v2816
    %v2967 = vpack.c.b16 %v2819, %v2817
    %v2968 = vpack.c.b16 %v2822, %v2820
    %v2969 = vpack.c.b16 %v2823, %v2821
    %v2970 = vpack.c.b16 %v2826, %v2824
    %v2971 = vpack.c.b16 %v2827, %v2825
    %v2972 = vpack.c.b16 %v2830, %v2828
    %v2973 = vpack.c.b16 %v2831, %v2829
    %v2974 = vpack.c.b16 %v2834, %v2832
    %v2975 = vpack.c.b16 %v2835, %v2833
    %v2976 = vpack.c.b16 %v2838, %v2836
    %v2977 = vpack.c.b16 %v2839, %v2837
    %v2978 = vpack.c.b16 %v2842, %v2840
    %v2979 = vpack.c.b16 %v2843, %v2841
    %v2980 = vpack.c.b16 %v2846, %v2844
    %v2981 = vpack.c.b16 %v2847, %v2845
    %v2982 = vpack.c.b16 %v2850, %v2848
    %v2983 = vpack.c.b16 %v2851, %v2849
    %v2984 = vpack.c.b16 %v2854, %v2852
    %v2985 = vpack.c.b16 %v2855, %v2853
    %v2986 = vpack.c.b16 %v2858, %v2856
    %v2987 = vpack.c.b16 %v2859, %v2857
    %3116 = vmatpush.bf16.msra.mxu0 %v2874
    %3117 = vmatpush.bf16.msra.mxu0 %v2872
    %3118 = vmatpush.bf16.msra.mxu0 %v2870
    %3119 = vmatpush.bf16.msra.mxu0 %v2868
    %3120 = vmatpush.bf16.msra.mxu0 %v2866
    %3121 = vmatpush.bf16.msra.mxu0 %v2864
    %3122 = vmatpush.bf16.msra.mxu0 %v2862
    %3123 = vmatpush.bf16.msra.mxu0 %v2860
    %3124 = vmatmul.bf16.gmra.mxu0 %v2278
    %v3125 = vpop.f32.mrf.mxu0
    %v3126 = vadd.f32 %v2472, %v3125
    %v3127 = vpop.f32.mrf.mxu0
    %v3128 = vadd.f32 %v2472, %v3127
    %3129 = vmatmul.bf16.gmra.mxu0 %v2286
    %v3130 = vpop.f32.mrf.mxu0
    %v3131 = vadd.f32 %v2472, %v3130
    %v3132 = vpop.f32.mrf.mxu0
    %v3133 = vadd.f32 %v2472, %v3132
    %3134 = vmatmul.bf16.gmra.mxu0 %v2294
    %v3135 = vpop.f32.mrf.mxu0
    %v3136 = vadd.f32 %v2472, %v3135
    %v3137 = vpop.f32.mrf.mxu0
    %v3138 = vadd.f32 %v2472, %v3137
    %3139 = vmatmul.bf16.gmra.mxu0 %v2302
    %v3140 = vpop.f32.mrf.mxu0
    %v3141 = vadd.f32 %v2472, %v3140
    %v3142 = vpop.f32.mrf.mxu0
    %v3143 = vadd.f32 %v2472, %v3142
    %3144 = vmatmul.bf16.gmra.mxu0 %v2310
    %v3145 = vpop.f32.mrf.mxu0
    %v3146 = vadd.f32 %v2472, %v3145
    %v3147 = vpop.f32.mrf.mxu0
    %v3148 = vadd.f32 %v2472, %v3147
    %3149 = vmatmul.bf16.gmra.mxu0 %v2318
    %v3150 = vpop.f32.mrf.mxu0
    %v3151 = vadd.f32 %v2472, %v3150
    %v3152 = vpop.f32.mrf.mxu0
    %v3153 = vadd.f32 %v2472, %v3152
    %3154 = vmatmul.bf16.gmra.mxu0 %v2326
    %v3155 = vpop.f32.mrf.mxu0
    %v3156 = vadd.f32 %v2472, %v3155
    %v3157 = vpop.f32.mrf.mxu0
    %v3158 = vadd.f32 %v2472, %v3157
    %3159 = vmatmul.bf16.gmra.mxu0 %v2334
    %v3160 = vpop.f32.mrf.mxu0
    %v3161 = vadd.f32 %v2472, %v3160
    %v3162 = vpop.f32.mrf.mxu0
    %v3163 = vadd.f32 %v2472, %v3162
    %3164 = vdwg.mxu0
    %3165 = vmatpush.bf16.msra.mxu0 %v2890
    %3166 = vmatpush.bf16.msra.mxu0 %v2888
    %3167 = vmatpush.bf16.msra.mxu0 %v2886
    %3168 = vmatpush.bf16.msra.mxu0 %v2884
    %3169 = vmatpush.bf16.msra.mxu0 %v2882
    %3170 = vmatpush.bf16.msra.mxu0 %v2880
    %3171 = vmatpush.bf16.msra.mxu0 %v2878
    %3172 = vmatpush.bf16.msra.mxu0 %v2876
    %3173 = vmatmul.bf16.gmra.mxu0 %v2279
    %v3174 = vpop.f32.mrf.mxu0
    %v3175 = vadd.f32 %v3126, %v3174
    %v3176 = vpop.f32.mrf.mxu0
    %v3177 = vadd.f32 %v3128, %v3176
    %3178 = vmatmul.bf16.gmra.mxu0 %v2287
    %v3179 = vpop.f32.mrf.mxu0
    %v3180 = vadd.f32 %v3131, %v3179
    %v3181 = vpop.f32.mrf.mxu0
    %v3182 = vadd.f32 %v3133, %v3181
    %3183 = vmatmul.bf16.gmra.mxu0 %v2295
    %v3184 = vpop.f32.mrf.mxu0
    %v3185 = vadd.f32 %v3136, %v3184
    %v3186 = vpop.f32.mrf.mxu0
    %v3187 = vadd.f32 %v3138, %v3186
    %3188 = vmatmul.bf16.gmra.mxu0 %v2303
    %v3189 = vpop.f32.mrf.mxu0
    %v3190 = vadd.f32 %v3141, %v3189
    %v3191 = vpop.f32.mrf.mxu0
    %v3192 = vadd.f32 %v3143, %v3191
    %3193 = vmatmul.bf16.gmra.mxu0 %v2311
    %v3194 = vpop.f32.mrf.mxu0
    %v3195 = vadd.f32 %v3146, %v3194
    %v3196 = vpop.f32.mrf.mxu0
    %v3197 = vadd.f32 %v3148, %v3196
    %3198 = vmatmul.bf16.gmra.mxu0 %v2319
    %v3199 = vpop.f32.mrf.mxu0
    %v3200 = vadd.f32 %v3151, %v3199
    %v3201 = vpop.f32.mrf.mxu0
    %v3202 = vadd.f32 %v3153, %v3201
    %3203 = vmatmul.bf16.gmra.mxu0 %v2327
    %v3204 = vpop.f32.mrf.mxu0
    %v3205 = vadd.f32 %v3156, %v3204
    %v3206 = vpop.f32.mrf.mxu0
    %v3207 = vadd.f32 %v3158, %v3206
    %3208 = vmatmul.bf16.gmra.mxu0 %v2335
    %v3209 = vpop.f32.mrf.mxu0
    %v3210 = vadd.f32 %v3161, %v3209
    %v3211 = vpop.f32.mrf.mxu0
    %v3212 = vadd.f32 %v3163, %v3211
    %3213 = vdwg.mxu0
    %3214 = vmatpush.bf16.msra.mxu0 %v2906
    %3215 = vmatpush.bf16.msra.mxu0 %v2904
    %3216 = vmatpush.bf16.msra.mxu0 %v2902
    %3217 = vmatpush.bf16.msra.mxu0 %v2900
    %3218 = vmatpush.bf16.msra.mxu0 %v2898
    %3219 = vmatpush.bf16.msra.mxu0 %v2896
    %3220 = vmatpush.bf16.msra.mxu0 %v2894
    %3221 = vmatpush.bf16.msra.mxu0 %v2892
    %3222 = vmatmul.bf16.gmra.mxu0 %v2280
    %v3223 = vpop.f32.mrf.mxu0
    %v3224 = vadd.f32 %v3175, %v3223
    %v3225 = vpop.f32.mrf.mxu0
    %v3226 = vadd.f32 %v3177, %v3225
    %3227 = vmatmul.bf16.gmra.mxu0 %v2288
    %v3228 = vpop.f32.mrf.mxu0
    %v3229 = vadd.f32 %v3180, %v3228
    %v3230 = vpop.f32.mrf.mxu0
    %v3231 = vadd.f32 %v3182, %v3230
    %3232 = vmatmul.bf16.gmra.mxu0 %v2296
    %v3233 = vpop.f32.mrf.mxu0
    %v3234 = vadd.f32 %v3185, %v3233
    %v3235 = vpop.f32.mrf.mxu0
    %v3236 = vadd.f32 %v3187, %v3235
    %3237 = vmatmul.bf16.gmra.mxu0 %v2304
    %v3238 = vpop.f32.mrf.mxu0
    %v3239 = vadd.f32 %v3190, %v3238
    %v3240 = vpop.f32.mrf.mxu0
    %v3241 = vadd.f32 %v3192, %v3240
    %3242 = vmatmul.bf16.gmra.mxu0 %v2312
    %v3243 = vpop.f32.mrf.mxu0
    %v3244 = vadd.f32 %v3195, %v3243
    %v3245 = vpop.f32.mrf.mxu0
    %v3246 = vadd.f32 %v3197, %v3245
    %3247 = vmatmul.bf16.gmra.mxu0 %v2320
    %v3248 = vpop.f32.mrf.mxu0
    %v3249 = vadd.f32 %v3200, %v3248
    %v3250 = vpop.f32.mrf.mxu0
    %v3251 = vadd.f32 %v3202, %v3250
    %3252 = vmatmul.bf16.gmra.mxu0 %v2328
    %v3253 = vpop.f32.mrf.mxu0
    %v3254 = vadd.f32 %v3205, %v3253
    %v3255 = vpop.f32.mrf.mxu0
    %v3256 = vadd.f32 %v3207, %v3255
    %3257 = vmatmul.bf16.gmra.mxu0 %v2336
    %v3258 = vpop.f32.mrf.mxu0
    %v3259 = vadd.f32 %v3210, %v3258
    %v3260 = vpop.f32.mrf.mxu0
    %v3261 = vadd.f32 %v3212, %v3260
    %3262 = vdwg.mxu0
    %3263 = vmatpush.bf16.msra.mxu0 %v2922
    %3264 = vmatpush.bf16.msra.mxu0 %v2920
    %3265 = vmatpush.bf16.msra.mxu0 %v2918
    %3266 = vmatpush.bf16.msra.mxu0 %v2916
    %3267 = vmatpush.bf16.msra.mxu0 %v2914
    %3268 = vmatpush.bf16.msra.mxu0 %v2912
    %3269 = vmatpush.bf16.msra.mxu0 %v2910
    %3270 = vmatpush.bf16.msra.mxu0 %v2908
    %3271 = vmatmul.bf16.gmra.mxu0 %v2281
    %v3272 = vpop.f32.mrf.mxu0
    %v3273 = vadd.f32 %v3224, %v3272
    %v3274 = vpop.f32.mrf.mxu0
    %v3275 = vadd.f32 %v3226, %v3274
    %3276 = vmatmul.bf16.gmra.mxu0 %v2289
    %v3277 = vpop.f32.mrf.mxu0
    %v3278 = vadd.f32 %v3229, %v3277
    %v3279 = vpop.f32.mrf.mxu0
    %v3280 = vadd.f32 %v3231, %v3279
    %3281 = vmatmul.bf16.gmra.mxu0 %v2297
    %v3282 = vpop.f32.mrf.mxu0
    %v3283 = vadd.f32 %v3234, %v3282
    %v3284 = vpop.f32.mrf.mxu0
    %v3285 = vadd.f32 %v3236, %v3284
    %3286 = vmatmul.bf16.gmra.mxu0 %v2305
    %v3287 = vpop.f32.mrf.mxu0
    %v3288 = vadd.f32 %v3239, %v3287
    %v3289 = vpop.f32.mrf.mxu0
    %v3290 = vadd.f32 %v3241, %v3289
    %3291 = vmatmul.bf16.gmra.mxu0 %v2313
    %v3292 = vpop.f32.mrf.mxu0
    %v3293 = vadd.f32 %v3244, %v3292
    %v3294 = vpop.f32.mrf.mxu0
    %v3295 = vadd.f32 %v3246, %v3294
    %3296 = vmatmul.bf16.gmra.mxu0 %v2321
    %v3297 = vpop.f32.mrf.mxu0
    %v3298 = vadd.f32 %v3249, %v3297
    %v3299 = vpop.f32.mrf.mxu0
    %v3300 = vadd.f32 %v3251, %v3299
    %3301 = vmatmul.bf16.gmra.mxu0 %v2329
    %v3302 = vpop.f32.mrf.mxu0
    %v3303 = vadd.f32 %v3254, %v3302
    %v3304 = vpop.f32.mrf.mxu0
    %v3305 = vadd.f32 %v3256, %v3304
    %3306 = vmatmul.bf16.gmra.mxu0 %v2337
    %v3307 = vpop.f32.mrf.mxu0
    %v3308 = vadd.f32 %v3259, %v3307
    %v3309 = vpop.f32.mrf.mxu0
    %v3310 = vadd.f32 %v3261, %v3309
    %3311 = vdwg.mxu0
    %3312 = vmatpush.bf16.msra.mxu0 %v2938
    %3313 = vmatpush.bf16.msra.mxu0 %v2936
    %3314 = vmatpush.bf16.msra.mxu0 %v2934
    %3315 = vmatpush.bf16.msra.mxu0 %v2932
    %3316 = vmatpush.bf16.msra.mxu0 %v2930
    %3317 = vmatpush.bf16.msra.mxu0 %v2928
    %3318 = vmatpush.bf16.msra.mxu0 %v2926
    %3319 = vmatpush.bf16.msra.mxu0 %v2924
    %3320 = vmatmul.bf16.gmra.mxu0 %v2282
    %v3321 = vpop.f32.mrf.mxu0
    %v3322 = vadd.f32 %v3273, %v3321
    %v3323 = vpop.f32.mrf.mxu0
    %v3324 = vadd.f32 %v3275, %v3323
    %3325 = vmatmul.bf16.gmra.mxu0 %v2290
    %v3326 = vpop.f32.mrf.mxu0
    %v3327 = vadd.f32 %v3278, %v3326
    %v3328 = vpop.f32.mrf.mxu0
    %v3329 = vadd.f32 %v3280, %v3328
    %3330 = vmatmul.bf16.gmra.mxu0 %v2298
    %v3331 = vpop.f32.mrf.mxu0
    %v3332 = vadd.f32 %v3283, %v3331
    %v3333 = vpop.f32.mrf.mxu0
    %v3334 = vadd.f32 %v3285, %v3333
    %3335 = vmatmul.bf16.gmra.mxu0 %v2306
    %v3336 = vpop.f32.mrf.mxu0
    %v3337 = vadd.f32 %v3288, %v3336
    %v3338 = vpop.f32.mrf.mxu0
    %v3339 = vadd.f32 %v3290, %v3338
    %3340 = vmatmul.bf16.gmra.mxu0 %v2314
    %v3341 = vpop.f32.mrf.mxu0
    %v3342 = vadd.f32 %v3293, %v3341
    %v3343 = vpop.f32.mrf.mxu0
    %v3344 = vadd.f32 %v3295, %v3343
    %3345 = vmatmul.bf16.gmra.mxu0 %v2322
    %v3346 = vpop.f32.mrf.mxu0
    %v3347 = vadd.f32 %v3298, %v3346
    %v3348 = vpop.f32.mrf.mxu0
    %v3349 = vadd.f32 %v3300, %v3348
    %3350 = vmatmul.bf16.gmra.mxu0 %v2330
    %v3351 = vpop.f32.mrf.mxu0
    %v3352 = vadd.f32 %v3303, %v3351
    %v3353 = vpop.f32.mrf.mxu0
    %v3354 = vadd.f32 %v3305, %v3353
    %3355 = vmatmul.bf16.gmra.mxu0 %v2338
    %v3356 = vpop.f32.mrf.mxu0
    %v3357 = vadd.f32 %v3308, %v3356
    %v3358 = vpop.f32.mrf.mxu0
    %v3359 = vadd.f32 %v3310, %v3358
    %3360 = vdwg.mxu0
    %3361 = vmatpush.bf16.msra.mxu0 %v2954
    %3362 = vmatpush.bf16.msra.mxu0 %v2952
    %3363 = vmatpush.bf16.msra.mxu0 %v2950
    %3364 = vmatpush.bf16.msra.mxu0 %v2948
    %3365 = vmatpush.bf16.msra.mxu0 %v2946
    %3366 = vmatpush.bf16.msra.mxu0 %v2944
    %3367 = vmatpush.bf16.msra.mxu0 %v2942
    %3368 = vmatpush.bf16.msra.mxu0 %v2940
    %3369 = vmatmul.bf16.gmra.mxu0 %v2283
    %v3370 = vpop.f32.mrf.mxu0
    %v3371 = vadd.f32 %v3322, %v3370
    %v3372 = vpop.f32.mrf.mxu0
    %v3373 = vadd.f32 %v3324, %v3372
    %3374 = vmatmul.bf16.gmra.mxu0 %v2291
    %v3375 = vpop.f32.mrf.mxu0
    %v3376 = vadd.f32 %v3327, %v3375
    %v3377 = vpop.f32.mrf.mxu0
    %v3378 = vadd.f32 %v3329, %v3377
    %3379 = vmatmul.bf16.gmra.mxu0 %v2299
    %v3380 = vpop.f32.mrf.mxu0
    %v3381 = vadd.f32 %v3332, %v3380
    %v3382 = vpop.f32.mrf.mxu0
    %v3383 = vadd.f32 %v3334, %v3382
    %3384 = vmatmul.bf16.gmra.mxu0 %v2307
    %v3385 = vpop.f32.mrf.mxu0
    %v3386 = vadd.f32 %v3337, %v3385
    %v3387 = vpop.f32.mrf.mxu0
    %v3388 = vadd.f32 %v3339, %v3387
    %3389 = vmatmul.bf16.gmra.mxu0 %v2315
    %v3390 = vpop.f32.mrf.mxu0
    %v3391 = vadd.f32 %v3342, %v3390
    %v3392 = vpop.f32.mrf.mxu0
    %v3393 = vadd.f32 %v3344, %v3392
    %3394 = vmatmul.bf16.gmra.mxu0 %v2323
    %v3395 = vpop.f32.mrf.mxu0
    %v3396 = vadd.f32 %v3347, %v3395
    %v3397 = vpop.f32.mrf.mxu0
    %v3398 = vadd.f32 %v3349, %v3397
    %3399 = vmatmul.bf16.gmra.mxu0 %v2331
    %v3400 = vpop.f32.mrf.mxu0
    %v3401 = vadd.f32 %v3352, %v3400
    %v3402 = vpop.f32.mrf.mxu0
    %v3403 = vadd.f32 %v3354, %v3402
    %3404 = vmatmul.bf16.gmra.mxu0 %v2339
    %v3405 = vpop.f32.mrf.mxu0
    %v3406 = vadd.f32 %v3357, %v3405
    %v3407 = vpop.f32.mrf.mxu0
    %v3408 = vadd.f32 %v3359, %v3407
    %3409 = vdwg.mxu0
    %3410 = vmatpush.bf16.msra.mxu0 %v2970
    %3411 = vmatpush.bf16.msra.mxu0 %v2968
    %3412 = vmatpush.bf16.msra.mxu0 %v2966
    %3413 = vmatpush.bf16.msra.mxu0 %v2964
    %3414 = vmatpush.bf16.msra.mxu0 %v2962
    %3415 = vmatpush.bf16.msra.mxu0 %v2960
    %3416 = vmatpush.bf16.msra.mxu0 %v2958
    %3417 = vmatpush.bf16.msra.mxu0 %v2956
    %3418 = vmatmul.bf16.gmra.mxu0 %v2284
    %v3419 = vpop.f32.mrf.mxu0
    %v3420 = vadd.f32 %v3371, %v3419
    %v3421 = vpop.f32.mrf.mxu0
    %v3422 = vadd.f32 %v3373, %v3421
    %3423 = vmatmul.bf16.gmra.mxu0 %v2292
    %v3424 = vpop.f32.mrf.mxu0
    %v3425 = vadd.f32 %v3376, %v3424
    %v3426 = vpop.f32.mrf.mxu0
    %v3427 = vadd.f32 %v3378, %v3426
    %3428 = vmatmul.bf16.gmra.mxu0 %v2300
    %v3429 = vpop.f32.mrf.mxu0
    %v3430 = vadd.f32 %v3381, %v3429
    %v3431 = vpop.f32.mrf.mxu0
    %v3432 = vadd.f32 %v3383, %v3431
    %3433 = vmatmul.bf16.gmra.mxu0 %v2308
    %v3434 = vpop.f32.mrf.mxu0
    %v3435 = vadd.f32 %v3386, %v3434
    %v3436 = vpop.f32.mrf.mxu0
    %v3437 = vadd.f32 %v3388, %v3436
    %3438 = vmatmul.bf16.gmra.mxu0 %v2316
    %v3439 = vpop.f32.mrf.mxu0
    %v3440 = vadd.f32 %v3391, %v3439
    %v3441 = vpop.f32.mrf.mxu0
    %v3442 = vadd.f32 %v3393, %v3441
    %3443 = vmatmul.bf16.gmra.mxu0 %v2324
    %v3444 = vpop.f32.mrf.mxu0
    %v3445 = vadd.f32 %v3396, %v3444
    %v3446 = vpop.f32.mrf.mxu0
    %v3447 = vadd.f32 %v3398, %v3446
    %3448 = vmatmul.bf16.gmra.mxu0 %v2332
    %v3449 = vpop.f32.mrf.mxu0
    %v3450 = vadd.f32 %v3401, %v3449
    %v3451 = vpop.f32.mrf.mxu0
    %v3452 = vadd.f32 %v3403, %v3451
    %3453 = vmatmul.bf16.gmra.mxu0 %v2340
    %v3454 = vpop.f32.mrf.mxu0
    %v3455 = vadd.f32 %v3406, %v3454
    %v3456 = vpop.f32.mrf.mxu0
    %v3457 = vadd.f32 %v3408, %v3456
    %3458 = vdwg.mxu0
    %3459 = vmatpush.bf16.msra.mxu0 %v2986
    %3460 = vmatpush.bf16.msra.mxu0 %v2984
    %3461 = vmatpush.bf16.msra.mxu0 %v2982
    %3462 = vmatpush.bf16.msra.mxu0 %v2980
    %3463 = vmatpush.bf16.msra.mxu0 %v2978
    %3464 = vmatpush.bf16.msra.mxu0 %v2976
    %3465 = vmatpush.bf16.msra.mxu0 %v2974
    %3466 = vmatpush.bf16.msra.mxu0 %v2972
    %3467 = vmatmul.bf16.gmra.mxu0 %v2285
    %v3468 = vpop.f32.mrf.mxu0
    %v3469 = vadd.f32 %v3420, %v3468
    %v3470 = vpop.f32.mrf.mxu0
    %v3471 = vadd.f32 %v3422, %v3470
    %3472 = vmatmul.bf16.gmra.mxu0 %v2293
    %v3473 = vpop.f32.mrf.mxu0
    %v3474 = vadd.f32 %v3425, %v3473
    %v3475 = vpop.f32.mrf.mxu0
    %v3476 = vadd.f32 %v3427, %v3475
    %3477 = vmatmul.bf16.gmra.mxu0 %v2301
    %v3478 = vpop.f32.mrf.mxu0
    %v3479 = vadd.f32 %v3430, %v3478
    %v3480 = vpop.f32.mrf.mxu0
    %v3481 = vadd.f32 %v3432, %v3480
    %3482 = vmatmul.bf16.gmra.mxu0 %v2309
    %v3483 = vpop.f32.mrf.mxu0
    %v3484 = vadd.f32 %v3435, %v3483
    %v3485 = vpop.f32.mrf.mxu0
    %v3486 = vadd.f32 %v3437, %v3485
    %3487 = vmatmul.bf16.gmra.mxu0 %v2317
    %v3488 = vpop.f32.mrf.mxu0
    %v3489 = vadd.f32 %v3440, %v3488
    %v3490 = vpop.f32.mrf.mxu0
    %v3491 = vadd.f32 %v3442, %v3490
    %3492 = vmatmul.bf16.gmra.mxu0 %v2325
    %v3493 = vpop.f32.mrf.mxu0
    %v3494 = vadd.f32 %v3445, %v3493
    %v3495 = vpop.f32.mrf.mxu0
    %v3496 = vadd.f32 %v3447, %v3495
    %3497 = vmatmul.bf16.gmra.mxu0 %v2333
    %v3498 = vpop.f32.mrf.mxu0
    %v3499 = vadd.f32 %v3450, %v3498
    %v3500 = vpop.f32.mrf.mxu0
    %v3501 = vadd.f32 %v3452, %v3500
    %3502 = vmatmul.bf16.gmra.mxu0 %v2341
    %v3503 = vpop.f32.mrf.mxu0
    %v3504 = vadd.f32 %v3455, %v3503
    %v3505 = vpop.f32.mrf.mxu0
    %v3506 = vadd.f32 %v3457, %v3505
    %3507 = vdwg.mxu0
    %3508 = vmatpush.bf16.msra.mxu0 %v2875
    %3509 = vmatpush.bf16.msra.mxu0 %v2873
    %3510 = vmatpush.bf16.msra.mxu0 %v2871
    %3511 = vmatpush.bf16.msra.mxu0 %v2869
    %3512 = vmatpush.bf16.msra.mxu0 %v2867
    %3513 = vmatpush.bf16.msra.mxu0 %v2865
    %3514 = vmatpush.bf16.msra.mxu0 %v2863
    %3515 = vmatpush.bf16.msra.mxu0 %v2861
    %3516 = vmatmul.bf16.gmra.mxu0 %v2278
    %v3517 = vpop.f32.mrf.mxu0
    %v3518 = vadd.f32 %v2473, %v3517
    %v3519 = vpop.f32.mrf.mxu0
    %v3520 = vadd.f32 %v2473, %v3519
    %3521 = vmatmul.bf16.gmra.mxu0 %v2286
    %v3522 = vpop.f32.mrf.mxu0
    %v3523 = vadd.f32 %v2473, %v3522
    %v3524 = vpop.f32.mrf.mxu0
    %v3525 = vadd.f32 %v2473, %v3524
    %3526 = vmatmul.bf16.gmra.mxu0 %v2294
    %v3527 = vpop.f32.mrf.mxu0
    %v3528 = vadd.f32 %v2473, %v3527
    %v3529 = vpop.f32.mrf.mxu0
    %v3530 = vadd.f32 %v2473, %v3529
    %3531 = vmatmul.bf16.gmra.mxu0 %v2302
    %v3532 = vpop.f32.mrf.mxu0
    %v3533 = vadd.f32 %v2473, %v3532
    %v3534 = vpop.f32.mrf.mxu0
    %v3535 = vadd.f32 %v2473, %v3534
    %3536 = vmatmul.bf16.gmra.mxu0 %v2310
    %v3537 = vpop.f32.mrf.mxu0
    %v3538 = vadd.f32 %v2473, %v3537
    %v3539 = vpop.f32.mrf.mxu0
    %v3540 = vadd.f32 %v2473, %v3539
    %3541 = vmatmul.bf16.gmra.mxu0 %v2318
    %v3542 = vpop.f32.mrf.mxu0
    %v3543 = vadd.f32 %v2473, %v3542
    %v3544 = vpop.f32.mrf.mxu0
    %v3545 = vadd.f32 %v2473, %v3544
    %3546 = vmatmul.bf16.gmra.mxu0 %v2326
    %v3547 = vpop.f32.mrf.mxu0
    %v3548 = vadd.f32 %v2473, %v3547
    %v3549 = vpop.f32.mrf.mxu0
    %v3550 = vadd.f32 %v2473, %v3549
    %3551 = vmatmul.bf16.gmra.mxu0 %v2334
    %v3552 = vpop.f32.mrf.mxu0
    %v3553 = vadd.f32 %v2473, %v3552
    %v3554 = vpop.f32.mrf.mxu0
    %v3555 = vadd.f32 %v2473, %v3554
    %3556 = vdwg.mxu0
    %3557 = vmatpush.bf16.msra.mxu0 %v2891
    %3558 = vmatpush.bf16.msra.mxu0 %v2889
    %3559 = vmatpush.bf16.msra.mxu0 %v2887
    %3560 = vmatpush.bf16.msra.mxu0 %v2885
    %3561 = vmatpush.bf16.msra.mxu0 %v2883
    %3562 = vmatpush.bf16.msra.mxu0 %v2881
    %3563 = vmatpush.bf16.msra.mxu0 %v2879
    %3564 = vmatpush.bf16.msra.mxu0 %v2877
    %3565 = vmatmul.bf16.gmra.mxu0 %v2279
    %v3566 = vpop.f32.mrf.mxu0
    %v3567 = vadd.f32 %v3518, %v3566
    %v3568 = vpop.f32.mrf.mxu0
    %v3569 = vadd.f32 %v3520, %v3568
    %3570 = vmatmul.bf16.gmra.mxu0 %v2287
    %v3571 = vpop.f32.mrf.mxu0
    %v3572 = vadd.f32 %v3523, %v3571
    %v3573 = vpop.f32.mrf.mxu0
    %v3574 = vadd.f32 %v3525, %v3573
    %3575 = vmatmul.bf16.gmra.mxu0 %v2295
    %v3576 = vpop.f32.mrf.mxu0
    %v3577 = vadd.f32 %v3528, %v3576
    %v3578 = vpop.f32.mrf.mxu0
    %v3579 = vadd.f32 %v3530, %v3578
    %3580 = vmatmul.bf16.gmra.mxu0 %v2303
    %v3581 = vpop.f32.mrf.mxu0
    %v3582 = vadd.f32 %v3533, %v3581
    %v3583 = vpop.f32.mrf.mxu0
    %v3584 = vadd.f32 %v3535, %v3583
    %3585 = vmatmul.bf16.gmra.mxu0 %v2311
    %v3586 = vpop.f32.mrf.mxu0
    %v3587 = vadd.f32 %v3538, %v3586
    %v3588 = vpop.f32.mrf.mxu0
    %v3589 = vadd.f32 %v3540, %v3588
    %3590 = vmatmul.bf16.gmra.mxu0 %v2319
    %v3591 = vpop.f32.mrf.mxu0
    %v3592 = vadd.f32 %v3543, %v3591
    %v3593 = vpop.f32.mrf.mxu0
    %v3594 = vadd.f32 %v3545, %v3593
    %3595 = vmatmul.bf16.gmra.mxu0 %v2327
    %v3596 = vpop.f32.mrf.mxu0
    %v3597 = vadd.f32 %v3548, %v3596
    %v3598 = vpop.f32.mrf.mxu0
    %v3599 = vadd.f32 %v3550, %v3598
    %3600 = vmatmul.bf16.gmra.mxu0 %v2335
    %v3601 = vpop.f32.mrf.mxu0
    %v3602 = vadd.f32 %v3553, %v3601
    %v3603 = vpop.f32.mrf.mxu0
    %v3604 = vadd.f32 %v3555, %v3603
    %3605 = vdwg.mxu0
    %3606 = vmatpush.bf16.msra.mxu0 %v2907
    %3607 = vmatpush.bf16.msra.mxu0 %v2905
    %3608 = vmatpush.bf16.msra.mxu0 %v2903
    %3609 = vmatpush.bf16.msra.mxu0 %v2901
    %3610 = vmatpush.bf16.msra.mxu0 %v2899
    %3611 = vmatpush.bf16.msra.mxu0 %v2897
    %3612 = vmatpush.bf16.msra.mxu0 %v2895
    %3613 = vmatpush.bf16.msra.mxu0 %v2893
    %3614 = vmatmul.bf16.gmra.mxu0 %v2280
    %v3615 = vpop.f32.mrf.mxu0
    %v3616 = vadd.f32 %v3567, %v3615
    %v3617 = vpop.f32.mrf.mxu0
    %v3618 = vadd.f32 %v3569, %v3617
    %3619 = vmatmul.bf16.gmra.mxu0 %v2288
    %v3620 = vpop.f32.mrf.mxu0
    %v3621 = vadd.f32 %v3572, %v3620
    %v3622 = vpop.f32.mrf.mxu0
    %v3623 = vadd.f32 %v3574, %v3622
    %3624 = vmatmul.bf16.gmra.mxu0 %v2296
    %v3625 = vpop.f32.mrf.mxu0
    %v3626 = vadd.f32 %v3577, %v3625
    %v3627 = vpop.f32.mrf.mxu0
    %v3628 = vadd.f32 %v3579, %v3627
    %3629 = vmatmul.bf16.gmra.mxu0 %v2304
    %v3630 = vpop.f32.mrf.mxu0
    %v3631 = vadd.f32 %v3582, %v3630
    %v3632 = vpop.f32.mrf.mxu0
    %v3633 = vadd.f32 %v3584, %v3632
    %3634 = vmatmul.bf16.gmra.mxu0 %v2312
    %v3635 = vpop.f32.mrf.mxu0
    %v3636 = vadd.f32 %v3587, %v3635
    %v3637 = vpop.f32.mrf.mxu0
    %v3638 = vadd.f32 %v3589, %v3637
    %3639 = vmatmul.bf16.gmra.mxu0 %v2320
    %v3640 = vpop.f32.mrf.mxu0
    %v3641 = vadd.f32 %v3592, %v3640
    %v3642 = vpop.f32.mrf.mxu0
    %v3643 = vadd.f32 %v3594, %v3642
    %3644 = vmatmul.bf16.gmra.mxu0 %v2328
    %v3645 = vpop.f32.mrf.mxu0
    %v3646 = vadd.f32 %v3597, %v3645
    %v3647 = vpop.f32.mrf.mxu0
    %v3648 = vadd.f32 %v3599, %v3647
    %3649 = vmatmul.bf16.gmra.mxu0 %v2336
    %v3650 = vpop.f32.mrf.mxu0
    %v3651 = vadd.f32 %v3602, %v3650
    %v3652 = vpop.f32.mrf.mxu0
    %v3653 = vadd.f32 %v3604, %v3652
    %3654 = vdwg.mxu0
    %3655 = vmatpush.bf16.msra.mxu0 %v2923
    %3656 = vmatpush.bf16.msra.mxu0 %v2921
    %3657 = vmatpush.bf16.msra.mxu0 %v2919
    %3658 = vmatpush.bf16.msra.mxu0 %v2917
    %3659 = vmatpush.bf16.msra.mxu0 %v2915
    %3660 = vmatpush.bf16.msra.mxu0 %v2913
    %3661 = vmatpush.bf16.msra.mxu0 %v2911
    %3662 = vmatpush.bf16.msra.mxu0 %v2909
    %3663 = vmatmul.bf16.gmra.mxu0 %v2281
    %v3664 = vpop.f32.mrf.mxu0
    %v3665 = vadd.f32 %v3616, %v3664
    %v3666 = vpop.f32.mrf.mxu0
    %v3667 = vadd.f32 %v3618, %v3666
    %3668 = vmatmul.bf16.gmra.mxu0 %v2289
    %v3669 = vpop.f32.mrf.mxu0
    %v3670 = vadd.f32 %v3621, %v3669
    %v3671 = vpop.f32.mrf.mxu0
    %v3672 = vadd.f32 %v3623, %v3671
    %3673 = vmatmul.bf16.gmra.mxu0 %v2297
    %v3674 = vpop.f32.mrf.mxu0
    %v3675 = vadd.f32 %v3626, %v3674
    %v3676 = vpop.f32.mrf.mxu0
    %v3677 = vadd.f32 %v3628, %v3676
    %3678 = vmatmul.bf16.gmra.mxu0 %v2305
    %v3679 = vpop.f32.mrf.mxu0
    %v3680 = vadd.f32 %v3631, %v3679
    %v3681 = vpop.f32.mrf.mxu0
    %v3682 = vadd.f32 %v3633, %v3681
    %3683 = vmatmul.bf16.gmra.mxu0 %v2313
    %v3684 = vpop.f32.mrf.mxu0
    %v3685 = vadd.f32 %v3636, %v3684
    %v3686 = vpop.f32.mrf.mxu0
    %v3687 = vadd.f32 %v3638, %v3686
    %3688 = vmatmul.bf16.gmra.mxu0 %v2321
    %v3689 = vpop.f32.mrf.mxu0
    %v3690 = vadd.f32 %v3641, %v3689
    %v3691 = vpop.f32.mrf.mxu0
    %v3692 = vadd.f32 %v3643, %v3691
    %3693 = vmatmul.bf16.gmra.mxu0 %v2329
    %v3694 = vpop.f32.mrf.mxu0
    %v3695 = vadd.f32 %v3646, %v3694
    %v3696 = vpop.f32.mrf.mxu0
    %v3697 = vadd.f32 %v3648, %v3696
    %3698 = vmatmul.bf16.gmra.mxu0 %v2337
    %v3699 = vpop.f32.mrf.mxu0
    %v3700 = vadd.f32 %v3651, %v3699
    %v3701 = vpop.f32.mrf.mxu0
    %v3702 = vadd.f32 %v3653, %v3701
    %3703 = vdwg.mxu0
    %3704 = vmatpush.bf16.msra.mxu0 %v2939
    %3705 = vmatpush.bf16.msra.mxu0 %v2937
    %3706 = vmatpush.bf16.msra.mxu0 %v2935
    %3707 = vmatpush.bf16.msra.mxu0 %v2933
    %3708 = vmatpush.bf16.msra.mxu0 %v2931
    %3709 = vmatpush.bf16.msra.mxu0 %v2929
    %3710 = vmatpush.bf16.msra.mxu0 %v2927
    %3711 = vmatpush.bf16.msra.mxu0 %v2925
    %3712 = vmatmul.bf16.gmra.mxu0 %v2282
    %v3713 = vpop.f32.mrf.mxu0
    %v3714 = vadd.f32 %v3665, %v3713
    %v3715 = vpop.f32.mrf.mxu0
    %v3716 = vadd.f32 %v3667, %v3715
    %3717 = vmatmul.bf16.gmra.mxu0 %v2290
    %v3718 = vpop.f32.mrf.mxu0
    %v3719 = vadd.f32 %v3670, %v3718
    %v3720 = vpop.f32.mrf.mxu0
    %v3721 = vadd.f32 %v3672, %v3720
    %3722 = vmatmul.bf16.gmra.mxu0 %v2298
    %v3723 = vpop.f32.mrf.mxu0
    %v3724 = vadd.f32 %v3675, %v3723
    %v3725 = vpop.f32.mrf.mxu0
    %v3726 = vadd.f32 %v3677, %v3725
    %3727 = vmatmul.bf16.gmra.mxu0 %v2306
    %v3728 = vpop.f32.mrf.mxu0
    %v3729 = vadd.f32 %v3680, %v3728
    %v3730 = vpop.f32.mrf.mxu0
    %v3731 = vadd.f32 %v3682, %v3730
    %3732 = vmatmul.bf16.gmra.mxu0 %v2314
    %v3733 = vpop.f32.mrf.mxu0
    %v3734 = vadd.f32 %v3685, %v3733
    %v3735 = vpop.f32.mrf.mxu0
    %v3736 = vadd.f32 %v3687, %v3735
    %3737 = vmatmul.bf16.gmra.mxu0 %v2322
    %v3738 = vpop.f32.mrf.mxu0
    %v3739 = vadd.f32 %v3690, %v3738
    %v3740 = vpop.f32.mrf.mxu0
    %v3741 = vadd.f32 %v3692, %v3740
    %3742 = vmatmul.bf16.gmra.mxu0 %v2330
    %v3743 = vpop.f32.mrf.mxu0
    %v3744 = vadd.f32 %v3695, %v3743
    %v3745 = vpop.f32.mrf.mxu0
    %v3746 = vadd.f32 %v3697, %v3745
    %3747 = vmatmul.bf16.gmra.mxu0 %v2338
    %v3748 = vpop.f32.mrf.mxu0
    %v3749 = vadd.f32 %v3700, %v3748
    %v3750 = vpop.f32.mrf.mxu0
    %v3751 = vadd.f32 %v3702, %v3750
    %3752 = vdwg.mxu0
    %3753 = vmatpush.bf16.msra.mxu0 %v2955
    %3754 = vmatpush.bf16.msra.mxu0 %v2953
    %3755 = vmatpush.bf16.msra.mxu0 %v2951
    %3756 = vmatpush.bf16.msra.mxu0 %v2949
    %3757 = vmatpush.bf16.msra.mxu0 %v2947
    %3758 = vmatpush.bf16.msra.mxu0 %v2945
    %3759 = vmatpush.bf16.msra.mxu0 %v2943
    %3760 = vmatpush.bf16.msra.mxu0 %v2941
    %3761 = vmatmul.bf16.gmra.mxu0 %v2283
    %v3762 = vpop.f32.mrf.mxu0
    %v3763 = vadd.f32 %v3714, %v3762
    %v3764 = vpop.f32.mrf.mxu0
    %v3765 = vadd.f32 %v3716, %v3764
    %3766 = vmatmul.bf16.gmra.mxu0 %v2291
    %v3767 = vpop.f32.mrf.mxu0
    %v3768 = vadd.f32 %v3719, %v3767
    %v3769 = vpop.f32.mrf.mxu0
    %v3770 = vadd.f32 %v3721, %v3769
    %3771 = vmatmul.bf16.gmra.mxu0 %v2299
    %v3772 = vpop.f32.mrf.mxu0
    %v3773 = vadd.f32 %v3724, %v3772
    %v3774 = vpop.f32.mrf.mxu0
    %v3775 = vadd.f32 %v3726, %v3774
    %3776 = vmatmul.bf16.gmra.mxu0 %v2307
    %v3777 = vpop.f32.mrf.mxu0
    %v3778 = vadd.f32 %v3729, %v3777
    %v3779 = vpop.f32.mrf.mxu0
    %v3780 = vadd.f32 %v3731, %v3779
    %3781 = vmatmul.bf16.gmra.mxu0 %v2315
    %v3782 = vpop.f32.mrf.mxu0
    %v3783 = vadd.f32 %v3734, %v3782
    %v3784 = vpop.f32.mrf.mxu0
    %v3785 = vadd.f32 %v3736, %v3784
    %3786 = vmatmul.bf16.gmra.mxu0 %v2323
    %v3787 = vpop.f32.mrf.mxu0
    %v3788 = vadd.f32 %v3739, %v3787
    %v3789 = vpop.f32.mrf.mxu0
    %v3790 = vadd.f32 %v3741, %v3789
    %3791 = vmatmul.bf16.gmra.mxu0 %v2331
    %v3792 = vpop.f32.mrf.mxu0
    %v3793 = vadd.f32 %v3744, %v3792
    %v3794 = vpop.f32.mrf.mxu0
    %v3795 = vadd.f32 %v3746, %v3794
    %3796 = vmatmul.bf16.gmra.mxu0 %v2339
    %v3797 = vpop.f32.mrf.mxu0
    %v3798 = vadd.f32 %v3749, %v3797
    %v3799 = vpop.f32.mrf.mxu0
    %v3800 = vadd.f32 %v3751, %v3799
    %3801 = vdwg.mxu0
    %3802 = vmatpush.bf16.msra.mxu0 %v2971
    %3803 = vmatpush.bf16.msra.mxu0 %v2969
    %3804 = vmatpush.bf16.msra.mxu0 %v2967
    %3805 = vmatpush.bf16.msra.mxu0 %v2965
    %3806 = vmatpush.bf16.msra.mxu0 %v2963
    %3807 = vmatpush.bf16.msra.mxu0 %v2961
    %3808 = vmatpush.bf16.msra.mxu0 %v2959
    %3809 = vmatpush.bf16.msra.mxu0 %v2957
    %3810 = vmatmul.bf16.gmra.mxu0 %v2284
    %v3811 = vpop.f32.mrf.mxu0
    %v3812 = vadd.f32 %v3763, %v3811
    %v3813 = vpop.f32.mrf.mxu0
    %v3814 = vadd.f32 %v3765, %v3813
    %3815 = vmatmul.bf16.gmra.mxu0 %v2292
    %v3816 = vpop.f32.mrf.mxu0
    %v3817 = vadd.f32 %v3768, %v3816
    %v3818 = vpop.f32.mrf.mxu0
    %v3819 = vadd.f32 %v3770, %v3818
    %3820 = vmatmul.bf16.gmra.mxu0 %v2300
    %v3821 = vpop.f32.mrf.mxu0
    %v3822 = vadd.f32 %v3773, %v3821
    %v3823 = vpop.f32.mrf.mxu0
    %v3824 = vadd.f32 %v3775, %v3823
    %3825 = vmatmul.bf16.gmra.mxu0 %v2308
    %v3826 = vpop.f32.mrf.mxu0
    %v3827 = vadd.f32 %v3778, %v3826
    %v3828 = vpop.f32.mrf.mxu0
    %v3829 = vadd.f32 %v3780, %v3828
    %3830 = vmatmul.bf16.gmra.mxu0 %v2316
    %v3831 = vpop.f32.mrf.mxu0
    %v3832 = vadd.f32 %v3783, %v3831
    %v3833 = vpop.f32.mrf.mxu0
    %v3834 = vadd.f32 %v3785, %v3833
    %3835 = vmatmul.bf16.gmra.mxu0 %v2324
    %v3836 = vpop.f32.mrf.mxu0
    %v3837 = vadd.f32 %v3788, %v3836
    %v3838 = vpop.f32.mrf.mxu0
    %v3839 = vadd.f32 %v3790, %v3838
    %3840 = vmatmul.bf16.gmra.mxu0 %v2332
    %v3841 = vpop.f32.mrf.mxu0
    %v3842 = vadd.f32 %v3793, %v3841
    %v3843 = vpop.f32.mrf.mxu0
    %v3844 = vadd.f32 %v3795, %v3843
    %3845 = vmatmul.bf16.gmra.mxu0 %v2340
    %v3846 = vpop.f32.mrf.mxu0
    %v3847 = vadd.f32 %v3798, %v3846
    %v3848 = vpop.f32.mrf.mxu0
    %v3849 = vadd.f32 %v3800, %v3848
    %3850 = vdwg.mxu0
    %3851 = vmatpush.bf16.msra.mxu0 %v2987
    %3852 = vmatpush.bf16.msra.mxu0 %v2985
    %3853 = vmatpush.bf16.msra.mxu0 %v2983
    %3854 = vmatpush.bf16.msra.mxu0 %v2981
    %3855 = vmatpush.bf16.msra.mxu0 %v2979
    %3856 = vmatpush.bf16.msra.mxu0 %v2977
    %3857 = vmatpush.bf16.msra.mxu0 %v2975
    %3858 = vmatpush.bf16.msra.mxu0 %v2973
    %3859 = vmatmul.bf16.gmra.mxu0 %v2285
    %v3860 = vpop.f32.mrf.mxu0
    %v3861 = vadd.f32 %v3812, %v3860
    %v3862 = vpop.f32.mrf.mxu0
    %v3863 = vadd.f32 %v3814, %v3862
    %3864 = vmatmul.bf16.gmra.mxu0 %v2293
    %v3865 = vpop.f32.mrf.mxu0
    %v3866 = vadd.f32 %v3817, %v3865
    %v3867 = vpop.f32.mrf.mxu0
    %v3868 = vadd.f32 %v3819, %v3867
    %3869 = vmatmul.bf16.gmra.mxu0 %v2301
    %v3870 = vpop.f32.mrf.mxu0
    %v3871 = vadd.f32 %v3822, %v3870
    %v3872 = vpop.f32.mrf.mxu0
    %v3873 = vadd.f32 %v3824, %v3872
    %3874 = vmatmul.bf16.gmra.mxu0 %v2309
    %v3875 = vpop.f32.mrf.mxu0
    %v3876 = vadd.f32 %v3827, %v3875
    %v3877 = vpop.f32.mrf.mxu0
    %v3878 = vadd.f32 %v3829, %v3877
    %3879 = vmatmul.bf16.gmra.mxu0 %v2317
    %v3880 = vpop.f32.mrf.mxu0
    %v3881 = vadd.f32 %v3832, %v3880
    %v3882 = vpop.f32.mrf.mxu0
    %v3883 = vadd.f32 %v3834, %v3882
    %3884 = vmatmul.bf16.gmra.mxu0 %v2325
    %v3885 = vpop.f32.mrf.mxu0
    %v3886 = vadd.f32 %v3837, %v3885
    %v3887 = vpop.f32.mrf.mxu0
    %v3888 = vadd.f32 %v3839, %v3887
    %3889 = vmatmul.bf16.gmra.mxu0 %v2333
    %v3890 = vpop.f32.mrf.mxu0
    %v3891 = vadd.f32 %v3842, %v3890
    %v3892 = vpop.f32.mrf.mxu0
    %v3893 = vadd.f32 %v3844, %v3892
    %3894 = vmatmul.bf16.gmra.mxu0 %v2341
    %v3895 = vpop.f32.mrf.mxu0
    %v3896 = vadd.f32 %v3847, %v3895
    %v3897 = vpop.f32.mrf.mxu0
    %v3898 = vadd.f32 %v3849, %v3897
    %3899 = vdwg.mxu0
    %v3900 = vadd.f32 %v49, %v3469
    %v3901 = vadd.f32 %v50, %v3861
    %v3902 = vadd.f32 %v51, %v3471
    %v3903 = vadd.f32 %v52, %v3863
    %v3904 = vadd.f32 %v53, %v3474
    %v3905 = vadd.f32 %v54, %v3866
    %v3906 = vadd.f32 %v55, %v3476
    %v3907 = vadd.f32 %v56, %v3868
    %v3908 = vadd.f32 %v57, %v3479
    %v3909 = vadd.f32 %v58, %v3871
    %v3910 = vadd.f32 %v59, %v3481
    %v3911 = vadd.f32 %v60, %v3873
    %v3912 = vadd.f32 %v61, %v3484
    %v3913 = vadd.f32 %v62, %v3876
    %v3914 = vadd.f32 %v63, %v3486
    %v3915 = vadd.f32 %v64, %v3878
    %v3916 = vadd.f32 %v65, %v3489
    %v3917 = vadd.f32 %v66, %v3881
    %v3918 = vadd.f32 %v67, %v3491
    %v3919 = vadd.f32 %v68, %v3883
    %v3920 = vadd.f32 %v69, %v3494
    %v3921 = vadd.f32 %v70, %v3886
    %v3922 = vadd.f32 %v71, %v3496
    %v3923 = vadd.f32 %v72, %v3888
    %v3924 = vadd.f32 %v73, %v3499
    %v3925 = vadd.f32 %v74, %v3891
    %v3926 = vadd.f32 %v75, %v3501
    %v3927 = vadd.f32 %v76, %v3893
    %v3928 = vadd.f32 %v77, %v3504
    %v3929 = vadd.f32 %v78, %v3896
    %v3930 = vadd.f32 %v79, %v3506
    %v3931 = vadd.f32 %v80, %v3898
    %v3932 = vld [vmem:[%s7] sm:$0x3]
    %v3933 = vld [vmem:[%s8] sm:$0x3]
    %v3934 = vadd.f32 %v3900, %v3901
    %3935 = vadd.xlane.f32.xlu0 %v3934
    %v3936 = vpop.xlane.xlu0 %3935
    %v3937 = vadd.f32 %v3902, %v3903
    %3938 = vadd.xlane.f32.xlu0 %v3937
    %v3939 = vpop.xlane.xlu0 %3938
    %v3940 = vadd.f32 %v3904, %v3905
    %3941 = vadd.xlane.f32.xlu0 %v3940
    %v3942 = vpop.xlane.xlu0 %3941
    %v3943 = vadd.f32 %v3906, %v3907
    %3944 = vadd.xlane.f32.xlu0 %v3943
    %v3945 = vpop.xlane.xlu0 %3944
    %v3946 = vadd.f32 %v3908, %v3909
    %3947 = vadd.xlane.f32.xlu0 %v3946
    %v3948 = vpop.xlane.xlu0 %3947
    %v3949 = vadd.f32 %v3910, %v3911
    %3950 = vadd.xlane.f32.xlu0 %v3949
    %v3951 = vpop.xlane.xlu0 %3950
    %v3952 = vadd.f32 %v3912, %v3913
    %3953 = vadd.xlane.f32.xlu0 %v3952
    %v3954 = vpop.xlane.xlu0 %3953
    %v3955 = vadd.f32 %v3914, %v3915
    %3956 = vadd.xlane.f32.xlu0 %v3955
    %v3957 = vpop.xlane.xlu0 %3956
    %v3958 = vadd.f32 %v3916, %v3917
    %3959 = vadd.xlane.f32.xlu0 %v3958
    %v3960 = vpop.xlane.xlu0 %3959
    %v3961 = vadd.f32 %v3918, %v3919
    %3962 = vadd.xlane.f32.xlu0 %v3961
    %v3963 = vpop.xlane.xlu0 %3962
    %v3964 = vadd.f32 %v3920, %v3921
    %3965 = vadd.xlane.f32.xlu0 %v3964
    %v3966 = vpop.xlane.xlu0 %3965
    %v3967 = vadd.f32 %v3922, %v3923
    %3968 = vadd.xlane.f32.xlu0 %v3967
    %v3969 = vpop.xlane.xlu0 %3968
    %v3970 = vadd.f32 %v3924, %v3925
    %3971 = vadd.xlane.f32.xlu0 %v3970
    %v3972 = vpop.xlane.xlu0 %3971
    %v3973 = vadd.f32 %v3926, %v3927
    %3974 = vadd.xlane.f32.xlu0 %v3973
    %v3975 = vpop.xlane.xlu0 %3974
    %v3976 = vadd.f32 %v3928, %v3929
    %3977 = vadd.xlane.f32.xlu0 %v3976
    %v3978 = vpop.xlane.xlu0 %3977
    %v3979 = vadd.f32 %v3930, %v3931
    %3980 = vadd.xlane.f32.xlu0 %v3979
    %v3981 = vpop.xlane.xlu0 %3980
    %v3982 = vmul.f32 %v3936, %v137
    %v3983 = vmul.f32 %v3939, %v137
    %v3984 = vmul.f32 %v3942, %v137
    %v3985 = vmul.f32 %v3945, %v137
    %v3986 = vmul.f32 %v3948, %v137
    %v3987 = vmul.f32 %v3951, %v137
    %v3988 = vmul.f32 %v3954, %v137
    %v3989 = vmul.f32 %v3957, %v137
    %v3990 = vmul.f32 %v3960, %v137
    %v3991 = vmul.f32 %v3963, %v137
    %v3992 = vmul.f32 %v3966, %v137
    %v3993 = vmul.f32 %v3969, %v137
    %v3994 = vmul.f32 %v3972, %v137
    %v3995 = vmul.f32 %v3975, %v137
    %v3996 = vmul.f32 %v3978, %v137
    %v3997 = vmul.f32 %v3981, %v137
    %v3998 = vsub.f32 %v3900, %v3982
    %v3999 = vsub.f32 %v3901, %v3982
    %v4000 = vsub.f32 %v3902, %v3983
    %v4001 = vsub.f32 %v3903, %v3983
    %v4002 = vsub.f32 %v3904, %v3984
    %v4003 = vsub.f32 %v3905, %v3984
    %v4004 = vsub.f32 %v3906, %v3985
    %v4005 = vsub.f32 %v3907, %v3985
    %v4006 = vsub.f32 %v3908, %v3986
    %v4007 = vsub.f32 %v3909, %v3986
    %v4008 = vsub.f32 %v3910, %v3987
    %v4009 = vsub.f32 %v3911, %v3987
    %v4010 = vsub.f32 %v3912, %v3988
    %v4011 = vsub.f32 %v3913, %v3988
    %v4012 = vsub.f32 %v3914, %v3989
    %v4013 = vsub.f32 %v3915, %v3989
    %v4014 = vsub.f32 %v3916, %v3990
    %v4015 = vsub.f32 %v3917, %v3990
    %v4016 = vsub.f32 %v3918, %v3991
    %v4017 = vsub.f32 %v3919, %v3991
    %v4018 = vsub.f32 %v3920, %v3992
    %v4019 = vsub.f32 %v3921, %v3992
    %v4020 = vsub.f32 %v3922, %v3993
    %v4021 = vsub.f32 %v3923, %v3993
    %v4022 = vsub.f32 %v3924, %v3994
    %v4023 = vsub.f32 %v3925, %v3994
    %v4024 = vsub.f32 %v3926, %v3995
    %v4025 = vsub.f32 %v3927, %v3995
    %v4026 = vsub.f32 %v3928, %v3996
    %v4027 = vsub.f32 %v3929, %v3996
    %v4028 = vsub.f32 %v3930, %v3997
    %v4029 = vsub.f32 %v3931, %v3997
    %v4030 = vmul.f32 %v3998, %v3998
    %v4031 = vmul.f32 %v3999, %v3999
    %v4032 = vmul.f32 %v4000, %v4000
    %v4033 = vmul.f32 %v4001, %v4001
    %v4034 = vmul.f32 %v4002, %v4002
    %v4035 = vmul.f32 %v4003, %v4003
    %v4036 = vmul.f32 %v4004, %v4004
    %v4037 = vmul.f32 %v4005, %v4005
    %v4038 = vmul.f32 %v4006, %v4006
    %v4039 = vmul.f32 %v4007, %v4007
    %v4040 = vmul.f32 %v4008, %v4008
    %v4041 = vmul.f32 %v4009, %v4009
    %v4042 = vmul.f32 %v4010, %v4010
    %v4043 = vmul.f32 %v4011, %v4011
    %v4044 = vmul.f32 %v4012, %v4012
    %v4045 = vmul.f32 %v4013, %v4013
    %v4046 = vmul.f32 %v4014, %v4014
    %v4047 = vmul.f32 %v4015, %v4015
    %v4048 = vmul.f32 %v4016, %v4016
    %v4049 = vmul.f32 %v4017, %v4017
    %v4050 = vmul.f32 %v4018, %v4018
    %v4051 = vmul.f32 %v4019, %v4019
    %v4052 = vmul.f32 %v4020, %v4020
    %v4053 = vmul.f32 %v4021, %v4021
    %v4054 = vmul.f32 %v4022, %v4022
    %v4055 = vmul.f32 %v4023, %v4023
    %v4056 = vmul.f32 %v4024, %v4024
    %v4057 = vmul.f32 %v4025, %v4025
    %v4058 = vmul.f32 %v4026, %v4026
    %v4059 = vmul.f32 %v4027, %v4027
    %v4060 = vmul.f32 %v4028, %v4028
    %v4061 = vmul.f32 %v4029, %v4029
    %v4062 = vadd.f32 %v4030, %v4031
    %4063 = vadd.xlane.f32.xlu0 %v4062
    %v4064 = vpop.xlane.xlu0 %4063
    %v4065 = vadd.f32 %v4032, %v4033
    %4066 = vadd.xlane.f32.xlu0 %v4065
    %v4067 = vpop.xlane.xlu0 %4066
    %v4068 = vadd.f32 %v4034, %v4035
    %4069 = vadd.xlane.f32.xlu0 %v4068
    %v4070 = vpop.xlane.xlu0 %4069
    %v4071 = vadd.f32 %v4036, %v4037
    %4072 = vadd.xlane.f32.xlu0 %v4071
    %v4073 = vpop.xlane.xlu0 %4072
    %v4074 = vadd.f32 %v4038, %v4039
    %4075 = vadd.xlane.f32.xlu0 %v4074
    %v4076 = vpop.xlane.xlu0 %4075
    %v4077 = vadd.f32 %v4040, %v4041
    %4078 = vadd.xlane.f32.xlu0 %v4077
    %v4079 = vpop.xlane.xlu0 %4078
    %v4080 = vadd.f32 %v4042, %v4043
    %4081 = vadd.xlane.f32.xlu0 %v4080
    %v4082 = vpop.xlane.xlu0 %4081
    %v4083 = vadd.f32 %v4044, %v4045
    %4084 = vadd.xlane.f32.xlu0 %v4083
    %v4085 = vpop.xlane.xlu0 %4084
    %v4086 = vadd.f32 %v4046, %v4047
    %4087 = vadd.xlane.f32.xlu0 %v4086
    %v4088 = vpop.xlane.xlu0 %4087
    %v4089 = vadd.f32 %v4048, %v4049
    %4090 = vadd.xlane.f32.xlu0 %v4089
    %v4091 = vpop.xlane.xlu0 %4090
    %v4092 = vadd.f32 %v4050, %v4051
    %4093 = vadd.xlane.f32.xlu0 %v4092
    %v4094 = vpop.xlane.xlu0 %4093
    %v4095 = vadd.f32 %v4052, %v4053
    %4096 = vadd.xlane.f32.xlu0 %v4095
    %v4097 = vpop.xlane.xlu0 %4096
    %v4098 = vadd.f32 %v4054, %v4055
    %4099 = vadd.xlane.f32.xlu0 %v4098
    %v4100 = vpop.xlane.xlu0 %4099
    %v4101 = vadd.f32 %v4056, %v4057
    %4102 = vadd.xlane.f32.xlu0 %v4101
    %v4103 = vpop.xlane.xlu0 %4102
    %v4104 = vadd.f32 %v4058, %v4059
    %4105 = vadd.xlane.f32.xlu0 %v4104
    %v4106 = vpop.xlane.xlu0 %4105
    %v4107 = vadd.f32 %v4060, %v4061
    %4108 = vadd.xlane.f32.xlu0 %v4107
    %v4109 = vpop.xlane.xlu0 %4108
    %v4110 = vmul.f32 %v4064, %v137
    %v4111 = vmul.f32 %v4067, %v137
    %v4112 = vmul.f32 %v4070, %v137
    %v4113 = vmul.f32 %v4073, %v137
    %v4114 = vmul.f32 %v4076, %v137
    %v4115 = vmul.f32 %v4079, %v137
    %v4116 = vmul.f32 %v4082, %v137
    %v4117 = vmul.f32 %v4085, %v137
    %v4118 = vmul.f32 %v4088, %v137
    %v4119 = vmul.f32 %v4091, %v137
    %v4120 = vmul.f32 %v4094, %v137
    %v4121 = vmul.f32 %v4097, %v137
    %v4122 = vmul.f32 %v4100, %v137
    %v4123 = vmul.f32 %v4103, %v137
    %v4124 = vmul.f32 %v4106, %v137
    %v4125 = vmul.f32 %v4109, %v137
    %v4126 = vadd.f32 %v4110, 1e-05
    %v4127 = vadd.f32 %v4111, 1e-05
    %v4128 = vadd.f32 %v4112, 1e-05
    %v4129 = vadd.f32 %v4113, 1e-05
    %v4130 = vadd.f32 %v4114, 1e-05
    %v4131 = vadd.f32 %v4115, 1e-05
    %v4132 = vadd.f32 %v4116, 1e-05
    %v4133 = vadd.f32 %v4117, 1e-05
    %v4134 = vadd.f32 %v4118, 1e-05
    %v4135 = vadd.f32 %v4119, 1e-05
    %v4136 = vadd.f32 %v4120, 1e-05
    %v4137 = vadd.f32 %v4121, 1e-05
    %v4138 = vadd.f32 %v4122, 1e-05
    %v4139 = vadd.f32 %v4123, 1e-05
    %v4140 = vadd.f32 %v4124, 1e-05
    %v4141 = vadd.f32 %v4125, 1e-05
    %v4142 = vrsqrt.pop %v4126
    %v4143 = vmul.f32 %v4142, %v4126
    %v4144 = vmul.f32 %v4143, %v4142
    %v4145 = vmul.f32 0.5, %v4144
    %v4146 = vsub.f32 1.5, %v4145
    %v4147 = vmul.f32 %v4142, %v4146
    %vm4148 = vweird.f32 %v4126
    %vm4149 = vweird.f32 %v4142
    %vm4150 = vmor %vm4148, %vm4149
    %v4151 = vsel %vm4150, %v4142, %v4147
    %v4152 = vrsqrt.pop %v4127
    %v4153 = vmul.f32 %v4152, %v4127
    %v4154 = vmul.f32 %v4153, %v4152
    %v4155 = vmul.f32 0.5, %v4154
    %v4156 = vsub.f32 1.5, %v4155
    %v4157 = vmul.f32 %v4152, %v4156
    %vm4158 = vweird.f32 %v4127
    %vm4159 = vweird.f32 %v4152
    %vm4160 = vmor %vm4158, %vm4159
    %v4161 = vsel %vm4160, %v4152, %v4157
    %v4162 = vrsqrt.pop %v4128
    %v4163 = vmul.f32 %v4162, %v4128
    %v4164 = vmul.f32 %v4163, %v4162
    %v4165 = vmul.f32 0.5, %v4164
    %v4166 = vsub.f32 1.5, %v4165
    %v4167 = vmul.f32 %v4162, %v4166
    %vm4168 = vweird.f32 %v4128
    %vm4169 = vweird.f32 %v4162
    %vm4170 = vmor %vm4168, %vm4169
    %v4171 = vsel %vm4170, %v4162, %v4167
    %v4172 = vrsqrt.pop %v4129
    %v4173 = vmul.f32 %v4172, %v4129
    %v4174 = vmul.f32 %v4173, %v4172
    %v4175 = vmul.f32 0.5, %v4174
    %v4176 = vsub.f32 1.5, %v4175
    %v4177 = vmul.f32 %v4172, %v4176
    %vm4178 = vweird.f32 %v4129
    %vm4179 = vweird.f32 %v4172
    %vm4180 = vmor %vm4178, %vm4179
    %v4181 = vsel %vm4180, %v4172, %v4177
    %v4182 = vrsqrt.pop %v4130
    %v4183 = vmul.f32 %v4182, %v4130
    %v4184 = vmul.f32 %v4183, %v4182
    %v4185 = vmul.f32 0.5, %v4184
    %v4186 = vsub.f32 1.5, %v4185
    %v4187 = vmul.f32 %v4182, %v4186
    %vm4188 = vweird.f32 %v4130
    %vm4189 = vweird.f32 %v4182
    %vm4190 = vmor %vm4188, %vm4189
    %v4191 = vsel %vm4190, %v4182, %v4187
    %v4192 = vrsqrt.pop %v4131
    %v4193 = vmul.f32 %v4192, %v4131
    %v4194 = vmul.f32 %v4193, %v4192
    %v4195 = vmul.f32 0.5, %v4194
    %v4196 = vsub.f32 1.5, %v4195
    %v4197 = vmul.f32 %v4192, %v4196
    %vm4198 = vweird.f32 %v4131
    %vm4199 = vweird.f32 %v4192
    %vm4200 = vmor %vm4198, %vm4199
    %v4201 = vsel %vm4200, %v4192, %v4197
    %v4202 = vrsqrt.pop %v4132
    %v4203 = vmul.f32 %v4202, %v4132
    %v4204 = vmul.f32 %v4203, %v4202
    %v4205 = vmul.f32 0.5, %v4204
    %v4206 = vsub.f32 1.5, %v4205
    %v4207 = vmul.f32 %v4202, %v4206
    %vm4208 = vweird.f32 %v4132
    %vm4209 = vweird.f32 %v4202
    %vm4210 = vmor %vm4208, %vm4209
    %v4211 = vsel %vm4210, %v4202, %v4207
    %v4212 = vrsqrt.pop %v4133
    %v4213 = vmul.f32 %v4212, %v4133
    %v4214 = vmul.f32 %v4213, %v4212
    %v4215 = vmul.f32 0.5, %v4214
    %v4216 = vsub.f32 1.5, %v4215
    %v4217 = vmul.f32 %v4212, %v4216
    %vm4218 = vweird.f32 %v4133
    %vm4219 = vweird.f32 %v4212
    %vm4220 = vmor %vm4218, %vm4219
    %v4221 = vsel %vm4220, %v4212, %v4217
    %v4222 = vrsqrt.pop %v4134
    %v4223 = vmul.f32 %v4222, %v4134
    %v4224 = vmul.f32 %v4223, %v4222
    %v4225 = vmul.f32 0.5, %v4224
    %v4226 = vsub.f32 1.5, %v4225
    %v4227 = vmul.f32 %v4222, %v4226
    %vm4228 = vweird.f32 %v4134
    %vm4229 = vweird.f32 %v4222
    %vm4230 = vmor %vm4228, %vm4229
    %v4231 = vsel %vm4230, %v4222, %v4227
    %v4232 = vrsqrt.pop %v4135
    %v4233 = vmul.f32 %v4232, %v4135
    %v4234 = vmul.f32 %v4233, %v4232
    %v4235 = vmul.f32 0.5, %v4234
    %v4236 = vsub.f32 1.5, %v4235
    %v4237 = vmul.f32 %v4232, %v4236
    %vm4238 = vweird.f32 %v4135
    %vm4239 = vweird.f32 %v4232
    %vm4240 = vmor %vm4238, %vm4239
    %v4241 = vsel %vm4240, %v4232, %v4237
    %v4242 = vrsqrt.pop %v4136
    %v4243 = vmul.f32 %v4242, %v4136
    %v4244 = vmul.f32 %v4243, %v4242
    %v4245 = vmul.f32 0.5, %v4244
    %v4246 = vsub.f32 1.5, %v4245
    %v4247 = vmul.f32 %v4242, %v4246
    %vm4248 = vweird.f32 %v4136
    %vm4249 = vweird.f32 %v4242
    %vm4250 = vmor %vm4248, %vm4249
    %v4251 = vsel %vm4250, %v4242, %v4247
    %v4252 = vrsqrt.pop %v4137
    %v4253 = vmul.f32 %v4252, %v4137
    %v4254 = vmul.f32 %v4253, %v4252
    %v4255 = vmul.f32 0.5, %v4254
    %v4256 = vsub.f32 1.5, %v4255
    %v4257 = vmul.f32 %v4252, %v4256
    %vm4258 = vweird.f32 %v4137
    %vm4259 = vweird.f32 %v4252
    %vm4260 = vmor %vm4258, %vm4259
    %v4261 = vsel %vm4260, %v4252, %v4257
    %v4262 = vrsqrt.pop %v4138
    %v4263 = vmul.f32 %v4262, %v4138
    %v4264 = vmul.f32 %v4263, %v4262
    %v4265 = vmul.f32 0.5, %v4264
    %v4266 = vsub.f32 1.5, %v4265
    %v4267 = vmul.f32 %v4262, %v4266
    %vm4268 = vweird.f32 %v4138
    %vm4269 = vweird.f32 %v4262
    %vm4270 = vmor %vm4268, %vm4269
    %v4271 = vsel %vm4270, %v4262, %v4267
    %v4272 = vrsqrt.pop %v4139
    %v4273 = vmul.f32 %v4272, %v4139
    %v4274 = vmul.f32 %v4273, %v4272
    %v4275 = vmul.f32 0.5, %v4274
    %v4276 = vsub.f32 1.5, %v4275
    %v4277 = vmul.f32 %v4272, %v4276
    %vm4278 = vweird.f32 %v4139
    %vm4279 = vweird.f32 %v4272
    %vm4280 = vmor %vm4278, %vm4279
    %v4281 = vsel %vm4280, %v4272, %v4277
    %v4282 = vrsqrt.pop %v4140
    %v4283 = vmul.f32 %v4282, %v4140
    %v4284 = vmul.f32 %v4283, %v4282
    %v4285 = vmul.f32 0.5, %v4284
    %v4286 = vsub.f32 1.5, %v4285
    %v4287 = vmul.f32 %v4282, %v4286
    %vm4288 = vweird.f32 %v4140
    %vm4289 = vweird.f32 %v4282
    %vm4290 = vmor %vm4288, %vm4289
    %v4291 = vsel %vm4290, %v4282, %v4287
    %v4292 = vrsqrt.pop %v4141
    %v4293 = vmul.f32 %v4292, %v4141
    %v4294 = vmul.f32 %v4293, %v4292
    %v4295 = vmul.f32 0.5, %v4294
    %v4296 = vsub.f32 1.5, %v4295
    %v4297 = vmul.f32 %v4292, %v4296
    %vm4298 = vweird.f32 %v4141
    %vm4299 = vweird.f32 %v4292
    %vm4300 = vmor %vm4298, %vm4299
    %v4301 = vsel %vm4300, %v4292, %v4297
    %v4302 = vmul.f32 %v3998, %v4151
    %v4303 = vmul.f32 %v3999, %v4151
    %v4304 = vmul.f32 %v4000, %v4161
    %v4305 = vmul.f32 %v4001, %v4161
    %v4306 = vmul.f32 %v4002, %v4171
    %v4307 = vmul.f32 %v4003, %v4171
    %v4308 = vmul.f32 %v4004, %v4181
    %v4309 = vmul.f32 %v4005, %v4181
    %v4310 = vmul.f32 %v4006, %v4191
    %v4311 = vmul.f32 %v4007, %v4191
    %v4312 = vmul.f32 %v4008, %v4201
    %v4313 = vmul.f32 %v4009, %v4201
    %v4314 = vmul.f32 %v4010, %v4211
    %v4315 = vmul.f32 %v4011, %v4211
    %v4316 = vmul.f32 %v4012, %v4221
    %v4317 = vmul.f32 %v4013, %v4221
    %v4318 = vmul.f32 %v4014, %v4231
    %v4319 = vmul.f32 %v4015, %v4231
    %v4320 = vmul.f32 %v4016, %v4241
    %v4321 = vmul.f32 %v4017, %v4241
    %v4322 = vmul.f32 %v4018, %v4251
    %v4323 = vmul.f32 %v4019, %v4251
    %v4324 = vmul.f32 %v4020, %v4261
    %v4325 = vmul.f32 %v4021, %v4261
    %v4326 = vmul.f32 %v4022, %v4271
    %v4327 = vmul.f32 %v4023, %v4271
    %v4328 = vmul.f32 %v4024, %v4281
    %v4329 = vmul.f32 %v4025, %v4281
    %v4330 = vmul.f32 %v4026, %v4291
    %v4331 = vmul.f32 %v4027, %v4291
    %v4332 = vmul.f32 %v4028, %v4301
    %v4333 = vmul.f32 %v4029, %v4301
    %v4335 = vperm.slane %v3932, 0
    %v4336 = vperm.slane %v3932, 1
    %v4339 = vmul.f32 %v4302, %v4335
    %v4340 = vmul.f32 %v4303, %v4336
    %v4341 = vmul.f32 %v4304, %v4335
    %v4342 = vmul.f32 %v4305, %v4336
    %v4343 = vmul.f32 %v4306, %v4335
    %v4344 = vmul.f32 %v4307, %v4336
    %v4345 = vmul.f32 %v4308, %v4335
    %v4346 = vmul.f32 %v4309, %v4336
    %v4347 = vmul.f32 %v4310, %v4335
    %v4348 = vmul.f32 %v4311, %v4336
    %v4349 = vmul.f32 %v4312, %v4335
    %v4350 = vmul.f32 %v4313, %v4336
    %v4351 = vmul.f32 %v4314, %v4335
    %v4352 = vmul.f32 %v4315, %v4336
    %v4353 = vmul.f32 %v4316, %v4335
    %v4354 = vmul.f32 %v4317, %v4336
    %v4355 = vmul.f32 %v4318, %v4335
    %v4356 = vmul.f32 %v4319, %v4336
    %v4357 = vmul.f32 %v4320, %v4335
    %v4358 = vmul.f32 %v4321, %v4336
    %v4359 = vmul.f32 %v4322, %v4335
    %v4360 = vmul.f32 %v4323, %v4336
    %v4361 = vmul.f32 %v4324, %v4335
    %v4362 = vmul.f32 %v4325, %v4336
    %v4363 = vmul.f32 %v4326, %v4335
    %v4364 = vmul.f32 %v4327, %v4336
    %v4365 = vmul.f32 %v4328, %v4335
    %v4366 = vmul.f32 %v4329, %v4336
    %v4367 = vmul.f32 %v4330, %v4335
    %v4368 = vmul.f32 %v4331, %v4336
    %v4369 = vmul.f32 %v4332, %v4335
    %v4370 = vmul.f32 %v4333, %v4336
    %v4372 = vperm.slane %v3933, 0
    %v4373 = vperm.slane %v3933, 1
    %v4376 = vadd.f32 %v4339, %v4372
    %v4377 = vadd.f32 %v4340, %v4373
    %v4378 = vadd.f32 %v4341, %v4372
    %v4379 = vadd.f32 %v4342, %v4373
    %v4380 = vadd.f32 %v4343, %v4372
    %v4381 = vadd.f32 %v4344, %v4373
    %v4382 = vadd.f32 %v4345, %v4372
    %v4383 = vadd.f32 %v4346, %v4373
    %v4384 = vadd.f32 %v4347, %v4372
    %v4385 = vadd.f32 %v4348, %v4373
    %v4386 = vadd.f32 %v4349, %v4372
    %v4387 = vadd.f32 %v4350, %v4373
    %v4388 = vadd.f32 %v4351, %v4372
    %v4389 = vadd.f32 %v4352, %v4373
    %v4390 = vadd.f32 %v4353, %v4372
    %v4391 = vadd.f32 %v4354, %v4373
    %v4392 = vadd.f32 %v4355, %v4372
    %v4393 = vadd.f32 %v4356, %v4373
    %v4394 = vadd.f32 %v4357, %v4372
    %v4395 = vadd.f32 %v4358, %v4373
    %v4396 = vadd.f32 %v4359, %v4372
    %v4397 = vadd.f32 %v4360, %v4373
    %v4398 = vadd.f32 %v4361, %v4372
    %v4399 = vadd.f32 %v4362, %v4373
    %v4400 = vadd.f32 %v4363, %v4372
    %v4401 = vadd.f32 %v4364, %v4373
    %v4402 = vadd.f32 %v4365, %v4372
    %v4403 = vadd.f32 %v4366, %v4373
    %v4404 = vadd.f32 %v4367, %v4372
    %v4405 = vadd.f32 %v4368, %v4373
    %v4406 = vadd.f32 %v4369, %v4372
    %v4407 = vadd.f32 %v4370, %v4373
    %4408 = vst [vmem:[#allocation5] sm:$0xff] %v4376
    %4409 = vst [vmem:[#allocation5 + $0x8] sm:$0xff] %v4377
    %4410 = vst [vmem:[#allocation5 + $0x10] sm:$0xff] %v4378
    %4411 = vst [vmem:[#allocation5 + $0x18] sm:$0xff] %v4379
    %4412 = vst [vmem:[#allocation5 + $0x20] sm:$0xff] %v4380
    %4413 = vst [vmem:[#allocation5 + $0x28] sm:$0xff] %v4381
    %4414 = vst [vmem:[#allocation5 + $0x30] sm:$0xff] %v4382
    %4415 = vst [vmem:[#allocation5 + $0x38] sm:$0xff] %v4383
    %4416 = vst [vmem:[#allocation5 + $0x40] sm:$0xff] %v4384
    %4417 = vst [vmem:[#allocation5 + $0x48] sm:$0xff] %v4385
    %4418 = vst [vmem:[#allocation5 + $0x50] sm:$0xff] %v4386
    %4419 = vst [vmem:[#allocation5 + $0x58] sm:$0xff] %v4387
    %4420 = vst [vmem:[#allocation5 + $0x60] sm:$0xff] %v4388
    %4421 = vst [vmem:[#allocation5 + $0x68] sm:$0xff] %v4389
    %4422 = vst [vmem:[#allocation5 + $0x70] sm:$0xff] %v4390
    %4423 = vst [vmem:[#allocation5 + $0x78] sm:$0xff] %v4391
    %4424 = vst [vmem:[#allocation5 + $0x80] sm:$0xff] %v4392
    %4425 = vst [vmem:[#allocation5 + $0x88] sm:$0xff] %v4393
    %4426 = vst [vmem:[#allocation5 + $0x90] sm:$0xff] %v4394
    %4427 = vst [vmem:[#allocation5 + $0x98] sm:$0xff] %v4395
    %4428 = vst [vmem:[#allocation5 + $0xa0] sm:$0xff] %v4396
    %4429 = vst [vmem:[#allocation5 + $0xa8] sm:$0xff] %v4397
    %4430 = vst [vmem:[#allocation5 + $0xb0] sm:$0xff] %v4398
    %4431 = vst [vmem:[#allocation5 + $0xb8] sm:$0xff] %v4399
    %4432 = vst [vmem:[#allocation5 + $0xc0] sm:$0xff] %v4400
    %4433 = vst [vmem:[#allocation5 + $0xc8] sm:$0xff] %v4401
    %4434 = vst [vmem:[#allocation5 + $0xd0] sm:$0xff] %v4402
    %4435 = vst [vmem:[#allocation5 + $0xd8] sm:$0xff] %v4403
    %4436 = vst [vmem:[#allocation5 + $0xe0] sm:$0xff] %v4404
    %4437 = vst [vmem:[#allocation5 + $0xe8] sm:$0xff] %v4405
    %4438 = vst [vmem:[#allocation5 + $0xf0] sm:$0xff] %v4406
    %4439 = vst [vmem:[#allocation5 + $0xf8] sm:$0xff] %v4407
    // Predicated region
    $region42: #{pair2msa_forward.5} parent=1 // pred_check
      _
    $region43: #{pair2msa_forward.5} parent=1 // pred_check_branch
      %4441 = sbr.rel (0) target = $region45
    $region44: #{pair2msa_forward.5} parent=1 // pred_region
      %4443 = vsyncadd [#allocation4], 0
      %s4444 = sshll.u32 [#allocation5], 4
      %s4445 = int_to_ptr.vmem [resolvable:$true] %s4444
      %s4446 = sshll.u32 %s9, 4
      %s4447 = int_to_ptr.hbm [resolvable:$true] %s4446
      %4452 = dma.vmem_to_hbm [thread:$0]  %s4445, 4096, %s4447, [#allocation4], 256, 256, 16
    $region45: #{pair2msa_forward.5} parent=1 // pred_fallthru
      _
    // Predicated region
    $region46: #{pair2msa_forward.5} parent=1 // pred_check
      _
    $region47: #{pair2msa_forward.5} parent=1 // pred_check_branch
      %4454 = sbr.rel (0) target = $region49
    $region48: #{pair2msa_forward.5} parent=1 // pred_region
      %4456 = dma.done [#allocation4], 4096
    $region49: #{pair2msa_forward.5} parent=1 // pred_fallthru
      _
    %4457 = vsyncpa [#allocation3], 1
    %4458 = vsyncpa [#allocation4], 1

</llo_original>
